<compile_context>
chip_gen: v5e
topology: v5e:2x2
jax: 0.10.0
libtpu: 0.0.40
codegen_flags: <defaults>
</compile_context>

<pallas_src>
import functools

import jax
import jax.numpy as jnp
from jax.experimental import pallas as pl
from jax.experimental.pallas import tpu as pltpu


def _round_up(v, m):
    return (v + m - 1) // m * m


# ---------------------------------------------------------------------------
# Pallas kernel: (M, K) @ (K, N) + bias, optional ReLU.
# bf16 operands on the MXU, f32 accumulate / epilogue, lane-dense N (mult 128).
# ---------------------------------------------------------------------------
def _matmul_bias_relu_kernel(x_ref, w_ref, b_ref, o_ref, *, relu):
    acc = jnp.dot(x_ref[...], w_ref[...], preferred_element_type=jnp.float32)
    acc = acc + b_ref[...]                      # f32 bias
    if relu:
        acc = jnp.maximum(acc, 0.0)             # f32 ReLU
    o_ref[...] = acc.astype(o_ref.dtype)


def matmul_bias_relu(x, w, b, *, relu, out_dtype, tm=512):
    """Gridded matmul: M tiled ("parallel"), weight (K, N) resident in VMEM.

    x: [M, K] bf16, w: [K, N] bf16 (N multiple of 128), b: [1, N] f32.
    """
    M, K = x.shape
    K2, N = w.shape
    assert K == K2 and N % 128 == 0 and b.shape == (1, N)
    tm = min(tm, M)                             # tm=512 keeps >=85% HBM roofline
    grid_m = pl.cdiv(M, tm)
    return pl.pallas_call(
        functools.partial(_matmul_bias_relu_kernel, relu=relu),
        grid=(grid_m,),
        in_specs=[
            pl.BlockSpec((tm, K), lambda i: (i, 0)),    # activations, M-tiled
            pl.BlockSpec((K, N), lambda i: (0, 0)),     # weight resident
            pl.BlockSpec((1, N), lambda i: (0, 0)),     # bias resident
        ],
        out_specs=pl.BlockSpec((tm, N), lambda i: (i, 0)),
        out_shape=jax.ShapeDtypeStruct((M, N), out_dtype),
        compiler_params=pltpu.CompilerParams(
            dimension_semantics=("parallel",),          # 2 TCs on v7x
            vmem_limit_bytes=32 * 1024 * 1024,          # fits v7x 64 MiB VMEM
        ),
    )(x, w, b)


# ---------------------------------------------------------------------------
# Plain-JAX glue: im2col patch extraction (static loops over kernel window)
# ---------------------------------------------------------------------------
def _im2col(x_nhwc, kh, kw, stride):
    N, H, W, C = x_nhwc.shape
    OH = (H - kh) // stride + 1
    OW = (W - kw) // stride + 1
    cols = []
    for i in range(kh):
        for j in range(kw):
            cols.append(
                x_nhwc[:, i:i + stride * (OH - 1) + 1:stride,
                          j:j + stride * (OW - 1) + 1:stride, :])
    patches = jnp.stack(cols, axis=3)           # [N, OH, OW, KH*KW, C]
    return patches.reshape(N * OH * OW, kh * kw * C), OH, OW


def conv_relu(x_nhwc, wm, b, *, kh, kw, stride):
    """Conv + bias + ReLU via im2col and the gridded Pallas matmul kernel."""
    N = x_nhwc.shape[0]
    cols, OH, OW = _im2col(x_nhwc, kh, kw, stride)          # bf16 patches
    out = matmul_bias_relu(cols, wm, b, relu=True, out_dtype=jnp.bfloat16)
    return out.reshape(N, OH, OW, wm.shape[1])              # OC padded to 128


# ---------------------------------------------------------------------------
# One-time parameter prep (outside jit): matmul layouts, lane padding, bf16,
# and folding the NCHW flatten + w_fc.T into the FC weight.
# ---------------------------------------------------------------------------
def prepare_params(params, embedding_size):
    def conv_w(w, ic_pad):
        oc, ic, kh, kw = w.shape
        wm = jnp.transpose(w, (2, 3, 1, 0))                 # (kh, kw, ic, oc)
        wm = jnp.pad(wm, ((0, 0), (0, 0), (0, ic_pad - ic), (0, 0)))
        wm = wm.reshape(kh * kw * ic_pad, oc)
        wm = jnp.pad(wm, ((0, 0), (0, _round_up(oc, 128) - oc)))
        return wm.astype(jnp.bfloat16)

    def bias(b):
        n = b.shape[0]
        bp = jnp.pad(b, (0, _round_up(n, 128) - n))
        return bp.reshape(1, -1).astype(jnp.float32)

    E = embedding_size
    Ep = _round_up(E, 128)
    wfc = params["w_fc"]                                    # [E, 64*7*7]
    assert wfc.shape == (E, 64 * 7 * 7)
    # torch flattens NCHW: input index = c*49 + h*7 + w (c in 0..63).
    # Re-order rows to the kernel's NHWC (h, w, c) order and pad c to 128 so
    # the padded conv3 output feeds the FC with a plain reshape.
    wfc_r = wfc.T.reshape(64, 7, 7, E)                      # (c, h, w, E)
    wfc_r = jnp.transpose(wfc_r, (1, 2, 0, 3))              # (h, w, c, E)
    wfc_r = jnp.pad(wfc_r, ((0, 0), (0, 0), (0, 128 - 64), (0, Ep - E)))
    wfc_m = wfc_r.reshape(7 * 7 * 128, Ep).astype(jnp.bfloat16)

    return {
        "w1": conv_w(params["w1"], ic_pad=1),   # input has a single channel
        "b1": bias(params["b1"]),
        "w2": conv_w(params["w2"], ic_pad=128),
        "b2": bias(params["b2"]),
        "w3": conv_w(params["w3"], ic_pad=128),
        "b3": bias(params["b3"]),
        "w_fc": wfc_m,
        "b_fc": bias(params["b_fc"]),
    }


# ---------------------------------------------------------------------------
# Embedding_fn forward
# ---------------------------------------------------------------------------
@functools.partial(jax.jit, static_argnames=("embedding_size",))
def embedding_forward(x_nchw, prep, *, embedding_size):
    N, C, H, W = x_nchw.shape
    assert C == 1
    x = jnp.transpose(x_nchw, (0, 2, 3, 1)).astype(jnp.bfloat16)     # NHWC bf16

    h = conv_relu(x, prep["w1"], prep["b1"], kh=8, kw=8, stride=4)   # [N,20,20,128]
    h = conv_relu(h, prep["w2"], prep["b2"], kh=4, kw=4, stride=2)   # [N, 9, 9,128]
    h = conv_relu(h, prep["w3"], prep["b3"], kh=3, kw=3, stride=1)   # [N, 7, 7,128]

    # NCHW flatten is already folded into prep["w_fc"] -> free reshape here.
    feat = h.reshape(N, -1)                                          # [N, 7*7*128]
    out = matmul_bias_relu(feat, prep["w_fc"], prep["b_fc"],
                           relu=True, out_dtype=jnp.float32)         # [N, Ep]
    return out[:, :embedding_size]


# ---------------------------------------------------------------------------
# Deterministic synthetic parameters (shapes from Embedding_fn.__init__)
# ---------------------------------------------------------------------------
def init_params(key, embedding_size):
    ks = jax.random.split(key, 8)

    def u(k, shape, fan_in):
        bound = 1.0 / jnp.sqrt(float(fan_in))
        return jax.random.uniform(k, shape, jnp.float32, -bound, bound)

    return {
        "w1": u(ks[0], (32, 1, 8, 8), 1 * 8 * 8),
        "b1": u(ks[1], (32,), 1 * 8 * 8),
        "w2": u(ks[2], (64, 32, 4, 4), 32 * 4 * 4),
        "b2": u(ks[3], (64,), 32 * 4 * 4),
        "w3": u(ks[4], (64, 64, 3, 3), 64 * 3 * 3),
        "b3": u(ks[5], (64,), 64 * 3 * 3),
        "w_fc": u(ks[6], (embedding_size, 64 * 7 * 7), 64 * 7 * 7),
        "b_fc": u(ks[7], (embedding_size,), 64 * 7 * 7),
    }


def _reference_forward(x, params):
    """Pure-JAX f32 reference (matches the PyTorch module)."""
    dn = ("NCHW", "OIHW", "NCHW")
    h = jax.lax.conv_general_dilated(x, params["w1"], (4, 4), "VALID",
                                     dimension_numbers=dn)
    h = jax.nn.relu(h + params["b1"][None, :, None, None])
    h = jax.lax.conv_general_dilated(h, params["w2"], (2, 2), "VALID",
                                     dimension_numbers=dn)
    h = jax.nn.relu(h + params["b2"][None, :, None, None])
    h = jax.lax.conv_general_dilated(h, params["w3"], (1, 1), "VALID",
                                     dimension_numbers=dn)
    h = jax.nn.relu(h + params["b3"][None, :, None, None])
    feat = h.reshape(x.shape[0], -1)
    return jax.nn.relu(feat @ params["w_fc"].T + params["b_fc"])


if __name__ == "__main__":
    EMB = 128
    key = jax.random.PRNGKey(0)
    pkey, xkey = jax.random.split(key)
    params = init_params(pkey, EMB)
    prep = prepare_params(params, EMB)      # one-time weight prep, outside jit

    # 84x84 spatial size is required by the Linear(64*7*7, E) layer.
    x = jax.random.normal(xkey, (2, 1, 84, 84), jnp.float32)

    out = embedding_forward(x, prep, embedding_size=EMB)
    out = jax.block_until_ready(out)
    assert out.shape == (2, EMB) and out.dtype == jnp.float32
    assert bool(jnp.all(out >= 0.0))        # final ReLU

    # Loose tolerance: kernel path uses bf16 MXU operands with f32 accumulate.
    ref = _reference_forward(x, params)
    max_err = float(jnp.max(jnp.abs(out - ref)))
    assert max_err < 0.1, f"mismatch vs reference: max abs err {max_err}"

    print("KERNEL_OK")
</pallas_src>

<mosaic_0001>
module attributes {stable_mosaic.version = 11 : i64} {
  func.func @_matmul_bias_relu_kernel(%arg0: i32, %arg1: memref<512x64xbf16, #tpu.memory_space<vmem>>, %arg2: memref<64x128xbf16, #tpu.memory_space<vmem>>, %arg3: memref<1x128xf32, #tpu.memory_space<vmem>>, %arg4: memref<512x128xbf16, #tpu.memory_space<vmem>>) attributes {dimension_semantics = [#tpu.dimension_semantics<parallel>], iteration_bounds = array<i64: 2>, scalar_prefetch = 0 : i64, scratch_operands = 0 : i64, tpu.core_type = #tpu.core_type<tc>, window_params = [{transform_indices = @transform_0, window_bounds = array<i64: 512, 64>}, {pipeline_mode = #tpu.pipeline_mode<synchronous>, transform_indices = @transform_1, window_bounds = array<i64: 64, 128>}, {pipeline_mode = #tpu.pipeline_mode<synchronous>, transform_indices = @transform_2, window_bounds = array<i64: 1, 128>}, {transform_indices = @transform_3, window_bounds = array<i64: 512, 128>}]} {
    %c0 = arith.constant 0 : index
    %c0_0 = arith.constant 0 : index
    %0 = vector.load %arg1[%c0, %c0_0] : memref<512x64xbf16, #tpu.memory_space<vmem>>, vector<512x64xbf16>
    %c0_1 = arith.constant 0 : index
    %c0_2 = arith.constant 0 : index
    %1 = vector.load %arg2[%c0_1, %c0_2] : memref<64x128xbf16, #tpu.memory_space<vmem>>, vector<64x128xbf16>
    %cst = arith.constant dense<0.000000e+00> : vector<512x128xf32>
    %2 = tpu.matmul %0, %1, %cst {dimension_numbers = #tpu.dot_dimension_numbers<[1], [0], [0], [1], [0, 0, 1, 1], [], []>} : vector<512x64xbf16>, vector<64x128xbf16>, vector<512x128xf32> -> vector<512x128xf32>
    %c0_3 = arith.constant 0 : index
    %c0_4 = arith.constant 0 : index
    %3 = vector.load %arg3[%c0_3, %c0_4] : memref<1x128xf32, #tpu.memory_space<vmem>>, vector<1x128xf32>
    %4 = vector.broadcast %3 : vector<1x128xf32> to vector<512x128xf32>
    %5 = arith.addf %2, %4 : vector<512x128xf32>
    %cst_5 = arith.constant 0.000000e+00 : f32
    %6 = vector.broadcast %cst_5 : f32 to vector<512x128xf32>
    %7 = arith.maximumf %5, %6 : vector<512x128xf32>
    %8 = arith.truncf %7 : vector<512x128xf32> to vector<512x128xbf16>
    %c0_6 = arith.constant 0 : index
    %c0_7 = arith.constant 0 : index
    %9 = vector.load %arg4[%c0_6, %c0_7] : memref<512x128xbf16, #tpu.memory_space<vmem>>, vector<512x128xbf16>
    tpu.vector_store %arg4[%c0_6, %c0_7], %8 {strides = array<i32>} : memref<512x128xbf16, #tpu.memory_space<vmem>>, vector<512x128xbf16>,
    return
  }
  func.func @transform_0(%arg0: i32) -> (i32, i32) {
    %c0_i32 = arith.constant 0 : i32
    %c0_i32_0 = arith.constant 0 : i32
    return %arg0, %c0_i32 : i32, i32
  }
  func.func @transform_1(%arg0: i32) -> (i32, i32) {
    %c0_i32 = arith.constant 0 : i32
    %c0_i32_0 = arith.constant 0 : i32
    %c0_i32_1 = arith.constant 0 : i32
    return %c0_i32, %c0_i32_0 : i32, i32
  }
  func.func @transform_2(%arg0: i32) -> (i32, i32) {
    %c0_i32 = arith.constant 0 : i32
    %c0_i32_0 = arith.constant 0 : i32
    %c0_i32_1 = arith.constant 0 : i32
    return %c0_i32, %c0_i32_0 : i32, i32
  }
  func.func @transform_3(%arg0: i32) -> (i32, i32) {
    %c0_i32 = arith.constant 0 : i32
    %c0_i32_0 = arith.constant 0 : i32
    return %arg0, %c0_i32 : i32, i32
  }
}

module attributes {stable_mosaic.version = 11 : i64} {
  func.func @_matmul_bias_relu_kernel(%arg0: i32, %arg1: memref<162x2048xbf16, #tpu.memory_space<vmem>>, %arg2: memref<2048x128xbf16, #tpu.memory_space<vmem>>, %arg3: memref<1x128xf32, #tpu.memory_space<vmem>>, %arg4: memref<162x128xbf16, #tpu.memory_space<vmem>>) attributes {dimension_semantics = [#tpu.dimension_semantics<parallel>], iteration_bounds = array<i64: 1>, scalar_prefetch = 0 : i64, scratch_operands = 0 : i64, tpu.core_type = #tpu.core_type<tc>, window_params = [{transform_indices = @transform_0, window_bounds = array<i64: 162, 2048>}, {pipeline_mode = #tpu.pipeline_mode<synchronous>, transform_indices = @transform_1, window_bounds = array<i64: 2048, 128>}, {pipeline_mode = #tpu.pipeline_mode<synchronous>, transform_indices = @transform_2, window_bounds = array<i64: 1, 128>}, {transform_indices = @transform_3, window_bounds = array<i64: 162, 128>}]} {
    %c0 = arith.constant 0 : index
    %c0_0 = arith.constant 0 : index
    %0 = vector.load %arg1[%c0, %c0_0] : memref<162x2048xbf16, #tpu.memory_space<vmem>>, vector<162x2048xbf16>
    %c0_1 = arith.constant 0 : index
    %c0_2 = arith.constant 0 : index
    %1 = vector.load %arg2[%c0_1, %c0_2] : memref<2048x128xbf16, #tpu.memory_space<vmem>>, vector<2048x128xbf16>
    %cst = arith.constant dense<0.000000e+00> : vector<162x128xf32>
    %2 = tpu.matmul %0, %1, %cst {dimension_numbers = #tpu.dot_dimension_numbers<[1], [0], [0], [1], [0, 0, 1, 1], [], []>} : vector<162x2048xbf16>, vector<2048x128xbf16>, vector<162x128xf32> -> vector<162x128xf32>
    %c0_3 = arith.constant 0 : index
    %c0_4 = arith.constant 0 : index
    %3 = vector.load %arg3[%c0_3, %c0_4] : memref<1x128xf32, #tpu.memory_space<vmem>>, vector<1x128xf32>
    %4 = vector.broadcast %3 : vector<1x128xf32> to vector<162x128xf32>
    %5 = arith.addf %2, %4 : vector<162x128xf32>
    %cst_5 = arith.constant 0.000000e+00 : f32
    %6 = vector.broadcast %cst_5 : f32 to vector<162x128xf32>
    %7 = arith.maximumf %5, %6 : vector<162x128xf32>
    %8 = arith.truncf %7 : vector<162x128xf32> to vector<162x128xbf16>
    %c0_6 = arith.constant 0 : index
    %c0_7 = arith.constant 0 : index
    %9 = vector.load %arg4[%c0_6, %c0_7] : memref<162x128xbf16, #tpu.memory_space<vmem>>, vector<162x128xbf16>
    tpu.vector_store %arg4[%c0_6, %c0_7], %8 {strides = array<i32>} : memref<162x128xbf16, #tpu.memory_space<vmem>>, vector<162x128xbf16>,
    return
  }
  func.func @transform_0(%arg0: i32) -> (i32, i32) {
    %c0_i32 = arith.constant 0 : i32
    %c0_i32_0 = arith.constant 0 : i32
    return %arg0, %c0_i32 : i32, i32
  }
  func.func @transform_1(%arg0: i32) -> (i32, i32) {
    %c0_i32 = arith.constant 0 : i32
    %c0_i32_0 = arith.constant 0 : i32
    %c0_i32_1 = arith.constant 0 : i32
    return %c0_i32, %c0_i32_0 : i32, i32
  }
  func.func @transform_2(%arg0: i32) -> (i32, i32) {
    %c0_i32 = arith.constant 0 : i32
    %c0_i32_0 = arith.constant 0 : i32
    %c0_i32_1 = arith.constant 0 : i32
    return %c0_i32, %c0_i32_0 : i32, i32
  }
  func.func @transform_3(%arg0: i32) -> (i32, i32) {
    %c0_i32 = arith.constant 0 : i32
    %c0_i32_0 = arith.constant 0 : i32
    return %arg0, %c0_i32 : i32, i32
  }
}

module attributes {stable_mosaic.version = 11 : i64} {
  func.func @_matmul_bias_relu_kernel(%arg0: i32, %arg1: memref<98x1152xbf16, #tpu.memory_space<vmem>>, %arg2: memref<1152x128xbf16, #tpu.memory_space<vmem>>, %arg3: memref<1x128xf32, #tpu.memory_space<vmem>>, %arg4: memref<98x128xbf16, #tpu.memory_space<vmem>>) attributes {dimension_semantics = [#tpu.dimension_semantics<parallel>], iteration_bounds = array<i64: 1>, scalar_prefetch = 0 : i64, scratch_operands = 0 : i64, tpu.core_type = #tpu.core_type<tc>, window_params = [{transform_indices = @transform_0, window_bounds = array<i64: 98, 1152>}, {pipeline_mode = #tpu.pipeline_mode<synchronous>, transform_indices = @transform_1, window_bounds = array<i64: 1152, 128>}, {pipeline_mode = #tpu.pipeline_mode<synchronous>, transform_indices = @transform_2, window_bounds = array<i64: 1, 128>}, {transform_indices = @transform_3, window_bounds = array<i64: 98, 128>}]} {
    %c0 = arith.constant 0 : index
    %c0_0 = arith.constant 0 : index
    %0 = vector.load %arg1[%c0, %c0_0] : memref<98x1152xbf16, #tpu.memory_space<vmem>>, vector<98x1152xbf16>
    %c0_1 = arith.constant 0 : index
    %c0_2 = arith.constant 0 : index
    %1 = vector.load %arg2[%c0_1, %c0_2] : memref<1152x128xbf16, #tpu.memory_space<vmem>>, vector<1152x128xbf16>
    %cst = arith.constant dense<0.000000e+00> : vector<98x128xf32>
    %2 = tpu.matmul %0, %1, %cst {dimension_numbers = #tpu.dot_dimension_numbers<[1], [0], [0], [1], [0, 0, 1, 1], [], []>} : vector<98x1152xbf16>, vector<1152x128xbf16>, vector<98x128xf32> -> vector<98x128xf32>
    %c0_3 = arith.constant 0 : index
    %c0_4 = arith.constant 0 : index
    %3 = vector.load %arg3[%c0_3, %c0_4] : memref<1x128xf32, #tpu.memory_space<vmem>>, vector<1x128xf32>
    %4 = vector.broadcast %3 : vector<1x128xf32> to vector<98x128xf32>
    %5 = arith.addf %2, %4 : vector<98x128xf32>
    %cst_5 = arith.constant 0.000000e+00 : f32
    %6 = vector.broadcast %cst_5 : f32 to vector<98x128xf32>
    %7 = arith.maximumf %5, %6 : vector<98x128xf32>
    %8 = arith.truncf %7 : vector<98x128xf32> to vector<98x128xbf16>
    %c0_6 = arith.constant 0 : index
    %c0_7 = arith.constant 0 : index
    %9 = vector.load %arg4[%c0_6, %c0_7] : memref<98x128xbf16, #tpu.memory_space<vmem>>, vector<98x128xbf16>
    tpu.vector_store %arg4[%c0_6, %c0_7], %8 {strides = array<i32>} : memref<98x128xbf16, #tpu.memory_space<vmem>>, vector<98x128xbf16>,
    return
  }
  func.func @transform_0(%arg0: i32) -> (i32, i32) {
    %c0_i32 = arith.constant 0 : i32
    %c0_i32_0 = arith.constant 0 : i32
    return %arg0, %c0_i32 : i32, i32
  }
  func.func @transform_1(%arg0: i32) -> (i32, i32) {
    %c0_i32 = arith.constant 0 : i32
    %c0_i32_0 = arith.constant 0 : i32
    %c0_i32_1 = arith.constant 0 : i32
    return %c0_i32, %c0_i32_0 : i32, i32
  }
  func.func @transform_2(%arg0: i32) -> (i32, i32) {
    %c0_i32 = arith.constant 0 : i32
    %c0_i32_0 = arith.constant 0 : i32
    %c0_i32_1 = arith.constant 0 : i32
    return %c0_i32, %c0_i32_0 : i32, i32
  }
  func.func @transform_3(%arg0: i32) -> (i32, i32) {
    %c0_i32 = arith.constant 0 : i32
    %c0_i32_0 = arith.constant 0 : i32
    return %arg0, %c0_i32 : i32, i32
  }
}

module attributes {stable_mosaic.version = 11 : i64} {
  func.func @_matmul_bias_relu_kernel(%arg0: i32, %arg1: memref<2x6272xbf16, #tpu.memory_space<vmem>>, %arg2: memref<6272x128xbf16, #tpu.memory_space<vmem>>, %arg3: memref<1x128xf32, #tpu.memory_space<vmem>>, %arg4: memref<2x128xf32, #tpu.memory_space<vmem>>) attributes {dimension_semantics = [#tpu.dimension_semantics<parallel>], iteration_bounds = array<i64: 1>, scalar_prefetch = 0 : i64, scratch_operands = 0 : i64, tpu.core_type = #tpu.core_type<tc>, window_params = [{transform_indices = @transform_0, window_bounds = array<i64: 2, 6272>}, {pipeline_mode = #tpu.pipeline_mode<synchronous>, transform_indices = @transform_1, window_bounds = array<i64: 6272, 128>}, {pipeline_mode = #tpu.pipeline_mode<synchronous>, transform_indices = @transform_2, window_bounds = array<i64: 1, 128>}, {transform_indices = @transform_3, window_bounds = array<i64: 2, 128>}]} {
    %c0 = arith.constant 0 : index
    %c0_0 = arith.constant 0 : index
    %0 = vector.load %arg1[%c0, %c0_0] : memref<2x6272xbf16, #tpu.memory_space<vmem>>, vector<2x6272xbf16>
    %c0_1 = arith.constant 0 : index
    %c0_2 = arith.constant 0 : index
    %1 = vector.load %arg2[%c0_1, %c0_2] : memref<6272x128xbf16, #tpu.memory_space<vmem>>, vector<6272x128xbf16>
    %cst = arith.constant dense<0.000000e+00> : vector<2x128xf32>
    %2 = tpu.matmul %0, %1, %cst {dimension_numbers = #tpu.dot_dimension_numbers<[1], [0], [0], [1], [0, 0, 1, 1], [], []>} : vector<2x6272xbf16>, vector<6272x128xbf16>, vector<2x128xf32> -> vector<2x128xf32>
    %c0_3 = arith.constant 0 : index
    %c0_4 = arith.constant 0 : index
    %3 = vector.load %arg3[%c0_3, %c0_4] : memref<1x128xf32, #tpu.memory_space<vmem>>, vector<1x128xf32>
    %4 = vector.broadcast %3 : vector<1x128xf32> to vector<2x128xf32>
    %5 = arith.addf %2, %4 : vector<2x128xf32>
    %cst_5 = arith.constant 0.000000e+00 : f32
    %6 = vector.broadcast %cst_5 : f32 to vector<2x128xf32>
    %7 = arith.maximumf %5, %6 : vector<2x128xf32>
    %c0_6 = arith.constant 0 : index
    %c0_7 = arith.constant 0 : index
    %8 = vector.load %arg4[%c0_6, %c0_7] : memref<2x128xf32, #tpu.memory_space<vmem>>, vector<2x128xf32>
    tpu.vector_store %arg4[%c0_6, %c0_7], %7 {strides = array<i32>} : memref<2x128xf32, #tpu.memory_space<vmem>>, vector<2x128xf32>,
    return
  }
  func.func @transform_0(%arg0: i32) -> (i32, i32) {
    %c0_i32 = arith.constant 0 : i32
    %c0_i32_0 = arith.constant 0 : i32
    return %arg0, %c0_i32 : i32, i32
  }
  func.func @transform_1(%arg0: i32) -> (i32, i32) {
    %c0_i32 = arith.constant 0 : i32
    %c0_i32_0 = arith.constant 0 : i32
    %c0_i32_1 = arith.constant 0 : i32
    return %c0_i32, %c0_i32_0 : i32, i32
  }
  func.func @transform_2(%arg0: i32) -> (i32, i32) {
    %c0_i32 = arith.constant 0 : i32
    %c0_i32_0 = arith.constant 0 : i32
    %c0_i32_1 = arith.constant 0 : i32
    return %c0_i32, %c0_i32_0 : i32, i32
  }
  func.func @transform_3(%arg0: i32) -> (i32, i32) {
    %c0_i32 = arith.constant 0 : i32
    %c0_i32_0 = arith.constant 0 : i32
    return %arg0, %c0_i32 : i32, i32
  }
}

</mosaic_0001>

<llo_original>
// kernel: embedding_forward.4
$region0: #{embedding_forward.4}
  #allocation0 [shape = 'u32[]', space=smem, size = 0x4, offset = 0x4, fixed_abs, tag = 'smem constant byte address 0x4 - core index']
  #allocation1 [shape = 'u32[72,128]{1,0:T(1,128)}', space=vmem, size = 0x9000, scoped, tag = 'internal scratch']
  %s0 = inlined_call_operand.vmem [shape: bf16[800,64], index: 0, kind: input, shape index: {}]
  %s1 = inlined_call_operand.vmem [shape: bf16[64,128], index: 1, kind: input, shape index: {}]
  %s2 = inlined_call_operand.vmem [shape: f32[1,128], index: 2, kind: input, shape index: {}]
  %s3 = inlined_call_operand.vmem [shape: bf16[800,128], index: 3, kind: output, shape index: {}]
  %s4 = sld [smem:[#allocation0]]
  $region89: #{embedding_forward.4} parent=0
    _
  %s6 = ssub.s32 1, %s4
  %s7 = scalar_select 0, %s6, %s4
  $region1: #{embedding_forward.4} parent=0
    #allocation2 [shape = 'u8[262144]{0}', space=vmem, size = 0x40000, scoped, tag = 'output window, operand 0']
    loop: start=0, step=1, limit=4
    $region2: #{embedding_forward.4} parent=1 // loop_pre_header
      _
    $region3: #{embedding_forward.4} parent=1 // loop_header
      %s9 = sphi 0, %s13
      %p10 = scmp.ge.s32.totalorder %s9, 4
      %s19 = sphi 0, %s21
      %s22 = sphi 0, %s19
      %s23 = sphi 0, %s22
      %s39 = sphi 0, %s23
      %s43 = sphi 0, %s43
      %s45 = sphi 0, %s43
      %s46 = sphi 0, %s45
      %s60 = sphi 0, %s46
      %s64 = sphi 0, %s64
      %s66 = sphi 0, %s64
      %s67 = sphi 0, %s66
      %s81 = sphi 0, %s67
      %s87 = sphi 0, %s89
      %s90 = sphi 0, %s87
      %s91 = sphi 0, %s90
      %s107 = sphi 0, %s91
    $region4: #{embedding_forward.4} parent=1 // loop_header_branch
      %12 = sbr.rel (%p10) target = $region8
    $region5: #{embedding_forward.4} parent=1 // loop_body
      %s14 = ssub.s32 %s9, 1
      %s15 = ssub.s32 %s9, 2
      %s16 = sadd.s32 %s9, 1
      %s17 = ssub.s32 %s9, %s16
      %p18 = scmp.eq.s32.totalorder %s17, 0
      %s20 = sadd.s32 %s19, 1
      %s21 = scalar_select %p18, %s19, %s20
      %p24 = pneg %p18
      %p25 = scmp.eq.s32.totalorder %s9, 1
      %p26 = por %p24, %p25
      %p27 = scmp.ne.s32.totalorder %s19, %s22
      %p28 = scmp.eq.s32.totalorder %s9, 0
      %p29 = por %p27, %p28
      %p30 = scmp.ne.s32.totalorder %s19, %s22
      %p31 = scmp.eq.s32.totalorder %s14, 1
      %p32 = por %p30, %p31
      %p33 = scmp.ne.s32.totalorder %s22, %s23
      %p34 = scmp.eq.s32.totalorder %s14, 0
      %p35 = por %p33, %p34
      %p36 = scmp.ne.s32.totalorder %s22, %s23
      %p37 = scmp.eq.s32.totalorder %s15, 1
      %p38 = por %p36, %p37
      %p40 = scmp.ne.s32.totalorder %s23, %s39
      %p41 = scmp.eq.s32.totalorder %s15, 0
      %p42 = por %p40, %p41
      %s44 = sadd.s32 %s43, 1
      %p47 = scmp.eq.s32.totalorder %s9, 1
      %p48 = scmp.ne.s32.totalorder %s43, %s45
      %p49 = scmp.eq.s32.totalorder %s9, 0
      %p50 = por %p48, %p49
      %p51 = scmp.ne.s32.totalorder %s43, %s45
      %p52 = scmp.eq.s32.totalorder %s14, 1
      %p53 = por %p51, %p52
      %p54 = scmp.ne.s32.totalorder %s45, %s46
      %p55 = scmp.eq.s32.totalorder %s14, 0
      %p56 = por %p54, %p55
      %p57 = scmp.ne.s32.totalorder %s45, %s46
      %p58 = scmp.eq.s32.totalorder %s15, 1
      %p59 = por %p57, %p58
      %p61 = scmp.ne.s32.totalorder %s46, %s60
      %p62 = scmp.eq.s32.totalorder %s15, 0
      %p63 = por %p61, %p62
      %s65 = sadd.s32 %s64, 1
      %p68 = scmp.eq.s32.totalorder %s9, 1
      %p69 = scmp.ne.s32.totalorder %s64, %s66
      %p70 = scmp.eq.s32.totalorder %s9, 0
      %p71 = por %p69, %p70
      %p72 = scmp.ne.s32.totalorder %s64, %s66
      %p73 = scmp.eq.s32.totalorder %s14, 1
      %p74 = por %p72, %p73
      %p75 = scmp.ne.s32.totalorder %s66, %s67
      %p76 = scmp.eq.s32.totalorder %s14, 0
      %p77 = por %p75, %p76
      %p78 = scmp.ne.s32.totalorder %s66, %s67
      %p79 = scmp.eq.s32.totalorder %s15, 1
      %p80 = por %p78, %p79
      %p82 = scmp.ne.s32.totalorder %s67, %s81
      %p83 = scmp.eq.s32.totalorder %s15, 0
      %p84 = por %p82, %p83
      %s85 = ssub.s32 %s9, %s16
      %p86 = scmp.eq.s32.totalorder %s85, 0
      %s88 = sadd.s32 %s87, 1
      %s89 = scalar_select %p86, %s87, %s88
      %p92 = pneg %p86
      %p93 = scmp.eq.s32.totalorder %s9, 1
      %p94 = por %p92, %p93
      %p95 = scmp.ne.s32.totalorder %s87, %s90
      %p96 = scmp.eq.s32.totalorder %s9, 0
      %p97 = por %p95, %p96
      %p98 = scmp.ne.s32.totalorder %s87, %s90
      %p99 = scmp.eq.s32.totalorder %s14, 1
      %p100 = por %p98, %p99
      %p101 = scmp.ne.s32.totalorder %s90, %s91
      %p102 = scmp.eq.s32.totalorder %s14, 0
      %p103 = por %p101, %p102
      %p104 = scmp.ne.s32.totalorder %s90, %s91
      %p105 = scmp.eq.s32.totalorder %s15, 1
      %p106 = por %p104, %p105
      %p108 = scmp.ne.s32.totalorder %s91, %s107
      %p109 = scmp.eq.s32.totalorder %s15, 0
      %p110 = por %p108, %p109
      %p111 = scmp.le.s32.totalorder 1, %s9
      %p112 = scmp.lt.s32.totalorder %s9, 3
      %p113 = pnand %p111, %p112
      %p114 = pneg %p113
      // Predicated region
      $region9: #{embedding_forward.4} parent=5 // pred_check
        _
      $region10: #{embedding_forward.4} parent=5 // pred_check_branch
        %116 = sbr.rel (%p113) target = $region12
      $region11: #{embedding_forward.4} parent=5 // pred_region
        %s117 = ssub.s32 %s9, 1
        // Predicated region
        $region13: #{embedding_forward.4} parent=11 // pred_check
          %p118 = pneg %p56
        $region14: #{embedding_forward.4} parent=11 // pred_check_branch
          %120 = sbr.rel (%p118) target = $region16
        $region15: #{embedding_forward.4} parent=11 // pred_region
          _
        $region16: #{embedding_forward.4} parent=11 // pred_fallthru
          _
        // Predicated region
        $region17: #{embedding_forward.4} parent=11 // pred_check
          %p121 = pneg %p77
        $region18: #{embedding_forward.4} parent=11 // pred_check_branch
          %123 = sbr.rel (%p121) target = $region20
        $region19: #{embedding_forward.4} parent=11 // pred_region
          _
        $region20: #{embedding_forward.4} parent=11 // pred_fallthru
          _
      $region12: #{embedding_forward.4} parent=5 // pred_fallthru
        _
      %p124 = scmp.lt.s32.totalorder %s9, 2
      // Predicated region
      $region21: #{embedding_forward.4} parent=5 // pred_check
        %p125 = pneg %p124
      $region22: #{embedding_forward.4} parent=5 // pred_check_branch
        %127 = sbr.rel (%p125) target = $region24
      $region23: #{embedding_forward.4} parent=5 // pred_region
        // Predicated region
        $region25: #{embedding_forward.4} parent=23 // pred_check
          %p128 = pneg %p29
        $region26: #{embedding_forward.4} parent=23 // pred_check_branch
          %130 = sbr.rel (%p128) target = $region28
        $region27: #{embedding_forward.4} parent=23 // pred_region
          %s131 = smul.u32 64, %s9
          %s132 = ssub.s32 100, %s131
          %p133 = scmp.lt.s32.totalorder %s132, 64
          %s134 = scalar_select %p133, %s132, 64
          %s135 = smul.u32 4, %s134
          %p136 = scmp.lt.s32.totalorder %s131, 99
          %s137 = scalar_select %p136, %s131, 99
          %s138 = smul.addr %s137, 4
          %s139 = scalar_lea.vmem %s0, %s138
          %s140 = smul.u32 64, %s9
          %s141 = ssub.s32 100, %s140
          %p142 = scmp.lt.s32.totalorder %s141, 64
          %s143 = scalar_select %p142, %s141, 64
          %s144 = smul.u32 4, %s143
        $region28: #{embedding_forward.4} parent=23 // pred_fallthru
          _
      $region24: #{embedding_forward.4} parent=5 // pred_fallthru
        _
      %p145 = scmp.le.s32.totalorder 1, %s9
      %p146 = scmp.lt.s32.totalorder %s9, 3
      %p147 = pnand %p145, %p146
      %p148 = pneg %p147
      // Predicated region
      $region29: #{embedding_forward.4} parent=5 // pred_check
        _
      $region30: #{embedding_forward.4} parent=5 // pred_check_branch
        %150 = sbr.rel (%p147) target = $region32
      $region31: #{embedding_forward.4} parent=5 // pred_region
        %s151 = ssub.s32 %s9, 1
        %s152 = smul.u32 64, %s14
        %s153 = ssub.s32 100, %s152
        %p154 = scmp.lt.s32.totalorder %s153, 64
        %s155 = scalar_select %p154, %s153, 64
        %s156 = smul.u32 4, %s155
        %p157 = scmp.lt.s32.totalorder %s152, 99
        %s158 = scalar_select %p157, %s152, 99
        %s159 = smul.addr %s158, 4
        %s160 = scalar_lea.vmem %s0, %s159
        %p161 = pneg %p35
        %p162 = pneg %p32
        %p163 = pneg %p56
        %p164 = pneg %p53
        %p165 = pneg %p77
        %p166 = pneg %p74
        %p167 = pneg %p103
        %p168 = pneg %p100
        %s169 = sand.u32 %s90, 1
        %s170 = sand.u32 %s90, 1
        %s171 = smul.addr %s170, 256
        %s172 = scalar_lea.vmem [#allocation2], %s171
        %s173 = smul.u32 64, %s14
        %s174 = ssub.s32 100, %s173
        %p175 = scmp.lt.s32.totalorder %s174, 64
        %s176 = scalar_select %p175, %s174, 64
        %s177 = smul.u32 4, %s176
        %p178 = scmp.lt.s32.totalorder %s173, 99
        %s179 = scalar_select %p178, %s173, 99
        %s180 = smul.addr %s179, 4
        %s181 = scalar_lea.vmem %s0, %s180
        %s182 = smul.u32 64, %s14
        %s183 = ssub.s32 100, %s182
        %p184 = scmp.lt.s32.totalorder %s183, 64
        %s185 = scalar_select %p184, %s183, 64
        %s186 = smul.u32 4, %s185
        %s187 = smul.u32 64, %s14
        %s188 = ssub.s32 100, %s187
        %p189 = scmp.lt.s32.totalorder %s188, 64
        %s190 = scalar_select %p189, %s188, 64
        %s191 = smul.u32 4, %s190
        %v193 = vld [vmem:[%s181] sm:$0xf]
        %v194 = vld [vmem:[%s181 + $0x4] sm:$0xf]
        %v195 = vld [vmem:[%s181 + $0x8] sm:$0xf]
        %v196 = vld [vmem:[%s181 + $0xc] sm:$0xf]
        %v197 = vld [vmem:[%s181 + $0x10] sm:$0xf]
        %v198 = vld [vmem:[%s181 + $0x14] sm:$0xf]
        %v199 = vld [vmem:[%s181 + $0x18] sm:$0xf]
        %v200 = vld [vmem:[%s181 + $0x1c] sm:$0xf]
        %v201 = vld [vmem:[%s181 + $0x20] sm:$0xf]
        %v202 = vld [vmem:[%s181 + $0x24] sm:$0xf]
        %v203 = vld [vmem:[%s181 + $0x28] sm:$0xf]
        %v204 = vld [vmem:[%s181 + $0x2c] sm:$0xf]
        %v205 = vld [vmem:[%s181 + $0x30] sm:$0xf]
        %v206 = vld [vmem:[%s181 + $0x34] sm:$0xf]
        %v207 = vld [vmem:[%s181 + $0x38] sm:$0xf]
        %v208 = vld [vmem:[%s181 + $0x3c] sm:$0xf]
        %v209 = vld [vmem:[%s181 + $0x40] sm:$0xf]
        %v210 = vld [vmem:[%s181 + $0x44] sm:$0xf]
        %v211 = vld [vmem:[%s181 + $0x48] sm:$0xf]
        %v212 = vld [vmem:[%s181 + $0x4c] sm:$0xf]
        %v213 = vld [vmem:[%s181 + $0x50] sm:$0xf]
        %v214 = vld [vmem:[%s181 + $0x54] sm:$0xf]
        %v215 = vld [vmem:[%s181 + $0x58] sm:$0xf]
        %v216 = vld [vmem:[%s181 + $0x5c] sm:$0xf]
        %v217 = vld [vmem:[%s181 + $0x60] sm:$0xf]
        %v218 = vld [vmem:[%s181 + $0x64] sm:$0xf]
        %v219 = vld [vmem:[%s181 + $0x68] sm:$0xf]
        %v220 = vld [vmem:[%s181 + $0x6c] sm:$0xf]
        %v221 = vld [vmem:[%s181 + $0x70] sm:$0xf]
        %v222 = vld [vmem:[%s181 + $0x74] sm:$0xf]
        %v223 = vld [vmem:[%s181 + $0x78] sm:$0xf]
        %v224 = vld [vmem:[%s181 + $0x7c] sm:$0xf]
        %v225 = vld [vmem:[%s181 + $0x80] sm:$0xf]
        %v226 = vld [vmem:[%s181 + $0x84] sm:$0xf]
        %v227 = vld [vmem:[%s181 + $0x88] sm:$0xf]
        %v228 = vld [vmem:[%s181 + $0x8c] sm:$0xf]
        %v229 = vld [vmem:[%s181 + $0x90] sm:$0xf]
        %v230 = vld [vmem:[%s181 + $0x94] sm:$0xf]
        %v231 = vld [vmem:[%s181 + $0x98] sm:$0xf]
        %v232 = vld [vmem:[%s181 + $0x9c] sm:$0xf]
        %v233 = vld [vmem:[%s181 + $0xa0] sm:$0xf]
        %v234 = vld [vmem:[%s181 + $0xa4] sm:$0xf]
        %v235 = vld [vmem:[%s181 + $0xa8] sm:$0xf]
        %v236 = vld [vmem:[%s181 + $0xac] sm:$0xf]
        %v237 = vld [vmem:[%s181 + $0xb0] sm:$0xf]
        %v238 = vld [vmem:[%s181 + $0xb4] sm:$0xf]
        %v239 = vld [vmem:[%s181 + $0xb8] sm:$0xf]
        %v240 = vld [vmem:[%s181 + $0xbc] sm:$0xf]
        %v241 = vld [vmem:[%s181 + $0xc0] sm:$0xf]
        %v242 = vld [vmem:[%s181 + $0xc4] sm:$0xf]
        %v243 = vld [vmem:[%s181 + $0xc8] sm:$0xf]
        %v244 = vld [vmem:[%s181 + $0xcc] sm:$0xf]
        %v245 = vld [vmem:[%s181 + $0xd0] sm:$0xf]
        %v246 = vld [vmem:[%s181 + $0xd4] sm:$0xf]
        %v247 = vld [vmem:[%s181 + $0xd8] sm:$0xf]
        %v248 = vld [vmem:[%s181 + $0xdc] sm:$0xf]
        %v249 = vld [vmem:[%s181 + $0xe0] sm:$0xf]
        %v250 = vld [vmem:[%s181 + $0xe4] sm:$0xf]
        %v251 = vld [vmem:[%s181 + $0xe8] sm:$0xf]
        %v252 = vld [vmem:[%s181 + $0xec] sm:$0xf]
        %v253 = vld [vmem:[%s181 + $0xf0] sm:$0xf]
        %v254 = vld [vmem:[%s181 + $0xf4] sm:$0xf]
        %v255 = vld [vmem:[%s181 + $0xf8] sm:$0xf]
        %v256 = vld [vmem:[%s181 + $0xfc] sm:$0xf]
        %v257 = vld [vmem:[%s1] sm:$0xf]
        %v258 = vld [vmem:[%s1 + $0x4] sm:$0xf]
        %v259 = vld [vmem:[%s1 + $0x8] sm:$0xf]
        %v260 = vld [vmem:[%s1 + $0xc] sm:$0xf]
        %v261 = vld [vmem:[%s1 + $0x10] sm:$0xf]
        %v262 = vld [vmem:[%s1 + $0x14] sm:$0xf]
        %v263 = vld [vmem:[%s1 + $0x18] sm:$0xf]
        %v264 = vld [vmem:[%s1 + $0x1c] sm:$0xf]
        %v265 = vld [vmem:[%s2] sm:$0x1]
        %v267 = vperm.slane %v265, 0
        %v333 = vunpack.c.l.b16 %v193
        %v334 = vunpack.c.l.b16 %v194
        %v335 = vunpack.c.l.b16 %v195
        %v336 = vunpack.c.l.b16 %v196
        %v337 = vunpack.c.l.b16 %v197
        %v338 = vunpack.c.l.b16 %v198
        %v339 = vunpack.c.l.b16 %v199
        %v340 = vunpack.c.l.b16 %v200
        %v341 = vunpack.c.l.b16 %v201
        %v342 = vunpack.c.l.b16 %v202
        %v343 = vunpack.c.l.b16 %v203
        %v344 = vunpack.c.l.b16 %v204
        %v345 = vunpack.c.l.b16 %v205
        %v346 = vunpack.c.l.b16 %v206
        %v347 = vunpack.c.l.b16 %v207
        %v348 = vunpack.c.l.b16 %v208
        %v349 = vunpack.c.l.b16 %v209
        %v350 = vunpack.c.l.b16 %v210
        %v351 = vunpack.c.l.b16 %v211
        %v352 = vunpack.c.l.b16 %v212
        %v353 = vunpack.c.l.b16 %v213
        %v354 = vunpack.c.l.b16 %v214
        %v355 = vunpack.c.l.b16 %v215
        %v356 = vunpack.c.l.b16 %v216
        %v357 = vunpack.c.l.b16 %v217
        %v358 = vunpack.c.l.b16 %v218
        %v359 = vunpack.c.l.b16 %v219
        %v360 = vunpack.c.l.b16 %v220
        %v361 = vunpack.c.l.b16 %v221
        %v362 = vunpack.c.l.b16 %v222
        %v363 = vunpack.c.l.b16 %v223
        %v364 = vunpack.c.l.b16 %v224
        %v365 = vunpack.c.l.b16 %v225
        %v366 = vunpack.c.l.b16 %v226
        %v367 = vunpack.c.l.b16 %v227
        %v368 = vunpack.c.l.b16 %v228
        %v369 = vunpack.c.l.b16 %v229
        %v370 = vunpack.c.l.b16 %v230
        %v371 = vunpack.c.l.b16 %v231
        %v372 = vunpack.c.l.b16 %v232
        %v373 = vunpack.c.l.b16 %v233
        %v374 = vunpack.c.l.b16 %v234
        %v375 = vunpack.c.l.b16 %v235
        %v376 = vunpack.c.l.b16 %v236
        %v377 = vunpack.c.l.b16 %v237
        %v378 = vunpack.c.l.b16 %v238
        %v379 = vunpack.c.l.b16 %v239
        %v380 = vunpack.c.l.b16 %v240
        %v381 = vunpack.c.l.b16 %v241
        %v382 = vunpack.c.l.b16 %v242
        %v383 = vunpack.c.l.b16 %v243
        %v384 = vunpack.c.l.b16 %v244
        %v385 = vunpack.c.l.b16 %v245
        %v386 = vunpack.c.l.b16 %v246
        %v387 = vunpack.c.l.b16 %v247
        %v388 = vunpack.c.l.b16 %v248
        %v389 = vunpack.c.l.b16 %v249
        %v390 = vunpack.c.l.b16 %v250
        %v391 = vunpack.c.l.b16 %v251
        %v392 = vunpack.c.l.b16 %v252
        %v393 = vunpack.c.l.b16 %v253
        %v394 = vunpack.c.l.b16 %v254
        %v395 = vunpack.c.l.b16 %v255
        %v396 = vunpack.c.l.b16 %v256
        %v397 = vpack.c.b16 %v334, %v333
        %v398 = vpack.c.b16 %v336, %v335
        %v399 = vpack.c.b16 %v338, %v337
        %v400 = vpack.c.b16 %v340, %v339
        %v401 = vpack.c.b16 %v342, %v341
        %v402 = vpack.c.b16 %v344, %v343
        %v403 = vpack.c.b16 %v346, %v345
        %v404 = vpack.c.b16 %v348, %v347
        %v405 = vpack.c.b16 %v350, %v349
        %v406 = vpack.c.b16 %v352, %v351
        %v407 = vpack.c.b16 %v354, %v353
        %v408 = vpack.c.b16 %v356, %v355
        %v409 = vpack.c.b16 %v358, %v357
        %v410 = vpack.c.b16 %v360, %v359
        %v411 = vpack.c.b16 %v362, %v361
        %v412 = vpack.c.b16 %v364, %v363
        %v413 = vpack.c.b16 %v366, %v365
        %v414 = vpack.c.b16 %v368, %v367
        %v415 = vpack.c.b16 %v370, %v369
        %v416 = vpack.c.b16 %v372, %v371
        %v417 = vpack.c.b16 %v374, %v373
        %v418 = vpack.c.b16 %v376, %v375
        %v419 = vpack.c.b16 %v378, %v377
        %v420 = vpack.c.b16 %v380, %v379
        %v421 = vpack.c.b16 %v382, %v381
        %v422 = vpack.c.b16 %v384, %v383
        %v423 = vpack.c.b16 %v386, %v385
        %v424 = vpack.c.b16 %v388, %v387
        %v425 = vpack.c.b16 %v390, %v389
        %v426 = vpack.c.b16 %v392, %v391
        %v427 = vpack.c.b16 %v394, %v393
        %v428 = vpack.c.b16 %v396, %v395
        %v437 = vunpack.c.l.b16 %v257
        %v438 = vunpack.c.l.b16 %v258
        %v439 = vunpack.c.l.b16 %v259
        %v440 = vunpack.c.l.b16 %v260
        %v441 = vunpack.c.l.b16 %v261
        %v442 = vunpack.c.l.b16 %v262
        %v443 = vunpack.c.l.b16 %v263
        %v444 = vunpack.c.l.b16 %v264
        %v445 = vpack.c.b16 %v438, %v437
        %v446 = vpack.c.b16 %v440, %v439
        %v447 = vpack.c.b16 %v442, %v441
        %v448 = vpack.c.b16 %v444, %v443
        %vm453 = vcmask 523264
        %v455 = vsel %vm453, %v397, 0
        %v458 = vsel %vm453, %v398, 0
        %v461 = vsel %vm453, %v399, 0
        %v464 = vsel %vm453, %v400, 0
        %v467 = vsel %vm453, %v401, 0
        %v470 = vsel %vm453, %v402, 0
        %v473 = vsel %vm453, %v403, 0
        %v476 = vsel %vm453, %v404, 0
        %v479 = vsel %vm453, %v405, 0
        %v482 = vsel %vm453, %v406, 0
        %v485 = vsel %vm453, %v407, 0
        %v488 = vsel %vm453, %v408, 0
        %v491 = vsel %vm453, %v409, 0
        %v494 = vsel %vm453, %v410, 0
        %v497 = vsel %vm453, %v411, 0
        %v500 = vsel %vm453, %v412, 0
        %v503 = vsel %vm453, %v413, 0
        %v506 = vsel %vm453, %v414, 0
        %v509 = vsel %vm453, %v415, 0
        %v512 = vsel %vm453, %v416, 0
        %v515 = vsel %vm453, %v417, 0
        %v518 = vsel %vm453, %v418, 0
        %v521 = vsel %vm453, %v419, 0
        %v524 = vsel %vm453, %v420, 0
        %v527 = vsel %vm453, %v421, 0
        %v530 = vsel %vm453, %v422, 0
        %v533 = vsel %vm453, %v423, 0
        %v536 = vsel %vm453, %v424, 0
        %v539 = vsel %vm453, %v425, 0
        %v542 = vsel %vm453, %v426, 0
        %v545 = vsel %vm453, %v427, 0
        %v548 = vsel %vm453, %v428, 0
        %550 = vmatpush.bf16.msra.mxu0 0
        %551 = vmatpush.bf16.msra.mxu0 0
        %552 = vmatpush.bf16.msra.mxu0 0
        %553 = vmatpush.bf16.msra.mxu0 0
        %554 = vmatpush.bf16.msra.mxu0 %v448
        %555 = vmatpush.bf16.msra.mxu0 %v447
        %556 = vmatpush.bf16.msra.mxu0 %v446
        %557 = vmatpush.bf16.msra.mxu0 %v445
        %558 = vmatmul.bf16.gmra.mxu0 %v455
        %v559 = vpop.f32.mrf.mxu0
        %v560 = vadd.f32 %v267, %v559
        %v561 = vpop.f32.mrf.mxu0
        %v562 = vadd.f32 %v267, %v561
        %563 = vmatmul.bf16.gmra.mxu0 %v458
        %v564 = vpop.f32.mrf.mxu0
        %v565 = vadd.f32 %v267, %v564
        %v566 = vpop.f32.mrf.mxu0
        %v567 = vadd.f32 %v267, %v566
        %568 = vmatmul.bf16.gmra.mxu0 %v461
        %v569 = vpop.f32.mrf.mxu0
        %v570 = vadd.f32 %v267, %v569
        %v571 = vpop.f32.mrf.mxu0
        %v572 = vadd.f32 %v267, %v571
        %573 = vmatmul.bf16.gmra.mxu0 %v464
        %v574 = vpop.f32.mrf.mxu0
        %v575 = vadd.f32 %v267, %v574
        %v576 = vpop.f32.mrf.mxu0
        %v577 = vadd.f32 %v267, %v576
        %578 = vmatmul.bf16.gmra.mxu0 %v467
        %v579 = vpop.f32.mrf.mxu0
        %v580 = vadd.f32 %v267, %v579
        %v581 = vpop.f32.mrf.mxu0
        %v582 = vadd.f32 %v267, %v581
        %583 = vmatmul.bf16.gmra.mxu0 %v470
        %v584 = vpop.f32.mrf.mxu0
        %v585 = vadd.f32 %v267, %v584
        %v586 = vpop.f32.mrf.mxu0
        %v587 = vadd.f32 %v267, %v586
        %588 = vmatmul.bf16.gmra.mxu0 %v473
        %v589 = vpop.f32.mrf.mxu0
        %v590 = vadd.f32 %v267, %v589
        %v591 = vpop.f32.mrf.mxu0
        %v592 = vadd.f32 %v267, %v591
        %593 = vmatmul.bf16.gmra.mxu0 %v476
        %v594 = vpop.f32.mrf.mxu0
        %v595 = vadd.f32 %v267, %v594
        %v596 = vpop.f32.mrf.mxu0
        %v597 = vadd.f32 %v267, %v596
        %598 = vmatmul.bf16.gmra.mxu0 %v479
        %v599 = vpop.f32.mrf.mxu0
        %v600 = vadd.f32 %v267, %v599
        %v601 = vpop.f32.mrf.mxu0
        %v602 = vadd.f32 %v267, %v601
        %603 = vmatmul.bf16.gmra.mxu0 %v482
        %v604 = vpop.f32.mrf.mxu0
        %v605 = vadd.f32 %v267, %v604
        %v606 = vpop.f32.mrf.mxu0
        %v607 = vadd.f32 %v267, %v606
        %608 = vmatmul.bf16.gmra.mxu0 %v485
        %v609 = vpop.f32.mrf.mxu0
        %v610 = vadd.f32 %v267, %v609
        %v611 = vpop.f32.mrf.mxu0
        %v612 = vadd.f32 %v267, %v611
        %613 = vmatmul.bf16.gmra.mxu0 %v488
        %v614 = vpop.f32.mrf.mxu0
        %v615 = vadd.f32 %v267, %v614
        %v616 = vpop.f32.mrf.mxu0
        %v617 = vadd.f32 %v267, %v616
        %618 = vmatmul.bf16.gmra.mxu0 %v491
        %v619 = vpop.f32.mrf.mxu0
        %v620 = vadd.f32 %v267, %v619
        %v621 = vpop.f32.mrf.mxu0
        %v622 = vadd.f32 %v267, %v621
        %623 = vmatmul.bf16.gmra.mxu0 %v494
        %v624 = vpop.f32.mrf.mxu0
        %v625 = vadd.f32 %v267, %v624
        %v626 = vpop.f32.mrf.mxu0
        %v627 = vadd.f32 %v267, %v626
        %628 = vmatmul.bf16.gmra.mxu0 %v497
        %v629 = vpop.f32.mrf.mxu0
        %v630 = vadd.f32 %v267, %v629
        %v631 = vpop.f32.mrf.mxu0
        %v632 = vadd.f32 %v267, %v631
        %633 = vmatmul.bf16.gmra.mxu0 %v500
        %v634 = vpop.f32.mrf.mxu0
        %v635 = vadd.f32 %v267, %v634
        %v636 = vpop.f32.mrf.mxu0
        %v637 = vadd.f32 %v267, %v636
        %638 = vmatmul.bf16.gmra.mxu0 %v503
        %v639 = vpop.f32.mrf.mxu0
        %v640 = vadd.f32 %v267, %v639
        %v641 = vpop.f32.mrf.mxu0
        %v642 = vadd.f32 %v267, %v641
        %643 = vmatmul.bf16.gmra.mxu0 %v506
        %v644 = vpop.f32.mrf.mxu0
        %v645 = vadd.f32 %v267, %v644
        %v646 = vpop.f32.mrf.mxu0
        %v647 = vadd.f32 %v267, %v646
        %648 = vmatmul.bf16.gmra.mxu0 %v509
        %v649 = vpop.f32.mrf.mxu0
        %v650 = vadd.f32 %v267, %v649
        %v651 = vpop.f32.mrf.mxu0
        %v652 = vadd.f32 %v267, %v651
        %653 = vmatmul.bf16.gmra.mxu0 %v512
        %v654 = vpop.f32.mrf.mxu0
        %v655 = vadd.f32 %v267, %v654
        %v656 = vpop.f32.mrf.mxu0
        %v657 = vadd.f32 %v267, %v656
        %658 = vmatmul.bf16.gmra.mxu0 %v515
        %v659 = vpop.f32.mrf.mxu0
        %v660 = vadd.f32 %v267, %v659
        %v661 = vpop.f32.mrf.mxu0
        %v662 = vadd.f32 %v267, %v661
        %663 = vmatmul.bf16.gmra.mxu0 %v518
        %v664 = vpop.f32.mrf.mxu0
        %v665 = vadd.f32 %v267, %v664
        %v666 = vpop.f32.mrf.mxu0
        %v667 = vadd.f32 %v267, %v666
        %668 = vmatmul.bf16.gmra.mxu0 %v521
        %v669 = vpop.f32.mrf.mxu0
        %v670 = vadd.f32 %v267, %v669
        %v671 = vpop.f32.mrf.mxu0
        %v672 = vadd.f32 %v267, %v671
        %673 = vmatmul.bf16.gmra.mxu0 %v524
        %v674 = vpop.f32.mrf.mxu0
        %v675 = vadd.f32 %v267, %v674
        %v676 = vpop.f32.mrf.mxu0
        %v677 = vadd.f32 %v267, %v676
        %678 = vmatmul.bf16.gmra.mxu0 %v527
        %v679 = vpop.f32.mrf.mxu0
        %v680 = vadd.f32 %v267, %v679
        %v681 = vpop.f32.mrf.mxu0
        %v682 = vadd.f32 %v267, %v681
        %683 = vmatmul.bf16.gmra.mxu0 %v530
        %v684 = vpop.f32.mrf.mxu0
        %v685 = vadd.f32 %v267, %v684
        %v686 = vpop.f32.mrf.mxu0
        %v687 = vadd.f32 %v267, %v686
        %688 = vmatmul.bf16.gmra.mxu0 %v533
        %v689 = vpop.f32.mrf.mxu0
        %v690 = vadd.f32 %v267, %v689
        %v691 = vpop.f32.mrf.mxu0
        %v692 = vadd.f32 %v267, %v691
        %693 = vmatmul.bf16.gmra.mxu0 %v536
        %v694 = vpop.f32.mrf.mxu0
        %v695 = vadd.f32 %v267, %v694
        %v696 = vpop.f32.mrf.mxu0
        %v697 = vadd.f32 %v267, %v696
        %698 = vmatmul.bf16.gmra.mxu0 %v539
        %v699 = vpop.f32.mrf.mxu0
        %v700 = vadd.f32 %v267, %v699
        %v701 = vpop.f32.mrf.mxu0
        %v702 = vadd.f32 %v267, %v701
        %703 = vmatmul.bf16.gmra.mxu0 %v542
        %v704 = vpop.f32.mrf.mxu0
        %v705 = vadd.f32 %v267, %v704
        %v706 = vpop.f32.mrf.mxu0
        %v707 = vadd.f32 %v267, %v706
        %708 = vmatmul.bf16.gmra.mxu0 %v545
        %v709 = vpop.f32.mrf.mxu0
        %v710 = vadd.f32 %v267, %v709
        %v711 = vpop.f32.mrf.mxu0
        %v712 = vadd.f32 %v267, %v711
        %713 = vmatmul.bf16.gmra.mxu0 %v548
        %v714 = vpop.f32.mrf.mxu0
        %v715 = vadd.f32 %v267, %v714
        %v716 = vpop.f32.mrf.mxu0
        %v717 = vadd.f32 %v267, %v716
        %718 = vdwg.mxu0
        %v719 = vmax.f32 %v560, 0.0
        %v720 = vmax.f32 %v562, 0.0
        %v721 = vmax.f32 %v565, 0.0
        %v722 = vmax.f32 %v567, 0.0
        %v723 = vmax.f32 %v570, 0.0
        %v724 = vmax.f32 %v572, 0.0
        %v725 = vmax.f32 %v575, 0.0
        %v726 = vmax.f32 %v577, 0.0
        %v727 = vmax.f32 %v580, 0.0
        %v728 = vmax.f32 %v582, 0.0
        %v729 = vmax.f32 %v585, 0.0
        %v730 = vmax.f32 %v587, 0.0
        %v731 = vmax.f32 %v590, 0.0
        %v732 = vmax.f32 %v592, 0.0
        %v733 = vmax.f32 %v595, 0.0
        %v734 = vmax.f32 %v597, 0.0
        %v735 = vmax.f32 %v600, 0.0
        %v736 = vmax.f32 %v602, 0.0
        %v737 = vmax.f32 %v605, 0.0
        %v738 = vmax.f32 %v607, 0.0
        %v739 = vmax.f32 %v610, 0.0
        %v740 = vmax.f32 %v612, 0.0
        %v741 = vmax.f32 %v615, 0.0
        %v742 = vmax.f32 %v617, 0.0
        %v743 = vmax.f32 %v620, 0.0
        %v744 = vmax.f32 %v622, 0.0
        %v745 = vmax.f32 %v625, 0.0
        %v746 = vmax.f32 %v627, 0.0
        %v747 = vmax.f32 %v630, 0.0
        %v748 = vmax.f32 %v632, 0.0
        %v749 = vmax.f32 %v635, 0.0
        %v750 = vmax.f32 %v637, 0.0
        %v751 = vmax.f32 %v640, 0.0
        %v752 = vmax.f32 %v642, 0.0
        %v753 = vmax.f32 %v645, 0.0
        %v754 = vmax.f32 %v647, 0.0
        %v755 = vmax.f32 %v650, 0.0
        %v756 = vmax.f32 %v652, 0.0
        %v757 = vmax.f32 %v655, 0.0
        %v758 = vmax.f32 %v657, 0.0
        %v759 = vmax.f32 %v660, 0.0
        %v760 = vmax.f32 %v662, 0.0
        %v761 = vmax.f32 %v665, 0.0
        %v762 = vmax.f32 %v667, 0.0
        %v763 = vmax.f32 %v670, 0.0
        %v764 = vmax.f32 %v672, 0.0
        %v765 = vmax.f32 %v675, 0.0
        %v766 = vmax.f32 %v677, 0.0
        %v767 = vmax.f32 %v680, 0.0
        %v768 = vmax.f32 %v682, 0.0
        %v769 = vmax.f32 %v685, 0.0
        %v770 = vmax.f32 %v687, 0.0
        %v771 = vmax.f32 %v690, 0.0
        %v772 = vmax.f32 %v692, 0.0
        %v773 = vmax.f32 %v695, 0.0
        %v774 = vmax.f32 %v697, 0.0
        %v775 = vmax.f32 %v700, 0.0
        %v776 = vmax.f32 %v702, 0.0
        %v777 = vmax.f32 %v705, 0.0
        %v778 = vmax.f32 %v707, 0.0
        %v779 = vmax.f32 %v710, 0.0
        %v780 = vmax.f32 %v712, 0.0
        %v781 = vmax.f32 %v715, 0.0
        %v782 = vmax.f32 %v717, 0.0
        %v783 = vpack.c.bf16 %v719, %v719
        %v784 = vpack.c.bf16 %v720, %v720
        %v785 = vpack.c.bf16 %v721, %v721
        %v786 = vpack.c.bf16 %v722, %v722
        %v787 = vpack.c.bf16 %v723, %v723
        %v788 = vpack.c.bf16 %v724, %v724
        %v789 = vpack.c.bf16 %v725, %v725
        %v790 = vpack.c.bf16 %v726, %v726
        %v791 = vpack.c.bf16 %v727, %v727
        %v792 = vpack.c.bf16 %v728, %v728
        %v793 = vpack.c.bf16 %v729, %v729
        %v794 = vpack.c.bf16 %v730, %v730
        %v795 = vpack.c.bf16 %v731, %v731
        %v796 = vpack.c.bf16 %v732, %v732
        %v797 = vpack.c.bf16 %v733, %v733
        %v798 = vpack.c.bf16 %v734, %v734
        %v799 = vpack.c.bf16 %v735, %v735
        %v800 = vpack.c.bf16 %v736, %v736
        %v801 = vpack.c.bf16 %v737, %v737
        %v802 = vpack.c.bf16 %v738, %v738
        %v803 = vpack.c.bf16 %v739, %v739
        %v804 = vpack.c.bf16 %v740, %v740
        %v805 = vpack.c.bf16 %v741, %v741
        %v806 = vpack.c.bf16 %v742, %v742
        %v807 = vpack.c.bf16 %v743, %v743
        %v808 = vpack.c.bf16 %v744, %v744
        %v809 = vpack.c.bf16 %v745, %v745
        %v810 = vpack.c.bf16 %v746, %v746
        %v811 = vpack.c.bf16 %v747, %v747
        %v812 = vpack.c.bf16 %v748, %v748
        %v813 = vpack.c.bf16 %v749, %v749
        %v814 = vpack.c.bf16 %v750, %v750
        %v815 = vpack.c.bf16 %v751, %v751
        %v816 = vpack.c.bf16 %v752, %v752
        %v817 = vpack.c.bf16 %v753, %v753
        %v818 = vpack.c.bf16 %v754, %v754
        %v819 = vpack.c.bf16 %v755, %v755
        %v820 = vpack.c.bf16 %v756, %v756
        %v821 = vpack.c.bf16 %v757, %v757
        %v822 = vpack.c.bf16 %v758, %v758
        %v823 = vpack.c.bf16 %v759, %v759
        %v824 = vpack.c.bf16 %v760, %v760
        %v825 = vpack.c.bf16 %v761, %v761
        %v826 = vpack.c.bf16 %v762, %v762
        %v827 = vpack.c.bf16 %v763, %v763
        %v828 = vpack.c.bf16 %v764, %v764
        %v829 = vpack.c.bf16 %v765, %v765
        %v830 = vpack.c.bf16 %v766, %v766
        %v831 = vpack.c.bf16 %v767, %v767
        %v832 = vpack.c.bf16 %v768, %v768
        %v833 = vpack.c.bf16 %v769, %v769
        %v834 = vpack.c.bf16 %v770, %v770
        %v835 = vpack.c.bf16 %v771, %v771
        %v836 = vpack.c.bf16 %v772, %v772
        %v837 = vpack.c.bf16 %v773, %v773
        %v838 = vpack.c.bf16 %v774, %v774
        %v839 = vpack.c.bf16 %v775, %v775
        %v840 = vpack.c.bf16 %v776, %v776
        %v841 = vpack.c.bf16 %v777, %v777
        %v842 = vpack.c.bf16 %v778, %v778
        %v843 = vpack.c.bf16 %v779, %v779
        %v844 = vpack.c.bf16 %v780, %v780
        %v845 = vpack.c.bf16 %v781, %v781
        %v846 = vpack.c.bf16 %v782, %v782
        %847 = vst [vmem:[%s172] sm:$0xf] %v783
        %848 = vst [vmem:[%s172 + $0x4] sm:$0xf] %v784
        %849 = vst [vmem:[%s172 + $0x8] sm:$0xf] %v785
        %850 = vst [vmem:[%s172 + $0xc] sm:$0xf] %v786
        %851 = vst [vmem:[%s172 + $0x10] sm:$0xf] %v787
        %852 = vst [vmem:[%s172 + $0x14] sm:$0xf] %v788
        %853 = vst [vmem:[%s172 + $0x18] sm:$0xf] %v789
        %854 = vst [vmem:[%s172 + $0x1c] sm:$0xf] %v790
        %855 = vst [vmem:[%s172 + $0x20] sm:$0xf] %v791
        %856 = vst [vmem:[%s172 + $0x24] sm:$0xf] %v792
        %857 = vst [vmem:[%s172 + $0x28] sm:$0xf] %v793
        %858 = vst [vmem:[%s172 + $0x2c] sm:$0xf] %v794
        %859 = vst [vmem:[%s172 + $0x30] sm:$0xf] %v795
        %860 = vst [vmem:[%s172 + $0x34] sm:$0xf] %v796
        %861 = vst [vmem:[%s172 + $0x38] sm:$0xf] %v797
        %862 = vst [vmem:[%s172 + $0x3c] sm:$0xf] %v798
        %863 = vst [vmem:[%s172 + $0x40] sm:$0xf] %v799
        %864 = vst [vmem:[%s172 + $0x44] sm:$0xf] %v800
        %865 = vst [vmem:[%s172 + $0x48] sm:$0xf] %v801
        %866 = vst [vmem:[%s172 + $0x4c] sm:$0xf] %v802
        %867 = vst [vmem:[%s172 + $0x50] sm:$0xf] %v803
        %868 = vst [vmem:[%s172 + $0x54] sm:$0xf] %v804
        %869 = vst [vmem:[%s172 + $0x58] sm:$0xf] %v805
        %870 = vst [vmem:[%s172 + $0x5c] sm:$0xf] %v806
        %871 = vst [vmem:[%s172 + $0x60] sm:$0xf] %v807
        %872 = vst [vmem:[%s172 + $0x64] sm:$0xf] %v808
        %873 = vst [vmem:[%s172 + $0x68] sm:$0xf] %v809
        %874 = vst [vmem:[%s172 + $0x6c] sm:$0xf] %v810
        %875 = vst [vmem:[%s172 + $0x70] sm:$0xf] %v811
        %876 = vst [vmem:[%s172 + $0x74] sm:$0xf] %v812
        %877 = vst [vmem:[%s172 + $0x78] sm:$0xf] %v813
        %878 = vst [vmem:[%s172 + $0x7c] sm:$0xf] %v814
        %879 = vst [vmem:[%s172 + $0x80] sm:$0xf] %v815
        %880 = vst [vmem:[%s172 + $0x84] sm:$0xf] %v816
        %881 = vst [vmem:[%s172 + $0x88] sm:$0xf] %v817
        %882 = vst [vmem:[%s172 + $0x8c] sm:$0xf] %v818
        %883 = vst [vmem:[%s172 + $0x90] sm:$0xf] %v819
        %884 = vst [vmem:[%s172 + $0x94] sm:$0xf] %v820
        %885 = vst [vmem:[%s172 + $0x98] sm:$0xf] %v821
        %886 = vst [vmem:[%s172 + $0x9c] sm:$0xf] %v822
        %887 = vst [vmem:[%s172 + $0xa0] sm:$0xf] %v823
        %888 = vst [vmem:[%s172 + $0xa4] sm:$0xf] %v824
        %889 = vst [vmem:[%s172 + $0xa8] sm:$0xf] %v825
        %890 = vst [vmem:[%s172 + $0xac] sm:$0xf] %v826
        %891 = vst [vmem:[%s172 + $0xb0] sm:$0xf] %v827
        %892 = vst [vmem:[%s172 + $0xb4] sm:$0xf] %v828
        %893 = vst [vmem:[%s172 + $0xb8] sm:$0xf] %v829
        %894 = vst [vmem:[%s172 + $0xbc] sm:$0xf] %v830
        %895 = vst [vmem:[%s172 + $0xc0] sm:$0xf] %v831
        %896 = vst [vmem:[%s172 + $0xc4] sm:$0xf] %v832
        %897 = vst [vmem:[%s172 + $0xc8] sm:$0xf] %v833
        %898 = vst [vmem:[%s172 + $0xcc] sm:$0xf] %v834
        %899 = vst [vmem:[%s172 + $0xd0] sm:$0xf] %v835
        %900 = vst [vmem:[%s172 + $0xd4] sm:$0xf] %v836
        %901 = vst [vmem:[%s172 + $0xd8] sm:$0xf] %v837
        %902 = vst [vmem:[%s172 + $0xdc] sm:$0xf] %v838
        %903 = vst [vmem:[%s172 + $0xe0] sm:$0xf] %v839
        %904 = vst [vmem:[%s172 + $0xe4] sm:$0xf] %v840
        %905 = vst [vmem:[%s172 + $0xe8] sm:$0xf] %v841
        %906 = vst [vmem:[%s172 + $0xec] sm:$0xf] %v842
        %907 = vst [vmem:[%s172 + $0xf0] sm:$0xf] %v843
        %908 = vst [vmem:[%s172 + $0xf4] sm:$0xf] %v844
        %909 = vst [vmem:[%s172 + $0xf8] sm:$0xf] %v845
        %910 = vst [vmem:[%s172 + $0xfc] sm:$0xf] %v846
        %s911 = sand.u32 %s90, 1
        %s912 = sand.u32 %s90, 1
        %s913 = smul.addr %s912, 256
        %s914 = scalar_lea.vmem [#allocation2], %s913
        // Predicated region
        $region33: #{embedding_forward.4} parent=31 // pred_check
          %p915 = pneg %p100
        $region34: #{embedding_forward.4} parent=31 // pred_check_branch
          %917 = sbr.rel (%p915) target = $region36
        $region35: #{embedding_forward.4} parent=31 // pred_region
          %s918 = smul.u32 64, %s14
          %s919 = ssub.s32 100, %s918
          %p920 = scmp.lt.s32.totalorder %s919, 64
          %s921 = scalar_select %p920, %s919, 64
          %s922 = smul.u32 4, %s921
          %p923 = scmp.ne.s32.totalorder 0, %s922
          %s924 = smul.addr %s918, 4
          %s925 = scalar_lea.vmem %s3, %s924
          // Predicated region
          $region37: #{embedding_forward.4} parent=35 // pred_check
            %p926 = pneg %p923
          $region38: #{embedding_forward.4} parent=35 // pred_check_branch
            %928 = sbr.rel (%p926) target = $region40
          $region39: #{embedding_forward.4} parent=35 // pred_region
            // Predicated region
            $region41: #{embedding_forward.4} parent=39 // pred_check
              _
            $region42: #{embedding_forward.4} parent=39 // pred_check_branch
              %930 = sbr.rel target = $region44
            $region43: #{embedding_forward.4} parent=39 // pred_region
              // Predicated region
              $region63: #{embedding_forward.4} parent=43 // pred_check
                _
              $region64: #{embedding_forward.4} parent=43 // pred_check_branch
                %1042 = sbr.rel (0) target = $region66
              $region65: #{embedding_forward.4} parent=43 // pred_region
                %s1044 = ssub.s32 16, 1
                %s1045 = sshrl.u32 %s921, 5
                // While loop
                $region67: #{embedding_forward.4} parent=65 // loop_pre_header
                  _
                $region68: #{embedding_forward.4} parent=65 // loop_header
                  %s1047 = sphi 0, %s1049
                  %p1048 = scmp.ge.s32.totalorder %s1047, %s1045
                  %s1052 = sphi 0, %s1121
                  %s1053 = sphi %s914, %s1124
                  %s1054 = sphi %s925, %s1125
                $region69: #{embedding_forward.4} parent=65 // loop_header_branch
                  %1051 = sbr.rel (%p1048) target = $region73
                $region70: #{embedding_forward.4} parent=65 // loop_body
                  %v1055 = vld [vmem:[%s1053] sm:%s1044]
                  %1056 = vst [vmem:[%s1054] sm:%s1044] %v1055
                  %v1057 = vld [vmem:[%s1053 + $0x4] sm:%s1044]
                  %1058 = vst [vmem:[%s1054 + $0x4] sm:%s1044] %v1057
                  %v1059 = vld [vmem:[%s1053 + $0x8] sm:%s1044]
                  %1060 = vst [vmem:[%s1054 + $0x8] sm:%s1044] %v1059
                  %v1061 = vld [vmem:[%s1053 + $0xc] sm:%s1044]
                  %1062 = vst [vmem:[%s1054 + $0xc] sm:%s1044] %v1061
                  %v1063 = vld [vmem:[%s1053 + $0x10] sm:%s1044]
                  %1064 = vst [vmem:[%s1054 + $0x10] sm:%s1044] %v1063
                  %v1065 = vld [vmem:[%s1053 + $0x14] sm:%s1044]
                  %1066 = vst [vmem:[%s1054 + $0x14] sm:%s1044] %v1065
                  %v1067 = vld [vmem:[%s1053 + $0x18] sm:%s1044]
                  %1068 = vst [vmem:[%s1054 + $0x18] sm:%s1044] %v1067
                  %v1069 = vld [vmem:[%s1053 + $0x1c] sm:%s1044]
                  %1070 = vst [vmem:[%s1054 + $0x1c] sm:%s1044] %v1069
                  %v1071 = vld [vmem:[%s1053 + $0x20] sm:%s1044]
                  %1072 = vst [vmem:[%s1054 + $0x20] sm:%s1044] %v1071
                  %v1073 = vld [vmem:[%s1053 + $0x24] sm:%s1044]
                  %1074 = vst [vmem:[%s1054 + $0x24] sm:%s1044] %v1073
                  %v1075 = vld [vmem:[%s1053 + $0x28] sm:%s1044]
                  %1076 = vst [vmem:[%s1054 + $0x28] sm:%s1044] %v1075
                  %v1077 = vld [vmem:[%s1053 + $0x2c] sm:%s1044]
                  %1078 = vst [vmem:[%s1054 + $0x2c] sm:%s1044] %v1077
                  %v1079 = vld [vmem:[%s1053 + $0x30] sm:%s1044]
                  %1080 = vst [vmem:[%s1054 + $0x30] sm:%s1044] %v1079
                  %v1081 = vld [vmem:[%s1053 + $0x34] sm:%s1044]
                  %1082 = vst [vmem:[%s1054 + $0x34] sm:%s1044] %v1081
                  %v1083 = vld [vmem:[%s1053 + $0x38] sm:%s1044]
                  %1084 = vst [vmem:[%s1054 + $0x38] sm:%s1044] %v1083
                  %v1085 = vld [vmem:[%s1053 + $0x3c] sm:%s1044]
                  %1086 = vst [vmem:[%s1054 + $0x3c] sm:%s1044] %v1085
                  %v1087 = vld [vmem:[%s1053 + $0x40] sm:%s1044]
                  %1088 = vst [vmem:[%s1054 + $0x40] sm:%s1044] %v1087
                  %v1089 = vld [vmem:[%s1053 + $0x44] sm:%s1044]
                  %1090 = vst [vmem:[%s1054 + $0x44] sm:%s1044] %v1089
                  %v1091 = vld [vmem:[%s1053 + $0x48] sm:%s1044]
                  %1092 = vst [vmem:[%s1054 + $0x48] sm:%s1044] %v1091
                  %v1093 = vld [vmem:[%s1053 + $0x4c] sm:%s1044]
                  %1094 = vst [vmem:[%s1054 + $0x4c] sm:%s1044] %v1093
                  %v1095 = vld [vmem:[%s1053 + $0x50] sm:%s1044]
                  %1096 = vst [vmem:[%s1054 + $0x50] sm:%s1044] %v1095
                  %v1097 = vld [vmem:[%s1053 + $0x54] sm:%s1044]
                  %1098 = vst [vmem:[%s1054 + $0x54] sm:%s1044] %v1097
                  %v1099 = vld [vmem:[%s1053 + $0x58] sm:%s1044]
                  %1100 = vst [vmem:[%s1054 + $0x58] sm:%s1044] %v1099
                  %v1101 = vld [vmem:[%s1053 + $0x5c] sm:%s1044]
                  %1102 = vst [vmem:[%s1054 + $0x5c] sm:%s1044] %v1101
                  %v1103 = vld [vmem:[%s1053 + $0x60] sm:%s1044]
                  %1104 = vst [vmem:[%s1054 + $0x60] sm:%s1044] %v1103
                  %v1105 = vld [vmem:[%s1053 + $0x64] sm:%s1044]
                  %1106 = vst [vmem:[%s1054 + $0x64] sm:%s1044] %v1105
                  %v1107 = vld [vmem:[%s1053 + $0x68] sm:%s1044]
                  %1108 = vst [vmem:[%s1054 + $0x68] sm:%s1044] %v1107
                  %v1109 = vld [vmem:[%s1053 + $0x6c] sm:%s1044]
                  %1110 = vst [vmem:[%s1054 + $0x6c] sm:%s1044] %v1109
                  %v1111 = vld [vmem:[%s1053 + $0x70] sm:%s1044]
                  %1112 = vst [vmem:[%s1054 + $0x70] sm:%s1044] %v1111
                  %v1113 = vld [vmem:[%s1053 + $0x74] sm:%s1044]
                  %1114 = vst [vmem:[%s1054 + $0x74] sm:%s1044] %v1113
                  %v1115 = vld [vmem:[%s1053 + $0x78] sm:%s1044]
                  %1116 = vst [vmem:[%s1054 + $0x78] sm:%s1044] %v1115
                  %v1117 = vld [vmem:[%s1053 + $0x7c] sm:%s1044]
                  %1118 = vst [vmem:[%s1054 + $0x7c] sm:%s1044] %v1117
                  %s1119 = sadd.s32 1, %s1052
                  %p1120 = scmp.ge.s32.totalorder %s1119, %s1045
                  %s1121 = scalar_select %p1120, 0, %s1119
                  %s1122 = smul.u32 %s1121, 128
                  %s1123 = smul.u32 %s1121, 128
                  %s1124 = scalar_lea.vmem %s914, %s1122 [#allocation2]
                  %s1125 = scalar_lea.vmem %s925, %s1123
                $region71: #{embedding_forward.4} parent=65 // loop_footer
                  %s1049 = sadd.s32 %s1047, 1
                $region72: #{embedding_forward.4} parent=65 // loop_footer_branch
                  %1046 = sbr.rel target = $region68
                $region73: #{embedding_forward.4} parent=65 // loop_exit
                  _
                %s1126 = sshrl.u32 %s921, 5
                %s1127 = sand.u32 %s921, 31
                %s1128 = smul.u32 %s1126, 32
                %s1129 = smul.u32 4, %s1128
                %s1130 = scalar_lea.vmem %s914, %s1129 [#allocation2]
                %s1131 = smul.u32 4, %s1128
                %s1132 = scalar_lea.vmem %s925, %s1131
                // While loop
                $region74: #{embedding_forward.4} parent=65 // loop_pre_header
                  _
                $region75: #{embedding_forward.4} parent=65 // loop_header
                  %s1134 = sphi 0, %s1136
                  %p1135 = scmp.ge.s32.totalorder %s1134, %s1127
                  %s1139 = sphi 0, %s1146
                  %s1140 = sphi %s1130, %s1149
                  %s1141 = sphi %s1132, %s1150
                $region76: #{embedding_forward.4} parent=65 // loop_header_branch
                  %1138 = sbr.rel (%p1135) target = $region80
                $region77: #{embedding_forward.4} parent=65 // loop_body
                  %v1142 = vld [vmem:[%s1140] sm:%s1044]
                  %1143 = vst [vmem:[%s1141] sm:%s1044] %v1142
                  %s1144 = sadd.s32 1, %s1139
                  %p1145 = scmp.ge.s32.totalorder %s1144, %s1127
                  %s1146 = scalar_select %p1145, 0, %s1144
                  %s1147 = smul.u32 %s1146, 4
                  %s1148 = smul.u32 %s1146, 4
                  %s1149 = scalar_lea.vmem %s1130, %s1147 [#allocation2]
                  %s1150 = scalar_lea.vmem %s1132, %s1148
                $region78: #{embedding_forward.4} parent=65 // loop_footer
                  %s1136 = sadd.s32 %s1134, 1
                $region79: #{embedding_forward.4} parent=65 // loop_footer_branch
                  %1133 = sbr.rel target = $region75
                $region80: #{embedding_forward.4} parent=65 // loop_exit
                  _
              $region66: #{embedding_forward.4} parent=43 // pred_fallthru
                _
            $region44: #{embedding_forward.4} parent=39 // pred_fallthru
              _
            // Predicated region
            $region45: #{embedding_forward.4} parent=39 // pred_check
              _
            $region46: #{embedding_forward.4} parent=39 // pred_check_branch
              %932 = sbr.rel (0) target = $region48
            $region47: #{embedding_forward.4} parent=39 // pred_region
              %s934 = ssub.s32 16, 1
              %s935 = sshrl.u32 %s921, 5
              // While loop
              $region49: #{embedding_forward.4} parent=47 // loop_pre_header
                _
              $region50: #{embedding_forward.4} parent=47 // loop_header
                %s937 = sphi 0, %s939
                %p938 = scmp.ge.s32.totalorder %s937, %s935
                %s942 = sphi 0, %s1011
                %s943 = sphi %s914, %s1014
                %s944 = sphi %s925, %s1015
              $region51: #{embedding_forward.4} parent=47 // loop_header_branch
                %941 = sbr.rel (%p938) target = $region55
              $region52: #{embedding_forward.4} parent=47 // loop_body
                %v945 = vld [vmem:[%s943] sm:%s934]
                %946 = vst [vmem:[%s944] sm:%s934] %v945
                %v947 = vld [vmem:[%s943 + $0x4] sm:%s934]
                %948 = vst [vmem:[%s944 + $0x4] sm:%s934] %v947
                %v949 = vld [vmem:[%s943 + $0x8] sm:%s934]
                %950 = vst [vmem:[%s944 + $0x8] sm:%s934] %v949
                %v951 = vld [vmem:[%s943 + $0xc] sm:%s934]
                %952 = vst [vmem:[%s944 + $0xc] sm:%s934] %v951
                %v953 = vld [vmem:[%s943 + $0x10] sm:%s934]
                %954 = vst [vmem:[%s944 + $0x10] sm:%s934] %v953
                %v955 = vld [vmem:[%s943 + $0x14] sm:%s934]
                %956 = vst [vmem:[%s944 + $0x14] sm:%s934] %v955
                %v957 = vld [vmem:[%s943 + $0x18] sm:%s934]
                %958 = vst [vmem:[%s944 + $0x18] sm:%s934] %v957
                %v959 = vld [vmem:[%s943 + $0x1c] sm:%s934]
                %960 = vst [vmem:[%s944 + $0x1c] sm:%s934] %v959
                %v961 = vld [vmem:[%s943 + $0x20] sm:%s934]
                %962 = vst [vmem:[%s944 + $0x20] sm:%s934] %v961
                %v963 = vld [vmem:[%s943 + $0x24] sm:%s934]
                %964 = vst [vmem:[%s944 + $0x24] sm:%s934] %v963
                %v965 = vld [vmem:[%s943 + $0x28] sm:%s934]
                %966 = vst [vmem:[%s944 + $0x28] sm:%s934] %v965
                %v967 = vld [vmem:[%s943 + $0x2c] sm:%s934]
                %968 = vst [vmem:[%s944 + $0x2c] sm:%s934] %v967
                %v969 = vld [vmem:[%s943 + $0x30] sm:%s934]
                %970 = vst [vmem:[%s944 + $0x30] sm:%s934] %v969
                %v971 = vld [vmem:[%s943 + $0x34] sm:%s934]
                %972 = vst [vmem:[%s944 + $0x34] sm:%s934] %v971
                %v973 = vld [vmem:[%s943 + $0x38] sm:%s934]
                %974 = vst [vmem:[%s944 + $0x38] sm:%s934] %v973
                %v975 = vld [vmem:[%s943 + $0x3c] sm:%s934]
                %976 = vst [vmem:[%s944 + $0x3c] sm:%s934] %v975
                %v977 = vld [vmem:[%s943 + $0x40] sm:%s934]
                %978 = vst [vmem:[%s944 + $0x40] sm:%s934] %v977
                %v979 = vld [vmem:[%s943 + $0x44] sm:%s934]
                %980 = vst [vmem:[%s944 + $0x44] sm:%s934] %v979
                %v981 = vld [vmem:[%s943 + $0x48] sm:%s934]
                %982 = vst [vmem:[%s944 + $0x48] sm:%s934] %v981
                %v983 = vld [vmem:[%s943 + $0x4c] sm:%s934]
                %984 = vst [vmem:[%s944 + $0x4c] sm:%s934] %v983
                %v985 = vld [vmem:[%s943 + $0x50] sm:%s934]
                %986 = vst [vmem:[%s944 + $0x50] sm:%s934] %v985
                %v987 = vld [vmem:[%s943 + $0x54] sm:%s934]
                %988 = vst [vmem:[%s944 + $0x54] sm:%s934] %v987
                %v989 = vld [vmem:[%s943 + $0x58] sm:%s934]
                %990 = vst [vmem:[%s944 + $0x58] sm:%s934] %v989
                %v991 = vld [vmem:[%s943 + $0x5c] sm:%s934]
                %992 = vst [vmem:[%s944 + $0x5c] sm:%s934] %v991
                %v993 = vld [vmem:[%s943 + $0x60] sm:%s934]
                %994 = vst [vmem:[%s944 + $0x60] sm:%s934] %v993
                %v995 = vld [vmem:[%s943 + $0x64] sm:%s934]
                %996 = vst [vmem:[%s944 + $0x64] sm:%s934] %v995
                %v997 = vld [vmem:[%s943 + $0x68] sm:%s934]
                %998 = vst [vmem:[%s944 + $0x68] sm:%s934] %v997
                %v999 = vld [vmem:[%s943 + $0x6c] sm:%s934]
                %1000 = vst [vmem:[%s944 + $0x6c] sm:%s934] %v999
                %v1001 = vld [vmem:[%s943 + $0x70] sm:%s934]
                %1002 = vst [vmem:[%s944 + $0x70] sm:%s934] %v1001
                %v1003 = vld [vmem:[%s943 + $0x74] sm:%s934]
                %1004 = vst [vmem:[%s944 + $0x74] sm:%s934] %v1003
                %v1005 = vld [vmem:[%s943 + $0x78] sm:%s934]
                %1006 = vst [vmem:[%s944 + $0x78] sm:%s934] %v1005
                %v1007 = vld [vmem:[%s943 + $0x7c] sm:%s934]
                %1008 = vst [vmem:[%s944 + $0x7c] sm:%s934] %v1007
                %s1009 = sadd.s32 1, %s942
                %p1010 = scmp.ge.s32.totalorder %s1009, %s935
                %s1011 = scalar_select %p1010, 0, %s1009
                %s1012 = smul.u32 %s1011, 128
                %s1013 = smul.u32 %s1011, 128
                %s1014 = scalar_lea.vmem %s914, %s1012 [#allocation2]
                %s1015 = scalar_lea.vmem %s925, %s1013
              $region53: #{embedding_forward.4} parent=47 // loop_footer
                %s939 = sadd.s32 %s937, 1
              $region54: #{embedding_forward.4} parent=47 // loop_footer_branch
                %936 = sbr.rel target = $region50
              $region55: #{embedding_forward.4} parent=47 // loop_exit
                _
              %s1016 = sshrl.u32 %s921, 5
              %s1017 = sand.u32 %s921, 31
              %s1018 = smul.u32 %s1016, 32
              %s1019 = smul.u32 4, %s1018
              %s1020 = scalar_lea.vmem %s914, %s1019 [#allocation2]
              %s1021 = smul.u32 4, %s1018
              %s1022 = scalar_lea.vmem %s925, %s1021
              // While loop
              $region56: #{embedding_forward.4} parent=47 // loop_pre_header
                _
              $region57: #{embedding_forward.4} parent=47 // loop_header
                %s1024 = sphi 0, %s1026
                %p1025 = scmp.ge.s32.totalorder %s1024, %s1017
                %s1029 = sphi 0, %s1036
                %s1030 = sphi %s1020, %s1039
                %s1031 = sphi %s1022, %s1040
              $region58: #{embedding_forward.4} parent=47 // loop_header_branch
                %1028 = sbr.rel (%p1025) target = $region62
              $region59: #{embedding_forward.4} parent=47 // loop_body
                %v1032 = vld [vmem:[%s1030] sm:%s934]
                %1033 = vst [vmem:[%s1031] sm:%s934] %v1032
                %s1034 = sadd.s32 1, %s1029
                %p1035 = scmp.ge.s32.totalorder %s1034, %s1017
                %s1036 = scalar_select %p1035, 0, %s1034
                %s1037 = smul.u32 %s1036, 4
                %s1038 = smul.u32 %s1036, 4
                %s1039 = scalar_lea.vmem %s1020, %s1037 [#allocation2]
                %s1040 = scalar_lea.vmem %s1022, %s1038
              $region60: #{embedding_forward.4} parent=47 // loop_footer
                %s1026 = sadd.s32 %s1024, 1
              $region61: #{embedding_forward.4} parent=47 // loop_footer_branch
                %1023 = sbr.rel target = $region57
              $region62: #{embedding_forward.4} parent=47 // loop_exit
                _
            $region48: #{embedding_forward.4} parent=39 // pred_fallthru
              _
          $region40: #{embedding_forward.4} parent=35 // pred_fallthru
            _
          %1151 = vnop
        $region36: #{embedding_forward.4} parent=31 // pred_fallthru
          _
      $region32: #{embedding_forward.4} parent=5 // pred_fallthru
        _
      %p1152 = scmp.le.s32.totalorder 2, %s9
      // Predicated region
      $region81: #{embedding_forward.4} parent=5 // pred_check
        %p1153 = pneg %p1152
      $region82: #{embedding_forward.4} parent=5 // pred_check_branch
        %1155 = sbr.rel (%p1153) target = $region84
      $region83: #{embedding_forward.4} parent=5 // pred_region
        %s1156 = ssub.s32 %s9, 2
        // Predicated region
        $region85: #{embedding_forward.4} parent=83 // pred_check
          %p1157 = pneg %p106
        $region86: #{embedding_forward.4} parent=83 // pred_check_branch
          %1159 = sbr.rel (%p1157) target = $region88
        $region87: #{embedding_forward.4} parent=83 // pred_region
          %s1160 = sand.u32 %s91, 1
          %s1161 = sand.u32 %s91, 1
          %s1162 = smul.addr %s1161, 256
          %s1163 = scalar_lea.vmem [#allocation2], %s1162
        $region88: #{embedding_forward.4} parent=83 // pred_fallthru
          _
      $region84: #{embedding_forward.4} parent=5 // pred_fallthru
        _
    $region6: #{embedding_forward.4} parent=1 // loop_footer
      %s13 = sadd.s32 1, %s9
    $region7: #{embedding_forward.4} parent=1 // loop_footer_branch
      %8 = sbr.rel target = $region3
    $region8: #{embedding_forward.4} parent=1 // loop_exit
      _

// kernel: embedding_forward.5
$region0: #{embedding_forward.5}
  #allocation0 [shape = 'u32[]', space=smem, size = 0x4, offset = 0x4, fixed_abs, tag = 'smem constant byte address 0x4 - core index']
  #allocation1 [shape = 'u32[72,128]{1,0:T(1,128)}', space=vmem, size = 0x9000, scoped, tag = 'internal scratch']
  %s0 = inlined_call_operand.vmem [shape: bf16[162,2048], index: 0, kind: input, shape index: {}]
  %s1 = inlined_call_operand.vmem [shape: bf16[2048,128], index: 1, kind: input, shape index: {}]
  %s2 = inlined_call_operand.vmem [shape: f32[1,128], index: 2, kind: input, shape index: {}]
  %s3 = inlined_call_operand.vmem [shape: bf16[162,128], index: 3, kind: output, shape index: {}]
  %s4 = sld [smem:[#allocation0]]
  $region22: #{embedding_forward.5} parent=0
    _
  %s6 = ssub.s32 1, %s4
  %s7 = scalar_select 0, %s6, %s4
  // Predicated region
  $region2: #{embedding_forward.5} parent=0 // pred_check
    _
  $region3: #{embedding_forward.5} parent=0 // pred_check_branch
    %9 = sbr.rel (0) target = $region5
  $region4: #{embedding_forward.5} parent=0 // pred_region
    _
  $region5: #{embedding_forward.5} parent=0 // pred_fallthru
    _
  // Predicated region
  $region6: #{embedding_forward.5} parent=0 // pred_check
    _
  $region7: #{embedding_forward.5} parent=0 // pred_check_branch
    %11 = sbr.rel (0) target = $region9
  $region8: #{embedding_forward.5} parent=0 // pred_region
    _
  $region9: #{embedding_forward.5} parent=0 // pred_fallthru
    _
  // Predicated region
  $region10: #{embedding_forward.5} parent=0 // pred_check
    _
  $region11: #{embedding_forward.5} parent=0 // pred_check_branch
    %13 = sbr.rel (0) target = $region13
  $region12: #{embedding_forward.5} parent=0 // pred_region
    _
  $region13: #{embedding_forward.5} parent=0 // pred_fallthru
    _
  %v14 = vld [vmem:[%s0] sm:$0xff]
  %v15 = vld [vmem:[%s0 + $0x8] sm:$0xff]
  %v16 = vld [vmem:[%s0 + $0x10] sm:$0xff]
  %v17 = vld [vmem:[%s0 + $0x18] sm:$0xff]
  %v18 = vld [vmem:[%s0 + $0x20] sm:$0xff]
  %v19 = vld [vmem:[%s0 + $0x28] sm:$0xff]
  %v20 = vld [vmem:[%s0 + $0x30] sm:$0xff]
  %v21 = vld [vmem:[%s0 + $0x38] sm:$0xff]
  %v22 = vld [vmem:[%s0 + $0x40] sm:$0xff]
  %v23 = vld [vmem:[%s0 + $0x48] sm:$0xff]
  %v24 = vld [vmem:[%s0 + $0x50] sm:$0xff]
  %v25 = vld [vmem:[%s0 + $0x58] sm:$0xff]
  %v26 = vld [vmem:[%s0 + $0x60] sm:$0xff]
  %v27 = vld [vmem:[%s0 + $0x68] sm:$0xff]
  %v28 = vld [vmem:[%s0 + $0x70] sm:$0xff]
  %v29 = vld [vmem:[%s0 + $0x78] sm:$0xff]
  %v30 = vld [vmem:[%s0 + $0x80] sm:$0xff]
  %v31 = vld [vmem:[%s0 + $0x88] sm:$0xff]
  %v32 = vld [vmem:[%s0 + $0x90] sm:$0xff]
  %v33 = vld [vmem:[%s0 + $0x98] sm:$0xff]
  %v34 = vld [vmem:[%s0 + $0xa0] sm:$0xff]
  %v35 = vld [vmem:[%s0 + $0xa8] sm:$0xff]
  %v36 = vld [vmem:[%s0 + $0xb0] sm:$0xff]
  %v37 = vld [vmem:[%s0 + $0xb8] sm:$0xff]
  %v38 = vld [vmem:[%s0 + $0xc0] sm:$0xff]
  %v39 = vld [vmem:[%s0 + $0xc8] sm:$0xff]
  %v40 = vld [vmem:[%s0 + $0xd0] sm:$0xff]
  %v41 = vld [vmem:[%s0 + $0xd8] sm:$0xff]
  %v42 = vld [vmem:[%s0 + $0xe0] sm:$0xff]
  %v43 = vld [vmem:[%s0 + $0xe8] sm:$0xff]
  %v44 = vld [vmem:[%s0 + $0xf0] sm:$0xff]
  %v45 = vld [vmem:[%s0 + $0xf8] sm:$0xff]
  %v46 = vld [vmem:[%s0 + $0x100] sm:$0xff]
  %v47 = vld [vmem:[%s0 + $0x108] sm:$0xff]
  %v48 = vld [vmem:[%s0 + $0x110] sm:$0xff]
  %v49 = vld [vmem:[%s0 + $0x118] sm:$0xff]
  %v50 = vld [vmem:[%s0 + $0x120] sm:$0xff]
  %v51 = vld [vmem:[%s0 + $0x128] sm:$0xff]
  %v52 = vld [vmem:[%s0 + $0x130] sm:$0xff]
  %v53 = vld [vmem:[%s0 + $0x138] sm:$0xff]
  %v54 = vld [vmem:[%s0 + $0x140] sm:$0xff]
  %v55 = vld [vmem:[%s0 + $0x148] sm:$0xff]
  %v56 = vld [vmem:[%s0 + $0x150] sm:$0xff]
  %v57 = vld [vmem:[%s0 + $0x158] sm:$0xff]
  %v58 = vld [vmem:[%s0 + $0x160] sm:$0xff]
  %v59 = vld [vmem:[%s0 + $0x168] sm:$0xff]
  %v60 = vld [vmem:[%s0 + $0x170] sm:$0xff]
  %v61 = vld [vmem:[%s0 + $0x178] sm:$0xff]
  %v62 = vld [vmem:[%s0 + $0x180] sm:$0xff]
  %v63 = vld [vmem:[%s0 + $0x188] sm:$0xff]
  %v64 = vld [vmem:[%s0 + $0x190] sm:$0xff]
  %v65 = vld [vmem:[%s0 + $0x198] sm:$0xff]
  %v66 = vld [vmem:[%s0 + $0x1a0] sm:$0xff]
  %v67 = vld [vmem:[%s0 + $0x1a8] sm:$0xff]
  %v68 = vld [vmem:[%s0 + $0x1b0] sm:$0xff]
  %v69 = vld [vmem:[%s0 + $0x1b8] sm:$0xff]
  %v70 = vld [vmem:[%s0 + $0x1c0] sm:$0xff]
  %v71 = vld [vmem:[%s0 + $0x1c8] sm:$0xff]
  %v72 = vld [vmem:[%s0 + $0x1d0] sm:$0xff]
  %v73 = vld [vmem:[%s0 + $0x1d8] sm:$0xff]
  %v74 = vld [vmem:[%s0 + $0x1e0] sm:$0xff]
  %v75 = vld [vmem:[%s0 + $0x1e8] sm:$0xff]
  %v76 = vld [vmem:[%s0 + $0x1f0] sm:$0xff]
  %v77 = vld [vmem:[%s0 + $0x1f8] sm:$0xff]
  %v78 = vld [vmem:[%s0 + $0x200] sm:$0xff]
  %v79 = vld [vmem:[%s0 + $0x208] sm:$0xff]
  %v80 = vld [vmem:[%s0 + $0x210] sm:$0xff]
  %v81 = vld [vmem:[%s0 + $0x218] sm:$0xff]
  %v82 = vld [vmem:[%s0 + $0x220] sm:$0xff]
  %v83 = vld [vmem:[%s0 + $0x228] sm:$0xff]
  %v84 = vld [vmem:[%s0 + $0x230] sm:$0xff]
  %v85 = vld [vmem:[%s0 + $0x238] sm:$0xff]
  %v86 = vld [vmem:[%s0 + $0x240] sm:$0xff]
  %v87 = vld [vmem:[%s0 + $0x248] sm:$0xff]
  %v88 = vld [vmem:[%s0 + $0x250] sm:$0xff]
  %v89 = vld [vmem:[%s0 + $0x258] sm:$0xff]
  %v90 = vld [vmem:[%s0 + $0x260] sm:$0xff]
  %v91 = vld [vmem:[%s0 + $0x268] sm:$0xff]
  %v92 = vld [vmem:[%s0 + $0x270] sm:$0xff]
  %v93 = vld [vmem:[%s0 + $0x278] sm:$0xff]
  %v94 = vld [vmem:[%s0 + $0x280] sm:$0xff]
  %v95 = vld [vmem:[%s0 + $0x288] sm:$0xff]
  %v96 = vld [vmem:[%s0 + $0x290] sm:$0xff]
  %v97 = vld [vmem:[%s0 + $0x298] sm:$0xff]
  %v98 = vld [vmem:[%s0 + $0x2a0] sm:$0xff]
  %v99 = vld [vmem:[%s0 + $0x2a8] sm:$0xff]
  %v100 = vld [vmem:[%s0 + $0x2b0] sm:$0xff]
  %v101 = vld [vmem:[%s0 + $0x2b8] sm:$0xff]
  %v102 = vld [vmem:[%s0 + $0x2c0] sm:$0xff]
  %v103 = vld [vmem:[%s0 + $0x2c8] sm:$0xff]
  %v104 = vld [vmem:[%s0 + $0x2d0] sm:$0xff]
  %v105 = vld [vmem:[%s0 + $0x2d8] sm:$0xff]
  %v106 = vld [vmem:[%s0 + $0x2e0] sm:$0xff]
  %v107 = vld [vmem:[%s0 + $0x2e8] sm:$0xff]
  %v108 = vld [vmem:[%s0 + $0x2f0] sm:$0xff]
  %v109 = vld [vmem:[%s0 + $0x2f8] sm:$0xff]
  %v110 = vld [vmem:[%s0 + $0x300] sm:$0xff]
  %v111 = vld [vmem:[%s0 + $0x308] sm:$0xff]
  %v112 = vld [vmem:[%s0 + $0x310] sm:$0xff]
  %v113 = vld [vmem:[%s0 + $0x318] sm:$0xff]
  %v114 = vld [vmem:[%s0 + $0x320] sm:$0xff]
  %v115 = vld [vmem:[%s0 + $0x328] sm:$0xff]
  %v116 = vld [vmem:[%s0 + $0x330] sm:$0xff]
  %v117 = vld [vmem:[%s0 + $0x338] sm:$0xff]
  %v118 = vld [vmem:[%s0 + $0x340] sm:$0xff]
  %v119 = vld [vmem:[%s0 + $0x348] sm:$0xff]
  %v120 = vld [vmem:[%s0 + $0x350] sm:$0xff]
  %v121 = vld [vmem:[%s0 + $0x358] sm:$0xff]
  %v122 = vld [vmem:[%s0 + $0x360] sm:$0xff]
  %v123 = vld [vmem:[%s0 + $0x368] sm:$0xff]
  %v124 = vld [vmem:[%s0 + $0x370] sm:$0xff]
  %v125 = vld [vmem:[%s0 + $0x378] sm:$0xff]
  %v126 = vld [vmem:[%s0 + $0x380] sm:$0xff]
  %v127 = vld [vmem:[%s0 + $0x388] sm:$0xff]
  %v128 = vld [vmem:[%s0 + $0x390] sm:$0xff]
  %v129 = vld [vmem:[%s0 + $0x398] sm:$0xff]
  %v130 = vld [vmem:[%s0 + $0x3a0] sm:$0xff]
  %v131 = vld [vmem:[%s0 + $0x3a8] sm:$0xff]
  %v132 = vld [vmem:[%s0 + $0x3b0] sm:$0xff]
  %v133 = vld [vmem:[%s0 + $0x3b8] sm:$0xff]
  %v134 = vld [vmem:[%s0 + $0x3c0] sm:$0xff]
  %v135 = vld [vmem:[%s0 + $0x3c8] sm:$0xff]
  %v136 = vld [vmem:[%s0 + $0x3d0] sm:$0xff]
  %v137 = vld [vmem:[%s0 + $0x3d8] sm:$0xff]
  %v138 = vld [vmem:[%s0 + $0x3e0] sm:$0xff]
  %v139 = vld [vmem:[%s0 + $0x3e8] sm:$0xff]
  %v140 = vld [vmem:[%s0 + $0x3f0] sm:$0xff]
  %v141 = vld [vmem:[%s0 + $0x3f8] sm:$0xff]
  %v142 = vld [vmem:[%s0 + $0x400] sm:$0xff]
  %v143 = vld [vmem:[%s0 + $0x408] sm:$0xff]
  %v144 = vld [vmem:[%s0 + $0x410] sm:$0xff]
  %v145 = vld [vmem:[%s0 + $0x418] sm:$0xff]
  %v146 = vld [vmem:[%s0 + $0x420] sm:$0xff]
  %v147 = vld [vmem:[%s0 + $0x428] sm:$0xff]
  %v148 = vld [vmem:[%s0 + $0x430] sm:$0xff]
  %v149 = vld [vmem:[%s0 + $0x438] sm:$0xff]
  %v150 = vld [vmem:[%s0 + $0x440] sm:$0xff]
  %v151 = vld [vmem:[%s0 + $0x448] sm:$0xff]
  %v152 = vld [vmem:[%s0 + $0x450] sm:$0xff]
  %v153 = vld [vmem:[%s0 + $0x458] sm:$0xff]
  %v154 = vld [vmem:[%s0 + $0x460] sm:$0xff]
  %v155 = vld [vmem:[%s0 + $0x468] sm:$0xff]
  %v156 = vld [vmem:[%s0 + $0x470] sm:$0xff]
  %v157 = vld [vmem:[%s0 + $0x478] sm:$0xff]
  %v158 = vld [vmem:[%s0 + $0x480] sm:$0xff]
  %v159 = vld [vmem:[%s0 + $0x488] sm:$0xff]
  %v160 = vld [vmem:[%s0 + $0x490] sm:$0xff]
  %v161 = vld [vmem:[%s0 + $0x498] sm:$0xff]
  %v162 = vld [vmem:[%s0 + $0x4a0] sm:$0xff]
  %v163 = vld [vmem:[%s0 + $0x4a8] sm:$0xff]
  %v164 = vld [vmem:[%s0 + $0x4b0] sm:$0xff]
  %v165 = vld [vmem:[%s0 + $0x4b8] sm:$0xff]
  %v166 = vld [vmem:[%s0 + $0x4c0] sm:$0xff]
  %v167 = vld [vmem:[%s0 + $0x4c8] sm:$0xff]
  %v168 = vld [vmem:[%s0 + $0x4d0] sm:$0xff]
  %v169 = vld [vmem:[%s0 + $0x4d8] sm:$0xff]
  %v170 = vld [vmem:[%s0 + $0x4e0] sm:$0xff]
  %v171 = vld [vmem:[%s0 + $0x4e8] sm:$0xff]
  %v172 = vld [vmem:[%s0 + $0x4f0] sm:$0xff]
  %v173 = vld [vmem:[%s0 + $0x4f8] sm:$0xff]
  %v174 = vld [vmem:[%s0 + $0x500] sm:$0x11]
  %v175 = vld [vmem:[%s0 + $0x508] sm:$0x11]
  %v176 = vld [vmem:[%s0 + $0x510] sm:$0x11]
  %v177 = vld [vmem:[%s0 + $0x518] sm:$0x11]
  %v178 = vld [vmem:[%s0 + $0x520] sm:$0x11]
  %v179 = vld [vmem:[%s0 + $0x528] sm:$0x11]
  %v180 = vld [vmem:[%s0 + $0x530] sm:$0x11]
  %v181 = vld [vmem:[%s0 + $0x538] sm:$0x11]
  %v182 = vld [vmem:[%s1] sm:$0xf]
  %v183 = vld [vmem:[%s1 + $0x4] sm:$0xf]
  %v184 = vld [vmem:[%s1 + $0x8] sm:$0xf]
  %v185 = vld [vmem:[%s1 + $0xc] sm:$0xf]
  %v186 = vld [vmem:[%s1 + $0x10] sm:$0xf]
  %v187 = vld [vmem:[%s1 + $0x14] sm:$0xf]
  %v188 = vld [vmem:[%s1 + $0x18] sm:$0xf]
  %v189 = vld [vmem:[%s1 + $0x1c] sm:$0xf]
  %v190 = vld [vmem:[%s1 + $0x20] sm:$0xf]
  %v191 = vld [vmem:[%s1 + $0x24] sm:$0xf]
  %v192 = vld [vmem:[%s1 + $0x28] sm:$0xf]
  %v193 = vld [vmem:[%s1 + $0x2c] sm:$0xf]
  %v194 = vld [vmem:[%s1 + $0x30] sm:$0xf]
  %v195 = vld [vmem:[%s1 + $0x34] sm:$0xf]
  %v196 = vld [vmem:[%s1 + $0x38] sm:$0xf]
  %v197 = vld [vmem:[%s1 + $0x3c] sm:$0xf]
  %v198 = vld [vmem:[%s1 + $0x40] sm:$0xf]
  %v199 = vld [vmem:[%s1 + $0x44] sm:$0xf]
  %v200 = vld [vmem:[%s1 + $0x48] sm:$0xf]
  %v201 = vld [vmem:[%s1 + $0x4c] sm:$0xf]
  %v202 = vld [vmem:[%s1 + $0x50] sm:$0xf]
  %v203 = vld [vmem:[%s1 + $0x54] sm:$0xf]
  %v204 = vld [vmem:[%s1 + $0x58] sm:$0xf]
  %v205 = vld [vmem:[%s1 + $0x5c] sm:$0xf]
  %v206 = vld [vmem:[%s1 + $0x60] sm:$0xf]
  %v207 = vld [vmem:[%s1 + $0x64] sm:$0xf]
  %v208 = vld [vmem:[%s1 + $0x68] sm:$0xf]
  %v209 = vld [vmem:[%s1 + $0x6c] sm:$0xf]
  %v210 = vld [vmem:[%s1 + $0x70] sm:$0xf]
  %v211 = vld [vmem:[%s1 + $0x74] sm:$0xf]
  %v212 = vld [vmem:[%s1 + $0x78] sm:$0xf]
  %v213 = vld [vmem:[%s1 + $0x7c] sm:$0xf]
  %v214 = vld [vmem:[%s1 + $0x80] sm:$0xf]
  %v215 = vld [vmem:[%s1 + $0x84] sm:$0xf]
  %v216 = vld [vmem:[%s1 + $0x88] sm:$0xf]
  %v217 = vld [vmem:[%s1 + $0x8c] sm:$0xf]
  %v218 = vld [vmem:[%s1 + $0x90] sm:$0xf]
  %v219 = vld [vmem:[%s1 + $0x94] sm:$0xf]
  %v220 = vld [vmem:[%s1 + $0x98] sm:$0xf]
  %v221 = vld [vmem:[%s1 + $0x9c] sm:$0xf]
  %v222 = vld [vmem:[%s1 + $0xa0] sm:$0xf]
  %v223 = vld [vmem:[%s1 + $0xa4] sm:$0xf]
  %v224 = vld [vmem:[%s1 + $0xa8] sm:$0xf]
  %v225 = vld [vmem:[%s1 + $0xac] sm:$0xf]
  %v226 = vld [vmem:[%s1 + $0xb0] sm:$0xf]
  %v227 = vld [vmem:[%s1 + $0xb4] sm:$0xf]
  %v228 = vld [vmem:[%s1 + $0xb8] sm:$0xf]
  %v229 = vld [vmem:[%s1 + $0xbc] sm:$0xf]
  %v230 = vld [vmem:[%s1 + $0xc0] sm:$0xf]
  %v231 = vld [vmem:[%s1 + $0xc4] sm:$0xf]
  %v232 = vld [vmem:[%s1 + $0xc8] sm:$0xf]
  %v233 = vld [vmem:[%s1 + $0xcc] sm:$0xf]
  %v234 = vld [vmem:[%s1 + $0xd0] sm:$0xf]
  %v235 = vld [vmem:[%s1 + $0xd4] sm:$0xf]
  %v236 = vld [vmem:[%s1 + $0xd8] sm:$0xf]
  %v237 = vld [vmem:[%s1 + $0xdc] sm:$0xf]
  %v238 = vld [vmem:[%s1 + $0xe0] sm:$0xf]
  %v239 = vld [vmem:[%s1 + $0xe4] sm:$0xf]
  %v240 = vld [vmem:[%s1 + $0xe8] sm:$0xf]
  %v241 = vld [vmem:[%s1 + $0xec] sm:$0xf]
  %v242 = vld [vmem:[%s1 + $0xf0] sm:$0xf]
  %v243 = vld [vmem:[%s1 + $0xf4] sm:$0xf]
  %v244 = vld [vmem:[%s1 + $0xf8] sm:$0xf]
  %v245 = vld [vmem:[%s1 + $0xfc] sm:$0xf]
  %v246 = vld [vmem:[%s1 + $0x100] sm:$0xf]
  %v247 = vld [vmem:[%s1 + $0x104] sm:$0xf]
  %v248 = vld [vmem:[%s1 + $0x108] sm:$0xf]
  %v249 = vld [vmem:[%s1 + $0x10c] sm:$0xf]
  %v250 = vld [vmem:[%s1 + $0x110] sm:$0xf]
  %v251 = vld [vmem:[%s1 + $0x114] sm:$0xf]
  %v252 = vld [vmem:[%s1 + $0x118] sm:$0xf]
  %v253 = vld [vmem:[%s1 + $0x11c] sm:$0xf]
  %v254 = vld [vmem:[%s1 + $0x120] sm:$0xf]
  %v255 = vld [vmem:[%s1 + $0x124] sm:$0xf]
  %v256 = vld [vmem:[%s1 + $0x128] sm:$0xf]
  %v257 = vld [vmem:[%s1 + $0x12c] sm:$0xf]
  %v258 = vld [vmem:[%s1 + $0x130] sm:$0xf]
  %v259 = vld [vmem:[%s1 + $0x134] sm:$0xf]
  %v260 = vld [vmem:[%s1 + $0x138] sm:$0xf]
  %v261 = vld [vmem:[%s1 + $0x13c] sm:$0xf]
  %v262 = vld [vmem:[%s1 + $0x140] sm:$0xf]
  %v263 = vld [vmem:[%s1 + $0x144] sm:$0xf]
  %v264 = vld [vmem:[%s1 + $0x148] sm:$0xf]
  %v265 = vld [vmem:[%s1 + $0x14c] sm:$0xf]
  %v266 = vld [vmem:[%s1 + $0x150] sm:$0xf]
  %v267 = vld [vmem:[%s1 + $0x154] sm:$0xf]
  %v268 = vld [vmem:[%s1 + $0x158] sm:$0xf]
  %v269 = vld [vmem:[%s1 + $0x15c] sm:$0xf]
  %v270 = vld [vmem:[%s1 + $0x160] sm:$0xf]
  %v271 = vld [vmem:[%s1 + $0x164] sm:$0xf]
  %v272 = vld [vmem:[%s1 + $0x168] sm:$0xf]
  %v273 = vld [vmem:[%s1 + $0x16c] sm:$0xf]
  %v274 = vld [vmem:[%s1 + $0x170] sm:$0xf]
  %v275 = vld [vmem:[%s1 + $0x174] sm:$0xf]
  %v276 = vld [vmem:[%s1 + $0x178] sm:$0xf]
  %v277 = vld [vmem:[%s1 + $0x17c] sm:$0xf]
  %v278 = vld [vmem:[%s1 + $0x180] sm:$0xf]
  %v279 = vld [vmem:[%s1 + $0x184] sm:$0xf]
  %v280 = vld [vmem:[%s1 + $0x188] sm:$0xf]
  %v281 = vld [vmem:[%s1 + $0x18c] sm:$0xf]
  %v282 = vld [vmem:[%s1 + $0x190] sm:$0xf]
  %v283 = vld [vmem:[%s1 + $0x194] sm:$0xf]
  %v284 = vld [vmem:[%s1 + $0x198] sm:$0xf]
  %v285 = vld [vmem:[%s1 + $0x19c] sm:$0xf]
  %v286 = vld [vmem:[%s1 + $0x1a0] sm:$0xf]
  %v287 = vld [vmem:[%s1 + $0x1a4] sm:$0xf]
  %v288 = vld [vmem:[%s1 + $0x1a8] sm:$0xf]
  %v289 = vld [vmem:[%s1 + $0x1ac] sm:$0xf]
  %v290 = vld [vmem:[%s1 + $0x1b0] sm:$0xf]
  %v291 = vld [vmem:[%s1 + $0x1b4] sm:$0xf]
  %v292 = vld [vmem:[%s1 + $0x1b8] sm:$0xf]
  %v293 = vld [vmem:[%s1 + $0x1bc] sm:$0xf]
  %v294 = vld [vmem:[%s1 + $0x1c0] sm:$0xf]
  %v295 = vld [vmem:[%s1 + $0x1c4] sm:$0xf]
  %v296 = vld [vmem:[%s1 + $0x1c8] sm:$0xf]
  %v297 = vld [vmem:[%s1 + $0x1cc] sm:$0xf]
  %v298 = vld [vmem:[%s1 + $0x1d0] sm:$0xf]
  %v299 = vld [vmem:[%s1 + $0x1d4] sm:$0xf]
  %v300 = vld [vmem:[%s1 + $0x1d8] sm:$0xf]
  %v301 = vld [vmem:[%s1 + $0x1dc] sm:$0xf]
  %v302 = vld [vmem:[%s1 + $0x1e0] sm:$0xf]
  %v303 = vld [vmem:[%s1 + $0x1e4] sm:$0xf]
  %v304 = vld [vmem:[%s1 + $0x1e8] sm:$0xf]
  %v305 = vld [vmem:[%s1 + $0x1ec] sm:$0xf]
  %v306 = vld [vmem:[%s1 + $0x1f0] sm:$0xf]
  %v307 = vld [vmem:[%s1 + $0x1f4] sm:$0xf]
  %v308 = vld [vmem:[%s1 + $0x1f8] sm:$0xf]
  %v309 = vld [vmem:[%s1 + $0x1fc] sm:$0xf]
  %v310 = vld [vmem:[%s1 + $0x200] sm:$0xf]
  %v311 = vld [vmem:[%s1 + $0x204] sm:$0xf]
  %v312 = vld [vmem:[%s1 + $0x208] sm:$0xf]
  %v313 = vld [vmem:[%s1 + $0x20c] sm:$0xf]
  %v314 = vld [vmem:[%s1 + $0x210] sm:$0xf]
  %v315 = vld [vmem:[%s1 + $0x214] sm:$0xf]
  %v316 = vld [vmem:[%s1 + $0x218] sm:$0xf]
  %v317 = vld [vmem:[%s1 + $0x21c] sm:$0xf]
  %v318 = vld [vmem:[%s1 + $0x220] sm:$0xf]
  %v319 = vld [vmem:[%s1 + $0x224] sm:$0xf]
  %v320 = vld [vmem:[%s1 + $0x228] sm:$0xf]
  %v321 = vld [vmem:[%s1 + $0x22c] sm:$0xf]
  %v322 = vld [vmem:[%s1 + $0x230] sm:$0xf]
  %v323 = vld [vmem:[%s1 + $0x234] sm:$0xf]
  %v324 = vld [vmem:[%s1 + $0x238] sm:$0xf]
  %v325 = vld [vmem:[%s1 + $0x23c] sm:$0xf]
  %v326 = vld [vmem:[%s1 + $0x240] sm:$0xf]
  %v327 = vld [vmem:[%s1 + $0x244] sm:$0xf]
  %v328 = vld [vmem:[%s1 + $0x248] sm:$0xf]
  %v329 = vld [vmem:[%s1 + $0x24c] sm:$0xf]
  %v330 = vld [vmem:[%s1 + $0x250] sm:$0xf]
  %v331 = vld [vmem:[%s1 + $0x254] sm:$0xf]
  %v332 = vld [vmem:[%s1 + $0x258] sm:$0xf]
  %v333 = vld [vmem:[%s1 + $0x25c] sm:$0xf]
  %v334 = vld [vmem:[%s1 + $0x260] sm:$0xf]
  %v335 = vld [vmem:[%s1 + $0x264] sm:$0xf]
  %v336 = vld [vmem:[%s1 + $0x268] sm:$0xf]
  %v337 = vld [vmem:[%s1 + $0x26c] sm:$0xf]
  %v338 = vld [vmem:[%s1 + $0x270] sm:$0xf]
  %v339 = vld [vmem:[%s1 + $0x274] sm:$0xf]
  %v340 = vld [vmem:[%s1 + $0x278] sm:$0xf]
  %v341 = vld [vmem:[%s1 + $0x27c] sm:$0xf]
  %v342 = vld [vmem:[%s1 + $0x280] sm:$0xf]
  %v343 = vld [vmem:[%s1 + $0x284] sm:$0xf]
  %v344 = vld [vmem:[%s1 + $0x288] sm:$0xf]
  %v345 = vld [vmem:[%s1 + $0x28c] sm:$0xf]
  %v346 = vld [vmem:[%s1 + $0x290] sm:$0xf]
  %v347 = vld [vmem:[%s1 + $0x294] sm:$0xf]
  %v348 = vld [vmem:[%s1 + $0x298] sm:$0xf]
  %v349 = vld [vmem:[%s1 + $0x29c] sm:$0xf]
  %v350 = vld [vmem:[%s1 + $0x2a0] sm:$0xf]
  %v351 = vld [vmem:[%s1 + $0x2a4] sm:$0xf]
  %v352 = vld [vmem:[%s1 + $0x2a8] sm:$0xf]
  %v353 = vld [vmem:[%s1 + $0x2ac] sm:$0xf]
  %v354 = vld [vmem:[%s1 + $0x2b0] sm:$0xf]
  %v355 = vld [vmem:[%s1 + $0x2b4] sm:$0xf]
  %v356 = vld [vmem:[%s1 + $0x2b8] sm:$0xf]
  %v357 = vld [vmem:[%s1 + $0x2bc] sm:$0xf]
  %v358 = vld [vmem:[%s1 + $0x2c0] sm:$0xf]
  %v359 = vld [vmem:[%s1 + $0x2c4] sm:$0xf]
  %v360 = vld [vmem:[%s1 + $0x2c8] sm:$0xf]
  %v361 = vld [vmem:[%s1 + $0x2cc] sm:$0xf]
  %v362 = vld [vmem:[%s1 + $0x2d0] sm:$0xf]
  %v363 = vld [vmem:[%s1 + $0x2d4] sm:$0xf]
  %v364 = vld [vmem:[%s1 + $0x2d8] sm:$0xf]
  %v365 = vld [vmem:[%s1 + $0x2dc] sm:$0xf]
  %v366 = vld [vmem:[%s1 + $0x2e0] sm:$0xf]
  %v367 = vld [vmem:[%s1 + $0x2e4] sm:$0xf]
  %v368 = vld [vmem:[%s1 + $0x2e8] sm:$0xf]
  %v369 = vld [vmem:[%s1 + $0x2ec] sm:$0xf]
  %v370 = vld [vmem:[%s1 + $0x2f0] sm:$0xf]
  %v371 = vld [vmem:[%s1 + $0x2f4] sm:$0xf]
  %v372 = vld [vmem:[%s1 + $0x2f8] sm:$0xf]
  %v373 = vld [vmem:[%s1 + $0x2fc] sm:$0xf]
  %v374 = vld [vmem:[%s1 + $0x300] sm:$0xf]
  %v375 = vld [vmem:[%s1 + $0x304] sm:$0xf]
  %v376 = vld [vmem:[%s1 + $0x308] sm:$0xf]
  %v377 = vld [vmem:[%s1 + $0x30c] sm:$0xf]
  %v378 = vld [vmem:[%s1 + $0x310] sm:$0xf]
  %v379 = vld [vmem:[%s1 + $0x314] sm:$0xf]
  %v380 = vld [vmem:[%s1 + $0x318] sm:$0xf]
  %v381 = vld [vmem:[%s1 + $0x31c] sm:$0xf]
  %v382 = vld [vmem:[%s1 + $0x320] sm:$0xf]
  %v383 = vld [vmem:[%s1 + $0x324] sm:$0xf]
  %v384 = vld [vmem:[%s1 + $0x328] sm:$0xf]
  %v385 = vld [vmem:[%s1 + $0x32c] sm:$0xf]
  %v386 = vld [vmem:[%s1 + $0x330] sm:$0xf]
  %v387 = vld [vmem:[%s1 + $0x334] sm:$0xf]
  %v388 = vld [vmem:[%s1 + $0x338] sm:$0xf]
  %v389 = vld [vmem:[%s1 + $0x33c] sm:$0xf]
  %v390 = vld [vmem:[%s1 + $0x340] sm:$0xf]
  %v391 = vld [vmem:[%s1 + $0x344] sm:$0xf]
  %v392 = vld [vmem:[%s1 + $0x348] sm:$0xf]
  %v393 = vld [vmem:[%s1 + $0x34c] sm:$0xf]
  %v394 = vld [vmem:[%s1 + $0x350] sm:$0xf]
  %v395 = vld [vmem:[%s1 + $0x354] sm:$0xf]
  %v396 = vld [vmem:[%s1 + $0x358] sm:$0xf]
  %v397 = vld [vmem:[%s1 + $0x35c] sm:$0xf]
  %v398 = vld [vmem:[%s1 + $0x360] sm:$0xf]
  %v399 = vld [vmem:[%s1 + $0x364] sm:$0xf]
  %v400 = vld [vmem:[%s1 + $0x368] sm:$0xf]
  %v401 = vld [vmem:[%s1 + $0x36c] sm:$0xf]
  %v402 = vld [vmem:[%s1 + $0x370] sm:$0xf]
  %v403 = vld [vmem:[%s1 + $0x374] sm:$0xf]
  %v404 = vld [vmem:[%s1 + $0x378] sm:$0xf]
  %v405 = vld [vmem:[%s1 + $0x37c] sm:$0xf]
  %v406 = vld [vmem:[%s1 + $0x380] sm:$0xf]
  %v407 = vld [vmem:[%s1 + $0x384] sm:$0xf]
  %v408 = vld [vmem:[%s1 + $0x388] sm:$0xf]
  %v409 = vld [vmem:[%s1 + $0x38c] sm:$0xf]
  %v410 = vld [vmem:[%s1 + $0x390] sm:$0xf]
  %v411 = vld [vmem:[%s1 + $0x394] sm:$0xf]
  %v412 = vld [vmem:[%s1 + $0x398] sm:$0xf]
  %v413 = vld [vmem:[%s1 + $0x39c] sm:$0xf]
  %v414 = vld [vmem:[%s1 + $0x3a0] sm:$0xf]
  %v415 = vld [vmem:[%s1 + $0x3a4] sm:$0xf]
  %v416 = vld [vmem:[%s1 + $0x3a8] sm:$0xf]
  %v417 = vld [vmem:[%s1 + $0x3ac] sm:$0xf]
  %v418 = vld [vmem:[%s1 + $0x3b0] sm:$0xf]
  %v419 = vld [vmem:[%s1 + $0x3b4] sm:$0xf]
  %v420 = vld [vmem:[%s1 + $0x3b8] sm:$0xf]
  %v421 = vld [vmem:[%s1 + $0x3bc] sm:$0xf]
  %v422 = vld [vmem:[%s1 + $0x3c0] sm:$0xf]
  %v423 = vld [vmem:[%s1 + $0x3c4] sm:$0xf]
  %v424 = vld [vmem:[%s1 + $0x3c8] sm:$0xf]
  %v425 = vld [vmem:[%s1 + $0x3cc] sm:$0xf]
  %v426 = vld [vmem:[%s1 + $0x3d0] sm:$0xf]
  %v427 = vld [vmem:[%s1 + $0x3d4] sm:$0xf]
  %v428 = vld [vmem:[%s1 + $0x3d8] sm:$0xf]
  %v429 = vld [vmem:[%s1 + $0x3dc] sm:$0xf]
  %v430 = vld [vmem:[%s1 + $0x3e0] sm:$0xf]
  %v431 = vld [vmem:[%s1 + $0x3e4] sm:$0xf]
  %v432 = vld [vmem:[%s1 + $0x3e8] sm:$0xf]
  %v433 = vld [vmem:[%s1 + $0x3ec] sm:$0xf]
  %v434 = vld [vmem:[%s1 + $0x3f0] sm:$0xf]
  %v435 = vld [vmem:[%s1 + $0x3f4] sm:$0xf]
  %v436 = vld [vmem:[%s1 + $0x3f8] sm:$0xf]
  %v437 = vld [vmem:[%s1 + $0x3fc] sm:$0xf]
  %v438 = vld [vmem:[%s2] sm:$0x1]
  %v440 = vperm.slane %v438, 0
  %v610 = vunpack.c.l.b16 %v14
  %v611 = vunpack.c.h.b16 %v14
  %v612 = vunpack.c.l.b16 %v15
  %v613 = vunpack.c.h.b16 %v15
  %v614 = vunpack.c.l.b16 %v16
  %v615 = vunpack.c.h.b16 %v16
  %v616 = vunpack.c.l.b16 %v17
  %v617 = vunpack.c.h.b16 %v17
  %v618 = vunpack.c.l.b16 %v18
  %v619 = vunpack.c.h.b16 %v18
  %v620 = vunpack.c.l.b16 %v19
  %v621 = vunpack.c.h.b16 %v19
  %v622 = vunpack.c.l.b16 %v20
  %v623 = vunpack.c.h.b16 %v20
  %v624 = vunpack.c.l.b16 %v21
  %v625 = vunpack.c.h.b16 %v21
  %v626 = vunpack.c.l.b16 %v22
  %v627 = vunpack.c.h.b16 %v22
  %v628 = vunpack.c.l.b16 %v23
  %v629 = vunpack.c.h.b16 %v23
  %v630 = vunpack.c.l.b16 %v24
  %v631 = vunpack.c.h.b16 %v24
  %v632 = vunpack.c.l.b16 %v25
  %v633 = vunpack.c.h.b16 %v25
  %v634 = vunpack.c.l.b16 %v26
  %v635 = vunpack.c.h.b16 %v26
  %v636 = vunpack.c.l.b16 %v27
  %v637 = vunpack.c.h.b16 %v27
  %v638 = vunpack.c.l.b16 %v28
  %v639 = vunpack.c.h.b16 %v28
  %v640 = vunpack.c.l.b16 %v29
  %v641 = vunpack.c.h.b16 %v29
  %v642 = vunpack.c.l.b16 %v30
  %v643 = vunpack.c.h.b16 %v30
  %v644 = vunpack.c.l.b16 %v31
  %v645 = vunpack.c.h.b16 %v31
  %v646 = vunpack.c.l.b16 %v32
  %v647 = vunpack.c.h.b16 %v32
  %v648 = vunpack.c.l.b16 %v33
  %v649 = vunpack.c.h.b16 %v33
  %v650 = vunpack.c.l.b16 %v34
  %v651 = vunpack.c.h.b16 %v34
  %v652 = vunpack.c.l.b16 %v35
  %v653 = vunpack.c.h.b16 %v35
  %v654 = vunpack.c.l.b16 %v36
  %v655 = vunpack.c.h.b16 %v36
  %v656 = vunpack.c.l.b16 %v37
  %v657 = vunpack.c.h.b16 %v37
  %v658 = vunpack.c.l.b16 %v38
  %v659 = vunpack.c.h.b16 %v38
  %v660 = vunpack.c.l.b16 %v39
  %v661 = vunpack.c.h.b16 %v39
  %v662 = vunpack.c.l.b16 %v40
  %v663 = vunpack.c.h.b16 %v40
  %v664 = vunpack.c.l.b16 %v41
  %v665 = vunpack.c.h.b16 %v41
  %v666 = vunpack.c.l.b16 %v42
  %v667 = vunpack.c.h.b16 %v42
  %v668 = vunpack.c.l.b16 %v43
  %v669 = vunpack.c.h.b16 %v43
  %v670 = vunpack.c.l.b16 %v44
  %v671 = vunpack.c.h.b16 %v44
  %v672 = vunpack.c.l.b16 %v45
  %v673 = vunpack.c.h.b16 %v45
  %v674 = vunpack.c.l.b16 %v46
  %v675 = vunpack.c.h.b16 %v46
  %v676 = vunpack.c.l.b16 %v47
  %v677 = vunpack.c.h.b16 %v47
  %v678 = vunpack.c.l.b16 %v48
  %v679 = vunpack.c.h.b16 %v48
  %v680 = vunpack.c.l.b16 %v49
  %v681 = vunpack.c.h.b16 %v49
  %v682 = vunpack.c.l.b16 %v50
  %v683 = vunpack.c.h.b16 %v50
  %v684 = vunpack.c.l.b16 %v51
  %v685 = vunpack.c.h.b16 %v51
  %v686 = vunpack.c.l.b16 %v52
  %v687 = vunpack.c.h.b16 %v52
  %v688 = vunpack.c.l.b16 %v53
  %v689 = vunpack.c.h.b16 %v53
  %v690 = vunpack.c.l.b16 %v54
  %v691 = vunpack.c.h.b16 %v54
  %v692 = vunpack.c.l.b16 %v55
  %v693 = vunpack.c.h.b16 %v55
  %v694 = vunpack.c.l.b16 %v56
  %v695 = vunpack.c.h.b16 %v56
  %v696 = vunpack.c.l.b16 %v57
  %v697 = vunpack.c.h.b16 %v57
  %v698 = vunpack.c.l.b16 %v58
  %v699 = vunpack.c.h.b16 %v58
  %v700 = vunpack.c.l.b16 %v59
  %v701 = vunpack.c.h.b16 %v59
  %v702 = vunpack.c.l.b16 %v60
  %v703 = vunpack.c.h.b16 %v60
  %v704 = vunpack.c.l.b16 %v61
  %v705 = vunpack.c.h.b16 %v61
  %v706 = vunpack.c.l.b16 %v62
  %v707 = vunpack.c.h.b16 %v62
  %v708 = vunpack.c.l.b16 %v63
  %v709 = vunpack.c.h.b16 %v63
  %v710 = vunpack.c.l.b16 %v64
  %v711 = vunpack.c.h.b16 %v64
  %v712 = vunpack.c.l.b16 %v65
  %v713 = vunpack.c.h.b16 %v65
  %v714 = vunpack.c.l.b16 %v66
  %v715 = vunpack.c.h.b16 %v66
  %v716 = vunpack.c.l.b16 %v67
  %v717 = vunpack.c.h.b16 %v67
  %v718 = vunpack.c.l.b16 %v68
  %v719 = vunpack.c.h.b16 %v68
  %v720 = vunpack.c.l.b16 %v69
  %v721 = vunpack.c.h.b16 %v69
  %v722 = vunpack.c.l.b16 %v70
  %v723 = vunpack.c.h.b16 %v70
  %v724 = vunpack.c.l.b16 %v71
  %v725 = vunpack.c.h.b16 %v71
  %v726 = vunpack.c.l.b16 %v72
  %v727 = vunpack.c.h.b16 %v72
  %v728 = vunpack.c.l.b16 %v73
  %v729 = vunpack.c.h.b16 %v73
  %v730 = vunpack.c.l.b16 %v74
  %v731 = vunpack.c.h.b16 %v74
  %v732 = vunpack.c.l.b16 %v75
  %v733 = vunpack.c.h.b16 %v75
  %v734 = vunpack.c.l.b16 %v76
  %v735 = vunpack.c.h.b16 %v76
  %v736 = vunpack.c.l.b16 %v77
  %v737 = vunpack.c.h.b16 %v77
  %v738 = vunpack.c.l.b16 %v78
  %v739 = vunpack.c.h.b16 %v78
  %v740 = vunpack.c.l.b16 %v79
  %v741 = vunpack.c.h.b16 %v79
  %v742 = vunpack.c.l.b16 %v80
  %v743 = vunpack.c.h.b16 %v80
  %v744 = vunpack.c.l.b16 %v81
  %v745 = vunpack.c.h.b16 %v81
  %v746 = vunpack.c.l.b16 %v82
  %v747 = vunpack.c.h.b16 %v82
  %v748 = vunpack.c.l.b16 %v83
  %v749 = vunpack.c.h.b16 %v83
  %v750 = vunpack.c.l.b16 %v84
  %v751 = vunpack.c.h.b16 %v84
  %v752 = vunpack.c.l.b16 %v85
  %v753 = vunpack.c.h.b16 %v85
  %v754 = vunpack.c.l.b16 %v86
  %v755 = vunpack.c.h.b16 %v86
  %v756 = vunpack.c.l.b16 %v87
  %v757 = vunpack.c.h.b16 %v87
  %v758 = vunpack.c.l.b16 %v88
  %v759 = vunpack.c.h.b16 %v88
  %v760 = vunpack.c.l.b16 %v89
  %v761 = vunpack.c.h.b16 %v89
  %v762 = vunpack.c.l.b16 %v90
  %v763 = vunpack.c.h.b16 %v90
  %v764 = vunpack.c.l.b16 %v91
  %v765 = vunpack.c.h.b16 %v91
  %v766 = vunpack.c.l.b16 %v92
  %v767 = vunpack.c.h.b16 %v92
  %v768 = vunpack.c.l.b16 %v93
  %v769 = vunpack.c.h.b16 %v93
  %v770 = vunpack.c.l.b16 %v94
  %v771 = vunpack.c.h.b16 %v94
  %v772 = vunpack.c.l.b16 %v95
  %v773 = vunpack.c.h.b16 %v95
  %v774 = vunpack.c.l.b16 %v96
  %v775 = vunpack.c.h.b16 %v96
  %v776 = vunpack.c.l.b16 %v97
  %v777 = vunpack.c.h.b16 %v97
  %v778 = vunpack.c.l.b16 %v98
  %v779 = vunpack.c.h.b16 %v98
  %v780 = vunpack.c.l.b16 %v99
  %v781 = vunpack.c.h.b16 %v99
  %v782 = vunpack.c.l.b16 %v100
  %v783 = vunpack.c.h.b16 %v100
  %v784 = vunpack.c.l.b16 %v101
  %v785 = vunpack.c.h.b16 %v101
  %v786 = vunpack.c.l.b16 %v102
  %v787 = vunpack.c.h.b16 %v102
  %v788 = vunpack.c.l.b16 %v103
  %v789 = vunpack.c.h.b16 %v103
  %v790 = vunpack.c.l.b16 %v104
  %v791 = vunpack.c.h.b16 %v104
  %v792 = vunpack.c.l.b16 %v105
  %v793 = vunpack.c.h.b16 %v105
  %v794 = vunpack.c.l.b16 %v106
  %v795 = vunpack.c.h.b16 %v106
  %v796 = vunpack.c.l.b16 %v107
  %v797 = vunpack.c.h.b16 %v107
  %v798 = vunpack.c.l.b16 %v108
  %v799 = vunpack.c.h.b16 %v108
  %v800 = vunpack.c.l.b16 %v109
  %v801 = vunpack.c.h.b16 %v109
  %v802 = vunpack.c.l.b16 %v110
  %v803 = vunpack.c.h.b16 %v110
  %v804 = vunpack.c.l.b16 %v111
  %v805 = vunpack.c.h.b16 %v111
  %v806 = vunpack.c.l.b16 %v112
  %v807 = vunpack.c.h.b16 %v112
  %v808 = vunpack.c.l.b16 %v113
  %v809 = vunpack.c.h.b16 %v113
  %v810 = vunpack.c.l.b16 %v114
  %v811 = vunpack.c.h.b16 %v114
  %v812 = vunpack.c.l.b16 %v115
  %v813 = vunpack.c.h.b16 %v115
  %v814 = vunpack.c.l.b16 %v116
  %v815 = vunpack.c.h.b16 %v116
  %v816 = vunpack.c.l.b16 %v117
  %v817 = vunpack.c.h.b16 %v117
  %v818 = vunpack.c.l.b16 %v118
  %v819 = vunpack.c.h.b16 %v118
  %v820 = vunpack.c.l.b16 %v119
  %v821 = vunpack.c.h.b16 %v119
  %v822 = vunpack.c.l.b16 %v120
  %v823 = vunpack.c.h.b16 %v120
  %v824 = vunpack.c.l.b16 %v121
  %v825 = vunpack.c.h.b16 %v121
  %v826 = vunpack.c.l.b16 %v122
  %v827 = vunpack.c.h.b16 %v122
  %v828 = vunpack.c.l.b16 %v123
  %v829 = vunpack.c.h.b16 %v123
  %v830 = vunpack.c.l.b16 %v124
  %v831 = vunpack.c.h.b16 %v124
  %v832 = vunpack.c.l.b16 %v125
  %v833 = vunpack.c.h.b16 %v125
  %v834 = vunpack.c.l.b16 %v126
  %v835 = vunpack.c.h.b16 %v126
  %v836 = vunpack.c.l.b16 %v127
  %v837 = vunpack.c.h.b16 %v127
  %v838 = vunpack.c.l.b16 %v128
  %v839 = vunpack.c.h.b16 %v128
  %v840 = vunpack.c.l.b16 %v129
  %v841 = vunpack.c.h.b16 %v129
  %v842 = vunpack.c.l.b16 %v130
  %v843 = vunpack.c.h.b16 %v130
  %v844 = vunpack.c.l.b16 %v131
  %v845 = vunpack.c.h.b16 %v131
  %v846 = vunpack.c.l.b16 %v132
  %v847 = vunpack.c.h.b16 %v132
  %v848 = vunpack.c.l.b16 %v133
  %v849 = vunpack.c.h.b16 %v133
  %v850 = vunpack.c.l.b16 %v134
  %v851 = vunpack.c.h.b16 %v134
  %v852 = vunpack.c.l.b16 %v135
  %v853 = vunpack.c.h.b16 %v135
  %v854 = vunpack.c.l.b16 %v136
  %v855 = vunpack.c.h.b16 %v136
  %v856 = vunpack.c.l.b16 %v137
  %v857 = vunpack.c.h.b16 %v137
  %v858 = vunpack.c.l.b16 %v138
  %v859 = vunpack.c.h.b16 %v138
  %v860 = vunpack.c.l.b16 %v139
  %v861 = vunpack.c.h.b16 %v139
  %v862 = vunpack.c.l.b16 %v140
  %v863 = vunpack.c.h.b16 %v140
  %v864 = vunpack.c.l.b16 %v141
  %v865 = vunpack.c.h.b16 %v141
  %v866 = vunpack.c.l.b16 %v142
  %v867 = vunpack.c.h.b16 %v142
  %v868 = vunpack.c.l.b16 %v143
  %v869 = vunpack.c.h.b16 %v143
  %v870 = vunpack.c.l.b16 %v144
  %v871 = vunpack.c.h.b16 %v144
  %v872 = vunpack.c.l.b16 %v145
  %v873 = vunpack.c.h.b16 %v145
  %v874 = vunpack.c.l.b16 %v146
  %v875 = vunpack.c.h.b16 %v146
  %v876 = vunpack.c.l.b16 %v147
  %v877 = vunpack.c.h.b16 %v147
  %v878 = vunpack.c.l.b16 %v148
  %v879 = vunpack.c.h.b16 %v148
  %v880 = vunpack.c.l.b16 %v149
  %v881 = vunpack.c.h.b16 %v149
  %v882 = vunpack.c.l.b16 %v150
  %v883 = vunpack.c.h.b16 %v150
  %v884 = vunpack.c.l.b16 %v151
  %v885 = vunpack.c.h.b16 %v151
  %v886 = vunpack.c.l.b16 %v152
  %v887 = vunpack.c.h.b16 %v152
  %v888 = vunpack.c.l.b16 %v153
  %v889 = vunpack.c.h.b16 %v153
  %v890 = vunpack.c.l.b16 %v154
  %v891 = vunpack.c.h.b16 %v154
  %v892 = vunpack.c.l.b16 %v155
  %v893 = vunpack.c.h.b16 %v155
  %v894 = vunpack.c.l.b16 %v156
  %v895 = vunpack.c.h.b16 %v156
  %v896 = vunpack.c.l.b16 %v157
  %v897 = vunpack.c.h.b16 %v157
  %v898 = vunpack.c.l.b16 %v158
  %v899 = vunpack.c.h.b16 %v158
  %v900 = vunpack.c.l.b16 %v159
  %v901 = vunpack.c.h.b16 %v159
  %v902 = vunpack.c.l.b16 %v160
  %v903 = vunpack.c.h.b16 %v160
  %v904 = vunpack.c.l.b16 %v161
  %v905 = vunpack.c.h.b16 %v161
  %v906 = vunpack.c.l.b16 %v162
  %v907 = vunpack.c.h.b16 %v162
  %v908 = vunpack.c.l.b16 %v163
  %v909 = vunpack.c.h.b16 %v163
  %v910 = vunpack.c.l.b16 %v164
  %v911 = vunpack.c.h.b16 %v164
  %v912 = vunpack.c.l.b16 %v165
  %v913 = vunpack.c.h.b16 %v165
  %v914 = vunpack.c.l.b16 %v166
  %v915 = vunpack.c.h.b16 %v166
  %v916 = vunpack.c.l.b16 %v167
  %v917 = vunpack.c.h.b16 %v167
  %v918 = vunpack.c.l.b16 %v168
  %v919 = vunpack.c.h.b16 %v168
  %v920 = vunpack.c.l.b16 %v169
  %v921 = vunpack.c.h.b16 %v169
  %v922 = vunpack.c.l.b16 %v170
  %v923 = vunpack.c.h.b16 %v170
  %v924 = vunpack.c.l.b16 %v171
  %v925 = vunpack.c.h.b16 %v171
  %v926 = vunpack.c.l.b16 %v172
  %v927 = vunpack.c.h.b16 %v172
  %v928 = vunpack.c.l.b16 %v173
  %v929 = vunpack.c.h.b16 %v173
  %v930 = vunpack.c.l.b16 %v174
  %v931 = vunpack.c.h.b16 %v174
  %v932 = vunpack.c.l.b16 %v175
  %v933 = vunpack.c.h.b16 %v175
  %v934 = vunpack.c.l.b16 %v176
  %v935 = vunpack.c.h.b16 %v176
  %v936 = vunpack.c.l.b16 %v177
  %v937 = vunpack.c.h.b16 %v177
  %v938 = vunpack.c.l.b16 %v178
  %v939 = vunpack.c.h.b16 %v178
  %v940 = vunpack.c.l.b16 %v179
  %v941 = vunpack.c.h.b16 %v179
  %v942 = vunpack.c.l.b16 %v180
  %v943 = vunpack.c.h.b16 %v180
  %v944 = vunpack.c.l.b16 %v181
  %v945 = vunpack.c.h.b16 %v181
  %v946 = vpack.c.b16 %v626, %v610
  %v947 = vpack.c.b16 %v627, %v611
  %v948 = vpack.c.b16 %v628, %v612
  %v949 = vpack.c.b16 %v629, %v613
  %v950 = vpack.c.b16 %v630, %v614
  %v951 = vpack.c.b16 %v631, %v615
  %v952 = vpack.c.b16 %v632, %v616
  %v953 = vpack.c.b16 %v633, %v617
  %v954 = vpack.c.b16 %v634, %v618
  %v955 = vpack.c.b16 %v635, %v619
  %v956 = vpack.c.b16 %v636, %v620
  %v957 = vpack.c.b16 %v637, %v621
  %v958 = vpack.c.b16 %v638, %v622
  %v959 = vpack.c.b16 %v639, %v623
  %v960 = vpack.c.b16 %v640, %v624
  %v961 = vpack.c.b16 %v641, %v625
  %v962 = vpack.c.b16 %v658, %v642
  %v963 = vpack.c.b16 %v659, %v643
  %v964 = vpack.c.b16 %v660, %v644
  %v965 = vpack.c.b16 %v661, %v645
  %v966 = vpack.c.b16 %v662, %v646
  %v967 = vpack.c.b16 %v663, %v647
  %v968 = vpack.c.b16 %v664, %v648
  %v969 = vpack.c.b16 %v665, %v649
  %v970 = vpack.c.b16 %v666, %v650
  %v971 = vpack.c.b16 %v667, %v651
  %v972 = vpack.c.b16 %v668, %v652
  %v973 = vpack.c.b16 %v669, %v653
  %v974 = vpack.c.b16 %v670, %v654
  %v975 = vpack.c.b16 %v671, %v655
  %v976 = vpack.c.b16 %v672, %v656
  %v977 = vpack.c.b16 %v673, %v657
  %v978 = vpack.c.b16 %v690, %v674
  %v979 = vpack.c.b16 %v691, %v675
  %v980 = vpack.c.b16 %v692, %v676
  %v981 = vpack.c.b16 %v693, %v677
  %v982 = vpack.c.b16 %v694, %v678
  %v983 = vpack.c.b16 %v695, %v679
  %v984 = vpack.c.b16 %v696, %v680
  %v985 = vpack.c.b16 %v697, %v681
  %v986 = vpack.c.b16 %v698, %v682
  %v987 = vpack.c.b16 %v699, %v683
  %v988 = vpack.c.b16 %v700, %v684
  %v989 = vpack.c.b16 %v701, %v685
  %v990 = vpack.c.b16 %v702, %v686
  %v991 = vpack.c.b16 %v703, %v687
  %v992 = vpack.c.b16 %v704, %v688
  %v993 = vpack.c.b16 %v705, %v689
  %v994 = vpack.c.b16 %v722, %v706
  %v995 = vpack.c.b16 %v723, %v707
  %v996 = vpack.c.b16 %v724, %v708
  %v997 = vpack.c.b16 %v725, %v709
  %v998 = vpack.c.b16 %v726, %v710
  %v999 = vpack.c.b16 %v727, %v711
  %v1000 = vpack.c.b16 %v728, %v712
  %v1001 = vpack.c.b16 %v729, %v713
  %v1002 = vpack.c.b16 %v730, %v714
  %v1003 = vpack.c.b16 %v731, %v715
  %v1004 = vpack.c.b16 %v732, %v716
  %v1005 = vpack.c.b16 %v733, %v717
  %v1006 = vpack.c.b16 %v734, %v718
  %v1007 = vpack.c.b16 %v735, %v719
  %v1008 = vpack.c.b16 %v736, %v720
  %v1009 = vpack.c.b16 %v737, %v721
  %v1010 = vpack.c.b16 %v754, %v738
  %v1011 = vpack.c.b16 %v755, %v739
  %v1012 = vpack.c.b16 %v756, %v740
  %v1013 = vpack.c.b16 %v757, %v741
  %v1014 = vpack.c.b16 %v758, %v742
  %v1015 = vpack.c.b16 %v759, %v743
  %v1016 = vpack.c.b16 %v760, %v744
  %v1017 = vpack.c.b16 %v761, %v745
  %v1018 = vpack.c.b16 %v762, %v746
  %v1019 = vpack.c.b16 %v763, %v747
  %v1020 = vpack.c.b16 %v764, %v748
  %v1021 = vpack.c.b16 %v765, %v749
  %v1022 = vpack.c.b16 %v766, %v750
  %v1023 = vpack.c.b16 %v767, %v751
  %v1024 = vpack.c.b16 %v768, %v752
  %v1025 = vpack.c.b16 %v769, %v753
  %v1026 = vpack.c.b16 %v786, %v770
  %v1027 = vpack.c.b16 %v787, %v771
  %v1028 = vpack.c.b16 %v788, %v772
  %v1029 = vpack.c.b16 %v789, %v773
  %v1030 = vpack.c.b16 %v790, %v774
  %v1031 = vpack.c.b16 %v791, %v775
  %v1032 = vpack.c.b16 %v792, %v776
  %v1033 = vpack.c.b16 %v793, %v777
  %v1034 = vpack.c.b16 %v794, %v778
  %v1035 = vpack.c.b16 %v795, %v779
  %v1036 = vpack.c.b16 %v796, %v780
  %v1037 = vpack.c.b16 %v797, %v781
  %v1038 = vpack.c.b16 %v798, %v782
  %v1039 = vpack.c.b16 %v799, %v783
  %v1040 = vpack.c.b16 %v800, %v784
  %v1041 = vpack.c.b16 %v801, %v785
  %v1042 = vpack.c.b16 %v818, %v802
  %v1043 = vpack.c.b16 %v819, %v803
  %v1044 = vpack.c.b16 %v820, %v804
  %v1045 = vpack.c.b16 %v821, %v805
  %v1046 = vpack.c.b16 %v822, %v806
  %v1047 = vpack.c.b16 %v823, %v807
  %v1048 = vpack.c.b16 %v824, %v808
  %v1049 = vpack.c.b16 %v825, %v809
  %v1050 = vpack.c.b16 %v826, %v810
  %v1051 = vpack.c.b16 %v827, %v811
  %v1052 = vpack.c.b16 %v828, %v812
  %v1053 = vpack.c.b16 %v829, %v813
  %v1054 = vpack.c.b16 %v830, %v814
  %v1055 = vpack.c.b16 %v831, %v815
  %v1056 = vpack.c.b16 %v832, %v816
  %v1057 = vpack.c.b16 %v833, %v817
  %v1058 = vpack.c.b16 %v850, %v834
  %v1059 = vpack.c.b16 %v851, %v835
  %v1060 = vpack.c.b16 %v852, %v836
  %v1061 = vpack.c.b16 %v853, %v837
  %v1062 = vpack.c.b16 %v854, %v838
  %v1063 = vpack.c.b16 %v855, %v839
  %v1064 = vpack.c.b16 %v856, %v840
  %v1065 = vpack.c.b16 %v857, %v841
  %v1066 = vpack.c.b16 %v858, %v842
  %v1067 = vpack.c.b16 %v859, %v843
  %v1068 = vpack.c.b16 %v860, %v844
  %v1069 = vpack.c.b16 %v861, %v845
  %v1070 = vpack.c.b16 %v862, %v846
  %v1071 = vpack.c.b16 %v863, %v847
  %v1072 = vpack.c.b16 %v864, %v848
  %v1073 = vpack.c.b16 %v865, %v849
  %v1074 = vpack.c.b16 %v882, %v866
  %v1075 = vpack.c.b16 %v883, %v867
  %v1076 = vpack.c.b16 %v884, %v868
  %v1077 = vpack.c.b16 %v885, %v869
  %v1078 = vpack.c.b16 %v886, %v870
  %v1079 = vpack.c.b16 %v887, %v871
  %v1080 = vpack.c.b16 %v888, %v872
  %v1081 = vpack.c.b16 %v889, %v873
  %v1082 = vpack.c.b16 %v890, %v874
  %v1083 = vpack.c.b16 %v891, %v875
  %v1084 = vpack.c.b16 %v892, %v876
  %v1085 = vpack.c.b16 %v893, %v877
  %v1086 = vpack.c.b16 %v894, %v878
  %v1087 = vpack.c.b16 %v895, %v879
  %v1088 = vpack.c.b16 %v896, %v880
  %v1089 = vpack.c.b16 %v897, %v881
  %v1090 = vpack.c.b16 %v914, %v898
  %v1091 = vpack.c.b16 %v915, %v899
  %v1092 = vpack.c.b16 %v916, %v900
  %v1093 = vpack.c.b16 %v917, %v901
  %v1094 = vpack.c.b16 %v918, %v902
  %v1095 = vpack.c.b16 %v919, %v903
  %v1096 = vpack.c.b16 %v920, %v904
  %v1097 = vpack.c.b16 %v921, %v905
  %v1098 = vpack.c.b16 %v922, %v906
  %v1099 = vpack.c.b16 %v923, %v907
  %v1100 = vpack.c.b16 %v924, %v908
  %v1101 = vpack.c.b16 %v925, %v909
  %v1102 = vpack.c.b16 %v926, %v910
  %v1103 = vpack.c.b16 %v927, %v911
  %v1104 = vpack.c.b16 %v928, %v912
  %v1105 = vpack.c.b16 %v929, %v913
  %v1106 = vpack.c.b16 %v930, %v930
  %v1107 = vpack.c.b16 %v931, %v931
  %v1108 = vpack.c.b16 %v932, %v932
  %v1109 = vpack.c.b16 %v933, %v933
  %v1110 = vpack.c.b16 %v934, %v934
  %v1111 = vpack.c.b16 %v935, %v935
  %v1112 = vpack.c.b16 %v936, %v936
  %v1113 = vpack.c.b16 %v937, %v937
  %v1114 = vpack.c.b16 %v938, %v938
  %v1115 = vpack.c.b16 %v939, %v939
  %v1116 = vpack.c.b16 %v940, %v940
  %v1117 = vpack.c.b16 %v941, %v941
  %v1118 = vpack.c.b16 %v942, %v942
  %v1119 = vpack.c.b16 %v943, %v943
  %v1120 = vpack.c.b16 %v944, %v944
  %v1121 = vpack.c.b16 %v945, %v945
  %v1554 = vunpack.c.l.b16 %v182
  %v1555 = vunpack.c.l.b16 %v183
  %v1556 = vunpack.c.l.b16 %v184
  %v1557 = vunpack.c.l.b16 %v185
  %v1558 = vunpack.c.l.b16 %v186
  %v1559 = vunpack.c.l.b16 %v187
  %v1560 = vunpack.c.l.b16 %v188
  %v1561 = vunpack.c.l.b16 %v189
  %v1562 = vunpack.c.l.b16 %v190
  %v1563 = vunpack.c.l.b16 %v191
  %v1564 = vunpack.c.l.b16 %v192
  %v1565 = vunpack.c.l.b16 %v193
  %v1566 = vunpack.c.l.b16 %v194
  %v1567 = vunpack.c.l.b16 %v195
  %v1568 = vunpack.c.l.b16 %v196
  %v1569 = vunpack.c.l.b16 %v197
  %v1570 = vunpack.c.l.b16 %v198
  %v1571 = vunpack.c.l.b16 %v199
  %v1572 = vunpack.c.l.b16 %v200
  %v1573 = vunpack.c.l.b16 %v201
  %v1574 = vunpack.c.l.b16 %v202
  %v1575 = vunpack.c.l.b16 %v203
  %v1576 = vunpack.c.l.b16 %v204
  %v1577 = vunpack.c.l.b16 %v205
  %v1578 = vunpack.c.l.b16 %v206
  %v1579 = vunpack.c.l.b16 %v207
  %v1580 = vunpack.c.l.b16 %v208
  %v1581 = vunpack.c.l.b16 %v209
  %v1582 = vunpack.c.l.b16 %v210
  %v1583 = vunpack.c.l.b16 %v211
  %v1584 = vunpack.c.l.b16 %v212
  %v1585 = vunpack.c.l.b16 %v213
  %v1586 = vunpack.c.l.b16 %v214
  %v1587 = vunpack.c.l.b16 %v215
  %v1588 = vunpack.c.l.b16 %v216
  %v1589 = vunpack.c.l.b16 %v217
  %v1590 = vunpack.c.l.b16 %v218
  %v1591 = vunpack.c.l.b16 %v219
  %v1592 = vunpack.c.l.b16 %v220
  %v1593 = vunpack.c.l.b16 %v221
  %v1594 = vunpack.c.l.b16 %v222
  %v1595 = vunpack.c.l.b16 %v223
  %v1596 = vunpack.c.l.b16 %v224
  %v1597 = vunpack.c.l.b16 %v225
  %v1598 = vunpack.c.l.b16 %v226
  %v1599 = vunpack.c.l.b16 %v227
  %v1600 = vunpack.c.l.b16 %v228
  %v1601 = vunpack.c.l.b16 %v229
  %v1602 = vunpack.c.l.b16 %v230
  %v1603 = vunpack.c.l.b16 %v231
  %v1604 = vunpack.c.l.b16 %v232
  %v1605 = vunpack.c.l.b16 %v233
  %v1606 = vunpack.c.l.b16 %v234
  %v1607 = vunpack.c.l.b16 %v235
  %v1608 = vunpack.c.l.b16 %v236
  %v1609 = vunpack.c.l.b16 %v237
  %v1610 = vunpack.c.l.b16 %v238
  %v1611 = vunpack.c.l.b16 %v239
  %v1612 = vunpack.c.l.b16 %v240
  %v1613 = vunpack.c.l.b16 %v241
  %v1614 = vunpack.c.l.b16 %v242
  %v1615 = vunpack.c.l.b16 %v243
  %v1616 = vunpack.c.l.b16 %v244
  %v1617 = vunpack.c.l.b16 %v245
  %v1618 = vunpack.c.l.b16 %v246
  %v1619 = vunpack.c.l.b16 %v247
  %v1620 = vunpack.c.l.b16 %v248
  %v1621 = vunpack.c.l.b16 %v249
  %v1622 = vunpack.c.l.b16 %v250
  %v1623 = vunpack.c.l.b16 %v251
  %v1624 = vunpack.c.l.b16 %v252
  %v1625 = vunpack.c.l.b16 %v253
  %v1626 = vunpack.c.l.b16 %v254
  %v1627 = vunpack.c.l.b16 %v255
  %v1628 = vunpack.c.l.b16 %v256
  %v1629 = vunpack.c.l.b16 %v257
  %v1630 = vunpack.c.l.b16 %v258
  %v1631 = vunpack.c.l.b16 %v259
  %v1632 = vunpack.c.l.b16 %v260
  %v1633 = vunpack.c.l.b16 %v261
  %v1634 = vunpack.c.l.b16 %v262
  %v1635 = vunpack.c.l.b16 %v263
  %v1636 = vunpack.c.l.b16 %v264
  %v1637 = vunpack.c.l.b16 %v265
  %v1638 = vunpack.c.l.b16 %v266
  %v1639 = vunpack.c.l.b16 %v267
  %v1640 = vunpack.c.l.b16 %v268
  %v1641 = vunpack.c.l.b16 %v269
  %v1642 = vunpack.c.l.b16 %v270
  %v1643 = vunpack.c.l.b16 %v271
  %v1644 = vunpack.c.l.b16 %v272
  %v1645 = vunpack.c.l.b16 %v273
  %v1646 = vunpack.c.l.b16 %v274
  %v1647 = vunpack.c.l.b16 %v275
  %v1648 = vunpack.c.l.b16 %v276
  %v1649 = vunpack.c.l.b16 %v277
  %v1650 = vunpack.c.l.b16 %v278
  %v1651 = vunpack.c.l.b16 %v279
  %v1652 = vunpack.c.l.b16 %v280
  %v1653 = vunpack.c.l.b16 %v281
  %v1654 = vunpack.c.l.b16 %v282
  %v1655 = vunpack.c.l.b16 %v283
  %v1656 = vunpack.c.l.b16 %v284
  %v1657 = vunpack.c.l.b16 %v285
  %v1658 = vunpack.c.l.b16 %v286
  %v1659 = vunpack.c.l.b16 %v287
  %v1660 = vunpack.c.l.b16 %v288
  %v1661 = vunpack.c.l.b16 %v289
  %v1662 = vunpack.c.l.b16 %v290
  %v1663 = vunpack.c.l.b16 %v291
  %v1664 = vunpack.c.l.b16 %v292
  %v1665 = vunpack.c.l.b16 %v293
  %v1666 = vunpack.c.l.b16 %v294
  %v1667 = vunpack.c.l.b16 %v295
  %v1668 = vunpack.c.l.b16 %v296
  %v1669 = vunpack.c.l.b16 %v297
  %v1670 = vunpack.c.l.b16 %v298
  %v1671 = vunpack.c.l.b16 %v299
  %v1672 = vunpack.c.l.b16 %v300
  %v1673 = vunpack.c.l.b16 %v301
  %v1674 = vunpack.c.l.b16 %v302
  %v1675 = vunpack.c.l.b16 %v303
  %v1676 = vunpack.c.l.b16 %v304
  %v1677 = vunpack.c.l.b16 %v305
  %v1678 = vunpack.c.l.b16 %v306
  %v1679 = vunpack.c.l.b16 %v307
  %v1680 = vunpack.c.l.b16 %v308
  %v1681 = vunpack.c.l.b16 %v309
  %v1682 = vunpack.c.l.b16 %v310
  %v1683 = vunpack.c.l.b16 %v311
  %v1684 = vunpack.c.l.b16 %v312
  %v1685 = vunpack.c.l.b16 %v313
  %v1686 = vunpack.c.l.b16 %v314
  %v1687 = vunpack.c.l.b16 %v315
  %v1688 = vunpack.c.l.b16 %v316
  %v1689 = vunpack.c.l.b16 %v317
  %v1690 = vunpack.c.l.b16 %v318
  %v1691 = vunpack.c.l.b16 %v319
  %v1692 = vunpack.c.l.b16 %v320
  %v1693 = vunpack.c.l.b16 %v321
  %v1694 = vunpack.c.l.b16 %v322
  %v1695 = vunpack.c.l.b16 %v323
  %v1696 = vunpack.c.l.b16 %v324
  %v1697 = vunpack.c.l.b16 %v325
  %v1698 = vunpack.c.l.b16 %v326
  %v1699 = vunpack.c.l.b16 %v327
  %v1700 = vunpack.c.l.b16 %v328
  %v1701 = vunpack.c.l.b16 %v329
  %v1702 = vunpack.c.l.b16 %v330
  %v1703 = vunpack.c.l.b16 %v331
  %v1704 = vunpack.c.l.b16 %v332
  %v1705 = vunpack.c.l.b16 %v333
  %v1706 = vunpack.c.l.b16 %v334
  %v1707 = vunpack.c.l.b16 %v335
  %v1708 = vunpack.c.l.b16 %v336
  %v1709 = vunpack.c.l.b16 %v337
  %v1710 = vunpack.c.l.b16 %v338
  %v1711 = vunpack.c.l.b16 %v339
  %v1712 = vunpack.c.l.b16 %v340
  %v1713 = vunpack.c.l.b16 %v341
  %v1714 = vunpack.c.l.b16 %v342
  %v1715 = vunpack.c.l.b16 %v343
  %v1716 = vunpack.c.l.b16 %v344
  %v1717 = vunpack.c.l.b16 %v345
  %v1718 = vunpack.c.l.b16 %v346
  %v1719 = vunpack.c.l.b16 %v347
  %v1720 = vunpack.c.l.b16 %v348
  %v1721 = vunpack.c.l.b16 %v349
  %v1722 = vunpack.c.l.b16 %v350
  %v1723 = vunpack.c.l.b16 %v351
  %v1724 = vunpack.c.l.b16 %v352
  %v1725 = vunpack.c.l.b16 %v353
  %v1726 = vunpack.c.l.b16 %v354
  %v1727 = vunpack.c.l.b16 %v355
  %v1728 = vunpack.c.l.b16 %v356
  %v1729 = vunpack.c.l.b16 %v357
  %v1730 = vunpack.c.l.b16 %v358
  %v1731 = vunpack.c.l.b16 %v359
  %v1732 = vunpack.c.l.b16 %v360
  %v1733 = vunpack.c.l.b16 %v361
  %v1734 = vunpack.c.l.b16 %v362
  %v1735 = vunpack.c.l.b16 %v363
  %v1736 = vunpack.c.l.b16 %v364
  %v1737 = vunpack.c.l.b16 %v365
  %v1738 = vunpack.c.l.b16 %v366
  %v1739 = vunpack.c.l.b16 %v367
  %v1740 = vunpack.c.l.b16 %v368
  %v1741 = vunpack.c.l.b16 %v369
  %v1742 = vunpack.c.l.b16 %v370
  %v1743 = vunpack.c.l.b16 %v371
  %v1744 = vunpack.c.l.b16 %v372
  %v1745 = vunpack.c.l.b16 %v373
  %v1746 = vunpack.c.l.b16 %v374
  %v1747 = vunpack.c.l.b16 %v375
  %v1748 = vunpack.c.l.b16 %v376
  %v1749 = vunpack.c.l.b16 %v377
  %v1750 = vunpack.c.l.b16 %v378
  %v1751 = vunpack.c.l.b16 %v379
  %v1752 = vunpack.c.l.b16 %v380
  %v1753 = vunpack.c.l.b16 %v381
  %v1754 = vunpack.c.l.b16 %v382
  %v1755 = vunpack.c.l.b16 %v383
  %v1756 = vunpack.c.l.b16 %v384
  %v1757 = vunpack.c.l.b16 %v385
  %v1758 = vunpack.c.l.b16 %v386
  %v1759 = vunpack.c.l.b16 %v387
  %v1760 = vunpack.c.l.b16 %v388
  %v1761 = vunpack.c.l.b16 %v389
  %v1762 = vunpack.c.l.b16 %v390
  %v1763 = vunpack.c.l.b16 %v391
  %v1764 = vunpack.c.l.b16 %v392
  %v1765 = vunpack.c.l.b16 %v393
  %v1766 = vunpack.c.l.b16 %v394
  %v1767 = vunpack.c.l.b16 %v395
  %v1768 = vunpack.c.l.b16 %v396
  %v1769 = vunpack.c.l.b16 %v397
  %v1770 = vunpack.c.l.b16 %v398
  %v1771 = vunpack.c.l.b16 %v399
  %v1772 = vunpack.c.l.b16 %v400
  %v1773 = vunpack.c.l.b16 %v401
  %v1774 = vunpack.c.l.b16 %v402
  %v1775 = vunpack.c.l.b16 %v403
  %v1776 = vunpack.c.l.b16 %v404
  %v1777 = vunpack.c.l.b16 %v405
  %v1778 = vunpack.c.l.b16 %v406
  %v1779 = vunpack.c.l.b16 %v407
  %v1780 = vunpack.c.l.b16 %v408
  %v1781 = vunpack.c.l.b16 %v409
  %v1782 = vunpack.c.l.b16 %v410
  %v1783 = vunpack.c.l.b16 %v411
  %v1784 = vunpack.c.l.b16 %v412
  %v1785 = vunpack.c.l.b16 %v413
  %v1786 = vunpack.c.l.b16 %v414
  %v1787 = vunpack.c.l.b16 %v415
  %v1788 = vunpack.c.l.b16 %v416
  %v1789 = vunpack.c.l.b16 %v417
  %v1790 = vunpack.c.l.b16 %v418
  %v1791 = vunpack.c.l.b16 %v419
  %v1792 = vunpack.c.l.b16 %v420
  %v1793 = vunpack.c.l.b16 %v421
  %v1794 = vunpack.c.l.b16 %v422
  %v1795 = vunpack.c.l.b16 %v423
  %v1796 = vunpack.c.l.b16 %v424
  %v1797 = vunpack.c.l.b16 %v425
  %v1798 = vunpack.c.l.b16 %v426
  %v1799 = vunpack.c.l.b16 %v427
  %v1800 = vunpack.c.l.b16 %v428
  %v1801 = vunpack.c.l.b16 %v429
  %v1802 = vunpack.c.l.b16 %v430
  %v1803 = vunpack.c.l.b16 %v431
  %v1804 = vunpack.c.l.b16 %v432
  %v1805 = vunpack.c.l.b16 %v433
  %v1806 = vunpack.c.l.b16 %v434
  %v1807 = vunpack.c.l.b16 %v435
  %v1808 = vunpack.c.l.b16 %v436
  %v1809 = vunpack.c.l.b16 %v437
  %v1810 = vpack.c.b16 %v1555, %v1554
  %v1811 = vpack.c.b16 %v1557, %v1556
  %v1812 = vpack.c.b16 %v1559, %v1558
  %v1813 = vpack.c.b16 %v1561, %v1560
  %v1814 = vpack.c.b16 %v1563, %v1562
  %v1815 = vpack.c.b16 %v1565, %v1564
  %v1816 = vpack.c.b16 %v1567, %v1566
  %v1817 = vpack.c.b16 %v1569, %v1568
  %v1818 = vpack.c.b16 %v1571, %v1570
  %v1819 = vpack.c.b16 %v1573, %v1572
  %v1820 = vpack.c.b16 %v1575, %v1574
  %v1821 = vpack.c.b16 %v1577, %v1576
  %v1822 = vpack.c.b16 %v1579, %v1578
  %v1823 = vpack.c.b16 %v1581, %v1580
  %v1824 = vpack.c.b16 %v1583, %v1582
  %v1825 = vpack.c.b16 %v1585, %v1584
  %v1826 = vpack.c.b16 %v1587, %v1586
  %v1827 = vpack.c.b16 %v1589, %v1588
  %v1828 = vpack.c.b16 %v1591, %v1590
  %v1829 = vpack.c.b16 %v1593, %v1592
  %v1830 = vpack.c.b16 %v1595, %v1594
  %v1831 = vpack.c.b16 %v1597, %v1596
  %v1832 = vpack.c.b16 %v1599, %v1598
  %v1833 = vpack.c.b16 %v1601, %v1600
  %v1834 = vpack.c.b16 %v1603, %v1602
  %v1835 = vpack.c.b16 %v1605, %v1604
  %v1836 = vpack.c.b16 %v1607, %v1606
  %v1837 = vpack.c.b16 %v1609, %v1608
  %v1838 = vpack.c.b16 %v1611, %v1610
  %v1839 = vpack.c.b16 %v1613, %v1612
  %v1840 = vpack.c.b16 %v1615, %v1614
  %v1841 = vpack.c.b16 %v1617, %v1616
  %v1842 = vpack.c.b16 %v1619, %v1618
  %v1843 = vpack.c.b16 %v1621, %v1620
  %v1844 = vpack.c.b16 %v1623, %v1622
  %v1845 = vpack.c.b16 %v1625, %v1624
  %v1846 = vpack.c.b16 %v1627, %v1626
  %v1847 = vpack.c.b16 %v1629, %v1628
  %v1848 = vpack.c.b16 %v1631, %v1630
  %v1849 = vpack.c.b16 %v1633, %v1632
  %v1850 = vpack.c.b16 %v1635, %v1634
  %v1851 = vpack.c.b16 %v1637, %v1636
  %v1852 = vpack.c.b16 %v1639, %v1638
  %v1853 = vpack.c.b16 %v1641, %v1640
  %v1854 = vpack.c.b16 %v1643, %v1642
  %v1855 = vpack.c.b16 %v1645, %v1644
  %v1856 = vpack.c.b16 %v1647, %v1646
  %v1857 = vpack.c.b16 %v1649, %v1648
  %v1858 = vpack.c.b16 %v1651, %v1650
  %v1859 = vpack.c.b16 %v1653, %v1652
  %v1860 = vpack.c.b16 %v1655, %v1654
  %v1861 = vpack.c.b16 %v1657, %v1656
  %v1862 = vpack.c.b16 %v1659, %v1658
  %v1863 = vpack.c.b16 %v1661, %v1660
  %v1864 = vpack.c.b16 %v1663, %v1662
  %v1865 = vpack.c.b16 %v1665, %v1664
  %v1866 = vpack.c.b16 %v1667, %v1666
  %v1867 = vpack.c.b16 %v1669, %v1668
  %v1868 = vpack.c.b16 %v1671, %v1670
  %v1869 = vpack.c.b16 %v1673, %v1672
  %v1870 = vpack.c.b16 %v1675, %v1674
  %v1871 = vpack.c.b16 %v1677, %v1676
  %v1872 = vpack.c.b16 %v1679, %v1678
  %v1873 = vpack.c.b16 %v1681, %v1680
  %v1874 = vpack.c.b16 %v1683, %v1682
  %v1875 = vpack.c.b16 %v1685, %v1684
  %v1876 = vpack.c.b16 %v1687, %v1686
  %v1877 = vpack.c.b16 %v1689, %v1688
  %v1878 = vpack.c.b16 %v1691, %v1690
  %v1879 = vpack.c.b16 %v1693, %v1692
  %v1880 = vpack.c.b16 %v1695, %v1694
  %v1881 = vpack.c.b16 %v1697, %v1696
  %v1882 = vpack.c.b16 %v1699, %v1698
  %v1883 = vpack.c.b16 %v1701, %v1700
  %v1884 = vpack.c.b16 %v1703, %v1702
  %v1885 = vpack.c.b16 %v1705, %v1704
  %v1886 = vpack.c.b16 %v1707, %v1706
  %v1887 = vpack.c.b16 %v1709, %v1708
  %v1888 = vpack.c.b16 %v1711, %v1710
  %v1889 = vpack.c.b16 %v1713, %v1712
  %v1890 = vpack.c.b16 %v1715, %v1714
  %v1891 = vpack.c.b16 %v1717, %v1716
  %v1892 = vpack.c.b16 %v1719, %v1718
  %v1893 = vpack.c.b16 %v1721, %v1720
  %v1894 = vpack.c.b16 %v1723, %v1722
  %v1895 = vpack.c.b16 %v1725, %v1724
  %v1896 = vpack.c.b16 %v1727, %v1726
  %v1897 = vpack.c.b16 %v1729, %v1728
  %v1898 = vpack.c.b16 %v1731, %v1730
  %v1899 = vpack.c.b16 %v1733, %v1732
  %v1900 = vpack.c.b16 %v1735, %v1734
  %v1901 = vpack.c.b16 %v1737, %v1736
  %v1902 = vpack.c.b16 %v1739, %v1738
  %v1903 = vpack.c.b16 %v1741, %v1740
  %v1904 = vpack.c.b16 %v1743, %v1742
  %v1905 = vpack.c.b16 %v1745, %v1744
  %v1906 = vpack.c.b16 %v1747, %v1746
  %v1907 = vpack.c.b16 %v1749, %v1748
  %v1908 = vpack.c.b16 %v1751, %v1750
  %v1909 = vpack.c.b16 %v1753, %v1752
  %v1910 = vpack.c.b16 %v1755, %v1754
  %v1911 = vpack.c.b16 %v1757, %v1756
  %v1912 = vpack.c.b16 %v1759, %v1758
  %v1913 = vpack.c.b16 %v1761, %v1760
  %v1914 = vpack.c.b16 %v1763, %v1762
  %v1915 = vpack.c.b16 %v1765, %v1764
  %v1916 = vpack.c.b16 %v1767, %v1766
  %v1917 = vpack.c.b16 %v1769, %v1768
  %v1918 = vpack.c.b16 %v1771, %v1770
  %v1919 = vpack.c.b16 %v1773, %v1772
  %v1920 = vpack.c.b16 %v1775, %v1774
  %v1921 = vpack.c.b16 %v1777, %v1776
  %v1922 = vpack.c.b16 %v1779, %v1778
  %v1923 = vpack.c.b16 %v1781, %v1780
  %v1924 = vpack.c.b16 %v1783, %v1782
  %v1925 = vpack.c.b16 %v1785, %v1784
  %v1926 = vpack.c.b16 %v1787, %v1786
  %v1927 = vpack.c.b16 %v1789, %v1788
  %v1928 = vpack.c.b16 %v1791, %v1790
  %v1929 = vpack.c.b16 %v1793, %v1792
  %v1930 = vpack.c.b16 %v1795, %v1794
  %v1931 = vpack.c.b16 %v1797, %v1796
  %v1932 = vpack.c.b16 %v1799, %v1798
  %v1933 = vpack.c.b16 %v1801, %v1800
  %v1934 = vpack.c.b16 %v1803, %v1802
  %v1935 = vpack.c.b16 %v1805, %v1804
  %v1936 = vpack.c.b16 %v1807, %v1806
  %v1937 = vpack.c.b16 %v1809, %v1808
  %2066 = vmatpush.bf16.msra.mxu0 %v1817
  %2067 = vmatpush.bf16.msra.mxu0 %v1816
  %2068 = vmatpush.bf16.msra.mxu0 %v1815
  %2069 = vmatpush.bf16.msra.mxu0 %v1814
  %2070 = vmatpush.bf16.msra.mxu0 %v1813
  %2071 = vmatpush.bf16.msra.mxu0 %v1812
  %2072 = vmatpush.bf16.msra.mxu0 %v1811
  %2073 = vmatpush.bf16.msra.mxu0 %v1810
  %2074 = vmatmul.bf16.gmra.mxu0 %v946
  %v2075 = vpop.f32.mrf.mxu0
  %v2076 = vadd.f32 %v440, %v2075
  %v2077 = vpop.f32.mrf.mxu0
  %v2078 = vadd.f32 %v440, %v2077
  %2079 = vmatmul.bf16.gmra.mxu0 %v962
  %v2080 = vpop.f32.mrf.mxu0
  %v2081 = vadd.f32 %v440, %v2080
  %v2082 = vpop.f32.mrf.mxu0
  %v2083 = vadd.f32 %v440, %v2082
  %2084 = vmatmul.bf16.gmra.mxu0 %v978
  %v2085 = vpop.f32.mrf.mxu0
  %v2086 = vadd.f32 %v440, %v2085
  %v2087 = vpop.f32.mrf.mxu0
  %v2088 = vadd.f32 %v440, %v2087
  %2089 = vmatmul.bf16.gmra.mxu0 %v994
  %v2090 = vpop.f32.mrf.mxu0
  %v2091 = vadd.f32 %v440, %v2090
  %v2092 = vpop.f32.mrf.mxu0
  %v2093 = vadd.f32 %v440, %v2092
  %2094 = vmatmul.bf16.gmra.mxu0 %v1010
  %v2095 = vpop.f32.mrf.mxu0
  %v2096 = vadd.f32 %v440, %v2095
  %v2097 = vpop.f32.mrf.mxu0
  %v2098 = vadd.f32 %v440, %v2097
  %2099 = vmatmul.bf16.gmra.mxu0 %v1026
  %v2100 = vpop.f32.mrf.mxu0
  %v2101 = vadd.f32 %v440, %v2100
  %v2102 = vpop.f32.mrf.mxu0
  %v2103 = vadd.f32 %v440, %v2102
  %2104 = vmatmul.bf16.gmra.mxu0 %v1042
  %v2105 = vpop.f32.mrf.mxu0
  %v2106 = vadd.f32 %v440, %v2105
  %v2107 = vpop.f32.mrf.mxu0
  %v2108 = vadd.f32 %v440, %v2107
  %2109 = vmatmul.bf16.gmra.mxu0 %v1058
  %v2110 = vpop.f32.mrf.mxu0
  %v2111 = vadd.f32 %v440, %v2110
  %v2112 = vpop.f32.mrf.mxu0
  %v2113 = vadd.f32 %v440, %v2112
  %2114 = vmatmul.bf16.gmra.mxu0 %v1074
  %v2115 = vpop.f32.mrf.mxu0
  %v2116 = vadd.f32 %v440, %v2115
  %v2117 = vpop.f32.mrf.mxu0
  %v2118 = vadd.f32 %v440, %v2117
  %2119 = vmatmul.bf16.gmra.mxu0 %v1090
  %v2120 = vpop.f32.mrf.mxu0
  %v2121 = vadd.f32 %v440, %v2120
  %v2122 = vpop.f32.mrf.mxu0
  %v2123 = vadd.f32 %v440, %v2122
  %2124 = vmatmul.bf16.gmra.mxu0 %v1106
  %v2125 = vpop.f32.mrf.mxu0
  %v2126 = vadd.f32 %v440, %v2125
  %v2127 = vpop.f32.mrf.mxu0
  %2128 = vdwg.mxu0
  %2129 = vmatpush.bf16.msra.mxu0 %v1825
  %2130 = vmatpush.bf16.msra.mxu0 %v1824
  %2131 = vmatpush.bf16.msra.mxu0 %v1823
  %2132 = vmatpush.bf16.msra.mxu0 %v1822
  %2133 = vmatpush.bf16.msra.mxu0 %v1821
  %2134 = vmatpush.bf16.msra.mxu0 %v1820
  %2135 = vmatpush.bf16.msra.mxu0 %v1819
  %2136 = vmatpush.bf16.msra.mxu0 %v1818
  %2137 = vmatmul.bf16.gmra.mxu0 %v947
  %v2138 = vpop.f32.mrf.mxu0
  %v2139 = vadd.f32 %v2076, %v2138
  %v2140 = vpop.f32.mrf.mxu0
  %v2141 = vadd.f32 %v2078, %v2140
  %2142 = vmatmul.bf16.gmra.mxu0 %v963
  %v2143 = vpop.f32.mrf.mxu0
  %v2144 = vadd.f32 %v2081, %v2143
  %v2145 = vpop.f32.mrf.mxu0
  %v2146 = vadd.f32 %v2083, %v2145
  %2147 = vmatmul.bf16.gmra.mxu0 %v979
  %v2148 = vpop.f32.mrf.mxu0
  %v2149 = vadd.f32 %v2086, %v2148
  %v2150 = vpop.f32.mrf.mxu0
  %v2151 = vadd.f32 %v2088, %v2150
  %2152 = vmatmul.bf16.gmra.mxu0 %v995
  %v2153 = vpop.f32.mrf.mxu0
  %v2154 = vadd.f32 %v2091, %v2153
  %v2155 = vpop.f32.mrf.mxu0
  %v2156 = vadd.f32 %v2093, %v2155
  %2157 = vmatmul.bf16.gmra.mxu0 %v1011
  %v2158 = vpop.f32.mrf.mxu0
  %v2159 = vadd.f32 %v2096, %v2158
  %v2160 = vpop.f32.mrf.mxu0
  %v2161 = vadd.f32 %v2098, %v2160
  %2162 = vmatmul.bf16.gmra.mxu0 %v1027
  %v2163 = vpop.f32.mrf.mxu0
  %v2164 = vadd.f32 %v2101, %v2163
  %v2165 = vpop.f32.mrf.mxu0
  %v2166 = vadd.f32 %v2103, %v2165
  %2167 = vmatmul.bf16.gmra.mxu0 %v1043
  %v2168 = vpop.f32.mrf.mxu0
  %v2169 = vadd.f32 %v2106, %v2168
  %v2170 = vpop.f32.mrf.mxu0
  %v2171 = vadd.f32 %v2108, %v2170
  %2172 = vmatmul.bf16.gmra.mxu0 %v1059
  %v2173 = vpop.f32.mrf.mxu0
  %v2174 = vadd.f32 %v2111, %v2173
  %v2175 = vpop.f32.mrf.mxu0
  %v2176 = vadd.f32 %v2113, %v2175
  %2177 = vmatmul.bf16.gmra.mxu0 %v1075
  %v2178 = vpop.f32.mrf.mxu0
  %v2179 = vadd.f32 %v2116, %v2178
  %v2180 = vpop.f32.mrf.mxu0
  %v2181 = vadd.f32 %v2118, %v2180
  %2182 = vmatmul.bf16.gmra.mxu0 %v1091
  %v2183 = vpop.f32.mrf.mxu0
  %v2184 = vadd.f32 %v2121, %v2183
  %v2185 = vpop.f32.mrf.mxu0
  %v2186 = vadd.f32 %v2123, %v2185
  %2187 = vmatmul.bf16.gmra.mxu0 %v1107
  %v2188 = vpop.f32.mrf.mxu0
  %v2189 = vadd.f32 %v2126, %v2188
  %v2190 = vpop.f32.mrf.mxu0
  %2191 = vdwg.mxu0
  %2192 = vmatpush.bf16.msra.mxu0 %v1833
  %2193 = vmatpush.bf16.msra.mxu0 %v1832
  %2194 = vmatpush.bf16.msra.mxu0 %v1831
  %2195 = vmatpush.bf16.msra.mxu0 %v1830
  %2196 = vmatpush.bf16.msra.mxu0 %v1829
  %2197 = vmatpush.bf16.msra.mxu0 %v1828
  %2198 = vmatpush.bf16.msra.mxu0 %v1827
  %2199 = vmatpush.bf16.msra.mxu0 %v1826
  %2200 = vmatmul.bf16.gmra.mxu0 %v948
  %v2201 = vpop.f32.mrf.mxu0
  %v2202 = vadd.f32 %v2139, %v2201
  %v2203 = vpop.f32.mrf.mxu0
  %v2204 = vadd.f32 %v2141, %v2203
  %2205 = vmatmul.bf16.gmra.mxu0 %v964
  %v2206 = vpop.f32.mrf.mxu0
  %v2207 = vadd.f32 %v2144, %v2206
  %v2208 = vpop.f32.mrf.mxu0
  %v2209 = vadd.f32 %v2146, %v2208
  %2210 = vmatmul.bf16.gmra.mxu0 %v980
  %v2211 = vpop.f32.mrf.mxu0
  %v2212 = vadd.f32 %v2149, %v2211
  %v2213 = vpop.f32.mrf.mxu0
  %v2214 = vadd.f32 %v2151, %v2213
  %2215 = vmatmul.bf16.gmra.mxu0 %v996
  %v2216 = vpop.f32.mrf.mxu0
  %v2217 = vadd.f32 %v2154, %v2216
  %v2218 = vpop.f32.mrf.mxu0
  %v2219 = vadd.f32 %v2156, %v2218
  %2220 = vmatmul.bf16.gmra.mxu0 %v1012
  %v2221 = vpop.f32.mrf.mxu0
  %v2222 = vadd.f32 %v2159, %v2221
  %v2223 = vpop.f32.mrf.mxu0
  %v2224 = vadd.f32 %v2161, %v2223
  %2225 = vmatmul.bf16.gmra.mxu0 %v1028
  %v2226 = vpop.f32.mrf.mxu0
  %v2227 = vadd.f32 %v2164, %v2226
  %v2228 = vpop.f32.mrf.mxu0
  %v2229 = vadd.f32 %v2166, %v2228
  %2230 = vmatmul.bf16.gmra.mxu0 %v1044
  %v2231 = vpop.f32.mrf.mxu0
  %v2232 = vadd.f32 %v2169, %v2231
  %v2233 = vpop.f32.mrf.mxu0
  %v2234 = vadd.f32 %v2171, %v2233
  %2235 = vmatmul.bf16.gmra.mxu0 %v1060
  %v2236 = vpop.f32.mrf.mxu0
  %v2237 = vadd.f32 %v2174, %v2236
  %v2238 = vpop.f32.mrf.mxu0
  %v2239 = vadd.f32 %v2176, %v2238
  %2240 = vmatmul.bf16.gmra.mxu0 %v1076
  %v2241 = vpop.f32.mrf.mxu0
  %v2242 = vadd.f32 %v2179, %v2241
  %v2243 = vpop.f32.mrf.mxu0
  %v2244 = vadd.f32 %v2181, %v2243
  %2245 = vmatmul.bf16.gmra.mxu0 %v1092
  %v2246 = vpop.f32.mrf.mxu0
  %v2247 = vadd.f32 %v2184, %v2246
  %v2248 = vpop.f32.mrf.mxu0
  %v2249 = vadd.f32 %v2186, %v2248
  %2250 = vmatmul.bf16.gmra.mxu0 %v1108
  %v2251 = vpop.f32.mrf.mxu0
  %v2252 = vadd.f32 %v2189, %v2251
  %v2253 = vpop.f32.mrf.mxu0
  %2254 = vdwg.mxu0
  %2255 = vmatpush.bf16.msra.mxu0 %v1841
  %2256 = vmatpush.bf16.msra.mxu0 %v1840
  %2257 = vmatpush.bf16.msra.mxu0 %v1839
  %2258 = vmatpush.bf16.msra.mxu0 %v1838
  %2259 = vmatpush.bf16.msra.mxu0 %v1837
  %2260 = vmatpush.bf16.msra.mxu0 %v1836
  %2261 = vmatpush.bf16.msra.mxu0 %v1835
  %2262 = vmatpush.bf16.msra.mxu0 %v1834
  %2263 = vmatmul.bf16.gmra.mxu0 %v949
  %v2264 = vpop.f32.mrf.mxu0
  %v2265 = vadd.f32 %v2202, %v2264
  %v2266 = vpop.f32.mrf.mxu0
  %v2267 = vadd.f32 %v2204, %v2266
  %2268 = vmatmul.bf16.gmra.mxu0 %v965
  %v2269 = vpop.f32.mrf.mxu0
  %v2270 = vadd.f32 %v2207, %v2269
  %v2271 = vpop.f32.mrf.mxu0
  %v2272 = vadd.f32 %v2209, %v2271
  %2273 = vmatmul.bf16.gmra.mxu0 %v981
  %v2274 = vpop.f32.mrf.mxu0
  %v2275 = vadd.f32 %v2212, %v2274
  %v2276 = vpop.f32.mrf.mxu0
  %v2277 = vadd.f32 %v2214, %v2276
  %2278 = vmatmul.bf16.gmra.mxu0 %v997
  %v2279 = vpop.f32.mrf.mxu0
  %v2280 = vadd.f32 %v2217, %v2279
  %v2281 = vpop.f32.mrf.mxu0
  %v2282 = vadd.f32 %v2219, %v2281
  %2283 = vmatmul.bf16.gmra.mxu0 %v1013
  %v2284 = vpop.f32.mrf.mxu0
  %v2285 = vadd.f32 %v2222, %v2284
  %v2286 = vpop.f32.mrf.mxu0
  %v2287 = vadd.f32 %v2224, %v2286
  %2288 = vmatmul.bf16.gmra.mxu0 %v1029
  %v2289 = vpop.f32.mrf.mxu0
  %v2290 = vadd.f32 %v2227, %v2289
  %v2291 = vpop.f32.mrf.mxu0
  %v2292 = vadd.f32 %v2229, %v2291
  %2293 = vmatmul.bf16.gmra.mxu0 %v1045
  %v2294 = vpop.f32.mrf.mxu0
  %v2295 = vadd.f32 %v2232, %v2294
  %v2296 = vpop.f32.mrf.mxu0
  %v2297 = vadd.f32 %v2234, %v2296
  %2298 = vmatmul.bf16.gmra.mxu0 %v1061
  %v2299 = vpop.f32.mrf.mxu0
  %v2300 = vadd.f32 %v2237, %v2299
  %v2301 = vpop.f32.mrf.mxu0
  %v2302 = vadd.f32 %v2239, %v2301
  %2303 = vmatmul.bf16.gmra.mxu0 %v1077
  %v2304 = vpop.f32.mrf.mxu0
  %v2305 = vadd.f32 %v2242, %v2304
  %v2306 = vpop.f32.mrf.mxu0
  %v2307 = vadd.f32 %v2244, %v2306
  %2308 = vmatmul.bf16.gmra.mxu0 %v1093
  %v2309 = vpop.f32.mrf.mxu0
  %v2310 = vadd.f32 %v2247, %v2309
  %v2311 = vpop.f32.mrf.mxu0
  %v2312 = vadd.f32 %v2249, %v2311
  %2313 = vmatmul.bf16.gmra.mxu0 %v1109
  %v2314 = vpop.f32.mrf.mxu0
  %v2315 = vadd.f32 %v2252, %v2314
  %v2316 = vpop.f32.mrf.mxu0
  %2317 = vdwg.mxu0
  %2318 = vmatpush.bf16.msra.mxu0 %v1849
  %2319 = vmatpush.bf16.msra.mxu0 %v1848
  %2320 = vmatpush.bf16.msra.mxu0 %v1847
  %2321 = vmatpush.bf16.msra.mxu0 %v1846
  %2322 = vmatpush.bf16.msra.mxu0 %v1845
  %2323 = vmatpush.bf16.msra.mxu0 %v1844
  %2324 = vmatpush.bf16.msra.mxu0 %v1843
  %2325 = vmatpush.bf16.msra.mxu0 %v1842
  %2326 = vmatmul.bf16.gmra.mxu0 %v950
  %v2327 = vpop.f32.mrf.mxu0
  %v2328 = vadd.f32 %v2265, %v2327
  %v2329 = vpop.f32.mrf.mxu0
  %v2330 = vadd.f32 %v2267, %v2329
  %2331 = vmatmul.bf16.gmra.mxu0 %v966
  %v2332 = vpop.f32.mrf.mxu0
  %v2333 = vadd.f32 %v2270, %v2332
  %v2334 = vpop.f32.mrf.mxu0
  %v2335 = vadd.f32 %v2272, %v2334
  %2336 = vmatmul.bf16.gmra.mxu0 %v982
  %v2337 = vpop.f32.mrf.mxu0
  %v2338 = vadd.f32 %v2275, %v2337
  %v2339 = vpop.f32.mrf.mxu0
  %v2340 = vadd.f32 %v2277, %v2339
  %2341 = vmatmul.bf16.gmra.mxu0 %v998
  %v2342 = vpop.f32.mrf.mxu0
  %v2343 = vadd.f32 %v2280, %v2342
  %v2344 = vpop.f32.mrf.mxu0
  %v2345 = vadd.f32 %v2282, %v2344
  %2346 = vmatmul.bf16.gmra.mxu0 %v1014
  %v2347 = vpop.f32.mrf.mxu0
  %v2348 = vadd.f32 %v2285, %v2347
  %v2349 = vpop.f32.mrf.mxu0
  %v2350 = vadd.f32 %v2287, %v2349
  %2351 = vmatmul.bf16.gmra.mxu0 %v1030
  %v2352 = vpop.f32.mrf.mxu0
  %v2353 = vadd.f32 %v2290, %v2352
  %v2354 = vpop.f32.mrf.mxu0
  %v2355 = vadd.f32 %v2292, %v2354
  %2356 = vmatmul.bf16.gmra.mxu0 %v1046
  %v2357 = vpop.f32.mrf.mxu0
  %v2358 = vadd.f32 %v2295, %v2357
  %v2359 = vpop.f32.mrf.mxu0
  %v2360 = vadd.f32 %v2297, %v2359
  %2361 = vmatmul.bf16.gmra.mxu0 %v1062
  %v2362 = vpop.f32.mrf.mxu0
  %v2363 = vadd.f32 %v2300, %v2362
  %v2364 = vpop.f32.mrf.mxu0
  %v2365 = vadd.f32 %v2302, %v2364
  %2366 = vmatmul.bf16.gmra.mxu0 %v1078
  %v2367 = vpop.f32.mrf.mxu0
  %v2368 = vadd.f32 %v2305, %v2367
  %v2369 = vpop.f32.mrf.mxu0
  %v2370 = vadd.f32 %v2307, %v2369
  %2371 = vmatmul.bf16.gmra.mxu0 %v1094
  %v2372 = vpop.f32.mrf.mxu0
  %v2373 = vadd.f32 %v2310, %v2372
  %v2374 = vpop.f32.mrf.mxu0
  %v2375 = vadd.f32 %v2312, %v2374
  %2376 = vmatmul.bf16.gmra.mxu0 %v1110
  %v2377 = vpop.f32.mrf.mxu0
  %v2378 = vadd.f32 %v2315, %v2377
  %v2379 = vpop.f32.mrf.mxu0
  %2380 = vdwg.mxu0
  %2381 = vmatpush.bf16.msra.mxu0 %v1857
  %2382 = vmatpush.bf16.msra.mxu0 %v1856
  %2383 = vmatpush.bf16.msra.mxu0 %v1855
  %2384 = vmatpush.bf16.msra.mxu0 %v1854
  %2385 = vmatpush.bf16.msra.mxu0 %v1853
  %2386 = vmatpush.bf16.msra.mxu0 %v1852
  %2387 = vmatpush.bf16.msra.mxu0 %v1851
  %2388 = vmatpush.bf16.msra.mxu0 %v1850
  %2389 = vmatmul.bf16.gmra.mxu0 %v951
  %v2390 = vpop.f32.mrf.mxu0
  %v2391 = vadd.f32 %v2328, %v2390
  %v2392 = vpop.f32.mrf.mxu0
  %v2393 = vadd.f32 %v2330, %v2392
  %2394 = vmatmul.bf16.gmra.mxu0 %v967
  %v2395 = vpop.f32.mrf.mxu0
  %v2396 = vadd.f32 %v2333, %v2395
  %v2397 = vpop.f32.mrf.mxu0
  %v2398 = vadd.f32 %v2335, %v2397
  %2399 = vmatmul.bf16.gmra.mxu0 %v983
  %v2400 = vpop.f32.mrf.mxu0
  %v2401 = vadd.f32 %v2338, %v2400
  %v2402 = vpop.f32.mrf.mxu0
  %v2403 = vadd.f32 %v2340, %v2402
  %2404 = vmatmul.bf16.gmra.mxu0 %v999
  %v2405 = vpop.f32.mrf.mxu0
  %v2406 = vadd.f32 %v2343, %v2405
  %v2407 = vpop.f32.mrf.mxu0
  %v2408 = vadd.f32 %v2345, %v2407
  %2409 = vmatmul.bf16.gmra.mxu0 %v1015
  %v2410 = vpop.f32.mrf.mxu0
  %v2411 = vadd.f32 %v2348, %v2410
  %v2412 = vpop.f32.mrf.mxu0
  %v2413 = vadd.f32 %v2350, %v2412
  %2414 = vmatmul.bf16.gmra.mxu0 %v1031
  %v2415 = vpop.f32.mrf.mxu0
  %v2416 = vadd.f32 %v2353, %v2415
  %v2417 = vpop.f32.mrf.mxu0
  %v2418 = vadd.f32 %v2355, %v2417
  %2419 = vmatmul.bf16.gmra.mxu0 %v1047
  %v2420 = vpop.f32.mrf.mxu0
  %v2421 = vadd.f32 %v2358, %v2420
  %v2422 = vpop.f32.mrf.mxu0
  %v2423 = vadd.f32 %v2360, %v2422
  %2424 = vmatmul.bf16.gmra.mxu0 %v1063
  %v2425 = vpop.f32.mrf.mxu0
  %v2426 = vadd.f32 %v2363, %v2425
  %v2427 = vpop.f32.mrf.mxu0
  %v2428 = vadd.f32 %v2365, %v2427
  %2429 = vmatmul.bf16.gmra.mxu0 %v1079
  %v2430 = vpop.f32.mrf.mxu0
  %v2431 = vadd.f32 %v2368, %v2430
  %v2432 = vpop.f32.mrf.mxu0
  %v2433 = vadd.f32 %v2370, %v2432
  %2434 = vmatmul.bf16.gmra.mxu0 %v1095
  %v2435 = vpop.f32.mrf.mxu0
  %v2436 = vadd.f32 %v2373, %v2435
  %v2437 = vpop.f32.mrf.mxu0
  %v2438 = vadd.f32 %v2375, %v2437
  %2439 = vmatmul.bf16.gmra.mxu0 %v1111
  %v2440 = vpop.f32.mrf.mxu0
  %v2441 = vadd.f32 %v2378, %v2440
  %v2442 = vpop.f32.mrf.mxu0
  %2443 = vdwg.mxu0
  %2444 = vmatpush.bf16.msra.mxu0 %v1865
  %2445 = vmatpush.bf16.msra.mxu0 %v1864
  %2446 = vmatpush.bf16.msra.mxu0 %v1863
  %2447 = vmatpush.bf16.msra.mxu0 %v1862
  %2448 = vmatpush.bf16.msra.mxu0 %v1861
  %2449 = vmatpush.bf16.msra.mxu0 %v1860
  %2450 = vmatpush.bf16.msra.mxu0 %v1859
  %2451 = vmatpush.bf16.msra.mxu0 %v1858
  %2452 = vmatmul.bf16.gmra.mxu0 %v952
  %v2453 = vpop.f32.mrf.mxu0
  %v2454 = vadd.f32 %v2391, %v2453
  %v2455 = vpop.f32.mrf.mxu0
  %v2456 = vadd.f32 %v2393, %v2455
  %2457 = vmatmul.bf16.gmra.mxu0 %v968
  %v2458 = vpop.f32.mrf.mxu0
  %v2459 = vadd.f32 %v2396, %v2458
  %v2460 = vpop.f32.mrf.mxu0
  %v2461 = vadd.f32 %v2398, %v2460
  %2462 = vmatmul.bf16.gmra.mxu0 %v984
  %v2463 = vpop.f32.mrf.mxu0
  %v2464 = vadd.f32 %v2401, %v2463
  %v2465 = vpop.f32.mrf.mxu0
  %v2466 = vadd.f32 %v2403, %v2465
  %2467 = vmatmul.bf16.gmra.mxu0 %v1000
  %v2468 = vpop.f32.mrf.mxu0
  %v2469 = vadd.f32 %v2406, %v2468
  %v2470 = vpop.f32.mrf.mxu0
  %v2471 = vadd.f32 %v2408, %v2470
  %2472 = vmatmul.bf16.gmra.mxu0 %v1016
  %v2473 = vpop.f32.mrf.mxu0
  %v2474 = vadd.f32 %v2411, %v2473
  %v2475 = vpop.f32.mrf.mxu0
  %v2476 = vadd.f32 %v2413, %v2475
  %2477 = vmatmul.bf16.gmra.mxu0 %v1032
  %v2478 = vpop.f32.mrf.mxu0
  %v2479 = vadd.f32 %v2416, %v2478
  %v2480 = vpop.f32.mrf.mxu0
  %v2481 = vadd.f32 %v2418, %v2480
  %2482 = vmatmul.bf16.gmra.mxu0 %v1048
  %v2483 = vpop.f32.mrf.mxu0
  %v2484 = vadd.f32 %v2421, %v2483
  %v2485 = vpop.f32.mrf.mxu0
  %v2486 = vadd.f32 %v2423, %v2485
  %2487 = vmatmul.bf16.gmra.mxu0 %v1064
  %v2488 = vpop.f32.mrf.mxu0
  %v2489 = vadd.f32 %v2426, %v2488
  %v2490 = vpop.f32.mrf.mxu0
  %v2491 = vadd.f32 %v2428, %v2490
  %2492 = vmatmul.bf16.gmra.mxu0 %v1080
  %v2493 = vpop.f32.mrf.mxu0
  %v2494 = vadd.f32 %v2431, %v2493
  %v2495 = vpop.f32.mrf.mxu0
  %v2496 = vadd.f32 %v2433, %v2495
  %2497 = vmatmul.bf16.gmra.mxu0 %v1096
  %v2498 = vpop.f32.mrf.mxu0
  %v2499 = vadd.f32 %v2436, %v2498
  %v2500 = vpop.f32.mrf.mxu0
  %v2501 = vadd.f32 %v2438, %v2500
  %2502 = vmatmul.bf16.gmra.mxu0 %v1112
  %v2503 = vpop.f32.mrf.mxu0
  %v2504 = vadd.f32 %v2441, %v2503
  %v2505 = vpop.f32.mrf.mxu0
  %2506 = vdwg.mxu0
  %2507 = vmatpush.bf16.msra.mxu0 %v1873
  %2508 = vmatpush.bf16.msra.mxu0 %v1872
  %2509 = vmatpush.bf16.msra.mxu0 %v1871
  %2510 = vmatpush.bf16.msra.mxu0 %v1870
  %2511 = vmatpush.bf16.msra.mxu0 %v1869
  %2512 = vmatpush.bf16.msra.mxu0 %v1868
  %2513 = vmatpush.bf16.msra.mxu0 %v1867
  %2514 = vmatpush.bf16.msra.mxu0 %v1866
  %2515 = vmatmul.bf16.gmra.mxu0 %v953
  %v2516 = vpop.f32.mrf.mxu0
  %v2517 = vadd.f32 %v2454, %v2516
  %v2518 = vpop.f32.mrf.mxu0
  %v2519 = vadd.f32 %v2456, %v2518
  %2520 = vmatmul.bf16.gmra.mxu0 %v969
  %v2521 = vpop.f32.mrf.mxu0
  %v2522 = vadd.f32 %v2459, %v2521
  %v2523 = vpop.f32.mrf.mxu0
  %v2524 = vadd.f32 %v2461, %v2523
  %2525 = vmatmul.bf16.gmra.mxu0 %v985
  %v2526 = vpop.f32.mrf.mxu0
  %v2527 = vadd.f32 %v2464, %v2526
  %v2528 = vpop.f32.mrf.mxu0
  %v2529 = vadd.f32 %v2466, %v2528
  %2530 = vmatmul.bf16.gmra.mxu0 %v1001
  %v2531 = vpop.f32.mrf.mxu0
  %v2532 = vadd.f32 %v2469, %v2531
  %v2533 = vpop.f32.mrf.mxu0
  %v2534 = vadd.f32 %v2471, %v2533
  %2535 = vmatmul.bf16.gmra.mxu0 %v1017
  %v2536 = vpop.f32.mrf.mxu0
  %v2537 = vadd.f32 %v2474, %v2536
  %v2538 = vpop.f32.mrf.mxu0
  %v2539 = vadd.f32 %v2476, %v2538
  %2540 = vmatmul.bf16.gmra.mxu0 %v1033
  %v2541 = vpop.f32.mrf.mxu0
  %v2542 = vadd.f32 %v2479, %v2541
  %v2543 = vpop.f32.mrf.mxu0
  %v2544 = vadd.f32 %v2481, %v2543
  %2545 = vmatmul.bf16.gmra.mxu0 %v1049
  %v2546 = vpop.f32.mrf.mxu0
  %v2547 = vadd.f32 %v2484, %v2546
  %v2548 = vpop.f32.mrf.mxu0
  %v2549 = vadd.f32 %v2486, %v2548
  %2550 = vmatmul.bf16.gmra.mxu0 %v1065
  %v2551 = vpop.f32.mrf.mxu0
  %v2552 = vadd.f32 %v2489, %v2551
  %v2553 = vpop.f32.mrf.mxu0
  %v2554 = vadd.f32 %v2491, %v2553
  %2555 = vmatmul.bf16.gmra.mxu0 %v1081
  %v2556 = vpop.f32.mrf.mxu0
  %v2557 = vadd.f32 %v2494, %v2556
  %v2558 = vpop.f32.mrf.mxu0
  %v2559 = vadd.f32 %v2496, %v2558
  %2560 = vmatmul.bf16.gmra.mxu0 %v1097
  %v2561 = vpop.f32.mrf.mxu0
  %v2562 = vadd.f32 %v2499, %v2561
  %v2563 = vpop.f32.mrf.mxu0
  %v2564 = vadd.f32 %v2501, %v2563
  %2565 = vmatmul.bf16.gmra.mxu0 %v1113
  %v2566 = vpop.f32.mrf.mxu0
  %v2567 = vadd.f32 %v2504, %v2566
  %v2568 = vpop.f32.mrf.mxu0
  %2569 = vdwg.mxu0
  %2570 = vmatpush.bf16.msra.mxu0 %v1881
  %2571 = vmatpush.bf16.msra.mxu0 %v1880
  %2572 = vmatpush.bf16.msra.mxu0 %v1879
  %2573 = vmatpush.bf16.msra.mxu0 %v1878
  %2574 = vmatpush.bf16.msra.mxu0 %v1877
  %2575 = vmatpush.bf16.msra.mxu0 %v1876
  %2576 = vmatpush.bf16.msra.mxu0 %v1875
  %2577 = vmatpush.bf16.msra.mxu0 %v1874
  %2578 = vmatmul.bf16.gmra.mxu0 %v954
  %v2579 = vpop.f32.mrf.mxu0
  %v2580 = vadd.f32 %v2517, %v2579
  %v2581 = vpop.f32.mrf.mxu0
  %v2582 = vadd.f32 %v2519, %v2581
  %2583 = vmatmul.bf16.gmra.mxu0 %v970
  %v2584 = vpop.f32.mrf.mxu0
  %v2585 = vadd.f32 %v2522, %v2584
  %v2586 = vpop.f32.mrf.mxu0
  %v2587 = vadd.f32 %v2524, %v2586
  %2588 = vmatmul.bf16.gmra.mxu0 %v986
  %v2589 = vpop.f32.mrf.mxu0
  %v2590 = vadd.f32 %v2527, %v2589
  %v2591 = vpop.f32.mrf.mxu0
  %v2592 = vadd.f32 %v2529, %v2591
  %2593 = vmatmul.bf16.gmra.mxu0 %v1002
  %v2594 = vpop.f32.mrf.mxu0
  %v2595 = vadd.f32 %v2532, %v2594
  %v2596 = vpop.f32.mrf.mxu0
  %v2597 = vadd.f32 %v2534, %v2596
  %2598 = vmatmul.bf16.gmra.mxu0 %v1018
  %v2599 = vpop.f32.mrf.mxu0
  %v2600 = vadd.f32 %v2537, %v2599
  %v2601 = vpop.f32.mrf.mxu0
  %v2602 = vadd.f32 %v2539, %v2601
  %2603 = vmatmul.bf16.gmra.mxu0 %v1034
  %v2604 = vpop.f32.mrf.mxu0
  %v2605 = vadd.f32 %v2542, %v2604
  %v2606 = vpop.f32.mrf.mxu0
  %v2607 = vadd.f32 %v2544, %v2606
  %2608 = vmatmul.bf16.gmra.mxu0 %v1050
  %v2609 = vpop.f32.mrf.mxu0
  %v2610 = vadd.f32 %v2547, %v2609
  %v2611 = vpop.f32.mrf.mxu0
  %v2612 = vadd.f32 %v2549, %v2611
  %2613 = vmatmul.bf16.gmra.mxu0 %v1066
  %v2614 = vpop.f32.mrf.mxu0
  %v2615 = vadd.f32 %v2552, %v2614
  %v2616 = vpop.f32.mrf.mxu0
  %v2617 = vadd.f32 %v2554, %v2616
  %2618 = vmatmul.bf16.gmra.mxu0 %v1082
  %v2619 = vpop.f32.mrf.mxu0
  %v2620 = vadd.f32 %v2557, %v2619
  %v2621 = vpop.f32.mrf.mxu0
  %v2622 = vadd.f32 %v2559, %v2621
  %2623 = vmatmul.bf16.gmra.mxu0 %v1098
  %v2624 = vpop.f32.mrf.mxu0
  %v2625 = vadd.f32 %v2562, %v2624
  %v2626 = vpop.f32.mrf.mxu0
  %v2627 = vadd.f32 %v2564, %v2626
  %2628 = vmatmul.bf16.gmra.mxu0 %v1114
  %v2629 = vpop.f32.mrf.mxu0
  %v2630 = vadd.f32 %v2567, %v2629
  %v2631 = vpop.f32.mrf.mxu0
  %2632 = vdwg.mxu0
  %2633 = vmatpush.bf16.msra.mxu0 %v1889
  %2634 = vmatpush.bf16.msra.mxu0 %v1888
  %2635 = vmatpush.bf16.msra.mxu0 %v1887
  %2636 = vmatpush.bf16.msra.mxu0 %v1886
  %2637 = vmatpush.bf16.msra.mxu0 %v1885
  %2638 = vmatpush.bf16.msra.mxu0 %v1884
  %2639 = vmatpush.bf16.msra.mxu0 %v1883
  %2640 = vmatpush.bf16.msra.mxu0 %v1882
  %2641 = vmatmul.bf16.gmra.mxu0 %v955
  %v2642 = vpop.f32.mrf.mxu0
  %v2643 = vadd.f32 %v2580, %v2642
  %v2644 = vpop.f32.mrf.mxu0
  %v2645 = vadd.f32 %v2582, %v2644
  %2646 = vmatmul.bf16.gmra.mxu0 %v971
  %v2647 = vpop.f32.mrf.mxu0
  %v2648 = vadd.f32 %v2585, %v2647
  %v2649 = vpop.f32.mrf.mxu0
  %v2650 = vadd.f32 %v2587, %v2649
  %2651 = vmatmul.bf16.gmra.mxu0 %v987
  %v2652 = vpop.f32.mrf.mxu0
  %v2653 = vadd.f32 %v2590, %v2652
  %v2654 = vpop.f32.mrf.mxu0
  %v2655 = vadd.f32 %v2592, %v2654
  %2656 = vmatmul.bf16.gmra.mxu0 %v1003
  %v2657 = vpop.f32.mrf.mxu0
  %v2658 = vadd.f32 %v2595, %v2657
  %v2659 = vpop.f32.mrf.mxu0
  %v2660 = vadd.f32 %v2597, %v2659
  %2661 = vmatmul.bf16.gmra.mxu0 %v1019
  %v2662 = vpop.f32.mrf.mxu0
  %v2663 = vadd.f32 %v2600, %v2662
  %v2664 = vpop.f32.mrf.mxu0
  %v2665 = vadd.f32 %v2602, %v2664
  %2666 = vmatmul.bf16.gmra.mxu0 %v1035
  %v2667 = vpop.f32.mrf.mxu0
  %v2668 = vadd.f32 %v2605, %v2667
  %v2669 = vpop.f32.mrf.mxu0
  %v2670 = vadd.f32 %v2607, %v2669
  %2671 = vmatmul.bf16.gmra.mxu0 %v1051
  %v2672 = vpop.f32.mrf.mxu0
  %v2673 = vadd.f32 %v2610, %v2672
  %v2674 = vpop.f32.mrf.mxu0
  %v2675 = vadd.f32 %v2612, %v2674
  %2676 = vmatmul.bf16.gmra.mxu0 %v1067
  %v2677 = vpop.f32.mrf.mxu0
  %v2678 = vadd.f32 %v2615, %v2677
  %v2679 = vpop.f32.mrf.mxu0
  %v2680 = vadd.f32 %v2617, %v2679
  %2681 = vmatmul.bf16.gmra.mxu0 %v1083
  %v2682 = vpop.f32.mrf.mxu0
  %v2683 = vadd.f32 %v2620, %v2682
  %v2684 = vpop.f32.mrf.mxu0
  %v2685 = vadd.f32 %v2622, %v2684
  %2686 = vmatmul.bf16.gmra.mxu0 %v1099
  %v2687 = vpop.f32.mrf.mxu0
  %v2688 = vadd.f32 %v2625, %v2687
  %v2689 = vpop.f32.mrf.mxu0
  %v2690 = vadd.f32 %v2627, %v2689
  %2691 = vmatmul.bf16.gmra.mxu0 %v1115
  %v2692 = vpop.f32.mrf.mxu0
  %v2693 = vadd.f32 %v2630, %v2692
  %v2694 = vpop.f32.mrf.mxu0
  %2695 = vdwg.mxu0
  %2696 = vmatpush.bf16.msra.mxu0 %v1897
  %2697 = vmatpush.bf16.msra.mxu0 %v1896
  %2698 = vmatpush.bf16.msra.mxu0 %v1895
  %2699 = vmatpush.bf16.msra.mxu0 %v1894
  %2700 = vmatpush.bf16.msra.mxu0 %v1893
  %2701 = vmatpush.bf16.msra.mxu0 %v1892
  %2702 = vmatpush.bf16.msra.mxu0 %v1891
  %2703 = vmatpush.bf16.msra.mxu0 %v1890
  %2704 = vmatmul.bf16.gmra.mxu0 %v956
  %v2705 = vpop.f32.mrf.mxu0
  %v2706 = vadd.f32 %v2643, %v2705
  %v2707 = vpop.f32.mrf.mxu0
  %v2708 = vadd.f32 %v2645, %v2707
  %2709 = vmatmul.bf16.gmra.mxu0 %v972
  %v2710 = vpop.f32.mrf.mxu0
  %v2711 = vadd.f32 %v2648, %v2710
  %v2712 = vpop.f32.mrf.mxu0
  %v2713 = vadd.f32 %v2650, %v2712
  %2714 = vmatmul.bf16.gmra.mxu0 %v988
  %v2715 = vpop.f32.mrf.mxu0
  %v2716 = vadd.f32 %v2653, %v2715
  %v2717 = vpop.f32.mrf.mxu0
  %v2718 = vadd.f32 %v2655, %v2717
  %2719 = vmatmul.bf16.gmra.mxu0 %v1004
  %v2720 = vpop.f32.mrf.mxu0
  %v2721 = vadd.f32 %v2658, %v2720
  %v2722 = vpop.f32.mrf.mxu0
  %v2723 = vadd.f32 %v2660, %v2722
  %2724 = vmatmul.bf16.gmra.mxu0 %v1020
  %v2725 = vpop.f32.mrf.mxu0
  %v2726 = vadd.f32 %v2663, %v2725
  %v2727 = vpop.f32.mrf.mxu0
  %v2728 = vadd.f32 %v2665, %v2727
  %2729 = vmatmul.bf16.gmra.mxu0 %v1036
  %v2730 = vpop.f32.mrf.mxu0
  %v2731 = vadd.f32 %v2668, %v2730
  %v2732 = vpop.f32.mrf.mxu0
  %v2733 = vadd.f32 %v2670, %v2732
  %2734 = vmatmul.bf16.gmra.mxu0 %v1052
  %v2735 = vpop.f32.mrf.mxu0
  %v2736 = vadd.f32 %v2673, %v2735
  %v2737 = vpop.f32.mrf.mxu0
  %v2738 = vadd.f32 %v2675, %v2737
  %2739 = vmatmul.bf16.gmra.mxu0 %v1068
  %v2740 = vpop.f32.mrf.mxu0
  %v2741 = vadd.f32 %v2678, %v2740
  %v2742 = vpop.f32.mrf.mxu0
  %v2743 = vadd.f32 %v2680, %v2742
  %2744 = vmatmul.bf16.gmra.mxu0 %v1084
  %v2745 = vpop.f32.mrf.mxu0
  %v2746 = vadd.f32 %v2683, %v2745
  %v2747 = vpop.f32.mrf.mxu0
  %v2748 = vadd.f32 %v2685, %v2747
  %2749 = vmatmul.bf16.gmra.mxu0 %v1100
  %v2750 = vpop.f32.mrf.mxu0
  %v2751 = vadd.f32 %v2688, %v2750
  %v2752 = vpop.f32.mrf.mxu0
  %v2753 = vadd.f32 %v2690, %v2752
  %2754 = vmatmul.bf16.gmra.mxu0 %v1116
  %v2755 = vpop.f32.mrf.mxu0
  %v2756 = vadd.f32 %v2693, %v2755
  %v2757 = vpop.f32.mrf.mxu0
  %2758 = vdwg.mxu0
  %2759 = vmatpush.bf16.msra.mxu0 %v1905
  %2760 = vmatpush.bf16.msra.mxu0 %v1904
  %2761 = vmatpush.bf16.msra.mxu0 %v1903
  %2762 = vmatpush.bf16.msra.mxu0 %v1902
  %2763 = vmatpush.bf16.msra.mxu0 %v1901
  %2764 = vmatpush.bf16.msra.mxu0 %v1900
  %2765 = vmatpush.bf16.msra.mxu0 %v1899
  %2766 = vmatpush.bf16.msra.mxu0 %v1898
  %2767 = vmatmul.bf16.gmra.mxu0 %v957
  %v2768 = vpop.f32.mrf.mxu0
  %v2769 = vadd.f32 %v2706, %v2768
  %v2770 = vpop.f32.mrf.mxu0
  %v2771 = vadd.f32 %v2708, %v2770
  %2772 = vmatmul.bf16.gmra.mxu0 %v973
  %v2773 = vpop.f32.mrf.mxu0
  %v2774 = vadd.f32 %v2711, %v2773
  %v2775 = vpop.f32.mrf.mxu0
  %v2776 = vadd.f32 %v2713, %v2775
  %2777 = vmatmul.bf16.gmra.mxu0 %v989
  %v2778 = vpop.f32.mrf.mxu0
  %v2779 = vadd.f32 %v2716, %v2778
  %v2780 = vpop.f32.mrf.mxu0
  %v2781 = vadd.f32 %v2718, %v2780
  %2782 = vmatmul.bf16.gmra.mxu0 %v1005
  %v2783 = vpop.f32.mrf.mxu0
  %v2784 = vadd.f32 %v2721, %v2783
  %v2785 = vpop.f32.mrf.mxu0
  %v2786 = vadd.f32 %v2723, %v2785
  %2787 = vmatmul.bf16.gmra.mxu0 %v1021
  %v2788 = vpop.f32.mrf.mxu0
  %v2789 = vadd.f32 %v2726, %v2788
  %v2790 = vpop.f32.mrf.mxu0
  %v2791 = vadd.f32 %v2728, %v2790
  %2792 = vmatmul.bf16.gmra.mxu0 %v1037
  %v2793 = vpop.f32.mrf.mxu0
  %v2794 = vadd.f32 %v2731, %v2793
  %v2795 = vpop.f32.mrf.mxu0
  %v2796 = vadd.f32 %v2733, %v2795
  %2797 = vmatmul.bf16.gmra.mxu0 %v1053
  %v2798 = vpop.f32.mrf.mxu0
  %v2799 = vadd.f32 %v2736, %v2798
  %v2800 = vpop.f32.mrf.mxu0
  %v2801 = vadd.f32 %v2738, %v2800
  %2802 = vmatmul.bf16.gmra.mxu0 %v1069
  %v2803 = vpop.f32.mrf.mxu0
  %v2804 = vadd.f32 %v2741, %v2803
  %v2805 = vpop.f32.mrf.mxu0
  %v2806 = vadd.f32 %v2743, %v2805
  %2807 = vmatmul.bf16.gmra.mxu0 %v1085
  %v2808 = vpop.f32.mrf.mxu0
  %v2809 = vadd.f32 %v2746, %v2808
  %v2810 = vpop.f32.mrf.mxu0
  %v2811 = vadd.f32 %v2748, %v2810
  %2812 = vmatmul.bf16.gmra.mxu0 %v1101
  %v2813 = vpop.f32.mrf.mxu0
  %v2814 = vadd.f32 %v2751, %v2813
  %v2815 = vpop.f32.mrf.mxu0
  %v2816 = vadd.f32 %v2753, %v2815
  %2817 = vmatmul.bf16.gmra.mxu0 %v1117
  %v2818 = vpop.f32.mrf.mxu0
  %v2819 = vadd.f32 %v2756, %v2818
  %v2820 = vpop.f32.mrf.mxu0
  %2821 = vdwg.mxu0
  %2822 = vmatpush.bf16.msra.mxu0 %v1913
  %2823 = vmatpush.bf16.msra.mxu0 %v1912
  %2824 = vmatpush.bf16.msra.mxu0 %v1911
  %2825 = vmatpush.bf16.msra.mxu0 %v1910
  %2826 = vmatpush.bf16.msra.mxu0 %v1909
  %2827 = vmatpush.bf16.msra.mxu0 %v1908
  %2828 = vmatpush.bf16.msra.mxu0 %v1907
  %2829 = vmatpush.bf16.msra.mxu0 %v1906
  %2830 = vmatmul.bf16.gmra.mxu0 %v958
  %v2831 = vpop.f32.mrf.mxu0
  %v2832 = vadd.f32 %v2769, %v2831
  %v2833 = vpop.f32.mrf.mxu0
  %v2834 = vadd.f32 %v2771, %v2833
  %2835 = vmatmul.bf16.gmra.mxu0 %v974
  %v2836 = vpop.f32.mrf.mxu0
  %v2837 = vadd.f32 %v2774, %v2836
  %v2838 = vpop.f32.mrf.mxu0
  %v2839 = vadd.f32 %v2776, %v2838
  %2840 = vmatmul.bf16.gmra.mxu0 %v990
  %v2841 = vpop.f32.mrf.mxu0
  %v2842 = vadd.f32 %v2779, %v2841
  %v2843 = vpop.f32.mrf.mxu0
  %v2844 = vadd.f32 %v2781, %v2843
  %2845 = vmatmul.bf16.gmra.mxu0 %v1006
  %v2846 = vpop.f32.mrf.mxu0
  %v2847 = vadd.f32 %v2784, %v2846
  %v2848 = vpop.f32.mrf.mxu0
  %v2849 = vadd.f32 %v2786, %v2848
  %2850 = vmatmul.bf16.gmra.mxu0 %v1022
  %v2851 = vpop.f32.mrf.mxu0
  %v2852 = vadd.f32 %v2789, %v2851
  %v2853 = vpop.f32.mrf.mxu0
  %v2854 = vadd.f32 %v2791, %v2853
  %2855 = vmatmul.bf16.gmra.mxu0 %v1038
  %v2856 = vpop.f32.mrf.mxu0
  %v2857 = vadd.f32 %v2794, %v2856
  %v2858 = vpop.f32.mrf.mxu0
  %v2859 = vadd.f32 %v2796, %v2858
  %2860 = vmatmul.bf16.gmra.mxu0 %v1054
  %v2861 = vpop.f32.mrf.mxu0
  %v2862 = vadd.f32 %v2799, %v2861
  %v2863 = vpop.f32.mrf.mxu0
  %v2864 = vadd.f32 %v2801, %v2863
  %2865 = vmatmul.bf16.gmra.mxu0 %v1070
  %v2866 = vpop.f32.mrf.mxu0
  %v2867 = vadd.f32 %v2804, %v2866
  %v2868 = vpop.f32.mrf.mxu0
  %v2869 = vadd.f32 %v2806, %v2868
  %2870 = vmatmul.bf16.gmra.mxu0 %v1086
  %v2871 = vpop.f32.mrf.mxu0
  %v2872 = vadd.f32 %v2809, %v2871
  %v2873 = vpop.f32.mrf.mxu0
  %v2874 = vadd.f32 %v2811, %v2873
  %2875 = vmatmul.bf16.gmra.mxu0 %v1102
  %v2876 = vpop.f32.mrf.mxu0
  %v2877 = vadd.f32 %v2814, %v2876
  %v2878 = vpop.f32.mrf.mxu0
  %v2879 = vadd.f32 %v2816, %v2878
  %2880 = vmatmul.bf16.gmra.mxu0 %v1118
  %v2881 = vpop.f32.mrf.mxu0
  %v2882 = vadd.f32 %v2819, %v2881
  %v2883 = vpop.f32.mrf.mxu0
  %2884 = vdwg.mxu0
  %2885 = vmatpush.bf16.msra.mxu0 %v1921
  %2886 = vmatpush.bf16.msra.mxu0 %v1920
  %2887 = vmatpush.bf16.msra.mxu0 %v1919
  %2888 = vmatpush.bf16.msra.mxu0 %v1918
  %2889 = vmatpush.bf16.msra.mxu0 %v1917
  %2890 = vmatpush.bf16.msra.mxu0 %v1916
  %2891 = vmatpush.bf16.msra.mxu0 %v1915
  %2892 = vmatpush.bf16.msra.mxu0 %v1914
  %2893 = vmatmul.bf16.gmra.mxu0 %v959
  %v2894 = vpop.f32.mrf.mxu0
  %v2895 = vadd.f32 %v2832, %v2894
  %v2896 = vpop.f32.mrf.mxu0
  %v2897 = vadd.f32 %v2834, %v2896
  %2898 = vmatmul.bf16.gmra.mxu0 %v975
  %v2899 = vpop.f32.mrf.mxu0
  %v2900 = vadd.f32 %v2837, %v2899
  %v2901 = vpop.f32.mrf.mxu0
  %v2902 = vadd.f32 %v2839, %v2901
  %2903 = vmatmul.bf16.gmra.mxu0 %v991
  %v2904 = vpop.f32.mrf.mxu0
  %v2905 = vadd.f32 %v2842, %v2904
  %v2906 = vpop.f32.mrf.mxu0
  %v2907 = vadd.f32 %v2844, %v2906
  %2908 = vmatmul.bf16.gmra.mxu0 %v1007
  %v2909 = vpop.f32.mrf.mxu0
  %v2910 = vadd.f32 %v2847, %v2909
  %v2911 = vpop.f32.mrf.mxu0
  %v2912 = vadd.f32 %v2849, %v2911
  %2913 = vmatmul.bf16.gmra.mxu0 %v1023
  %v2914 = vpop.f32.mrf.mxu0
  %v2915 = vadd.f32 %v2852, %v2914
  %v2916 = vpop.f32.mrf.mxu0
  %v2917 = vadd.f32 %v2854, %v2916
  %2918 = vmatmul.bf16.gmra.mxu0 %v1039
  %v2919 = vpop.f32.mrf.mxu0
  %v2920 = vadd.f32 %v2857, %v2919
  %v2921 = vpop.f32.mrf.mxu0
  %v2922 = vadd.f32 %v2859, %v2921
  %2923 = vmatmul.bf16.gmra.mxu0 %v1055
  %v2924 = vpop.f32.mrf.mxu0
  %v2925 = vadd.f32 %v2862, %v2924
  %v2926 = vpop.f32.mrf.mxu0
  %v2927 = vadd.f32 %v2864, %v2926
  %2928 = vmatmul.bf16.gmra.mxu0 %v1071
  %v2929 = vpop.f32.mrf.mxu0
  %v2930 = vadd.f32 %v2867, %v2929
  %v2931 = vpop.f32.mrf.mxu0
  %v2932 = vadd.f32 %v2869, %v2931
  %2933 = vmatmul.bf16.gmra.mxu0 %v1087
  %v2934 = vpop.f32.mrf.mxu0
  %v2935 = vadd.f32 %v2872, %v2934
  %v2936 = vpop.f32.mrf.mxu0
  %v2937 = vadd.f32 %v2874, %v2936
  %2938 = vmatmul.bf16.gmra.mxu0 %v1103
  %v2939 = vpop.f32.mrf.mxu0
  %v2940 = vadd.f32 %v2877, %v2939
  %v2941 = vpop.f32.mrf.mxu0
  %v2942 = vadd.f32 %v2879, %v2941
  %2943 = vmatmul.bf16.gmra.mxu0 %v1119
  %v2944 = vpop.f32.mrf.mxu0
  %v2945 = vadd.f32 %v2882, %v2944
  %v2946 = vpop.f32.mrf.mxu0
  %2947 = vdwg.mxu0
  %2948 = vmatpush.bf16.msra.mxu0 %v1929
  %2949 = vmatpush.bf16.msra.mxu0 %v1928
  %2950 = vmatpush.bf16.msra.mxu0 %v1927
  %2951 = vmatpush.bf16.msra.mxu0 %v1926
  %2952 = vmatpush.bf16.msra.mxu0 %v1925
  %2953 = vmatpush.bf16.msra.mxu0 %v1924
  %2954 = vmatpush.bf16.msra.mxu0 %v1923
  %2955 = vmatpush.bf16.msra.mxu0 %v1922
  %2956 = vmatmul.bf16.gmra.mxu0 %v960
  %v2957 = vpop.f32.mrf.mxu0
  %v2958 = vadd.f32 %v2895, %v2957
  %v2959 = vpop.f32.mrf.mxu0
  %v2960 = vadd.f32 %v2897, %v2959
  %2961 = vmatmul.bf16.gmra.mxu0 %v976
  %v2962 = vpop.f32.mrf.mxu0
  %v2963 = vadd.f32 %v2900, %v2962
  %v2964 = vpop.f32.mrf.mxu0
  %v2965 = vadd.f32 %v2902, %v2964
  %2966 = vmatmul.bf16.gmra.mxu0 %v992
  %v2967 = vpop.f32.mrf.mxu0
  %v2968 = vadd.f32 %v2905, %v2967
  %v2969 = vpop.f32.mrf.mxu0
  %v2970 = vadd.f32 %v2907, %v2969
  %2971 = vmatmul.bf16.gmra.mxu0 %v1008
  %v2972 = vpop.f32.mrf.mxu0
  %v2973 = vadd.f32 %v2910, %v2972
  %v2974 = vpop.f32.mrf.mxu0
  %v2975 = vadd.f32 %v2912, %v2974
  %2976 = vmatmul.bf16.gmra.mxu0 %v1024
  %v2977 = vpop.f32.mrf.mxu0
  %v2978 = vadd.f32 %v2915, %v2977
  %v2979 = vpop.f32.mrf.mxu0
  %v2980 = vadd.f32 %v2917, %v2979
  %2981 = vmatmul.bf16.gmra.mxu0 %v1040
  %v2982 = vpop.f32.mrf.mxu0
  %v2983 = vadd.f32 %v2920, %v2982
  %v2984 = vpop.f32.mrf.mxu0
  %v2985 = vadd.f32 %v2922, %v2984
  %2986 = vmatmul.bf16.gmra.mxu0 %v1056
  %v2987 = vpop.f32.mrf.mxu0
  %v2988 = vadd.f32 %v2925, %v2987
  %v2989 = vpop.f32.mrf.mxu0
  %v2990 = vadd.f32 %v2927, %v2989
  %2991 = vmatmul.bf16.gmra.mxu0 %v1072
  %v2992 = vpop.f32.mrf.mxu0
  %v2993 = vadd.f32 %v2930, %v2992
  %v2994 = vpop.f32.mrf.mxu0
  %v2995 = vadd.f32 %v2932, %v2994
  %2996 = vmatmul.bf16.gmra.mxu0 %v1088
  %v2997 = vpop.f32.mrf.mxu0
  %v2998 = vadd.f32 %v2935, %v2997
  %v2999 = vpop.f32.mrf.mxu0
  %v3000 = vadd.f32 %v2937, %v2999
  %3001 = vmatmul.bf16.gmra.mxu0 %v1104
  %v3002 = vpop.f32.mrf.mxu0
  %v3003 = vadd.f32 %v2940, %v3002
  %v3004 = vpop.f32.mrf.mxu0
  %v3005 = vadd.f32 %v2942, %v3004
  %3006 = vmatmul.bf16.gmra.mxu0 %v1120
  %v3007 = vpop.f32.mrf.mxu0
  %v3008 = vadd.f32 %v2945, %v3007
  %v3009 = vpop.f32.mrf.mxu0
  %3010 = vdwg.mxu0
  %3011 = vmatpush.bf16.msra.mxu0 %v1937
  %3012 = vmatpush.bf16.msra.mxu0 %v1936
  %3013 = vmatpush.bf16.msra.mxu0 %v1935
  %3014 = vmatpush.bf16.msra.mxu0 %v1934
  %3015 = vmatpush.bf16.msra.mxu0 %v1933
  %3016 = vmatpush.bf16.msra.mxu0 %v1932
  %3017 = vmatpush.bf16.msra.mxu0 %v1931
  %3018 = vmatpush.bf16.msra.mxu0 %v1930
  %3019 = vmatmul.bf16.gmra.mxu0 %v961
  %v3020 = vpop.f32.mrf.mxu0
  %v3021 = vadd.f32 %v2958, %v3020
  %v3022 = vpop.f32.mrf.mxu0
  %v3023 = vadd.f32 %v2960, %v3022
  %3024 = vmatmul.bf16.gmra.mxu0 %v977
  %v3025 = vpop.f32.mrf.mxu0
  %v3026 = vadd.f32 %v2963, %v3025
  %v3027 = vpop.f32.mrf.mxu0
  %v3028 = vadd.f32 %v2965, %v3027
  %3029 = vmatmul.bf16.gmra.mxu0 %v993
  %v3030 = vpop.f32.mrf.mxu0
  %v3031 = vadd.f32 %v2968, %v3030
  %v3032 = vpop.f32.mrf.mxu0
  %v3033 = vadd.f32 %v2970, %v3032
  %3034 = vmatmul.bf16.gmra.mxu0 %v1009
  %v3035 = vpop.f32.mrf.mxu0
  %v3036 = vadd.f32 %v2973, %v3035
  %v3037 = vpop.f32.mrf.mxu0
  %v3038 = vadd.f32 %v2975, %v3037
  %3039 = vmatmul.bf16.gmra.mxu0 %v1025
  %v3040 = vpop.f32.mrf.mxu0
  %v3041 = vadd.f32 %v2978, %v3040
  %v3042 = vpop.f32.mrf.mxu0
  %v3043 = vadd.f32 %v2980, %v3042
  %3044 = vmatmul.bf16.gmra.mxu0 %v1041
  %v3045 = vpop.f32.mrf.mxu0
  %v3046 = vadd.f32 %v2983, %v3045
  %v3047 = vpop.f32.mrf.mxu0
  %v3048 = vadd.f32 %v2985, %v3047
  %3049 = vmatmul.bf16.gmra.mxu0 %v1057
  %v3050 = vpop.f32.mrf.mxu0
  %v3051 = vadd.f32 %v2988, %v3050
  %v3052 = vpop.f32.mrf.mxu0
  %v3053 = vadd.f32 %v2990, %v3052
  %3054 = vmatmul.bf16.gmra.mxu0 %v1073
  %v3055 = vpop.f32.mrf.mxu0
  %v3056 = vadd.f32 %v2993, %v3055
  %v3057 = vpop.f32.mrf.mxu0
  %v3058 = vadd.f32 %v2995, %v3057
  %3059 = vmatmul.bf16.gmra.mxu0 %v1089
  %v3060 = vpop.f32.mrf.mxu0
  %v3061 = vadd.f32 %v2998, %v3060
  %v3062 = vpop.f32.mrf.mxu0
  %v3063 = vadd.f32 %v3000, %v3062
  %3064 = vmatmul.bf16.gmra.mxu0 %v1105
  %v3065 = vpop.f32.mrf.mxu0
  %v3066 = vadd.f32 %v3003, %v3065
  %v3067 = vpop.f32.mrf.mxu0
  %v3068 = vadd.f32 %v3005, %v3067
  %3069 = vmatmul.bf16.gmra.mxu0 %v1121
  %v3070 = vpop.f32.mrf.mxu0
  %v3071 = vadd.f32 %v3008, %v3070
  %v3072 = vpop.f32.mrf.mxu0
  %3073 = vdwg.mxu0
  %v3074 = vmax.f32 %v3021, 0.0
  %v3075 = vmax.f32 %v3023, 0.0
  %v3076 = vmax.f32 %v3026, 0.0
  %v3077 = vmax.f32 %v3028, 0.0
  %v3078 = vmax.f32 %v3031, 0.0
  %v3079 = vmax.f32 %v3033, 0.0
  %v3080 = vmax.f32 %v3036, 0.0
  %v3081 = vmax.f32 %v3038, 0.0
  %v3082 = vmax.f32 %v3041, 0.0
  %v3083 = vmax.f32 %v3043, 0.0
  %v3084 = vmax.f32 %v3046, 0.0
  %v3085 = vmax.f32 %v3048, 0.0
  %v3086 = vmax.f32 %v3051, 0.0
  %v3087 = vmax.f32 %v3053, 0.0
  %v3088 = vmax.f32 %v3056, 0.0
  %v3089 = vmax.f32 %v3058, 0.0
  %v3090 = vmax.f32 %v3061, 0.0
  %v3091 = vmax.f32 %v3063, 0.0
  %v3092 = vmax.f32 %v3066, 0.0
  %v3093 = vmax.f32 %v3068, 0.0
  %v3094 = vmax.f32 %v3071, 0.0
  %v3095 = vpack.c.bf16 %v3074, %v3074
  %v3096 = vpack.c.bf16 %v3075, %v3075
  %v3097 = vpack.c.bf16 %v3076, %v3076
  %v3098 = vpack.c.bf16 %v3077, %v3077
  %v3099 = vpack.c.bf16 %v3078, %v3078
  %v3100 = vpack.c.bf16 %v3079, %v3079
  %v3101 = vpack.c.bf16 %v3080, %v3080
  %v3102 = vpack.c.bf16 %v3081, %v3081
  %v3103 = vpack.c.bf16 %v3082, %v3082
  %v3104 = vpack.c.bf16 %v3083, %v3083
  %v3105 = vpack.c.bf16 %v3084, %v3084
  %v3106 = vpack.c.bf16 %v3085, %v3085
  %v3107 = vpack.c.bf16 %v3086, %v3086
  %v3108 = vpack.c.bf16 %v3087, %v3087
  %v3109 = vpack.c.bf16 %v3088, %v3088
  %v3110 = vpack.c.bf16 %v3089, %v3089
  %v3111 = vpack.c.bf16 %v3090, %v3090
  %v3112 = vpack.c.bf16 %v3091, %v3091
  %v3113 = vpack.c.bf16 %v3092, %v3092
  %v3114 = vpack.c.bf16 %v3093, %v3093
  %v3115 = vpack.c.bf16 %v3094, %v3094
  %3116 = vst [vmem:[%s3] sm:$0xf] %v3095
  %3117 = vst [vmem:[%s3 + $0x4] sm:$0xf] %v3096
  %3118 = vst [vmem:[%s3 + $0x8] sm:$0xf] %v3097
  %3119 = vst [vmem:[%s3 + $0xc] sm:$0xf] %v3098
  %3120 = vst [vmem:[%s3 + $0x10] sm:$0xf] %v3099
  %3121 = vst [vmem:[%s3 + $0x14] sm:$0xf] %v3100
  %3122 = vst [vmem:[%s3 + $0x18] sm:$0xf] %v3101
  %3123 = vst [vmem:[%s3 + $0x1c] sm:$0xf] %v3102
  %3124 = vst [vmem:[%s3 + $0x20] sm:$0xf] %v3103
  %3125 = vst [vmem:[%s3 + $0x24] sm:$0xf] %v3104
  %3126 = vst [vmem:[%s3 + $0x28] sm:$0xf] %v3105
  %3127 = vst [vmem:[%s3 + $0x2c] sm:$0xf] %v3106
  %3128 = vst [vmem:[%s3 + $0x30] sm:$0xf] %v3107
  %3129 = vst [vmem:[%s3 + $0x34] sm:$0xf] %v3108
  %3130 = vst [vmem:[%s3 + $0x38] sm:$0xf] %v3109
  %3131 = vst [vmem:[%s3 + $0x3c] sm:$0xf] %v3110
  %3132 = vst [vmem:[%s3 + $0x40] sm:$0xf] %v3111
  %3133 = vst [vmem:[%s3 + $0x44] sm:$0xf] %v3112
  %3134 = vst [vmem:[%s3 + $0x48] sm:$0xf] %v3113
  %3135 = vst [vmem:[%s3 + $0x4c] sm:$0xf] %v3114
  %3136 = vst [vmem:[%s3 + $0x50] sm:$0x1] %v3115
  // Predicated region
  $region14: #{embedding_forward.5} parent=0 // pred_check
    _
  $region15: #{embedding_forward.5} parent=0 // pred_check_branch
    %3138 = sbr.rel (0) target = $region17
  $region16: #{embedding_forward.5} parent=0 // pred_region
    _
  $region17: #{embedding_forward.5} parent=0 // pred_fallthru
    _
  // Predicated region
  $region18: #{embedding_forward.5} parent=0 // pred_check
    _
  $region19: #{embedding_forward.5} parent=0 // pred_check_branch
    %3140 = sbr.rel (0) target = $region21
  $region20: #{embedding_forward.5} parent=0 // pred_region
    _
  $region21: #{embedding_forward.5} parent=0 // pred_fallthru
    _

// kernel: embedding_forward.6
$region0: #{embedding_forward.6}
  #allocation0 [shape = 'u32[]', space=smem, size = 0x4, offset = 0x4, fixed_abs, tag = 'smem constant byte address 0x4 - core index']
  #allocation1 [shape = 'u32[72,128]{1,0:T(1,128)}', space=vmem, size = 0x9000, scoped, tag = 'internal scratch']
  %s0 = inlined_call_operand.vmem [shape: bf16[98,1152], index: 0, kind: input, shape index: {}]
  %s1 = inlined_call_operand.vmem [shape: bf16[1152,128], index: 1, kind: input, shape index: {}]
  %s2 = inlined_call_operand.vmem [shape: f32[1,128], index: 2, kind: input, shape index: {}]
  %s3 = inlined_call_operand.vmem [shape: bf16[98,128], index: 3, kind: output, shape index: {}]
  %s4 = sld [smem:[#allocation0]]
  $region22: #{embedding_forward.6} parent=0
    _
  %s6 = ssub.s32 1, %s4
  %s7 = scalar_select 0, %s6, %s4
  // Predicated region
  $region2: #{embedding_forward.6} parent=0 // pred_check
    _
  $region3: #{embedding_forward.6} parent=0 // pred_check_branch
    %9 = sbr.rel (0) target = $region5
  $region4: #{embedding_forward.6} parent=0 // pred_region
    _
  $region5: #{embedding_forward.6} parent=0 // pred_fallthru
    _
  // Predicated region
  $region6: #{embedding_forward.6} parent=0 // pred_check
    _
  $region7: #{embedding_forward.6} parent=0 // pred_check_branch
    %11 = sbr.rel (0) target = $region9
  $region8: #{embedding_forward.6} parent=0 // pred_region
    _
  $region9: #{embedding_forward.6} parent=0 // pred_fallthru
    _
  // Predicated region
  $region10: #{embedding_forward.6} parent=0 // pred_check
    _
  $region11: #{embedding_forward.6} parent=0 // pred_check_branch
    %13 = sbr.rel (0) target = $region13
  $region12: #{embedding_forward.6} parent=0 // pred_region
    _
  $region13: #{embedding_forward.6} parent=0 // pred_fallthru
    _
  %v14 = vld [vmem:[%s0] sm:$0xff]
  %v15 = vld [vmem:[%s0 + $0x8] sm:$0xff]
  %v16 = vld [vmem:[%s0 + $0x10] sm:$0xff]
  %v17 = vld [vmem:[%s0 + $0x18] sm:$0xff]
  %v18 = vld [vmem:[%s0 + $0x20] sm:$0xf]
  %v19 = vld [vmem:[%s0 + $0x24] sm:$0xff]
  %v20 = vld [vmem:[%s0 + $0x2c] sm:$0xff]
  %v21 = vld [vmem:[%s0 + $0x34] sm:$0xff]
  %v22 = vld [vmem:[%s0 + $0x3c] sm:$0xff]
  %v23 = vld [vmem:[%s0 + $0x44] sm:$0xf]
  %v24 = vld [vmem:[%s0 + $0x48] sm:$0xff]
  %v25 = vld [vmem:[%s0 + $0x50] sm:$0xff]
  %v26 = vld [vmem:[%s0 + $0x58] sm:$0xff]
  %v27 = vld [vmem:[%s0 + $0x60] sm:$0xff]
  %v28 = vld [vmem:[%s0 + $0x68] sm:$0xf]
  %v29 = vld [vmem:[%s0 + $0x6c] sm:$0xff]
  %v30 = vld [vmem:[%s0 + $0x74] sm:$0xff]
  %v31 = vld [vmem:[%s0 + $0x7c] sm:$0xff]
  %v32 = vld [vmem:[%s0 + $0x84] sm:$0xff]
  %v33 = vld [vmem:[%s0 + $0x8c] sm:$0xf]
  %v34 = vld [vmem:[%s0 + $0x90] sm:$0xff]
  %v35 = vld [vmem:[%s0 + $0x98] sm:$0xff]
  %v36 = vld [vmem:[%s0 + $0xa0] sm:$0xff]
  %v37 = vld [vmem:[%s0 + $0xa8] sm:$0xff]
  %v38 = vld [vmem:[%s0 + $0xb0] sm:$0xf]
  %v39 = vld [vmem:[%s0 + $0xb4] sm:$0xff]
  %v40 = vld [vmem:[%s0 + $0xbc] sm:$0xff]
  %v41 = vld [vmem:[%s0 + $0xc4] sm:$0xff]
  %v42 = vld [vmem:[%s0 + $0xcc] sm:$0xff]
  %v43 = vld [vmem:[%s0 + $0xd4] sm:$0xf]
  %v44 = vld [vmem:[%s0 + $0xd8] sm:$0xff]
  %v45 = vld [vmem:[%s0 + $0xe0] sm:$0xff]
  %v46 = vld [vmem:[%s0 + $0xe8] sm:$0xff]
  %v47 = vld [vmem:[%s0 + $0xf0] sm:$0xff]
  %v48 = vld [vmem:[%s0 + $0xf8] sm:$0xf]
  %v49 = vld [vmem:[%s0 + $0xfc] sm:$0xff]
  %v50 = vld [vmem:[%s0 + $0x104] sm:$0xff]
  %v51 = vld [vmem:[%s0 + $0x10c] sm:$0xff]
  %v52 = vld [vmem:[%s0 + $0x114] sm:$0xff]
  %v53 = vld [vmem:[%s0 + $0x11c] sm:$0xf]
  %v54 = vld [vmem:[%s0 + $0x120] sm:$0xff]
  %v55 = vld [vmem:[%s0 + $0x128] sm:$0xff]
  %v56 = vld [vmem:[%s0 + $0x130] sm:$0xff]
  %v57 = vld [vmem:[%s0 + $0x138] sm:$0xff]
  %v58 = vld [vmem:[%s0 + $0x140] sm:$0xf]
  %v59 = vld [vmem:[%s0 + $0x144] sm:$0xff]
  %v60 = vld [vmem:[%s0 + $0x14c] sm:$0xff]
  %v61 = vld [vmem:[%s0 + $0x154] sm:$0xff]
  %v62 = vld [vmem:[%s0 + $0x15c] sm:$0xff]
  %v63 = vld [vmem:[%s0 + $0x164] sm:$0xf]
  %v64 = vld [vmem:[%s0 + $0x168] sm:$0xff]
  %v65 = vld [vmem:[%s0 + $0x170] sm:$0xff]
  %v66 = vld [vmem:[%s0 + $0x178] sm:$0xff]
  %v67 = vld [vmem:[%s0 + $0x180] sm:$0xff]
  %v68 = vld [vmem:[%s0 + $0x188] sm:$0xf]
  %v69 = vld [vmem:[%s0 + $0x18c] sm:$0xff]
  %v70 = vld [vmem:[%s0 + $0x194] sm:$0xff]
  %v71 = vld [vmem:[%s0 + $0x19c] sm:$0xff]
  %v72 = vld [vmem:[%s0 + $0x1a4] sm:$0xff]
  %v73 = vld [vmem:[%s0 + $0x1ac] sm:$0xf]
  %v74 = vld [vmem:[%s0 + $0x1b0] sm:$0x11]
  %v75 = vld [vmem:[%s0 + $0x1b8] sm:$0x11]
  %v76 = vld [vmem:[%s0 + $0x1c0] sm:$0x11]
  %v77 = vld [vmem:[%s0 + $0x1c8] sm:$0x11]
  %v78 = vld [vmem:[%s0 + $0x1d0] sm:$0x1]
  %v79 = vld [vmem:[%s1] sm:$0xf]
  %v80 = vld [vmem:[%s1 + $0x4] sm:$0xf]
  %v81 = vld [vmem:[%s1 + $0x8] sm:$0xf]
  %v82 = vld [vmem:[%s1 + $0xc] sm:$0xf]
  %v83 = vld [vmem:[%s1 + $0x10] sm:$0xf]
  %v84 = vld [vmem:[%s1 + $0x14] sm:$0xf]
  %v85 = vld [vmem:[%s1 + $0x18] sm:$0xf]
  %v86 = vld [vmem:[%s1 + $0x1c] sm:$0xf]
  %v87 = vld [vmem:[%s1 + $0x20] sm:$0xf]
  %v88 = vld [vmem:[%s1 + $0x24] sm:$0xf]
  %v89 = vld [vmem:[%s1 + $0x28] sm:$0xf]
  %v90 = vld [vmem:[%s1 + $0x2c] sm:$0xf]
  %v91 = vld [vmem:[%s1 + $0x30] sm:$0xf]
  %v92 = vld [vmem:[%s1 + $0x34] sm:$0xf]
  %v93 = vld [vmem:[%s1 + $0x38] sm:$0xf]
  %v94 = vld [vmem:[%s1 + $0x3c] sm:$0xf]
  %v95 = vld [vmem:[%s1 + $0x40] sm:$0xf]
  %v96 = vld [vmem:[%s1 + $0x44] sm:$0xf]
  %v97 = vld [vmem:[%s1 + $0x48] sm:$0xf]
  %v98 = vld [vmem:[%s1 + $0x4c] sm:$0xf]
  %v99 = vld [vmem:[%s1 + $0x50] sm:$0xf]
  %v100 = vld [vmem:[%s1 + $0x54] sm:$0xf]
  %v101 = vld [vmem:[%s1 + $0x58] sm:$0xf]
  %v102 = vld [vmem:[%s1 + $0x5c] sm:$0xf]
  %v103 = vld [vmem:[%s1 + $0x60] sm:$0xf]
  %v104 = vld [vmem:[%s1 + $0x64] sm:$0xf]
  %v105 = vld [vmem:[%s1 + $0x68] sm:$0xf]
  %v106 = vld [vmem:[%s1 + $0x6c] sm:$0xf]
  %v107 = vld [vmem:[%s1 + $0x70] sm:$0xf]
  %v108 = vld [vmem:[%s1 + $0x74] sm:$0xf]
  %v109 = vld [vmem:[%s1 + $0x78] sm:$0xf]
  %v110 = vld [vmem:[%s1 + $0x7c] sm:$0xf]
  %v111 = vld [vmem:[%s1 + $0x80] sm:$0xf]
  %v112 = vld [vmem:[%s1 + $0x84] sm:$0xf]
  %v113 = vld [vmem:[%s1 + $0x88] sm:$0xf]
  %v114 = vld [vmem:[%s1 + $0x8c] sm:$0xf]
  %v115 = vld [vmem:[%s1 + $0x90] sm:$0xf]
  %v116 = vld [vmem:[%s1 + $0x94] sm:$0xf]
  %v117 = vld [vmem:[%s1 + $0x98] sm:$0xf]
  %v118 = vld [vmem:[%s1 + $0x9c] sm:$0xf]
  %v119 = vld [vmem:[%s1 + $0xa0] sm:$0xf]
  %v120 = vld [vmem:[%s1 + $0xa4] sm:$0xf]
  %v121 = vld [vmem:[%s1 + $0xa8] sm:$0xf]
  %v122 = vld [vmem:[%s1 + $0xac] sm:$0xf]
  %v123 = vld [vmem:[%s1 + $0xb0] sm:$0xf]
  %v124 = vld [vmem:[%s1 + $0xb4] sm:$0xf]
  %v125 = vld [vmem:[%s1 + $0xb8] sm:$0xf]
  %v126 = vld [vmem:[%s1 + $0xbc] sm:$0xf]
  %v127 = vld [vmem:[%s1 + $0xc0] sm:$0xf]
  %v128 = vld [vmem:[%s1 + $0xc4] sm:$0xf]
  %v129 = vld [vmem:[%s1 + $0xc8] sm:$0xf]
  %v130 = vld [vmem:[%s1 + $0xcc] sm:$0xf]
  %v131 = vld [vmem:[%s1 + $0xd0] sm:$0xf]
  %v132 = vld [vmem:[%s1 + $0xd4] sm:$0xf]
  %v133 = vld [vmem:[%s1 + $0xd8] sm:$0xf]
  %v134 = vld [vmem:[%s1 + $0xdc] sm:$0xf]
  %v135 = vld [vmem:[%s1 + $0xe0] sm:$0xf]
  %v136 = vld [vmem:[%s1 + $0xe4] sm:$0xf]
  %v137 = vld [vmem:[%s1 + $0xe8] sm:$0xf]
  %v138 = vld [vmem:[%s1 + $0xec] sm:$0xf]
  %v139 = vld [vmem:[%s1 + $0xf0] sm:$0xf]
  %v140 = vld [vmem:[%s1 + $0xf4] sm:$0xf]
  %v141 = vld [vmem:[%s1 + $0xf8] sm:$0xf]
  %v142 = vld [vmem:[%s1 + $0xfc] sm:$0xf]
  %v143 = vld [vmem:[%s1 + $0x100] sm:$0xf]
  %v144 = vld [vmem:[%s1 + $0x104] sm:$0xf]
  %v145 = vld [vmem:[%s1 + $0x108] sm:$0xf]
  %v146 = vld [vmem:[%s1 + $0x10c] sm:$0xf]
  %v147 = vld [vmem:[%s1 + $0x110] sm:$0xf]
  %v148 = vld [vmem:[%s1 + $0x114] sm:$0xf]
  %v149 = vld [vmem:[%s1 + $0x118] sm:$0xf]
  %v150 = vld [vmem:[%s1 + $0x11c] sm:$0xf]
  %v151 = vld [vmem:[%s1 + $0x120] sm:$0xf]
  %v152 = vld [vmem:[%s1 + $0x124] sm:$0xf]
  %v153 = vld [vmem:[%s1 + $0x128] sm:$0xf]
  %v154 = vld [vmem:[%s1 + $0x12c] sm:$0xf]
  %v155 = vld [vmem:[%s1 + $0x130] sm:$0xf]
  %v156 = vld [vmem:[%s1 + $0x134] sm:$0xf]
  %v157 = vld [vmem:[%s1 + $0x138] sm:$0xf]
  %v158 = vld [vmem:[%s1 + $0x13c] sm:$0xf]
  %v159 = vld [vmem:[%s1 + $0x140] sm:$0xf]
  %v160 = vld [vmem:[%s1 + $0x144] sm:$0xf]
  %v161 = vld [vmem:[%s1 + $0x148] sm:$0xf]
  %v162 = vld [vmem:[%s1 + $0x14c] sm:$0xf]
  %v163 = vld [vmem:[%s1 + $0x150] sm:$0xf]
  %v164 = vld [vmem:[%s1 + $0x154] sm:$0xf]
  %v165 = vld [vmem:[%s1 + $0x158] sm:$0xf]
  %v166 = vld [vmem:[%s1 + $0x15c] sm:$0xf]
  %v167 = vld [vmem:[%s1 + $0x160] sm:$0xf]
  %v168 = vld [vmem:[%s1 + $0x164] sm:$0xf]
  %v169 = vld [vmem:[%s1 + $0x168] sm:$0xf]
  %v170 = vld [vmem:[%s1 + $0x16c] sm:$0xf]
  %v171 = vld [vmem:[%s1 + $0x170] sm:$0xf]
  %v172 = vld [vmem:[%s1 + $0x174] sm:$0xf]
  %v173 = vld [vmem:[%s1 + $0x178] sm:$0xf]
  %v174 = vld [vmem:[%s1 + $0x17c] sm:$0xf]
  %v175 = vld [vmem:[%s1 + $0x180] sm:$0xf]
  %v176 = vld [vmem:[%s1 + $0x184] sm:$0xf]
  %v177 = vld [vmem:[%s1 + $0x188] sm:$0xf]
  %v178 = vld [vmem:[%s1 + $0x18c] sm:$0xf]
  %v179 = vld [vmem:[%s1 + $0x190] sm:$0xf]
  %v180 = vld [vmem:[%s1 + $0x194] sm:$0xf]
  %v181 = vld [vmem:[%s1 + $0x198] sm:$0xf]
  %v182 = vld [vmem:[%s1 + $0x19c] sm:$0xf]
  %v183 = vld [vmem:[%s1 + $0x1a0] sm:$0xf]
  %v184 = vld [vmem:[%s1 + $0x1a4] sm:$0xf]
  %v185 = vld [vmem:[%s1 + $0x1a8] sm:$0xf]
  %v186 = vld [vmem:[%s1 + $0x1ac] sm:$0xf]
  %v187 = vld [vmem:[%s1 + $0x1b0] sm:$0xf]
  %v188 = vld [vmem:[%s1 + $0x1b4] sm:$0xf]
  %v189 = vld [vmem:[%s1 + $0x1b8] sm:$0xf]
  %v190 = vld [vmem:[%s1 + $0x1bc] sm:$0xf]
  %v191 = vld [vmem:[%s1 + $0x1c0] sm:$0xf]
  %v192 = vld [vmem:[%s1 + $0x1c4] sm:$0xf]
  %v193 = vld [vmem:[%s1 + $0x1c8] sm:$0xf]
  %v194 = vld [vmem:[%s1 + $0x1cc] sm:$0xf]
  %v195 = vld [vmem:[%s1 + $0x1d0] sm:$0xf]
  %v196 = vld [vmem:[%s1 + $0x1d4] sm:$0xf]
  %v197 = vld [vmem:[%s1 + $0x1d8] sm:$0xf]
  %v198 = vld [vmem:[%s1 + $0x1dc] sm:$0xf]
  %v199 = vld [vmem:[%s1 + $0x1e0] sm:$0xf]
  %v200 = vld [vmem:[%s1 + $0x1e4] sm:$0xf]
  %v201 = vld [vmem:[%s1 + $0x1e8] sm:$0xf]
  %v202 = vld [vmem:[%s1 + $0x1ec] sm:$0xf]
  %v203 = vld [vmem:[%s1 + $0x1f0] sm:$0xf]
  %v204 = vld [vmem:[%s1 + $0x1f4] sm:$0xf]
  %v205 = vld [vmem:[%s1 + $0x1f8] sm:$0xf]
  %v206 = vld [vmem:[%s1 + $0x1fc] sm:$0xf]
  %v207 = vld [vmem:[%s1 + $0x200] sm:$0xf]
  %v208 = vld [vmem:[%s1 + $0x204] sm:$0xf]
  %v209 = vld [vmem:[%s1 + $0x208] sm:$0xf]
  %v210 = vld [vmem:[%s1 + $0x20c] sm:$0xf]
  %v211 = vld [vmem:[%s1 + $0x210] sm:$0xf]
  %v212 = vld [vmem:[%s1 + $0x214] sm:$0xf]
  %v213 = vld [vmem:[%s1 + $0x218] sm:$0xf]
  %v214 = vld [vmem:[%s1 + $0x21c] sm:$0xf]
  %v215 = vld [vmem:[%s1 + $0x220] sm:$0xf]
  %v216 = vld [vmem:[%s1 + $0x224] sm:$0xf]
  %v217 = vld [vmem:[%s1 + $0x228] sm:$0xf]
  %v218 = vld [vmem:[%s1 + $0x22c] sm:$0xf]
  %v219 = vld [vmem:[%s1 + $0x230] sm:$0xf]
  %v220 = vld [vmem:[%s1 + $0x234] sm:$0xf]
  %v221 = vld [vmem:[%s1 + $0x238] sm:$0xf]
  %v222 = vld [vmem:[%s1 + $0x23c] sm:$0xf]
  %v223 = vld [vmem:[%s2] sm:$0x1]
  %v225 = vperm.slane %v223, 0
  %v292 = vunpack.c.l.b16 %v14
  %v293 = vunpack.c.h.b16 %v14
  %v294 = vunpack.c.l.b16 %v15
  %v295 = vunpack.c.h.b16 %v15
  %v296 = vunpack.c.l.b16 %v16
  %v297 = vunpack.c.h.b16 %v16
  %v298 = vunpack.c.l.b16 %v17
  %v299 = vunpack.c.h.b16 %v17
  %v300 = vunpack.c.l.b16 %v18
  %v301 = vunpack.c.l.b16 %v19
  %v302 = vunpack.c.h.b16 %v19
  %v303 = vunpack.c.l.b16 %v20
  %v304 = vunpack.c.h.b16 %v20
  %v305 = vunpack.c.l.b16 %v21
  %v306 = vunpack.c.h.b16 %v21
  %v307 = vunpack.c.l.b16 %v22
  %v308 = vunpack.c.h.b16 %v22
  %v309 = vunpack.c.l.b16 %v23
  %v310 = vunpack.c.l.b16 %v24
  %v311 = vunpack.c.h.b16 %v24
  %v312 = vunpack.c.l.b16 %v25
  %v313 = vunpack.c.h.b16 %v25
  %v314 = vunpack.c.l.b16 %v26
  %v315 = vunpack.c.h.b16 %v26
  %v316 = vunpack.c.l.b16 %v27
  %v317 = vunpack.c.h.b16 %v27
  %v318 = vunpack.c.l.b16 %v28
  %v319 = vunpack.c.l.b16 %v29
  %v320 = vunpack.c.h.b16 %v29
  %v321 = vunpack.c.l.b16 %v30
  %v322 = vunpack.c.h.b16 %v30
  %v323 = vunpack.c.l.b16 %v31
  %v324 = vunpack.c.h.b16 %v31
  %v325 = vunpack.c.l.b16 %v32
  %v326 = vunpack.c.h.b16 %v32
  %v327 = vunpack.c.l.b16 %v33
  %v328 = vunpack.c.l.b16 %v34
  %v329 = vunpack.c.h.b16 %v34
  %v330 = vunpack.c.l.b16 %v35
  %v331 = vunpack.c.h.b16 %v35
  %v332 = vunpack.c.l.b16 %v36
  %v333 = vunpack.c.h.b16 %v36
  %v334 = vunpack.c.l.b16 %v37
  %v335 = vunpack.c.h.b16 %v37
  %v336 = vunpack.c.l.b16 %v38
  %v337 = vunpack.c.l.b16 %v39
  %v338 = vunpack.c.h.b16 %v39
  %v339 = vunpack.c.l.b16 %v40
  %v340 = vunpack.c.h.b16 %v40
  %v341 = vunpack.c.l.b16 %v41
  %v342 = vunpack.c.h.b16 %v41
  %v343 = vunpack.c.l.b16 %v42
  %v344 = vunpack.c.h.b16 %v42
  %v345 = vunpack.c.l.b16 %v43
  %v346 = vunpack.c.l.b16 %v44
  %v347 = vunpack.c.h.b16 %v44
  %v348 = vunpack.c.l.b16 %v45
  %v349 = vunpack.c.h.b16 %v45
  %v350 = vunpack.c.l.b16 %v46
  %v351 = vunpack.c.h.b16 %v46
  %v352 = vunpack.c.l.b16 %v47
  %v353 = vunpack.c.h.b16 %v47
  %v354 = vunpack.c.l.b16 %v48
  %v355 = vunpack.c.l.b16 %v49
  %v356 = vunpack.c.h.b16 %v49
  %v357 = vunpack.c.l.b16 %v50
  %v358 = vunpack.c.h.b16 %v50
  %v359 = vunpack.c.l.b16 %v51
  %v360 = vunpack.c.h.b16 %v51
  %v361 = vunpack.c.l.b16 %v52
  %v362 = vunpack.c.h.b16 %v52
  %v363 = vunpack.c.l.b16 %v53
  %v364 = vunpack.c.l.b16 %v54
  %v365 = vunpack.c.h.b16 %v54
  %v366 = vunpack.c.l.b16 %v55
  %v367 = vunpack.c.h.b16 %v55
  %v368 = vunpack.c.l.b16 %v56
  %v369 = vunpack.c.h.b16 %v56
  %v370 = vunpack.c.l.b16 %v57
  %v371 = vunpack.c.h.b16 %v57
  %v372 = vunpack.c.l.b16 %v58
  %v373 = vunpack.c.l.b16 %v59
  %v374 = vunpack.c.h.b16 %v59
  %v375 = vunpack.c.l.b16 %v60
  %v376 = vunpack.c.h.b16 %v60
  %v377 = vunpack.c.l.b16 %v61
  %v378 = vunpack.c.h.b16 %v61
  %v379 = vunpack.c.l.b16 %v62
  %v380 = vunpack.c.h.b16 %v62
  %v381 = vunpack.c.l.b16 %v63
  %v382 = vunpack.c.l.b16 %v64
  %v383 = vunpack.c.h.b16 %v64
  %v384 = vunpack.c.l.b16 %v65
  %v385 = vunpack.c.h.b16 %v65
  %v386 = vunpack.c.l.b16 %v66
  %v387 = vunpack.c.h.b16 %v66
  %v388 = vunpack.c.l.b16 %v67
  %v389 = vunpack.c.h.b16 %v67
  %v390 = vunpack.c.l.b16 %v68
  %v391 = vunpack.c.l.b16 %v69
  %v392 = vunpack.c.h.b16 %v69
  %v393 = vunpack.c.l.b16 %v70
  %v394 = vunpack.c.h.b16 %v70
  %v395 = vunpack.c.l.b16 %v71
  %v396 = vunpack.c.h.b16 %v71
  %v397 = vunpack.c.l.b16 %v72
  %v398 = vunpack.c.h.b16 %v72
  %v399 = vunpack.c.l.b16 %v73
  %v400 = vunpack.c.l.b16 %v74
  %v401 = vunpack.c.h.b16 %v74
  %v402 = vunpack.c.l.b16 %v75
  %v403 = vunpack.c.h.b16 %v75
  %v404 = vunpack.c.l.b16 %v76
  %v405 = vunpack.c.h.b16 %v76
  %v406 = vunpack.c.l.b16 %v77
  %v407 = vunpack.c.h.b16 %v77
  %v408 = vunpack.c.l.b16 %v78
  %v409 = vpack.c.b16 %v301, %v292
  %v410 = vpack.c.b16 %v302, %v293
  %v411 = vpack.c.b16 %v303, %v294
  %v412 = vpack.c.b16 %v304, %v295
  %v413 = vpack.c.b16 %v305, %v296
  %v414 = vpack.c.b16 %v306, %v297
  %v415 = vpack.c.b16 %v307, %v298
  %v416 = vpack.c.b16 %v308, %v299
  %v417 = vpack.c.b16 %v309, %v300
  %v418 = vpack.c.b16 %v319, %v310
  %v419 = vpack.c.b16 %v320, %v311
  %v420 = vpack.c.b16 %v321, %v312
  %v421 = vpack.c.b16 %v322, %v313
  %v422 = vpack.c.b16 %v323, %v314
  %v423 = vpack.c.b16 %v324, %v315
  %v424 = vpack.c.b16 %v325, %v316
  %v425 = vpack.c.b16 %v326, %v317
  %v426 = vpack.c.b16 %v327, %v318
  %v427 = vpack.c.b16 %v337, %v328
  %v428 = vpack.c.b16 %v338, %v329
  %v429 = vpack.c.b16 %v339, %v330
  %v430 = vpack.c.b16 %v340, %v331
  %v431 = vpack.c.b16 %v341, %v332
  %v432 = vpack.c.b16 %v342, %v333
  %v433 = vpack.c.b16 %v343, %v334
  %v434 = vpack.c.b16 %v344, %v335
  %v435 = vpack.c.b16 %v345, %v336
  %v436 = vpack.c.b16 %v355, %v346
  %v437 = vpack.c.b16 %v356, %v347
  %v438 = vpack.c.b16 %v357, %v348
  %v439 = vpack.c.b16 %v358, %v349
  %v440 = vpack.c.b16 %v359, %v350
  %v441 = vpack.c.b16 %v360, %v351
  %v442 = vpack.c.b16 %v361, %v352
  %v443 = vpack.c.b16 %v362, %v353
  %v444 = vpack.c.b16 %v363, %v354
  %v445 = vpack.c.b16 %v373, %v364
  %v446 = vpack.c.b16 %v374, %v365
  %v447 = vpack.c.b16 %v375, %v366
  %v448 = vpack.c.b16 %v376, %v367
  %v449 = vpack.c.b16 %v377, %v368
  %v450 = vpack.c.b16 %v378, %v369
  %v451 = vpack.c.b16 %v379, %v370
  %v452 = vpack.c.b16 %v380, %v371
  %v453 = vpack.c.b16 %v381, %v372
  %v454 = vpack.c.b16 %v391, %v382
  %v455 = vpack.c.b16 %v392, %v383
  %v456 = vpack.c.b16 %v393, %v384
  %v457 = vpack.c.b16 %v394, %v385
  %v458 = vpack.c.b16 %v395, %v386
  %v459 = vpack.c.b16 %v396, %v387
  %v460 = vpack.c.b16 %v397, %v388
  %v461 = vpack.c.b16 %v398, %v389
  %v462 = vpack.c.b16 %v399, %v390
  %v463 = vpack.c.b16 %v400, %v400
  %v464 = vpack.c.b16 %v401, %v401
  %v465 = vpack.c.b16 %v402, %v402
  %v466 = vpack.c.b16 %v403, %v403
  %v467 = vpack.c.b16 %v404, %v404
  %v468 = vpack.c.b16 %v405, %v405
  %v469 = vpack.c.b16 %v406, %v406
  %v470 = vpack.c.b16 %v407, %v407
  %v471 = vpack.c.b16 %v408, %v408
  %v679 = vunpack.c.l.b16 %v79
  %v680 = vunpack.c.l.b16 %v80
  %v681 = vunpack.c.l.b16 %v81
  %v682 = vunpack.c.l.b16 %v82
  %v683 = vunpack.c.l.b16 %v83
  %v684 = vunpack.c.l.b16 %v84
  %v685 = vunpack.c.l.b16 %v85
  %v686 = vunpack.c.l.b16 %v86
  %v687 = vunpack.c.l.b16 %v87
  %v688 = vunpack.c.l.b16 %v88
  %v689 = vunpack.c.l.b16 %v89
  %v690 = vunpack.c.l.b16 %v90
  %v691 = vunpack.c.l.b16 %v91
  %v692 = vunpack.c.l.b16 %v92
  %v693 = vunpack.c.l.b16 %v93
  %v694 = vunpack.c.l.b16 %v94
  %v695 = vunpack.c.l.b16 %v95
  %v696 = vunpack.c.l.b16 %v96
  %v697 = vunpack.c.l.b16 %v97
  %v698 = vunpack.c.l.b16 %v98
  %v699 = vunpack.c.l.b16 %v99
  %v700 = vunpack.c.l.b16 %v100
  %v701 = vunpack.c.l.b16 %v101
  %v702 = vunpack.c.l.b16 %v102
  %v703 = vunpack.c.l.b16 %v103
  %v704 = vunpack.c.l.b16 %v104
  %v705 = vunpack.c.l.b16 %v105
  %v706 = vunpack.c.l.b16 %v106
  %v707 = vunpack.c.l.b16 %v107
  %v708 = vunpack.c.l.b16 %v108
  %v709 = vunpack.c.l.b16 %v109
  %v710 = vunpack.c.l.b16 %v110
  %v711 = vunpack.c.l.b16 %v111
  %v712 = vunpack.c.l.b16 %v112
  %v713 = vunpack.c.l.b16 %v113
  %v714 = vunpack.c.l.b16 %v114
  %v715 = vunpack.c.l.b16 %v115
  %v716 = vunpack.c.l.b16 %v116
  %v717 = vunpack.c.l.b16 %v117
  %v718 = vunpack.c.l.b16 %v118
  %v719 = vunpack.c.l.b16 %v119
  %v720 = vunpack.c.l.b16 %v120
  %v721 = vunpack.c.l.b16 %v121
  %v722 = vunpack.c.l.b16 %v122
  %v723 = vunpack.c.l.b16 %v123
  %v724 = vunpack.c.l.b16 %v124
  %v725 = vunpack.c.l.b16 %v125
  %v726 = vunpack.c.l.b16 %v126
  %v727 = vunpack.c.l.b16 %v127
  %v728 = vunpack.c.l.b16 %v128
  %v729 = vunpack.c.l.b16 %v129
  %v730 = vunpack.c.l.b16 %v130
  %v731 = vunpack.c.l.b16 %v131
  %v732 = vunpack.c.l.b16 %v132
  %v733 = vunpack.c.l.b16 %v133
  %v734 = vunpack.c.l.b16 %v134
  %v735 = vunpack.c.l.b16 %v135
  %v736 = vunpack.c.l.b16 %v136
  %v737 = vunpack.c.l.b16 %v137
  %v738 = vunpack.c.l.b16 %v138
  %v739 = vunpack.c.l.b16 %v139
  %v740 = vunpack.c.l.b16 %v140
  %v741 = vunpack.c.l.b16 %v141
  %v742 = vunpack.c.l.b16 %v142
  %v743 = vunpack.c.l.b16 %v143
  %v744 = vunpack.c.l.b16 %v144
  %v745 = vunpack.c.l.b16 %v145
  %v746 = vunpack.c.l.b16 %v146
  %v747 = vunpack.c.l.b16 %v147
  %v748 = vunpack.c.l.b16 %v148
  %v749 = vunpack.c.l.b16 %v149
  %v750 = vunpack.c.l.b16 %v150
  %v751 = vunpack.c.l.b16 %v151
  %v752 = vunpack.c.l.b16 %v152
  %v753 = vunpack.c.l.b16 %v153
  %v754 = vunpack.c.l.b16 %v154
  %v755 = vunpack.c.l.b16 %v155
  %v756 = vunpack.c.l.b16 %v156
  %v757 = vunpack.c.l.b16 %v157
  %v758 = vunpack.c.l.b16 %v158
  %v759 = vunpack.c.l.b16 %v159
  %v760 = vunpack.c.l.b16 %v160
  %v761 = vunpack.c.l.b16 %v161
  %v762 = vunpack.c.l.b16 %v162
  %v763 = vunpack.c.l.b16 %v163
  %v764 = vunpack.c.l.b16 %v164
  %v765 = vunpack.c.l.b16 %v165
  %v766 = vunpack.c.l.b16 %v166
  %v767 = vunpack.c.l.b16 %v167
  %v768 = vunpack.c.l.b16 %v168
  %v769 = vunpack.c.l.b16 %v169
  %v770 = vunpack.c.l.b16 %v170
  %v771 = vunpack.c.l.b16 %v171
  %v772 = vunpack.c.l.b16 %v172
  %v773 = vunpack.c.l.b16 %v173
  %v774 = vunpack.c.l.b16 %v174
  %v775 = vunpack.c.l.b16 %v175
  %v776 = vunpack.c.l.b16 %v176
  %v777 = vunpack.c.l.b16 %v177
  %v778 = vunpack.c.l.b16 %v178
  %v779 = vunpack.c.l.b16 %v179
  %v780 = vunpack.c.l.b16 %v180
  %v781 = vunpack.c.l.b16 %v181
  %v782 = vunpack.c.l.b16 %v182
  %v783 = vunpack.c.l.b16 %v183
  %v784 = vunpack.c.l.b16 %v184
  %v785 = vunpack.c.l.b16 %v185
  %v786 = vunpack.c.l.b16 %v186
  %v787 = vunpack.c.l.b16 %v187
  %v788 = vunpack.c.l.b16 %v188
  %v789 = vunpack.c.l.b16 %v189
  %v790 = vunpack.c.l.b16 %v190
  %v791 = vunpack.c.l.b16 %v191
  %v792 = vunpack.c.l.b16 %v192
  %v793 = vunpack.c.l.b16 %v193
  %v794 = vunpack.c.l.b16 %v194
  %v795 = vunpack.c.l.b16 %v195
  %v796 = vunpack.c.l.b16 %v196
  %v797 = vunpack.c.l.b16 %v197
  %v798 = vunpack.c.l.b16 %v198
  %v799 = vunpack.c.l.b16 %v199
  %v800 = vunpack.c.l.b16 %v200
  %v801 = vunpack.c.l.b16 %v201
  %v802 = vunpack.c.l.b16 %v202
  %v803 = vunpack.c.l.b16 %v203
  %v804 = vunpack.c.l.b16 %v204
  %v805 = vunpack.c.l.b16 %v205
  %v806 = vunpack.c.l.b16 %v206
  %v807 = vunpack.c.l.b16 %v207
  %v808 = vunpack.c.l.b16 %v208
  %v809 = vunpack.c.l.b16 %v209
  %v810 = vunpack.c.l.b16 %v210
  %v811 = vunpack.c.l.b16 %v211
  %v812 = vunpack.c.l.b16 %v212
  %v813 = vunpack.c.l.b16 %v213
  %v814 = vunpack.c.l.b16 %v214
  %v815 = vunpack.c.l.b16 %v215
  %v816 = vunpack.c.l.b16 %v216
  %v817 = vunpack.c.l.b16 %v217
  %v818 = vunpack.c.l.b16 %v218
  %v819 = vunpack.c.l.b16 %v219
  %v820 = vunpack.c.l.b16 %v220
  %v821 = vunpack.c.l.b16 %v221
  %v822 = vunpack.c.l.b16 %v222
  %v823 = vpack.c.b16 %v680, %v679
  %v824 = vpack.c.b16 %v682, %v681
  %v825 = vpack.c.b16 %v684, %v683
  %v826 = vpack.c.b16 %v686, %v685
  %v827 = vpack.c.b16 %v688, %v687
  %v828 = vpack.c.b16 %v690, %v689
  %v829 = vpack.c.b16 %v692, %v691
  %v830 = vpack.c.b16 %v694, %v693
  %v831 = vpack.c.b16 %v696, %v695
  %v832 = vpack.c.b16 %v698, %v697
  %v833 = vpack.c.b16 %v700, %v699
  %v834 = vpack.c.b16 %v702, %v701
  %v835 = vpack.c.b16 %v704, %v703
  %v836 = vpack.c.b16 %v706, %v705
  %v837 = vpack.c.b16 %v708, %v707
  %v838 = vpack.c.b16 %v710, %v709
  %v839 = vpack.c.b16 %v712, %v711
  %v840 = vpack.c.b16 %v714, %v713
  %v841 = vpack.c.b16 %v716, %v715
  %v842 = vpack.c.b16 %v718, %v717
  %v843 = vpack.c.b16 %v720, %v719
  %v844 = vpack.c.b16 %v722, %v721
  %v845 = vpack.c.b16 %v724, %v723
  %v846 = vpack.c.b16 %v726, %v725
  %v847 = vpack.c.b16 %v728, %v727
  %v848 = vpack.c.b16 %v730, %v729
  %v849 = vpack.c.b16 %v732, %v731
  %v850 = vpack.c.b16 %v734, %v733
  %v851 = vpack.c.b16 %v736, %v735
  %v852 = vpack.c.b16 %v738, %v737
  %v853 = vpack.c.b16 %v740, %v739
  %v854 = vpack.c.b16 %v742, %v741
  %v855 = vpack.c.b16 %v744, %v743
  %v856 = vpack.c.b16 %v746, %v745
  %v857 = vpack.c.b16 %v748, %v747
  %v858 = vpack.c.b16 %v750, %v749
  %v859 = vpack.c.b16 %v752, %v751
  %v860 = vpack.c.b16 %v754, %v753
  %v861 = vpack.c.b16 %v756, %v755
  %v862 = vpack.c.b16 %v758, %v757
  %v863 = vpack.c.b16 %v760, %v759
  %v864 = vpack.c.b16 %v762, %v761
  %v865 = vpack.c.b16 %v764, %v763
  %v866 = vpack.c.b16 %v766, %v765
  %v867 = vpack.c.b16 %v768, %v767
  %v868 = vpack.c.b16 %v770, %v769
  %v869 = vpack.c.b16 %v772, %v771
  %v870 = vpack.c.b16 %v774, %v773
  %v871 = vpack.c.b16 %v776, %v775
  %v872 = vpack.c.b16 %v778, %v777
  %v873 = vpack.c.b16 %v780, %v779
  %v874 = vpack.c.b16 %v782, %v781
  %v875 = vpack.c.b16 %v784, %v783
  %v876 = vpack.c.b16 %v786, %v785
  %v877 = vpack.c.b16 %v788, %v787
  %v878 = vpack.c.b16 %v790, %v789
  %v879 = vpack.c.b16 %v792, %v791
  %v880 = vpack.c.b16 %v794, %v793
  %v881 = vpack.c.b16 %v796, %v795
  %v882 = vpack.c.b16 %v798, %v797
  %v883 = vpack.c.b16 %v800, %v799
  %v884 = vpack.c.b16 %v802, %v801
  %v885 = vpack.c.b16 %v804, %v803
  %v886 = vpack.c.b16 %v806, %v805
  %v887 = vpack.c.b16 %v808, %v807
  %v888 = vpack.c.b16 %v810, %v809
  %v889 = vpack.c.b16 %v812, %v811
  %v890 = vpack.c.b16 %v814, %v813
  %v891 = vpack.c.b16 %v816, %v815
  %v892 = vpack.c.b16 %v818, %v817
  %v893 = vpack.c.b16 %v820, %v819
  %v894 = vpack.c.b16 %v822, %v821
  %967 = vmatpush.bf16.msra.mxu0 %v830
  %968 = vmatpush.bf16.msra.mxu0 %v829
  %969 = vmatpush.bf16.msra.mxu0 %v828
  %970 = vmatpush.bf16.msra.mxu0 %v827
  %971 = vmatpush.bf16.msra.mxu0 %v826
  %972 = vmatpush.bf16.msra.mxu0 %v825
  %973 = vmatpush.bf16.msra.mxu0 %v824
  %974 = vmatpush.bf16.msra.mxu0 %v823
  %975 = vmatmul.bf16.gmra.mxu0 %v409
  %v976 = vpop.f32.mrf.mxu0
  %v977 = vadd.f32 %v225, %v976
  %v978 = vpop.f32.mrf.mxu0
  %v979 = vadd.f32 %v225, %v978
  %980 = vmatmul.bf16.gmra.mxu0 %v418
  %v981 = vpop.f32.mrf.mxu0
  %v982 = vadd.f32 %v225, %v981
  %v983 = vpop.f32.mrf.mxu0
  %v984 = vadd.f32 %v225, %v983
  %985 = vmatmul.bf16.gmra.mxu0 %v427
  %v986 = vpop.f32.mrf.mxu0
  %v987 = vadd.f32 %v225, %v986
  %v988 = vpop.f32.mrf.mxu0
  %v989 = vadd.f32 %v225, %v988
  %990 = vmatmul.bf16.gmra.mxu0 %v436
  %v991 = vpop.f32.mrf.mxu0
  %v992 = vadd.f32 %v225, %v991
  %v993 = vpop.f32.mrf.mxu0
  %v994 = vadd.f32 %v225, %v993
  %995 = vmatmul.bf16.gmra.mxu0 %v445
  %v996 = vpop.f32.mrf.mxu0
  %v997 = vadd.f32 %v225, %v996
  %v998 = vpop.f32.mrf.mxu0
  %v999 = vadd.f32 %v225, %v998
  %1000 = vmatmul.bf16.gmra.mxu0 %v454
  %v1001 = vpop.f32.mrf.mxu0
  %v1002 = vadd.f32 %v225, %v1001
  %v1003 = vpop.f32.mrf.mxu0
  %v1004 = vadd.f32 %v225, %v1003
  %1005 = vmatmul.bf16.gmra.mxu0 %v463
  %v1006 = vpop.f32.mrf.mxu0
  %v1007 = vadd.f32 %v225, %v1006
  %v1008 = vpop.f32.mrf.mxu0
  %1009 = vdwg.mxu0
  %1010 = vmatpush.bf16.msra.mxu0 %v838
  %1011 = vmatpush.bf16.msra.mxu0 %v837
  %1012 = vmatpush.bf16.msra.mxu0 %v836
  %1013 = vmatpush.bf16.msra.mxu0 %v835
  %1014 = vmatpush.bf16.msra.mxu0 %v834
  %1015 = vmatpush.bf16.msra.mxu0 %v833
  %1016 = vmatpush.bf16.msra.mxu0 %v832
  %1017 = vmatpush.bf16.msra.mxu0 %v831
  %1018 = vmatmul.bf16.gmra.mxu0 %v410
  %v1019 = vpop.f32.mrf.mxu0
  %v1020 = vadd.f32 %v977, %v1019
  %v1021 = vpop.f32.mrf.mxu0
  %v1022 = vadd.f32 %v979, %v1021
  %1023 = vmatmul.bf16.gmra.mxu0 %v419
  %v1024 = vpop.f32.mrf.mxu0
  %v1025 = vadd.f32 %v982, %v1024
  %v1026 = vpop.f32.mrf.mxu0
  %v1027 = vadd.f32 %v984, %v1026
  %1028 = vmatmul.bf16.gmra.mxu0 %v428
  %v1029 = vpop.f32.mrf.mxu0
  %v1030 = vadd.f32 %v987, %v1029
  %v1031 = vpop.f32.mrf.mxu0
  %v1032 = vadd.f32 %v989, %v1031
  %1033 = vmatmul.bf16.gmra.mxu0 %v437
  %v1034 = vpop.f32.mrf.mxu0
  %v1035 = vadd.f32 %v992, %v1034
  %v1036 = vpop.f32.mrf.mxu0
  %v1037 = vadd.f32 %v994, %v1036
  %1038 = vmatmul.bf16.gmra.mxu0 %v446
  %v1039 = vpop.f32.mrf.mxu0
  %v1040 = vadd.f32 %v997, %v1039
  %v1041 = vpop.f32.mrf.mxu0
  %v1042 = vadd.f32 %v999, %v1041
  %1043 = vmatmul.bf16.gmra.mxu0 %v455
  %v1044 = vpop.f32.mrf.mxu0
  %v1045 = vadd.f32 %v1002, %v1044
  %v1046 = vpop.f32.mrf.mxu0
  %v1047 = vadd.f32 %v1004, %v1046
  %1048 = vmatmul.bf16.gmra.mxu0 %v464
  %v1049 = vpop.f32.mrf.mxu0
  %v1050 = vadd.f32 %v1007, %v1049
  %v1051 = vpop.f32.mrf.mxu0
  %1052 = vdwg.mxu0
  %1053 = vmatpush.bf16.msra.mxu0 %v846
  %1054 = vmatpush.bf16.msra.mxu0 %v845
  %1055 = vmatpush.bf16.msra.mxu0 %v844
  %1056 = vmatpush.bf16.msra.mxu0 %v843
  %1057 = vmatpush.bf16.msra.mxu0 %v842
  %1058 = vmatpush.bf16.msra.mxu0 %v841
  %1059 = vmatpush.bf16.msra.mxu0 %v840
  %1060 = vmatpush.bf16.msra.mxu0 %v839
  %1061 = vmatmul.bf16.gmra.mxu0 %v411
  %v1062 = vpop.f32.mrf.mxu0
  %v1063 = vadd.f32 %v1020, %v1062
  %v1064 = vpop.f32.mrf.mxu0
  %v1065 = vadd.f32 %v1022, %v1064
  %1066 = vmatmul.bf16.gmra.mxu0 %v420
  %v1067 = vpop.f32.mrf.mxu0
  %v1068 = vadd.f32 %v1025, %v1067
  %v1069 = vpop.f32.mrf.mxu0
  %v1070 = vadd.f32 %v1027, %v1069
  %1071 = vmatmul.bf16.gmra.mxu0 %v429
  %v1072 = vpop.f32.mrf.mxu0
  %v1073 = vadd.f32 %v1030, %v1072
  %v1074 = vpop.f32.mrf.mxu0
  %v1075 = vadd.f32 %v1032, %v1074
  %1076 = vmatmul.bf16.gmra.mxu0 %v438
  %v1077 = vpop.f32.mrf.mxu0
  %v1078 = vadd.f32 %v1035, %v1077
  %v1079 = vpop.f32.mrf.mxu0
  %v1080 = vadd.f32 %v1037, %v1079
  %1081 = vmatmul.bf16.gmra.mxu0 %v447
  %v1082 = vpop.f32.mrf.mxu0
  %v1083 = vadd.f32 %v1040, %v1082
  %v1084 = vpop.f32.mrf.mxu0
  %v1085 = vadd.f32 %v1042, %v1084
  %1086 = vmatmul.bf16.gmra.mxu0 %v456
  %v1087 = vpop.f32.mrf.mxu0
  %v1088 = vadd.f32 %v1045, %v1087
  %v1089 = vpop.f32.mrf.mxu0
  %v1090 = vadd.f32 %v1047, %v1089
  %1091 = vmatmul.bf16.gmra.mxu0 %v465
  %v1092 = vpop.f32.mrf.mxu0
  %v1093 = vadd.f32 %v1050, %v1092
  %v1094 = vpop.f32.mrf.mxu0
  %1095 = vdwg.mxu0
  %1096 = vmatpush.bf16.msra.mxu0 %v854
  %1097 = vmatpush.bf16.msra.mxu0 %v853
  %1098 = vmatpush.bf16.msra.mxu0 %v852
  %1099 = vmatpush.bf16.msra.mxu0 %v851
  %1100 = vmatpush.bf16.msra.mxu0 %v850
  %1101 = vmatpush.bf16.msra.mxu0 %v849
  %1102 = vmatpush.bf16.msra.mxu0 %v848
  %1103 = vmatpush.bf16.msra.mxu0 %v847
  %1104 = vmatmul.bf16.gmra.mxu0 %v412
  %v1105 = vpop.f32.mrf.mxu0
  %v1106 = vadd.f32 %v1063, %v1105
  %v1107 = vpop.f32.mrf.mxu0
  %v1108 = vadd.f32 %v1065, %v1107
  %1109 = vmatmul.bf16.gmra.mxu0 %v421
  %v1110 = vpop.f32.mrf.mxu0
  %v1111 = vadd.f32 %v1068, %v1110
  %v1112 = vpop.f32.mrf.mxu0
  %v1113 = vadd.f32 %v1070, %v1112
  %1114 = vmatmul.bf16.gmra.mxu0 %v430
  %v1115 = vpop.f32.mrf.mxu0
  %v1116 = vadd.f32 %v1073, %v1115
  %v1117 = vpop.f32.mrf.mxu0
  %v1118 = vadd.f32 %v1075, %v1117
  %1119 = vmatmul.bf16.gmra.mxu0 %v439
  %v1120 = vpop.f32.mrf.mxu0
  %v1121 = vadd.f32 %v1078, %v1120
  %v1122 = vpop.f32.mrf.mxu0
  %v1123 = vadd.f32 %v1080, %v1122
  %1124 = vmatmul.bf16.gmra.mxu0 %v448
  %v1125 = vpop.f32.mrf.mxu0
  %v1126 = vadd.f32 %v1083, %v1125
  %v1127 = vpop.f32.mrf.mxu0
  %v1128 = vadd.f32 %v1085, %v1127
  %1129 = vmatmul.bf16.gmra.mxu0 %v457
  %v1130 = vpop.f32.mrf.mxu0
  %v1131 = vadd.f32 %v1088, %v1130
  %v1132 = vpop.f32.mrf.mxu0
  %v1133 = vadd.f32 %v1090, %v1132
  %1134 = vmatmul.bf16.gmra.mxu0 %v466
  %v1135 = vpop.f32.mrf.mxu0
  %v1136 = vadd.f32 %v1093, %v1135
  %v1137 = vpop.f32.mrf.mxu0
  %1138 = vdwg.mxu0
  %1139 = vmatpush.bf16.msra.mxu0 %v862
  %1140 = vmatpush.bf16.msra.mxu0 %v861
  %1141 = vmatpush.bf16.msra.mxu0 %v860
  %1142 = vmatpush.bf16.msra.mxu0 %v859
  %1143 = vmatpush.bf16.msra.mxu0 %v858
  %1144 = vmatpush.bf16.msra.mxu0 %v857
  %1145 = vmatpush.bf16.msra.mxu0 %v856
  %1146 = vmatpush.bf16.msra.mxu0 %v855
  %1147 = vmatmul.bf16.gmra.mxu0 %v413
  %v1148 = vpop.f32.mrf.mxu0
  %v1149 = vadd.f32 %v1106, %v1148
  %v1150 = vpop.f32.mrf.mxu0
  %v1151 = vadd.f32 %v1108, %v1150
  %1152 = vmatmul.bf16.gmra.mxu0 %v422
  %v1153 = vpop.f32.mrf.mxu0
  %v1154 = vadd.f32 %v1111, %v1153
  %v1155 = vpop.f32.mrf.mxu0
  %v1156 = vadd.f32 %v1113, %v1155
  %1157 = vmatmul.bf16.gmra.mxu0 %v431
  %v1158 = vpop.f32.mrf.mxu0
  %v1159 = vadd.f32 %v1116, %v1158
  %v1160 = vpop.f32.mrf.mxu0
  %v1161 = vadd.f32 %v1118, %v1160
  %1162 = vmatmul.bf16.gmra.mxu0 %v440
  %v1163 = vpop.f32.mrf.mxu0
  %v1164 = vadd.f32 %v1121, %v1163
  %v1165 = vpop.f32.mrf.mxu0
  %v1166 = vadd.f32 %v1123, %v1165
  %1167 = vmatmul.bf16.gmra.mxu0 %v449
  %v1168 = vpop.f32.mrf.mxu0
  %v1169 = vadd.f32 %v1126, %v1168
  %v1170 = vpop.f32.mrf.mxu0
  %v1171 = vadd.f32 %v1128, %v1170
  %1172 = vmatmul.bf16.gmra.mxu0 %v458
  %v1173 = vpop.f32.mrf.mxu0
  %v1174 = vadd.f32 %v1131, %v1173
  %v1175 = vpop.f32.mrf.mxu0
  %v1176 = vadd.f32 %v1133, %v1175
  %1177 = vmatmul.bf16.gmra.mxu0 %v467
  %v1178 = vpop.f32.mrf.mxu0
  %v1179 = vadd.f32 %v1136, %v1178
  %v1180 = vpop.f32.mrf.mxu0
  %1181 = vdwg.mxu0
  %1182 = vmatpush.bf16.msra.mxu0 %v870
  %1183 = vmatpush.bf16.msra.mxu0 %v869
  %1184 = vmatpush.bf16.msra.mxu0 %v868
  %1185 = vmatpush.bf16.msra.mxu0 %v867
  %1186 = vmatpush.bf16.msra.mxu0 %v866
  %1187 = vmatpush.bf16.msra.mxu0 %v865
  %1188 = vmatpush.bf16.msra.mxu0 %v864
  %1189 = vmatpush.bf16.msra.mxu0 %v863
  %1190 = vmatmul.bf16.gmra.mxu0 %v414
  %v1191 = vpop.f32.mrf.mxu0
  %v1192 = vadd.f32 %v1149, %v1191
  %v1193 = vpop.f32.mrf.mxu0
  %v1194 = vadd.f32 %v1151, %v1193
  %1195 = vmatmul.bf16.gmra.mxu0 %v423
  %v1196 = vpop.f32.mrf.mxu0
  %v1197 = vadd.f32 %v1154, %v1196
  %v1198 = vpop.f32.mrf.mxu0
  %v1199 = vadd.f32 %v1156, %v1198
  %1200 = vmatmul.bf16.gmra.mxu0 %v432
  %v1201 = vpop.f32.mrf.mxu0
  %v1202 = vadd.f32 %v1159, %v1201
  %v1203 = vpop.f32.mrf.mxu0
  %v1204 = vadd.f32 %v1161, %v1203
  %1205 = vmatmul.bf16.gmra.mxu0 %v441
  %v1206 = vpop.f32.mrf.mxu0
  %v1207 = vadd.f32 %v1164, %v1206
  %v1208 = vpop.f32.mrf.mxu0
  %v1209 = vadd.f32 %v1166, %v1208
  %1210 = vmatmul.bf16.gmra.mxu0 %v450
  %v1211 = vpop.f32.mrf.mxu0
  %v1212 = vadd.f32 %v1169, %v1211
  %v1213 = vpop.f32.mrf.mxu0
  %v1214 = vadd.f32 %v1171, %v1213
  %1215 = vmatmul.bf16.gmra.mxu0 %v459
  %v1216 = vpop.f32.mrf.mxu0
  %v1217 = vadd.f32 %v1174, %v1216
  %v1218 = vpop.f32.mrf.mxu0
  %v1219 = vadd.f32 %v1176, %v1218
  %1220 = vmatmul.bf16.gmra.mxu0 %v468
  %v1221 = vpop.f32.mrf.mxu0
  %v1222 = vadd.f32 %v1179, %v1221
  %v1223 = vpop.f32.mrf.mxu0
  %1224 = vdwg.mxu0
  %1225 = vmatpush.bf16.msra.mxu0 %v878
  %1226 = vmatpush.bf16.msra.mxu0 %v877
  %1227 = vmatpush.bf16.msra.mxu0 %v876
  %1228 = vmatpush.bf16.msra.mxu0 %v875
  %1229 = vmatpush.bf16.msra.mxu0 %v874
  %1230 = vmatpush.bf16.msra.mxu0 %v873
  %1231 = vmatpush.bf16.msra.mxu0 %v872
  %1232 = vmatpush.bf16.msra.mxu0 %v871
  %1233 = vmatmul.bf16.gmra.mxu0 %v415
  %v1234 = vpop.f32.mrf.mxu0
  %v1235 = vadd.f32 %v1192, %v1234
  %v1236 = vpop.f32.mrf.mxu0
  %v1237 = vadd.f32 %v1194, %v1236
  %1238 = vmatmul.bf16.gmra.mxu0 %v424
  %v1239 = vpop.f32.mrf.mxu0
  %v1240 = vadd.f32 %v1197, %v1239
  %v1241 = vpop.f32.mrf.mxu0
  %v1242 = vadd.f32 %v1199, %v1241
  %1243 = vmatmul.bf16.gmra.mxu0 %v433
  %v1244 = vpop.f32.mrf.mxu0
  %v1245 = vadd.f32 %v1202, %v1244
  %v1246 = vpop.f32.mrf.mxu0
  %v1247 = vadd.f32 %v1204, %v1246
  %1248 = vmatmul.bf16.gmra.mxu0 %v442
  %v1249 = vpop.f32.mrf.mxu0
  %v1250 = vadd.f32 %v1207, %v1249
  %v1251 = vpop.f32.mrf.mxu0
  %v1252 = vadd.f32 %v1209, %v1251
  %1253 = vmatmul.bf16.gmra.mxu0 %v451
  %v1254 = vpop.f32.mrf.mxu0
  %v1255 = vadd.f32 %v1212, %v1254
  %v1256 = vpop.f32.mrf.mxu0
  %v1257 = vadd.f32 %v1214, %v1256
  %1258 = vmatmul.bf16.gmra.mxu0 %v460
  %v1259 = vpop.f32.mrf.mxu0
  %v1260 = vadd.f32 %v1217, %v1259
  %v1261 = vpop.f32.mrf.mxu0
  %v1262 = vadd.f32 %v1219, %v1261
  %1263 = vmatmul.bf16.gmra.mxu0 %v469
  %v1264 = vpop.f32.mrf.mxu0
  %v1265 = vadd.f32 %v1222, %v1264
  %v1266 = vpop.f32.mrf.mxu0
  %1267 = vdwg.mxu0
  %1268 = vmatpush.bf16.msra.mxu0 %v886
  %1269 = vmatpush.bf16.msra.mxu0 %v885
  %1270 = vmatpush.bf16.msra.mxu0 %v884
  %1271 = vmatpush.bf16.msra.mxu0 %v883
  %1272 = vmatpush.bf16.msra.mxu0 %v882
  %1273 = vmatpush.bf16.msra.mxu0 %v881
  %1274 = vmatpush.bf16.msra.mxu0 %v880
  %1275 = vmatpush.bf16.msra.mxu0 %v879
  %1276 = vmatmul.bf16.gmra.mxu0 %v416
  %v1277 = vpop.f32.mrf.mxu0
  %v1278 = vadd.f32 %v1235, %v1277
  %v1279 = vpop.f32.mrf.mxu0
  %v1280 = vadd.f32 %v1237, %v1279
  %1281 = vmatmul.bf16.gmra.mxu0 %v425
  %v1282 = vpop.f32.mrf.mxu0
  %v1283 = vadd.f32 %v1240, %v1282
  %v1284 = vpop.f32.mrf.mxu0
  %v1285 = vadd.f32 %v1242, %v1284
  %1286 = vmatmul.bf16.gmra.mxu0 %v434
  %v1287 = vpop.f32.mrf.mxu0
  %v1288 = vadd.f32 %v1245, %v1287
  %v1289 = vpop.f32.mrf.mxu0
  %v1290 = vadd.f32 %v1247, %v1289
  %1291 = vmatmul.bf16.gmra.mxu0 %v443
  %v1292 = vpop.f32.mrf.mxu0
  %v1293 = vadd.f32 %v1250, %v1292
  %v1294 = vpop.f32.mrf.mxu0
  %v1295 = vadd.f32 %v1252, %v1294
  %1296 = vmatmul.bf16.gmra.mxu0 %v452
  %v1297 = vpop.f32.mrf.mxu0
  %v1298 = vadd.f32 %v1255, %v1297
  %v1299 = vpop.f32.mrf.mxu0
  %v1300 = vadd.f32 %v1257, %v1299
  %1301 = vmatmul.bf16.gmra.mxu0 %v461
  %v1302 = vpop.f32.mrf.mxu0
  %v1303 = vadd.f32 %v1260, %v1302
  %v1304 = vpop.f32.mrf.mxu0
  %v1305 = vadd.f32 %v1262, %v1304
  %1306 = vmatmul.bf16.gmra.mxu0 %v470
  %v1307 = vpop.f32.mrf.mxu0
  %v1308 = vadd.f32 %v1265, %v1307
  %v1309 = vpop.f32.mrf.mxu0
  %1310 = vdwg.mxu0
  %1311 = vmatpush.bf16.msra.mxu0 %v894
  %1312 = vmatpush.bf16.msra.mxu0 %v893
  %1313 = vmatpush.bf16.msra.mxu0 %v892
  %1314 = vmatpush.bf16.msra.mxu0 %v891
  %1315 = vmatpush.bf16.msra.mxu0 %v890
  %1316 = vmatpush.bf16.msra.mxu0 %v889
  %1317 = vmatpush.bf16.msra.mxu0 %v888
  %1318 = vmatpush.bf16.msra.mxu0 %v887
  %1319 = vmatmul.bf16.gmra.mxu0 %v417
  %v1320 = vpop.f32.mrf.mxu0
  %v1321 = vadd.f32 %v1278, %v1320
  %v1322 = vpop.f32.mrf.mxu0
  %v1323 = vadd.f32 %v1280, %v1322
  %1324 = vmatmul.bf16.gmra.mxu0 %v426
  %v1325 = vpop.f32.mrf.mxu0
  %v1326 = vadd.f32 %v1283, %v1325
  %v1327 = vpop.f32.mrf.mxu0
  %v1328 = vadd.f32 %v1285, %v1327
  %1329 = vmatmul.bf16.gmra.mxu0 %v435
  %v1330 = vpop.f32.mrf.mxu0
  %v1331 = vadd.f32 %v1288, %v1330
  %v1332 = vpop.f32.mrf.mxu0
  %v1333 = vadd.f32 %v1290, %v1332
  %1334 = vmatmul.bf16.gmra.mxu0 %v444
  %v1335 = vpop.f32.mrf.mxu0
  %v1336 = vadd.f32 %v1293, %v1335
  %v1337 = vpop.f32.mrf.mxu0
  %v1338 = vadd.f32 %v1295, %v1337
  %1339 = vmatmul.bf16.gmra.mxu0 %v453
  %v1340 = vpop.f32.mrf.mxu0
  %v1341 = vadd.f32 %v1298, %v1340
  %v1342 = vpop.f32.mrf.mxu0
  %v1343 = vadd.f32 %v1300, %v1342
  %1344 = vmatmul.bf16.gmra.mxu0 %v462
  %v1345 = vpop.f32.mrf.mxu0
  %v1346 = vadd.f32 %v1303, %v1345
  %v1347 = vpop.f32.mrf.mxu0
  %v1348 = vadd.f32 %v1305, %v1347
  %1349 = vmatmul.bf16.gmra.mxu0 %v471
  %v1350 = vpop.f32.mrf.mxu0
  %v1351 = vadd.f32 %v1308, %v1350
  %v1352 = vpop.f32.mrf.mxu0
  %1353 = vdwg.mxu0
  %v1354 = vmax.f32 %v1321, 0.0
  %v1355 = vmax.f32 %v1323, 0.0
  %v1356 = vmax.f32 %v1326, 0.0
  %v1357 = vmax.f32 %v1328, 0.0
  %v1358 = vmax.f32 %v1331, 0.0
  %v1359 = vmax.f32 %v1333, 0.0
  %v1360 = vmax.f32 %v1336, 0.0
  %v1361 = vmax.f32 %v1338, 0.0
  %v1362 = vmax.f32 %v1341, 0.0
  %v1363 = vmax.f32 %v1343, 0.0
  %v1364 = vmax.f32 %v1346, 0.0
  %v1365 = vmax.f32 %v1348, 0.0
  %v1366 = vmax.f32 %v1351, 0.0
  %v1367 = vpack.c.bf16 %v1354, %v1354
  %v1368 = vpack.c.bf16 %v1355, %v1355
  %v1369 = vpack.c.bf16 %v1356, %v1356
  %v1370 = vpack.c.bf16 %v1357, %v1357
  %v1371 = vpack.c.bf16 %v1358, %v1358
  %v1372 = vpack.c.bf16 %v1359, %v1359
  %v1373 = vpack.c.bf16 %v1360, %v1360
  %v1374 = vpack.c.bf16 %v1361, %v1361
  %v1375 = vpack.c.bf16 %v1362, %v1362
  %v1376 = vpack.c.bf16 %v1363, %v1363
  %v1377 = vpack.c.bf16 %v1364, %v1364
  %v1378 = vpack.c.bf16 %v1365, %v1365
  %v1379 = vpack.c.bf16 %v1366, %v1366
  %1380 = vst [vmem:[%s3] sm:$0xf] %v1367
  %1381 = vst [vmem:[%s3 + $0x4] sm:$0xf] %v1368
  %1382 = vst [vmem:[%s3 + $0x8] sm:$0xf] %v1369
  %1383 = vst [vmem:[%s3 + $0xc] sm:$0xf] %v1370
  %1384 = vst [vmem:[%s3 + $0x10] sm:$0xf] %v1371
  %1385 = vst [vmem:[%s3 + $0x14] sm:$0xf] %v1372
  %1386 = vst [vmem:[%s3 + $0x18] sm:$0xf] %v1373
  %1387 = vst [vmem:[%s3 + $0x1c] sm:$0xf] %v1374
  %1388 = vst [vmem:[%s3 + $0x20] sm:$0xf] %v1375
  %1389 = vst [vmem:[%s3 + $0x24] sm:$0xf] %v1376
  %1390 = vst [vmem:[%s3 + $0x28] sm:$0xf] %v1377
  %1391 = vst [vmem:[%s3 + $0x2c] sm:$0xf] %v1378
  %1392 = vst [vmem:[%s3 + $0x30] sm:$0x1] %v1379
  // Predicated region
  $region14: #{embedding_forward.6} parent=0 // pred_check
    _
  $region15: #{embedding_forward.6} parent=0 // pred_check_branch
    %1394 = sbr.rel (0) target = $region17
  $region16: #{embedding_forward.6} parent=0 // pred_region
    _
  $region17: #{embedding_forward.6} parent=0 // pred_fallthru
    _
  // Predicated region
  $region18: #{embedding_forward.6} parent=0 // pred_check
    _
  $region19: #{embedding_forward.6} parent=0 // pred_check_branch
    %1396 = sbr.rel (0) target = $region21
  $region20: #{embedding_forward.6} parent=0 // pred_region
    _
  $region21: #{embedding_forward.6} parent=0 // pred_fallthru
    _

// kernel: embedding_forward.7
$region0: #{embedding_forward.7}
  #allocation0 [shape = 'u32[]', space=smem, size = 0x4, offset = 0x4, fixed_abs, tag = 'smem constant byte address 0x4 - core index']
  #allocation1 [shape = 'u32[72,128]{1,0:T(1,128)}', space=vmem, size = 0x9000, scoped, tag = 'internal scratch']
  %s0 = inlined_call_operand.vmem [shape: bf16[2,6272], index: 0, kind: input, shape index: {}]
  %s1 = inlined_call_operand.vmem [shape: bf16[6272,128], index: 1, kind: input, shape index: {}]
  %s2 = inlined_call_operand.vmem [shape: f32[1,128], index: 2, kind: input, shape index: {}]
  %s3 = inlined_call_operand.hbm [shape: f32[2,128], index: 3, kind: output, shape index: {}]
  %s4 = sld [smem:[#allocation0]]
  $region22: #{embedding_forward.7} parent=0
    _
  %s6 = ssub.s32 1, %s4
  %s7 = scalar_select 0, %s6, %s4
  $region1: #{embedding_forward.7} parent=0
    #allocation2 [shape = 'u8[1024]{0}', space=vmem, size = 0x400, scoped, tag = 'output window, operand 0, single buffered']
    #allocation3 [shape = 's32[1]{0}', space=sflag, size = 0x4, scoped, tag = 'scoped memory for embedding_forward.7']
    %8 = vsyncpa [#allocation3], 0
    // Predicated region
    $region2: #{embedding_forward.7} parent=1 // pred_check
      _
    $region3: #{embedding_forward.7} parent=1 // pred_check_branch
      %10 = sbr.rel (0) target = $region5
    $region4: #{embedding_forward.7} parent=1 // pred_region
      _
    $region5: #{embedding_forward.7} parent=1 // pred_fallthru
      _
    // Predicated region
    $region6: #{embedding_forward.7} parent=1 // pred_check
      _
    $region7: #{embedding_forward.7} parent=1 // pred_check_branch
      %12 = sbr.rel (0) target = $region9
    $region8: #{embedding_forward.7} parent=1 // pred_region
      _
    $region9: #{embedding_forward.7} parent=1 // pred_fallthru
      _
    // Predicated region
    $region10: #{embedding_forward.7} parent=1 // pred_check
      _
    $region11: #{embedding_forward.7} parent=1 // pred_check_branch
      %14 = sbr.rel (0) target = $region13
    $region12: #{embedding_forward.7} parent=1 // pred_region
      _
    $region13: #{embedding_forward.7} parent=1 // pred_fallthru
      _
    %v15 = vld [vmem:[%s0] sm:$0xff]
    %v16 = vld [vmem:[%s0 + $0x8] sm:$0xff]
    %v17 = vld [vmem:[%s0 + $0x10] sm:$0xff]
    %v18 = vld [vmem:[%s0 + $0x18] sm:$0xff]
    %v19 = vld [vmem:[%s0 + $0x20] sm:$0xff]
    %v20 = vld [vmem:[%s0 + $0x28] sm:$0xff]
    %v21 = vld [vmem:[%s0 + $0x30] sm:$0x1]
    %v22 = vld [vmem:[%s1] sm:$0xf]
    %v23 = vld [vmem:[%s1 + $0x4] sm:$0xf]
    %v24 = vld [vmem:[%s1 + $0x8] sm:$0xf]
    %v25 = vld [vmem:[%s1 + $0xc] sm:$0xf]
    %v26 = vld [vmem:[%s1 + $0x10] sm:$0xf]
    %v27 = vld [vmem:[%s1 + $0x14] sm:$0xf]
    %v28 = vld [vmem:[%s1 + $0x18] sm:$0xf]
    %v29 = vld [vmem:[%s1 + $0x1c] sm:$0xf]
    %v30 = vld [vmem:[%s1 + $0x20] sm:$0xf]
    %v31 = vld [vmem:[%s1 + $0x24] sm:$0xf]
    %v32 = vld [vmem:[%s1 + $0x28] sm:$0xf]
    %v33 = vld [vmem:[%s1 + $0x2c] sm:$0xf]
    %v34 = vld [vmem:[%s1 + $0x30] sm:$0xf]
    %v35 = vld [vmem:[%s1 + $0x34] sm:$0xf]
    %v36 = vld [vmem:[%s1 + $0x38] sm:$0xf]
    %v37 = vld [vmem:[%s1 + $0x3c] sm:$0xf]
    %v38 = vld [vmem:[%s1 + $0x40] sm:$0xf]
    %v39 = vld [vmem:[%s1 + $0x44] sm:$0xf]
    %v40 = vld [vmem:[%s1 + $0x48] sm:$0xf]
    %v41 = vld [vmem:[%s1 + $0x4c] sm:$0xf]
    %v42 = vld [vmem:[%s1 + $0x50] sm:$0xf]
    %v43 = vld [vmem:[%s1 + $0x54] sm:$0xf]
    %v44 = vld [vmem:[%s1 + $0x58] sm:$0xf]
    %v45 = vld [vmem:[%s1 + $0x5c] sm:$0xf]
    %v46 = vld [vmem:[%s1 + $0x60] sm:$0xf]
    %v47 = vld [vmem:[%s1 + $0x64] sm:$0xf]
    %v48 = vld [vmem:[%s1 + $0x68] sm:$0xf]
    %v49 = vld [vmem:[%s1 + $0x6c] sm:$0xf]
    %v50 = vld [vmem:[%s1 + $0x70] sm:$0xf]
    %v51 = vld [vmem:[%s1 + $0x74] sm:$0xf]
    %v52 = vld [vmem:[%s1 + $0x78] sm:$0xf]
    %v53 = vld [vmem:[%s1 + $0x7c] sm:$0xf]
    %v54 = vld [vmem:[%s1 + $0x80] sm:$0xf]
    %v55 = vld [vmem:[%s1 + $0x84] sm:$0xf]
    %v56 = vld [vmem:[%s1 + $0x88] sm:$0xf]
    %v57 = vld [vmem:[%s1 + $0x8c] sm:$0xf]
    %v58 = vld [vmem:[%s1 + $0x90] sm:$0xf]
    %v59 = vld [vmem:[%s1 + $0x94] sm:$0xf]
    %v60 = vld [vmem:[%s1 + $0x98] sm:$0xf]
    %v61 = vld [vmem:[%s1 + $0x9c] sm:$0xf]
    %v62 = vld [vmem:[%s1 + $0xa0] sm:$0xf]
    %v63 = vld [vmem:[%s1 + $0xa4] sm:$0xf]
    %v64 = vld [vmem:[%s1 + $0xa8] sm:$0xf]
    %v65 = vld [vmem:[%s1 + $0xac] sm:$0xf]
    %v66 = vld [vmem:[%s1 + $0xb0] sm:$0xf]
    %v67 = vld [vmem:[%s1 + $0xb4] sm:$0xf]
    %v68 = vld [vmem:[%s1 + $0xb8] sm:$0xf]
    %v69 = vld [vmem:[%s1 + $0xbc] sm:$0xf]
    %v70 = vld [vmem:[%s1 + $0xc0] sm:$0xf]
    %v71 = vld [vmem:[%s1 + $0xc4] sm:$0xf]
    %v72 = vld [vmem:[%s1 + $0xc8] sm:$0xf]
    %v73 = vld [vmem:[%s1 + $0xcc] sm:$0xf]
    %v74 = vld [vmem:[%s1 + $0xd0] sm:$0xf]
    %v75 = vld [vmem:[%s1 + $0xd4] sm:$0xf]
    %v76 = vld [vmem:[%s1 + $0xd8] sm:$0xf]
    %v77 = vld [vmem:[%s1 + $0xdc] sm:$0xf]
    %v78 = vld [vmem:[%s1 + $0xe0] sm:$0xf]
    %v79 = vld [vmem:[%s1 + $0xe4] sm:$0xf]
    %v80 = vld [vmem:[%s1 + $0xe8] sm:$0xf]
    %v81 = vld [vmem:[%s1 + $0xec] sm:$0xf]
    %v82 = vld [vmem:[%s1 + $0xf0] sm:$0xf]
    %v83 = vld [vmem:[%s1 + $0xf4] sm:$0xf]
    %v84 = vld [vmem:[%s1 + $0xf8] sm:$0xf]
    %v85 = vld [vmem:[%s1 + $0xfc] sm:$0xf]
    %v86 = vld [vmem:[%s1 + $0x100] sm:$0xf]
    %v87 = vld [vmem:[%s1 + $0x104] sm:$0xf]
    %v88 = vld [vmem:[%s1 + $0x108] sm:$0xf]
    %v89 = vld [vmem:[%s1 + $0x10c] sm:$0xf]
    %v90 = vld [vmem:[%s1 + $0x110] sm:$0xf]
    %v91 = vld [vmem:[%s1 + $0x114] sm:$0xf]
    %v92 = vld [vmem:[%s1 + $0x118] sm:$0xf]
    %v93 = vld [vmem:[%s1 + $0x11c] sm:$0xf]
    %v94 = vld [vmem:[%s1 + $0x120] sm:$0xf]
    %v95 = vld [vmem:[%s1 + $0x124] sm:$0xf]
    %v96 = vld [vmem:[%s1 + $0x128] sm:$0xf]
    %v97 = vld [vmem:[%s1 + $0x12c] sm:$0xf]
    %v98 = vld [vmem:[%s1 + $0x130] sm:$0xf]
    %v99 = vld [vmem:[%s1 + $0x134] sm:$0xf]
    %v100 = vld [vmem:[%s1 + $0x138] sm:$0xf]
    %v101 = vld [vmem:[%s1 + $0x13c] sm:$0xf]
    %v102 = vld [vmem:[%s1 + $0x140] sm:$0xf]
    %v103 = vld [vmem:[%s1 + $0x144] sm:$0xf]
    %v104 = vld [vmem:[%s1 + $0x148] sm:$0xf]
    %v105 = vld [vmem:[%s1 + $0x14c] sm:$0xf]
    %v106 = vld [vmem:[%s1 + $0x150] sm:$0xf]
    %v107 = vld [vmem:[%s1 + $0x154] sm:$0xf]
    %v108 = vld [vmem:[%s1 + $0x158] sm:$0xf]
    %v109 = vld [vmem:[%s1 + $0x15c] sm:$0xf]
    %v110 = vld [vmem:[%s1 + $0x160] sm:$0xf]
    %v111 = vld [vmem:[%s1 + $0x164] sm:$0xf]
    %v112 = vld [vmem:[%s1 + $0x168] sm:$0xf]
    %v113 = vld [vmem:[%s1 + $0x16c] sm:$0xf]
    %v114 = vld [vmem:[%s1 + $0x170] sm:$0xf]
    %v115 = vld [vmem:[%s1 + $0x174] sm:$0xf]
    %v116 = vld [vmem:[%s1 + $0x178] sm:$0xf]
    %v117 = vld [vmem:[%s1 + $0x17c] sm:$0xf]
    %v118 = vld [vmem:[%s1 + $0x180] sm:$0xf]
    %v119 = vld [vmem:[%s1 + $0x184] sm:$0xf]
    %v120 = vld [vmem:[%s1 + $0x188] sm:$0xf]
    %v121 = vld [vmem:[%s1 + $0x18c] sm:$0xf]
    %v122 = vld [vmem:[%s1 + $0x190] sm:$0xf]
    %v123 = vld [vmem:[%s1 + $0x194] sm:$0xf]
    %v124 = vld [vmem:[%s1 + $0x198] sm:$0xf]
    %v125 = vld [vmem:[%s1 + $0x19c] sm:$0xf]
    %v126 = vld [vmem:[%s1 + $0x1a0] sm:$0xf]
    %v127 = vld [vmem:[%s1 + $0x1a4] sm:$0xf]
    %v128 = vld [vmem:[%s1 + $0x1a8] sm:$0xf]
    %v129 = vld [vmem:[%s1 + $0x1ac] sm:$0xf]
    %v130 = vld [vmem:[%s1 + $0x1b0] sm:$0xf]
    %v131 = vld [vmem:[%s1 + $0x1b4] sm:$0xf]
    %v132 = vld [vmem:[%s1 + $0x1b8] sm:$0xf]
    %v133 = vld [vmem:[%s1 + $0x1bc] sm:$0xf]
    %v134 = vld [vmem:[%s1 + $0x1c0] sm:$0xf]
    %v135 = vld [vmem:[%s1 + $0x1c4] sm:$0xf]
    %v136 = vld [vmem:[%s1 + $0x1c8] sm:$0xf]
    %v137 = vld [vmem:[%s1 + $0x1cc] sm:$0xf]
    %v138 = vld [vmem:[%s1 + $0x1d0] sm:$0xf]
    %v139 = vld [vmem:[%s1 + $0x1d4] sm:$0xf]
    %v140 = vld [vmem:[%s1 + $0x1d8] sm:$0xf]
    %v141 = vld [vmem:[%s1 + $0x1dc] sm:$0xf]
    %v142 = vld [vmem:[%s1 + $0x1e0] sm:$0xf]
    %v143 = vld [vmem:[%s1 + $0x1e4] sm:$0xf]
    %v144 = vld [vmem:[%s1 + $0x1e8] sm:$0xf]
    %v145 = vld [vmem:[%s1 + $0x1ec] sm:$0xf]
    %v146 = vld [vmem:[%s1 + $0x1f0] sm:$0xf]
    %v147 = vld [vmem:[%s1 + $0x1f4] sm:$0xf]
    %v148 = vld [vmem:[%s1 + $0x1f8] sm:$0xf]
    %v149 = vld [vmem:[%s1 + $0x1fc] sm:$0xf]
    %v150 = vld [vmem:[%s1 + $0x200] sm:$0xf]
    %v151 = vld [vmem:[%s1 + $0x204] sm:$0xf]
    %v152 = vld [vmem:[%s1 + $0x208] sm:$0xf]
    %v153 = vld [vmem:[%s1 + $0x20c] sm:$0xf]
    %v154 = vld [vmem:[%s1 + $0x210] sm:$0xf]
    %v155 = vld [vmem:[%s1 + $0x214] sm:$0xf]
    %v156 = vld [vmem:[%s1 + $0x218] sm:$0xf]
    %v157 = vld [vmem:[%s1 + $0x21c] sm:$0xf]
    %v158 = vld [vmem:[%s1 + $0x220] sm:$0xf]
    %v159 = vld [vmem:[%s1 + $0x224] sm:$0xf]
    %v160 = vld [vmem:[%s1 + $0x228] sm:$0xf]
    %v161 = vld [vmem:[%s1 + $0x22c] sm:$0xf]
    %v162 = vld [vmem:[%s1 + $0x230] sm:$0xf]
    %v163 = vld [vmem:[%s1 + $0x234] sm:$0xf]
    %v164 = vld [vmem:[%s1 + $0x238] sm:$0xf]
    %v165 = vld [vmem:[%s1 + $0x23c] sm:$0xf]
    %v166 = vld [vmem:[%s1 + $0x240] sm:$0xf]
    %v167 = vld [vmem:[%s1 + $0x244] sm:$0xf]
    %v168 = vld [vmem:[%s1 + $0x248] sm:$0xf]
    %v169 = vld [vmem:[%s1 + $0x24c] sm:$0xf]
    %v170 = vld [vmem:[%s1 + $0x250] sm:$0xf]
    %v171 = vld [vmem:[%s1 + $0x254] sm:$0xf]
    %v172 = vld [vmem:[%s1 + $0x258] sm:$0xf]
    %v173 = vld [vmem:[%s1 + $0x25c] sm:$0xf]
    %v174 = vld [vmem:[%s1 + $0x260] sm:$0xf]
    %v175 = vld [vmem:[%s1 + $0x264] sm:$0xf]
    %v176 = vld [vmem:[%s1 + $0x268] sm:$0xf]
    %v177 = vld [vmem:[%s1 + $0x26c] sm:$0xf]
    %v178 = vld [vmem:[%s1 + $0x270] sm:$0xf]
    %v179 = vld [vmem:[%s1 + $0x274] sm:$0xf]
    %v180 = vld [vmem:[%s1 + $0x278] sm:$0xf]
    %v181 = vld [vmem:[%s1 + $0x27c] sm:$0xf]
    %v182 = vld [vmem:[%s1 + $0x280] sm:$0xf]
    %v183 = vld [vmem:[%s1 + $0x284] sm:$0xf]
    %v184 = vld [vmem:[%s1 + $0x288] sm:$0xf]
    %v185 = vld [vmem:[%s1 + $0x28c] sm:$0xf]
    %v186 = vld [vmem:[%s1 + $0x290] sm:$0xf]
    %v187 = vld [vmem:[%s1 + $0x294] sm:$0xf]
    %v188 = vld [vmem:[%s1 + $0x298] sm:$0xf]
    %v189 = vld [vmem:[%s1 + $0x29c] sm:$0xf]
    %v190 = vld [vmem:[%s1 + $0x2a0] sm:$0xf]
    %v191 = vld [vmem:[%s1 + $0x2a4] sm:$0xf]
    %v192 = vld [vmem:[%s1 + $0x2a8] sm:$0xf]
    %v193 = vld [vmem:[%s1 + $0x2ac] sm:$0xf]
    %v194 = vld [vmem:[%s1 + $0x2b0] sm:$0xf]
    %v195 = vld [vmem:[%s1 + $0x2b4] sm:$0xf]
    %v196 = vld [vmem:[%s1 + $0x2b8] sm:$0xf]
    %v197 = vld [vmem:[%s1 + $0x2bc] sm:$0xf]
    %v198 = vld [vmem:[%s1 + $0x2c0] sm:$0xf]
    %v199 = vld [vmem:[%s1 + $0x2c4] sm:$0xf]
    %v200 = vld [vmem:[%s1 + $0x2c8] sm:$0xf]
    %v201 = vld [vmem:[%s1 + $0x2cc] sm:$0xf]
    %v202 = vld [vmem:[%s1 + $0x2d0] sm:$0xf]
    %v203 = vld [vmem:[%s1 + $0x2d4] sm:$0xf]
    %v204 = vld [vmem:[%s1 + $0x2d8] sm:$0xf]
    %v205 = vld [vmem:[%s1 + $0x2dc] sm:$0xf]
    %v206 = vld [vmem:[%s1 + $0x2e0] sm:$0xf]
    %v207 = vld [vmem:[%s1 + $0x2e4] sm:$0xf]
    %v208 = vld [vmem:[%s1 + $0x2e8] sm:$0xf]
    %v209 = vld [vmem:[%s1 + $0x2ec] sm:$0xf]
    %v210 = vld [vmem:[%s1 + $0x2f0] sm:$0xf]
    %v211 = vld [vmem:[%s1 + $0x2f4] sm:$0xf]
    %v212 = vld [vmem:[%s1 + $0x2f8] sm:$0xf]
    %v213 = vld [vmem:[%s1 + $0x2fc] sm:$0xf]
    %v214 = vld [vmem:[%s1 + $0x300] sm:$0xf]
    %v215 = vld [vmem:[%s1 + $0x304] sm:$0xf]
    %v216 = vld [vmem:[%s1 + $0x308] sm:$0xf]
    %v217 = vld [vmem:[%s1 + $0x30c] sm:$0xf]
    %v218 = vld [vmem:[%s1 + $0x310] sm:$0xf]
    %v219 = vld [vmem:[%s1 + $0x314] sm:$0xf]
    %v220 = vld [vmem:[%s1 + $0x318] sm:$0xf]
    %v221 = vld [vmem:[%s1 + $0x31c] sm:$0xf]
    %v222 = vld [vmem:[%s1 + $0x320] sm:$0xf]
    %v223 = vld [vmem:[%s1 + $0x324] sm:$0xf]
    %v224 = vld [vmem:[%s1 + $0x328] sm:$0xf]
    %v225 = vld [vmem:[%s1 + $0x32c] sm:$0xf]
    %v226 = vld [vmem:[%s1 + $0x330] sm:$0xf]
    %v227 = vld [vmem:[%s1 + $0x334] sm:$0xf]
    %v228 = vld [vmem:[%s1 + $0x338] sm:$0xf]
    %v229 = vld [vmem:[%s1 + $0x33c] sm:$0xf]
    %v230 = vld [vmem:[%s1 + $0x340] sm:$0xf]
    %v231 = vld [vmem:[%s1 + $0x344] sm:$0xf]
    %v232 = vld [vmem:[%s1 + $0x348] sm:$0xf]
    %v233 = vld [vmem:[%s1 + $0x34c] sm:$0xf]
    %v234 = vld [vmem:[%s1 + $0x350] sm:$0xf]
    %v235 = vld [vmem:[%s1 + $0x354] sm:$0xf]
    %v236 = vld [vmem:[%s1 + $0x358] sm:$0xf]
    %v237 = vld [vmem:[%s1 + $0x35c] sm:$0xf]
    %v238 = vld [vmem:[%s1 + $0x360] sm:$0xf]
    %v239 = vld [vmem:[%s1 + $0x364] sm:$0xf]
    %v240 = vld [vmem:[%s1 + $0x368] sm:$0xf]
    %v241 = vld [vmem:[%s1 + $0x36c] sm:$0xf]
    %v242 = vld [vmem:[%s1 + $0x370] sm:$0xf]
    %v243 = vld [vmem:[%s1 + $0x374] sm:$0xf]
    %v244 = vld [vmem:[%s1 + $0x378] sm:$0xf]
    %v245 = vld [vmem:[%s1 + $0x37c] sm:$0xf]
    %v246 = vld [vmem:[%s1 + $0x380] sm:$0xf]
    %v247 = vld [vmem:[%s1 + $0x384] sm:$0xf]
    %v248 = vld [vmem:[%s1 + $0x388] sm:$0xf]
    %v249 = vld [vmem:[%s1 + $0x38c] sm:$0xf]
    %v250 = vld [vmem:[%s1 + $0x390] sm:$0xf]
    %v251 = vld [vmem:[%s1 + $0x394] sm:$0xf]
    %v252 = vld [vmem:[%s1 + $0x398] sm:$0xf]
    %v253 = vld [vmem:[%s1 + $0x39c] sm:$0xf]
    %v254 = vld [vmem:[%s1 + $0x3a0] sm:$0xf]
    %v255 = vld [vmem:[%s1 + $0x3a4] sm:$0xf]
    %v256 = vld [vmem:[%s1 + $0x3a8] sm:$0xf]
    %v257 = vld [vmem:[%s1 + $0x3ac] sm:$0xf]
    %v258 = vld [vmem:[%s1 + $0x3b0] sm:$0xf]
    %v259 = vld [vmem:[%s1 + $0x3b4] sm:$0xf]
    %v260 = vld [vmem:[%s1 + $0x3b8] sm:$0xf]
    %v261 = vld [vmem:[%s1 + $0x3bc] sm:$0xf]
    %v262 = vld [vmem:[%s1 + $0x3c0] sm:$0xf]
    %v263 = vld [vmem:[%s1 + $0x3c4] sm:$0xf]
    %v264 = vld [vmem:[%s1 + $0x3c8] sm:$0xf]
    %v265 = vld [vmem:[%s1 + $0x3cc] sm:$0xf]
    %v266 = vld [vmem:[%s1 + $0x3d0] sm:$0xf]
    %v267 = vld [vmem:[%s1 + $0x3d4] sm:$0xf]
    %v268 = vld [vmem:[%s1 + $0x3d8] sm:$0xf]
    %v269 = vld [vmem:[%s1 + $0x3dc] sm:$0xf]
    %v270 = vld [vmem:[%s1 + $0x3e0] sm:$0xf]
    %v271 = vld [vmem:[%s1 + $0x3e4] sm:$0xf]
    %v272 = vld [vmem:[%s1 + $0x3e8] sm:$0xf]
    %v273 = vld [vmem:[%s1 + $0x3ec] sm:$0xf]
    %v274 = vld [vmem:[%s1 + $0x3f0] sm:$0xf]
    %v275 = vld [vmem:[%s1 + $0x3f4] sm:$0xf]
    %v276 = vld [vmem:[%s1 + $0x3f8] sm:$0xf]
    %v277 = vld [vmem:[%s1 + $0x3fc] sm:$0xf]
    %v278 = vld [vmem:[%s1 + $0x400] sm:$0xf]
    %v279 = vld [vmem:[%s1 + $0x404] sm:$0xf]
    %v280 = vld [vmem:[%s1 + $0x408] sm:$0xf]
    %v281 = vld [vmem:[%s1 + $0x40c] sm:$0xf]
    %v282 = vld [vmem:[%s1 + $0x410] sm:$0xf]
    %v283 = vld [vmem:[%s1 + $0x414] sm:$0xf]
    %v284 = vld [vmem:[%s1 + $0x418] sm:$0xf]
    %v285 = vld [vmem:[%s1 + $0x41c] sm:$0xf]
    %v286 = vld [vmem:[%s1 + $0x420] sm:$0xf]
    %v287 = vld [vmem:[%s1 + $0x424] sm:$0xf]
    %v288 = vld [vmem:[%s1 + $0x428] sm:$0xf]
    %v289 = vld [vmem:[%s1 + $0x42c] sm:$0xf]
    %v290 = vld [vmem:[%s1 + $0x430] sm:$0xf]
    %v291 = vld [vmem:[%s1 + $0x434] sm:$0xf]
    %v292 = vld [vmem:[%s1 + $0x438] sm:$0xf]
    %v293 = vld [vmem:[%s1 + $0x43c] sm:$0xf]
    %v294 = vld [vmem:[%s1 + $0x440] sm:$0xf]
    %v295 = vld [vmem:[%s1 + $0x444] sm:$0xf]
    %v296 = vld [vmem:[%s1 + $0x448] sm:$0xf]
    %v297 = vld [vmem:[%s1 + $0x44c] sm:$0xf]
    %v298 = vld [vmem:[%s1 + $0x450] sm:$0xf]
    %v299 = vld [vmem:[%s1 + $0x454] sm:$0xf]
    %v300 = vld [vmem:[%s1 + $0x458] sm:$0xf]
    %v301 = vld [vmem:[%s1 + $0x45c] sm:$0xf]
    %v302 = vld [vmem:[%s1 + $0x460] sm:$0xf]
    %v303 = vld [vmem:[%s1 + $0x464] sm:$0xf]
    %v304 = vld [vmem:[%s1 + $0x468] sm:$0xf]
    %v305 = vld [vmem:[%s1 + $0x46c] sm:$0xf]
    %v306 = vld [vmem:[%s1 + $0x470] sm:$0xf]
    %v307 = vld [vmem:[%s1 + $0x474] sm:$0xf]
    %v308 = vld [vmem:[%s1 + $0x478] sm:$0xf]
    %v309 = vld [vmem:[%s1 + $0x47c] sm:$0xf]
    %v310 = vld [vmem:[%s1 + $0x480] sm:$0xf]
    %v311 = vld [vmem:[%s1 + $0x484] sm:$0xf]
    %v312 = vld [vmem:[%s1 + $0x488] sm:$0xf]
    %v313 = vld [vmem:[%s1 + $0x48c] sm:$0xf]
    %v314 = vld [vmem:[%s1 + $0x490] sm:$0xf]
    %v315 = vld [vmem:[%s1 + $0x494] sm:$0xf]
    %v316 = vld [vmem:[%s1 + $0x498] sm:$0xf]
    %v317 = vld [vmem:[%s1 + $0x49c] sm:$0xf]
    %v318 = vld [vmem:[%s1 + $0x4a0] sm:$0xf]
    %v319 = vld [vmem:[%s1 + $0x4a4] sm:$0xf]
    %v320 = vld [vmem:[%s1 + $0x4a8] sm:$0xf]
    %v321 = vld [vmem:[%s1 + $0x4ac] sm:$0xf]
    %v322 = vld [vmem:[%s1 + $0x4b0] sm:$0xf]
    %v323 = vld [vmem:[%s1 + $0x4b4] sm:$0xf]
    %v324 = vld [vmem:[%s1 + $0x4b8] sm:$0xf]
    %v325 = vld [vmem:[%s1 + $0x4bc] sm:$0xf]
    %v326 = vld [vmem:[%s1 + $0x4c0] sm:$0xf]
    %v327 = vld [vmem:[%s1 + $0x4c4] sm:$0xf]
    %v328 = vld [vmem:[%s1 + $0x4c8] sm:$0xf]
    %v329 = vld [vmem:[%s1 + $0x4cc] sm:$0xf]
    %v330 = vld [vmem:[%s1 + $0x4d0] sm:$0xf]
    %v331 = vld [vmem:[%s1 + $0x4d4] sm:$0xf]
    %v332 = vld [vmem:[%s1 + $0x4d8] sm:$0xf]
    %v333 = vld [vmem:[%s1 + $0x4dc] sm:$0xf]
    %v334 = vld [vmem:[%s1 + $0x4e0] sm:$0xf]
    %v335 = vld [vmem:[%s1 + $0x4e4] sm:$0xf]
    %v336 = vld [vmem:[%s1 + $0x4e8] sm:$0xf]
    %v337 = vld [vmem:[%s1 + $0x4ec] sm:$0xf]
    %v338 = vld [vmem:[%s1 + $0x4f0] sm:$0xf]
    %v339 = vld [vmem:[%s1 + $0x4f4] sm:$0xf]
    %v340 = vld [vmem:[%s1 + $0x4f8] sm:$0xf]
    %v341 = vld [vmem:[%s1 + $0x4fc] sm:$0xf]
    %v342 = vld [vmem:[%s1 + $0x500] sm:$0xf]
    %v343 = vld [vmem:[%s1 + $0x504] sm:$0xf]
    %v344 = vld [vmem:[%s1 + $0x508] sm:$0xf]
    %v345 = vld [vmem:[%s1 + $0x50c] sm:$0xf]
    %v346 = vld [vmem:[%s1 + $0x510] sm:$0xf]
    %v347 = vld [vmem:[%s1 + $0x514] sm:$0xf]
    %v348 = vld [vmem:[%s1 + $0x518] sm:$0xf]
    %v349 = vld [vmem:[%s1 + $0x51c] sm:$0xf]
    %v350 = vld [vmem:[%s1 + $0x520] sm:$0xf]
    %v351 = vld [vmem:[%s1 + $0x524] sm:$0xf]
    %v352 = vld [vmem:[%s1 + $0x528] sm:$0xf]
    %v353 = vld [vmem:[%s1 + $0x52c] sm:$0xf]
    %v354 = vld [vmem:[%s1 + $0x530] sm:$0xf]
    %v355 = vld [vmem:[%s1 + $0x534] sm:$0xf]
    %v356 = vld [vmem:[%s1 + $0x538] sm:$0xf]
    %v357 = vld [vmem:[%s1 + $0x53c] sm:$0xf]
    %v358 = vld [vmem:[%s1 + $0x540] sm:$0xf]
    %v359 = vld [vmem:[%s1 + $0x544] sm:$0xf]
    %v360 = vld [vmem:[%s1 + $0x548] sm:$0xf]
    %v361 = vld [vmem:[%s1 + $0x54c] sm:$0xf]
    %v362 = vld [vmem:[%s1 + $0x550] sm:$0xf]
    %v363 = vld [vmem:[%s1 + $0x554] sm:$0xf]
    %v364 = vld [vmem:[%s1 + $0x558] sm:$0xf]
    %v365 = vld [vmem:[%s1 + $0x55c] sm:$0xf]
    %v366 = vld [vmem:[%s1 + $0x560] sm:$0xf]
    %v367 = vld [vmem:[%s1 + $0x564] sm:$0xf]
    %v368 = vld [vmem:[%s1 + $0x568] sm:$0xf]
    %v369 = vld [vmem:[%s1 + $0x56c] sm:$0xf]
    %v370 = vld [vmem:[%s1 + $0x570] sm:$0xf]
    %v371 = vld [vmem:[%s1 + $0x574] sm:$0xf]
    %v372 = vld [vmem:[%s1 + $0x578] sm:$0xf]
    %v373 = vld [vmem:[%s1 + $0x57c] sm:$0xf]
    %v374 = vld [vmem:[%s1 + $0x580] sm:$0xf]
    %v375 = vld [vmem:[%s1 + $0x584] sm:$0xf]
    %v376 = vld [vmem:[%s1 + $0x588] sm:$0xf]
    %v377 = vld [vmem:[%s1 + $0x58c] sm:$0xf]
    %v378 = vld [vmem:[%s1 + $0x590] sm:$0xf]
    %v379 = vld [vmem:[%s1 + $0x594] sm:$0xf]
    %v380 = vld [vmem:[%s1 + $0x598] sm:$0xf]
    %v381 = vld [vmem:[%s1 + $0x59c] sm:$0xf]
    %v382 = vld [vmem:[%s1 + $0x5a0] sm:$0xf]
    %v383 = vld [vmem:[%s1 + $0x5a4] sm:$0xf]
    %v384 = vld [vmem:[%s1 + $0x5a8] sm:$0xf]
    %v385 = vld [vmem:[%s1 + $0x5ac] sm:$0xf]
    %v386 = vld [vmem:[%s1 + $0x5b0] sm:$0xf]
    %v387 = vld [vmem:[%s1 + $0x5b4] sm:$0xf]
    %v388 = vld [vmem:[%s1 + $0x5b8] sm:$0xf]
    %v389 = vld [vmem:[%s1 + $0x5bc] sm:$0xf]
    %v390 = vld [vmem:[%s1 + $0x5c0] sm:$0xf]
    %v391 = vld [vmem:[%s1 + $0x5c4] sm:$0xf]
    %v392 = vld [vmem:[%s1 + $0x5c8] sm:$0xf]
    %v393 = vld [vmem:[%s1 + $0x5cc] sm:$0xf]
    %v394 = vld [vmem:[%s1 + $0x5d0] sm:$0xf]
    %v395 = vld [vmem:[%s1 + $0x5d4] sm:$0xf]
    %v396 = vld [vmem:[%s1 + $0x5d8] sm:$0xf]
    %v397 = vld [vmem:[%s1 + $0x5dc] sm:$0xf]
    %v398 = vld [vmem:[%s1 + $0x5e0] sm:$0xf]
    %v399 = vld [vmem:[%s1 + $0x5e4] sm:$0xf]
    %v400 = vld [vmem:[%s1 + $0x5e8] sm:$0xf]
    %v401 = vld [vmem:[%s1 + $0x5ec] sm:$0xf]
    %v402 = vld [vmem:[%s1 + $0x5f0] sm:$0xf]
    %v403 = vld [vmem:[%s1 + $0x5f4] sm:$0xf]
    %v404 = vld [vmem:[%s1 + $0x5f8] sm:$0xf]
    %v405 = vld [vmem:[%s1 + $0x5fc] sm:$0xf]
    %v406 = vld [vmem:[%s1 + $0x600] sm:$0xf]
    %v407 = vld [vmem:[%s1 + $0x604] sm:$0xf]
    %v408 = vld [vmem:[%s1 + $0x608] sm:$0xf]
    %v409 = vld [vmem:[%s1 + $0x60c] sm:$0xf]
    %v410 = vld [vmem:[%s1 + $0x610] sm:$0xf]
    %v411 = vld [vmem:[%s1 + $0x614] sm:$0xf]
    %v412 = vld [vmem:[%s1 + $0x618] sm:$0xf]
    %v413 = vld [vmem:[%s1 + $0x61c] sm:$0xf]
    %v414 = vld [vmem:[%s1 + $0x620] sm:$0xf]
    %v415 = vld [vmem:[%s1 + $0x624] sm:$0xf]
    %v416 = vld [vmem:[%s1 + $0x628] sm:$0xf]
    %v417 = vld [vmem:[%s1 + $0x62c] sm:$0xf]
    %v418 = vld [vmem:[%s1 + $0x630] sm:$0xf]
    %v419 = vld [vmem:[%s1 + $0x634] sm:$0xf]
    %v420 = vld [vmem:[%s1 + $0x638] sm:$0xf]
    %v421 = vld [vmem:[%s1 + $0x63c] sm:$0xf]
    %v422 = vld [vmem:[%s1 + $0x640] sm:$0xf]
    %v423 = vld [vmem:[%s1 + $0x644] sm:$0xf]
    %v424 = vld [vmem:[%s1 + $0x648] sm:$0xf]
    %v425 = vld [vmem:[%s1 + $0x64c] sm:$0xf]
    %v426 = vld [vmem:[%s1 + $0x650] sm:$0xf]
    %v427 = vld [vmem:[%s1 + $0x654] sm:$0xf]
    %v428 = vld [vmem:[%s1 + $0x658] sm:$0xf]
    %v429 = vld [vmem:[%s1 + $0x65c] sm:$0xf]
    %v430 = vld [vmem:[%s1 + $0x660] sm:$0xf]
    %v431 = vld [vmem:[%s1 + $0x664] sm:$0xf]
    %v432 = vld [vmem:[%s1 + $0x668] sm:$0xf]
    %v433 = vld [vmem:[%s1 + $0x66c] sm:$0xf]
    %v434 = vld [vmem:[%s1 + $0x670] sm:$0xf]
    %v435 = vld [vmem:[%s1 + $0x674] sm:$0xf]
    %v436 = vld [vmem:[%s1 + $0x678] sm:$0xf]
    %v437 = vld [vmem:[%s1 + $0x67c] sm:$0xf]
    %v438 = vld [vmem:[%s1 + $0x680] sm:$0xf]
    %v439 = vld [vmem:[%s1 + $0x684] sm:$0xf]
    %v440 = vld [vmem:[%s1 + $0x688] sm:$0xf]
    %v441 = vld [vmem:[%s1 + $0x68c] sm:$0xf]
    %v442 = vld [vmem:[%s1 + $0x690] sm:$0xf]
    %v443 = vld [vmem:[%s1 + $0x694] sm:$0xf]
    %v444 = vld [vmem:[%s1 + $0x698] sm:$0xf]
    %v445 = vld [vmem:[%s1 + $0x69c] sm:$0xf]
    %v446 = vld [vmem:[%s1 + $0x6a0] sm:$0xf]
    %v447 = vld [vmem:[%s1 + $0x6a4] sm:$0xf]
    %v448 = vld [vmem:[%s1 + $0x6a8] sm:$0xf]
    %v449 = vld [vmem:[%s1 + $0x6ac] sm:$0xf]
    %v450 = vld [vmem:[%s1 + $0x6b0] sm:$0xf]
    %v451 = vld [vmem:[%s1 + $0x6b4] sm:$0xf]
    %v452 = vld [vmem:[%s1 + $0x6b8] sm:$0xf]
    %v453 = vld [vmem:[%s1 + $0x6bc] sm:$0xf]
    %v454 = vld [vmem:[%s1 + $0x6c0] sm:$0xf]
    %v455 = vld [vmem:[%s1 + $0x6c4] sm:$0xf]
    %v456 = vld [vmem:[%s1 + $0x6c8] sm:$0xf]
    %v457 = vld [vmem:[%s1 + $0x6cc] sm:$0xf]
    %v458 = vld [vmem:[%s1 + $0x6d0] sm:$0xf]
    %v459 = vld [vmem:[%s1 + $0x6d4] sm:$0xf]
    %v460 = vld [vmem:[%s1 + $0x6d8] sm:$0xf]
    %v461 = vld [vmem:[%s1 + $0x6dc] sm:$0xf]
    %v462 = vld [vmem:[%s1 + $0x6e0] sm:$0xf]
    %v463 = vld [vmem:[%s1 + $0x6e4] sm:$0xf]
    %v464 = vld [vmem:[%s1 + $0x6e8] sm:$0xf]
    %v465 = vld [vmem:[%s1 + $0x6ec] sm:$0xf]
    %v466 = vld [vmem:[%s1 + $0x6f0] sm:$0xf]
    %v467 = vld [vmem:[%s1 + $0x6f4] sm:$0xf]
    %v468 = vld [vmem:[%s1 + $0x6f8] sm:$0xf]
    %v469 = vld [vmem:[%s1 + $0x6fc] sm:$0xf]
    %v470 = vld [vmem:[%s1 + $0x700] sm:$0xf]
    %v471 = vld [vmem:[%s1 + $0x704] sm:$0xf]
    %v472 = vld [vmem:[%s1 + $0x708] sm:$0xf]
    %v473 = vld [vmem:[%s1 + $0x70c] sm:$0xf]
    %v474 = vld [vmem:[%s1 + $0x710] sm:$0xf]
    %v475 = vld [vmem:[%s1 + $0x714] sm:$0xf]
    %v476 = vld [vmem:[%s1 + $0x718] sm:$0xf]
    %v477 = vld [vmem:[%s1 + $0x71c] sm:$0xf]
    %v478 = vld [vmem:[%s1 + $0x720] sm:$0xf]
    %v479 = vld [vmem:[%s1 + $0x724] sm:$0xf]
    %v480 = vld [vmem:[%s1 + $0x728] sm:$0xf]
    %v481 = vld [vmem:[%s1 + $0x72c] sm:$0xf]
    %v482 = vld [vmem:[%s1 + $0x730] sm:$0xf]
    %v483 = vld [vmem:[%s1 + $0x734] sm:$0xf]
    %v484 = vld [vmem:[%s1 + $0x738] sm:$0xf]
    %v485 = vld [vmem:[%s1 + $0x73c] sm:$0xf]
    %v486 = vld [vmem:[%s1 + $0x740] sm:$0xf]
    %v487 = vld [vmem:[%s1 + $0x744] sm:$0xf]
    %v488 = vld [vmem:[%s1 + $0x748] sm:$0xf]
    %v489 = vld [vmem:[%s1 + $0x74c] sm:$0xf]
    %v490 = vld [vmem:[%s1 + $0x750] sm:$0xf]
    %v491 = vld [vmem:[%s1 + $0x754] sm:$0xf]
    %v492 = vld [vmem:[%s1 + $0x758] sm:$0xf]
    %v493 = vld [vmem:[%s1 + $0x75c] sm:$0xf]
    %v494 = vld [vmem:[%s1 + $0x760] sm:$0xf]
    %v495 = vld [vmem:[%s1 + $0x764] sm:$0xf]
    %v496 = vld [vmem:[%s1 + $0x768] sm:$0xf]
    %v497 = vld [vmem:[%s1 + $0x76c] sm:$0xf]
    %v498 = vld [vmem:[%s1 + $0x770] sm:$0xf]
    %v499 = vld [vmem:[%s1 + $0x774] sm:$0xf]
    %v500 = vld [vmem:[%s1 + $0x778] sm:$0xf]
    %v501 = vld [vmem:[%s1 + $0x77c] sm:$0xf]
    %v502 = vld [vmem:[%s1 + $0x780] sm:$0xf]
    %v503 = vld [vmem:[%s1 + $0x784] sm:$0xf]
    %v504 = vld [vmem:[%s1 + $0x788] sm:$0xf]
    %v505 = vld [vmem:[%s1 + $0x78c] sm:$0xf]
    %v506 = vld [vmem:[%s1 + $0x790] sm:$0xf]
    %v507 = vld [vmem:[%s1 + $0x794] sm:$0xf]
    %v508 = vld [vmem:[%s1 + $0x798] sm:$0xf]
    %v509 = vld [vmem:[%s1 + $0x79c] sm:$0xf]
    %v510 = vld [vmem:[%s1 + $0x7a0] sm:$0xf]
    %v511 = vld [vmem:[%s1 + $0x7a4] sm:$0xf]
    %v512 = vld [vmem:[%s1 + $0x7a8] sm:$0xf]
    %v513 = vld [vmem:[%s1 + $0x7ac] sm:$0xf]
    %v514 = vld [vmem:[%s1 + $0x7b0] sm:$0xf]
    %v515 = vld [vmem:[%s1 + $0x7b4] sm:$0xf]
    %v516 = vld [vmem:[%s1 + $0x7b8] sm:$0xf]
    %v517 = vld [vmem:[%s1 + $0x7bc] sm:$0xf]
    %v518 = vld [vmem:[%s1 + $0x7c0] sm:$0xf]
    %v519 = vld [vmem:[%s1 + $0x7c4] sm:$0xf]
    %v520 = vld [vmem:[%s1 + $0x7c8] sm:$0xf]
    %v521 = vld [vmem:[%s1 + $0x7cc] sm:$0xf]
    %v522 = vld [vmem:[%s1 + $0x7d0] sm:$0xf]
    %v523 = vld [vmem:[%s1 + $0x7d4] sm:$0xf]
    %v524 = vld [vmem:[%s1 + $0x7d8] sm:$0xf]
    %v525 = vld [vmem:[%s1 + $0x7dc] sm:$0xf]
    %v526 = vld [vmem:[%s1 + $0x7e0] sm:$0xf]
    %v527 = vld [vmem:[%s1 + $0x7e4] sm:$0xf]
    %v528 = vld [vmem:[%s1 + $0x7e8] sm:$0xf]
    %v529 = vld [vmem:[%s1 + $0x7ec] sm:$0xf]
    %v530 = vld [vmem:[%s1 + $0x7f0] sm:$0xf]
    %v531 = vld [vmem:[%s1 + $0x7f4] sm:$0xf]
    %v532 = vld [vmem:[%s1 + $0x7f8] sm:$0xf]
    %v533 = vld [vmem:[%s1 + $0x7fc] sm:$0xf]
    %v534 = vld [vmem:[%s1 + $0x800] sm:$0xf]
    %v535 = vld [vmem:[%s1 + $0x804] sm:$0xf]
    %v536 = vld [vmem:[%s1 + $0x808] sm:$0xf]
    %v537 = vld [vmem:[%s1 + $0x80c] sm:$0xf]
    %v538 = vld [vmem:[%s1 + $0x810] sm:$0xf]
    %v539 = vld [vmem:[%s1 + $0x814] sm:$0xf]
    %v540 = vld [vmem:[%s1 + $0x818] sm:$0xf]
    %v541 = vld [vmem:[%s1 + $0x81c] sm:$0xf]
    %v542 = vld [vmem:[%s1 + $0x820] sm:$0xf]
    %v543 = vld [vmem:[%s1 + $0x824] sm:$0xf]
    %v544 = vld [vmem:[%s1 + $0x828] sm:$0xf]
    %v545 = vld [vmem:[%s1 + $0x82c] sm:$0xf]
    %v546 = vld [vmem:[%s1 + $0x830] sm:$0xf]
    %v547 = vld [vmem:[%s1 + $0x834] sm:$0xf]
    %v548 = vld [vmem:[%s1 + $0x838] sm:$0xf]
    %v549 = vld [vmem:[%s1 + $0x83c] sm:$0xf]
    %v550 = vld [vmem:[%s1 + $0x840] sm:$0xf]
    %v551 = vld [vmem:[%s1 + $0x844] sm:$0xf]
    %v552 = vld [vmem:[%s1 + $0x848] sm:$0xf]
    %v553 = vld [vmem:[%s1 + $0x84c] sm:$0xf]
    %v554 = vld [vmem:[%s1 + $0x850] sm:$0xf]
    %v555 = vld [vmem:[%s1 + $0x854] sm:$0xf]
    %v556 = vld [vmem:[%s1 + $0x858] sm:$0xf]
    %v557 = vld [vmem:[%s1 + $0x85c] sm:$0xf]
    %v558 = vld [vmem:[%s1 + $0x860] sm:$0xf]
    %v559 = vld [vmem:[%s1 + $0x864] sm:$0xf]
    %v560 = vld [vmem:[%s1 + $0x868] sm:$0xf]
    %v561 = vld [vmem:[%s1 + $0x86c] sm:$0xf]
    %v562 = vld [vmem:[%s1 + $0x870] sm:$0xf]
    %v563 = vld [vmem:[%s1 + $0x874] sm:$0xf]
    %v564 = vld [vmem:[%s1 + $0x878] sm:$0xf]
    %v565 = vld [vmem:[%s1 + $0x87c] sm:$0xf]
    %v566 = vld [vmem:[%s1 + $0x880] sm:$0xf]
    %v567 = vld [vmem:[%s1 + $0x884] sm:$0xf]
    %v568 = vld [vmem:[%s1 + $0x888] sm:$0xf]
    %v569 = vld [vmem:[%s1 + $0x88c] sm:$0xf]
    %v570 = vld [vmem:[%s1 + $0x890] sm:$0xf]
    %v571 = vld [vmem:[%s1 + $0x894] sm:$0xf]
    %v572 = vld [vmem:[%s1 + $0x898] sm:$0xf]
    %v573 = vld [vmem:[%s1 + $0x89c] sm:$0xf]
    %v574 = vld [vmem:[%s1 + $0x8a0] sm:$0xf]
    %v575 = vld [vmem:[%s1 + $0x8a4] sm:$0xf]
    %v576 = vld [vmem:[%s1 + $0x8a8] sm:$0xf]
    %v577 = vld [vmem:[%s1 + $0x8ac] sm:$0xf]
    %v578 = vld [vmem:[%s1 + $0x8b0] sm:$0xf]
    %v579 = vld [vmem:[%s1 + $0x8b4] sm:$0xf]
    %v580 = vld [vmem:[%s1 + $0x8b8] sm:$0xf]
    %v581 = vld [vmem:[%s1 + $0x8bc] sm:$0xf]
    %v582 = vld [vmem:[%s1 + $0x8c0] sm:$0xf]
    %v583 = vld [vmem:[%s1 + $0x8c4] sm:$0xf]
    %v584 = vld [vmem:[%s1 + $0x8c8] sm:$0xf]
    %v585 = vld [vmem:[%s1 + $0x8cc] sm:$0xf]
    %v586 = vld [vmem:[%s1 + $0x8d0] sm:$0xf]
    %v587 = vld [vmem:[%s1 + $0x8d4] sm:$0xf]
    %v588 = vld [vmem:[%s1 + $0x8d8] sm:$0xf]
    %v589 = vld [vmem:[%s1 + $0x8dc] sm:$0xf]
    %v590 = vld [vmem:[%s1 + $0x8e0] sm:$0xf]
    %v591 = vld [vmem:[%s1 + $0x8e4] sm:$0xf]
    %v592 = vld [vmem:[%s1 + $0x8e8] sm:$0xf]
    %v593 = vld [vmem:[%s1 + $0x8ec] sm:$0xf]
    %v594 = vld [vmem:[%s1 + $0x8f0] sm:$0xf]
    %v595 = vld [vmem:[%s1 + $0x8f4] sm:$0xf]
    %v596 = vld [vmem:[%s1 + $0x8f8] sm:$0xf]
    %v597 = vld [vmem:[%s1 + $0x8fc] sm:$0xf]
    %v598 = vld [vmem:[%s1 + $0x900] sm:$0xf]
    %v599 = vld [vmem:[%s1 + $0x904] sm:$0xf]
    %v600 = vld [vmem:[%s1 + $0x908] sm:$0xf]
    %v601 = vld [vmem:[%s1 + $0x90c] sm:$0xf]
    %v602 = vld [vmem:[%s1 + $0x910] sm:$0xf]
    %v603 = vld [vmem:[%s1 + $0x914] sm:$0xf]
    %v604 = vld [vmem:[%s1 + $0x918] sm:$0xf]
    %v605 = vld [vmem:[%s1 + $0x91c] sm:$0xf]
    %v606 = vld [vmem:[%s1 + $0x920] sm:$0xf]
    %v607 = vld [vmem:[%s1 + $0x924] sm:$0xf]
    %v608 = vld [vmem:[%s1 + $0x928] sm:$0xf]
    %v609 = vld [vmem:[%s1 + $0x92c] sm:$0xf]
    %v610 = vld [vmem:[%s1 + $0x930] sm:$0xf]
    %v611 = vld [vmem:[%s1 + $0x934] sm:$0xf]
    %v612 = vld [vmem:[%s1 + $0x938] sm:$0xf]
    %v613 = vld [vmem:[%s1 + $0x93c] sm:$0xf]
    %v614 = vld [vmem:[%s1 + $0x940] sm:$0xf]
    %v615 = vld [vmem:[%s1 + $0x944] sm:$0xf]
    %v616 = vld [vmem:[%s1 + $0x948] sm:$0xf]
    %v617 = vld [vmem:[%s1 + $0x94c] sm:$0xf]
    %v618 = vld [vmem:[%s1 + $0x950] sm:$0xf]
    %v619 = vld [vmem:[%s1 + $0x954] sm:$0xf]
    %v620 = vld [vmem:[%s1 + $0x958] sm:$0xf]
    %v621 = vld [vmem:[%s1 + $0x95c] sm:$0xf]
    %v622 = vld [vmem:[%s1 + $0x960] sm:$0xf]
    %v623 = vld [vmem:[%s1 + $0x964] sm:$0xf]
    %v624 = vld [vmem:[%s1 + $0x968] sm:$0xf]
    %v625 = vld [vmem:[%s1 + $0x96c] sm:$0xf]
    %v626 = vld [vmem:[%s1 + $0x970] sm:$0xf]
    %v627 = vld [vmem:[%s1 + $0x974] sm:$0xf]
    %v628 = vld [vmem:[%s1 + $0x978] sm:$0xf]
    %v629 = vld [vmem:[%s1 + $0x97c] sm:$0xf]
    %v630 = vld [vmem:[%s1 + $0x980] sm:$0xf]
    %v631 = vld [vmem:[%s1 + $0x984] sm:$0xf]
    %v632 = vld [vmem:[%s1 + $0x988] sm:$0xf]
    %v633 = vld [vmem:[%s1 + $0x98c] sm:$0xf]
    %v634 = vld [vmem:[%s1 + $0x990] sm:$0xf]
    %v635 = vld [vmem:[%s1 + $0x994] sm:$0xf]
    %v636 = vld [vmem:[%s1 + $0x998] sm:$0xf]
    %v637 = vld [vmem:[%s1 + $0x99c] sm:$0xf]
    %v638 = vld [vmem:[%s1 + $0x9a0] sm:$0xf]
    %v639 = vld [vmem:[%s1 + $0x9a4] sm:$0xf]
    %v640 = vld [vmem:[%s1 + $0x9a8] sm:$0xf]
    %v641 = vld [vmem:[%s1 + $0x9ac] sm:$0xf]
    %v642 = vld [vmem:[%s1 + $0x9b0] sm:$0xf]
    %v643 = vld [vmem:[%s1 + $0x9b4] sm:$0xf]
    %v644 = vld [vmem:[%s1 + $0x9b8] sm:$0xf]
    %v645 = vld [vmem:[%s1 + $0x9bc] sm:$0xf]
    %v646 = vld [vmem:[%s1 + $0x9c0] sm:$0xf]
    %v647 = vld [vmem:[%s1 + $0x9c4] sm:$0xf]
    %v648 = vld [vmem:[%s1 + $0x9c8] sm:$0xf]
    %v649 = vld [vmem:[%s1 + $0x9cc] sm:$0xf]
    %v650 = vld [vmem:[%s1 + $0x9d0] sm:$0xf]
    %v651 = vld [vmem:[%s1 + $0x9d4] sm:$0xf]
    %v652 = vld [vmem:[%s1 + $0x9d8] sm:$0xf]
    %v653 = vld [vmem:[%s1 + $0x9dc] sm:$0xf]
    %v654 = vld [vmem:[%s1 + $0x9e0] sm:$0xf]
    %v655 = vld [vmem:[%s1 + $0x9e4] sm:$0xf]
    %v656 = vld [vmem:[%s1 + $0x9e8] sm:$0xf]
    %v657 = vld [vmem:[%s1 + $0x9ec] sm:$0xf]
    %v658 = vld [vmem:[%s1 + $0x9f0] sm:$0xf]
    %v659 = vld [vmem:[%s1 + $0x9f4] sm:$0xf]
    %v660 = vld [vmem:[%s1 + $0x9f8] sm:$0xf]
    %v661 = vld [vmem:[%s1 + $0x9fc] sm:$0xf]
    %v662 = vld [vmem:[%s1 + $0xa00] sm:$0xf]
    %v663 = vld [vmem:[%s1 + $0xa04] sm:$0xf]
    %v664 = vld [vmem:[%s1 + $0xa08] sm:$0xf]
    %v665 = vld [vmem:[%s1 + $0xa0c] sm:$0xf]
    %v666 = vld [vmem:[%s1 + $0xa10] sm:$0xf]
    %v667 = vld [vmem:[%s1 + $0xa14] sm:$0xf]
    %v668 = vld [vmem:[%s1 + $0xa18] sm:$0xf]
    %v669 = vld [vmem:[%s1 + $0xa1c] sm:$0xf]
    %v670 = vld [vmem:[%s1 + $0xa20] sm:$0xf]
    %v671 = vld [vmem:[%s1 + $0xa24] sm:$0xf]
    %v672 = vld [vmem:[%s1 + $0xa28] sm:$0xf]
    %v673 = vld [vmem:[%s1 + $0xa2c] sm:$0xf]
    %v674 = vld [vmem:[%s1 + $0xa30] sm:$0xf]
    %v675 = vld [vmem:[%s1 + $0xa34] sm:$0xf]
    %v676 = vld [vmem:[%s1 + $0xa38] sm:$0xf]
    %v677 = vld [vmem:[%s1 + $0xa3c] sm:$0xf]
    %v678 = vld [vmem:[%s1 + $0xa40] sm:$0xf]
    %v679 = vld [vmem:[%s1 + $0xa44] sm:$0xf]
    %v680 = vld [vmem:[%s1 + $0xa48] sm:$0xf]
    %v681 = vld [vmem:[%s1 + $0xa4c] sm:$0xf]
    %v682 = vld [vmem:[%s1 + $0xa50] sm:$0xf]
    %v683 = vld [vmem:[%s1 + $0xa54] sm:$0xf]
    %v684 = vld [vmem:[%s1 + $0xa58] sm:$0xf]
    %v685 = vld [vmem:[%s1 + $0xa5c] sm:$0xf]
    %v686 = vld [vmem:[%s1 + $0xa60] sm:$0xf]
    %v687 = vld [vmem:[%s1 + $0xa64] sm:$0xf]
    %v688 = vld [vmem:[%s1 + $0xa68] sm:$0xf]
    %v689 = vld [vmem:[%s1 + $0xa6c] sm:$0xf]
    %v690 = vld [vmem:[%s1 + $0xa70] sm:$0xf]
    %v691 = vld [vmem:[%s1 + $0xa74] sm:$0xf]
    %v692 = vld [vmem:[%s1 + $0xa78] sm:$0xf]
    %v693 = vld [vmem:[%s1 + $0xa7c] sm:$0xf]
    %v694 = vld [vmem:[%s1 + $0xa80] sm:$0xf]
    %v695 = vld [vmem:[%s1 + $0xa84] sm:$0xf]
    %v696 = vld [vmem:[%s1 + $0xa88] sm:$0xf]
    %v697 = vld [vmem:[%s1 + $0xa8c] sm:$0xf]
    %v698 = vld [vmem:[%s1 + $0xa90] sm:$0xf]
    %v699 = vld [vmem:[%s1 + $0xa94] sm:$0xf]
    %v700 = vld [vmem:[%s1 + $0xa98] sm:$0xf]
    %v701 = vld [vmem:[%s1 + $0xa9c] sm:$0xf]
    %v702 = vld [vmem:[%s1 + $0xaa0] sm:$0xf]
    %v703 = vld [vmem:[%s1 + $0xaa4] sm:$0xf]
    %v704 = vld [vmem:[%s1 + $0xaa8] sm:$0xf]
    %v705 = vld [vmem:[%s1 + $0xaac] sm:$0xf]
    %v706 = vld [vmem:[%s1 + $0xab0] sm:$0xf]
    %v707 = vld [vmem:[%s1 + $0xab4] sm:$0xf]
    %v708 = vld [vmem:[%s1 + $0xab8] sm:$0xf]
    %v709 = vld [vmem:[%s1 + $0xabc] sm:$0xf]
    %v710 = vld [vmem:[%s1 + $0xac0] sm:$0xf]
    %v711 = vld [vmem:[%s1 + $0xac4] sm:$0xf]
    %v712 = vld [vmem:[%s1 + $0xac8] sm:$0xf]
    %v713 = vld [vmem:[%s1 + $0xacc] sm:$0xf]
    %v714 = vld [vmem:[%s1 + $0xad0] sm:$0xf]
    %v715 = vld [vmem:[%s1 + $0xad4] sm:$0xf]
    %v716 = vld [vmem:[%s1 + $0xad8] sm:$0xf]
    %v717 = vld [vmem:[%s1 + $0xadc] sm:$0xf]
    %v718 = vld [vmem:[%s1 + $0xae0] sm:$0xf]
    %v719 = vld [vmem:[%s1 + $0xae4] sm:$0xf]
    %v720 = vld [vmem:[%s1 + $0xae8] sm:$0xf]
    %v721 = vld [vmem:[%s1 + $0xaec] sm:$0xf]
    %v722 = vld [vmem:[%s1 + $0xaf0] sm:$0xf]
    %v723 = vld [vmem:[%s1 + $0xaf4] sm:$0xf]
    %v724 = vld [vmem:[%s1 + $0xaf8] sm:$0xf]
    %v725 = vld [vmem:[%s1 + $0xafc] sm:$0xf]
    %v726 = vld [vmem:[%s1 + $0xb00] sm:$0xf]
    %v727 = vld [vmem:[%s1 + $0xb04] sm:$0xf]
    %v728 = vld [vmem:[%s1 + $0xb08] sm:$0xf]
    %v729 = vld [vmem:[%s1 + $0xb0c] sm:$0xf]
    %v730 = vld [vmem:[%s1 + $0xb10] sm:$0xf]
    %v731 = vld [vmem:[%s1 + $0xb14] sm:$0xf]
    %v732 = vld [vmem:[%s1 + $0xb18] sm:$0xf]
    %v733 = vld [vmem:[%s1 + $0xb1c] sm:$0xf]
    %v734 = vld [vmem:[%s1 + $0xb20] sm:$0xf]
    %v735 = vld [vmem:[%s1 + $0xb24] sm:$0xf]
    %v736 = vld [vmem:[%s1 + $0xb28] sm:$0xf]
    %v737 = vld [vmem:[%s1 + $0xb2c] sm:$0xf]
    %v738 = vld [vmem:[%s1 + $0xb30] sm:$0xf]
    %v739 = vld [vmem:[%s1 + $0xb34] sm:$0xf]
    %v740 = vld [vmem:[%s1 + $0xb38] sm:$0xf]
    %v741 = vld [vmem:[%s1 + $0xb3c] sm:$0xf]
    %v742 = vld [vmem:[%s1 + $0xb40] sm:$0xf]
    %v743 = vld [vmem:[%s1 + $0xb44] sm:$0xf]
    %v744 = vld [vmem:[%s1 + $0xb48] sm:$0xf]
    %v745 = vld [vmem:[%s1 + $0xb4c] sm:$0xf]
    %v746 = vld [vmem:[%s1 + $0xb50] sm:$0xf]
    %v747 = vld [vmem:[%s1 + $0xb54] sm:$0xf]
    %v748 = vld [vmem:[%s1 + $0xb58] sm:$0xf]
    %v749 = vld [vmem:[%s1 + $0xb5c] sm:$0xf]
    %v750 = vld [vmem:[%s1 + $0xb60] sm:$0xf]
    %v751 = vld [vmem:[%s1 + $0xb64] sm:$0xf]
    %v752 = vld [vmem:[%s1 + $0xb68] sm:$0xf]
    %v753 = vld [vmem:[%s1 + $0xb6c] sm:$0xf]
    %v754 = vld [vmem:[%s1 + $0xb70] sm:$0xf]
    %v755 = vld [vmem:[%s1 + $0xb74] sm:$0xf]
    %v756 = vld [vmem:[%s1 + $0xb78] sm:$0xf]
    %v757 = vld [vmem:[%s1 + $0xb7c] sm:$0xf]
    %v758 = vld [vmem:[%s1 + $0xb80] sm:$0xf]
    %v759 = vld [vmem:[%s1 + $0xb84] sm:$0xf]
    %v760 = vld [vmem:[%s1 + $0xb88] sm:$0xf]
    %v761 = vld [vmem:[%s1 + $0xb8c] sm:$0xf]
    %v762 = vld [vmem:[%s1 + $0xb90] sm:$0xf]
    %v763 = vld [vmem:[%s1 + $0xb94] sm:$0xf]
    %v764 = vld [vmem:[%s1 + $0xb98] sm:$0xf]
    %v765 = vld [vmem:[%s1 + $0xb9c] sm:$0xf]
    %v766 = vld [vmem:[%s1 + $0xba0] sm:$0xf]
    %v767 = vld [vmem:[%s1 + $0xba4] sm:$0xf]
    %v768 = vld [vmem:[%s1 + $0xba8] sm:$0xf]
    %v769 = vld [vmem:[%s1 + $0xbac] sm:$0xf]
    %v770 = vld [vmem:[%s1 + $0xbb0] sm:$0xf]
    %v771 = vld [vmem:[%s1 + $0xbb4] sm:$0xf]
    %v772 = vld [vmem:[%s1 + $0xbb8] sm:$0xf]
    %v773 = vld [vmem:[%s1 + $0xbbc] sm:$0xf]
    %v774 = vld [vmem:[%s1 + $0xbc0] sm:$0xf]
    %v775 = vld [vmem:[%s1 + $0xbc4] sm:$0xf]
    %v776 = vld [vmem:[%s1 + $0xbc8] sm:$0xf]
    %v777 = vld [vmem:[%s1 + $0xbcc] sm:$0xf]
    %v778 = vld [vmem:[%s1 + $0xbd0] sm:$0xf]
    %v779 = vld [vmem:[%s1 + $0xbd4] sm:$0xf]
    %v780 = vld [vmem:[%s1 + $0xbd8] sm:$0xf]
    %v781 = vld [vmem:[%s1 + $0xbdc] sm:$0xf]
    %v782 = vld [vmem:[%s1 + $0xbe0] sm:$0xf]
    %v783 = vld [vmem:[%s1 + $0xbe4] sm:$0xf]
    %v784 = vld [vmem:[%s1 + $0xbe8] sm:$0xf]
    %v785 = vld [vmem:[%s1 + $0xbec] sm:$0xf]
    %v786 = vld [vmem:[%s1 + $0xbf0] sm:$0xf]
    %v787 = vld [vmem:[%s1 + $0xbf4] sm:$0xf]
    %v788 = vld [vmem:[%s1 + $0xbf8] sm:$0xf]
    %v789 = vld [vmem:[%s1 + $0xbfc] sm:$0xf]
    %v790 = vld [vmem:[%s1 + $0xc00] sm:$0xf]
    %v791 = vld [vmem:[%s1 + $0xc04] sm:$0xf]
    %v792 = vld [vmem:[%s1 + $0xc08] sm:$0xf]
    %v793 = vld [vmem:[%s1 + $0xc0c] sm:$0xf]
    %v794 = vld [vmem:[%s1 + $0xc10] sm:$0xf]
    %v795 = vld [vmem:[%s1 + $0xc14] sm:$0xf]
    %v796 = vld [vmem:[%s1 + $0xc18] sm:$0xf]
    %v797 = vld [vmem:[%s1 + $0xc1c] sm:$0xf]
    %v798 = vld [vmem:[%s1 + $0xc20] sm:$0xf]
    %v799 = vld [vmem:[%s1 + $0xc24] sm:$0xf]
    %v800 = vld [vmem:[%s1 + $0xc28] sm:$0xf]
    %v801 = vld [vmem:[%s1 + $0xc2c] sm:$0xf]
    %v802 = vld [vmem:[%s1 + $0xc30] sm:$0xf]
    %v803 = vld [vmem:[%s1 + $0xc34] sm:$0xf]
    %v804 = vld [vmem:[%s1 + $0xc38] sm:$0xf]
    %v805 = vld [vmem:[%s1 + $0xc3c] sm:$0xf]
    %v806 = vld [vmem:[%s2] sm:$0x1]
    %v808 = vperm.slane %v806, 0
    %811 = vst [vmem:[#allocation1] ss:$9 sm:$0xff] %v15
    %v812 = vld [vmem:[#allocation1] sm:$0xff]
    %v813 = vld [vmem:[#allocation1 + $0x9] sm:$0xff]
    %v814 = vld [vmem:[#allocation1 + $0x12] sm:$0xff]
    %v815 = vld [vmem:[#allocation1 + $0x1b] sm:$0xff]
    %v816 = vld [vmem:[#allocation1 + $0x24] sm:$0xff]
    %v817 = vld [vmem:[#allocation1 + $0x2d] sm:$0xff]
    %v818 = vld [vmem:[#allocation1 + $0x36] sm:$0xff]
    %v819 = vld [vmem:[#allocation1 + $0x3f] sm:$0xff]
    %821 = vst [vmem:[#allocation1] ss:$9 sm:$0xff] %v16
    %v822 = vld [vmem:[#allocation1] sm:$0xff]
    %v823 = vld [vmem:[#allocation1 + $0x9] sm:$0xff]
    %v824 = vld [vmem:[#allocation1 + $0x12] sm:$0xff]
    %v825 = vld [vmem:[#allocation1 + $0x1b] sm:$0xff]
    %v826 = vld [vmem:[#allocation1 + $0x24] sm:$0xff]
    %v827 = vld [vmem:[#allocation1 + $0x2d] sm:$0xff]
    %v828 = vld [vmem:[#allocation1 + $0x36] sm:$0xff]
    %v829 = vld [vmem:[#allocation1 + $0x3f] sm:$0xff]
    %831 = vst [vmem:[#allocation1] ss:$9 sm:$0xff] %v17
    %v832 = vld [vmem:[#allocation1] sm:$0xff]
    %v833 = vld [vmem:[#allocation1 + $0x9] sm:$0xff]
    %v834 = vld [vmem:[#allocation1 + $0x12] sm:$0xff]
    %v835 = vld [vmem:[#allocation1 + $0x1b] sm:$0xff]
    %v836 = vld [vmem:[#allocation1 + $0x24] sm:$0xff]
    %v837 = vld [vmem:[#allocation1 + $0x2d] sm:$0xff]
    %v838 = vld [vmem:[#allocation1 + $0x36] sm:$0xff]
    %v839 = vld [vmem:[#allocation1 + $0x3f] sm:$0xff]
    %841 = vst [vmem:[#allocation1] ss:$9 sm:$0xff] %v18
    %v842 = vld [vmem:[#allocation1] sm:$0xff]
    %v843 = vld [vmem:[#allocation1 + $0x9] sm:$0xff]
    %v844 = vld [vmem:[#allocation1 + $0x12] sm:$0xff]
    %v845 = vld [vmem:[#allocation1 + $0x1b] sm:$0xff]
    %v846 = vld [vmem:[#allocation1 + $0x24] sm:$0xff]
    %v847 = vld [vmem:[#allocation1 + $0x2d] sm:$0xff]
    %v848 = vld [vmem:[#allocation1 + $0x36] sm:$0xff]
    %v849 = vld [vmem:[#allocation1 + $0x3f] sm:$0xff]
    %851 = vst [vmem:[#allocation1] ss:$9 sm:$0xff] %v19
    %v852 = vld [vmem:[#allocation1] sm:$0xff]
    %v853 = vld [vmem:[#allocation1 + $0x9] sm:$0xff]
    %v854 = vld [vmem:[#allocation1 + $0x12] sm:$0xff]
    %v855 = vld [vmem:[#allocation1 + $0x1b] sm:$0xff]
    %v856 = vld [vmem:[#allocation1 + $0x24] sm:$0xff]
    %v857 = vld [vmem:[#allocation1 + $0x2d] sm:$0xff]
    %v858 = vld [vmem:[#allocation1 + $0x36] sm:$0xff]
    %v859 = vld [vmem:[#allocation1 + $0x3f] sm:$0xff]
    %861 = vst [vmem:[#allocation1] ss:$9 sm:$0xff] %v20
    %v862 = vld [vmem:[#allocation1] sm:$0xff]
    %v863 = vld [vmem:[#allocation1 + $0x9] sm:$0xff]
    %v864 = vld [vmem:[#allocation1 + $0x12] sm:$0xff]
    %v865 = vld [vmem:[#allocation1 + $0x1b] sm:$0xff]
    %v866 = vld [vmem:[#allocation1 + $0x24] sm:$0xff]
    %v867 = vld [vmem:[#allocation1 + $0x2d] sm:$0xff]
    %v868 = vld [vmem:[#allocation1 + $0x36] sm:$0xff]
    %v869 = vld [vmem:[#allocation1 + $0x3f] sm:$0xff]
    %871 = vst [vmem:[#allocation1] ss:$9 sm:$0xff] %v21
    %v872 = vld [vmem:[#allocation1] sm:$0xff]
    %v1706 = vunpack.c.l.b16 %v22
    %v1707 = vunpack.c.l.b16 %v23
    %v1708 = vunpack.c.l.b16 %v24
    %v1709 = vunpack.c.l.b16 %v25
    %v1710 = vunpack.c.l.b16 %v26
    %v1711 = vunpack.c.l.b16 %v27
    %v1712 = vunpack.c.l.b16 %v28
    %v1713 = vunpack.c.l.b16 %v29
    %v1714 = vunpack.c.l.b16 %v30
    %v1715 = vunpack.c.l.b16 %v31
    %v1716 = vunpack.c.l.b16 %v32
    %v1717 = vunpack.c.l.b16 %v33
    %v1718 = vunpack.c.l.b16 %v34
    %v1719 = vunpack.c.l.b16 %v35
    %v1720 = vunpack.c.l.b16 %v36
    %v1721 = vunpack.c.l.b16 %v37
    %v1722 = vunpack.c.l.b16 %v38
    %v1723 = vunpack.c.l.b16 %v39
    %v1724 = vunpack.c.l.b16 %v40
    %v1725 = vunpack.c.l.b16 %v41
    %v1726 = vunpack.c.l.b16 %v42
    %v1727 = vunpack.c.l.b16 %v43
    %v1728 = vunpack.c.l.b16 %v44
    %v1729 = vunpack.c.l.b16 %v45
    %v1730 = vunpack.c.l.b16 %v46
    %v1731 = vunpack.c.l.b16 %v47
    %v1732 = vunpack.c.l.b16 %v48
    %v1733 = vunpack.c.l.b16 %v49
    %v1734 = vunpack.c.l.b16 %v50
    %v1735 = vunpack.c.l.b16 %v51
    %v1736 = vunpack.c.l.b16 %v52
    %v1737 = vunpack.c.l.b16 %v53
    %v1738 = vunpack.c.l.b16 %v54
    %v1739 = vunpack.c.l.b16 %v55
    %v1740 = vunpack.c.l.b16 %v56
    %v1741 = vunpack.c.l.b16 %v57
    %v1742 = vunpack.c.l.b16 %v58
    %v1743 = vunpack.c.l.b16 %v59
    %v1744 = vunpack.c.l.b16 %v60
    %v1745 = vunpack.c.l.b16 %v61
    %v1746 = vunpack.c.l.b16 %v62
    %v1747 = vunpack.c.l.b16 %v63
    %v1748 = vunpack.c.l.b16 %v64
    %v1749 = vunpack.c.l.b16 %v65
    %v1750 = vunpack.c.l.b16 %v66
    %v1751 = vunpack.c.l.b16 %v67
    %v1752 = vunpack.c.l.b16 %v68
    %v1753 = vunpack.c.l.b16 %v69
    %v1754 = vunpack.c.l.b16 %v70
    %v1755 = vunpack.c.l.b16 %v71
    %v1756 = vunpack.c.l.b16 %v72
    %v1757 = vunpack.c.l.b16 %v73
    %v1758 = vunpack.c.l.b16 %v74
    %v1759 = vunpack.c.l.b16 %v75
    %v1760 = vunpack.c.l.b16 %v76
    %v1761 = vunpack.c.l.b16 %v77
    %v1762 = vunpack.c.l.b16 %v78
    %v1763 = vunpack.c.l.b16 %v79
    %v1764 = vunpack.c.l.b16 %v80
    %v1765 = vunpack.c.l.b16 %v81
    %v1766 = vunpack.c.l.b16 %v82
    %v1767 = vunpack.c.l.b16 %v83
    %v1768 = vunpack.c.l.b16 %v84
    %v1769 = vunpack.c.l.b16 %v85
    %v1770 = vunpack.c.l.b16 %v86
    %v1771 = vunpack.c.l.b16 %v87
    %v1772 = vunpack.c.l.b16 %v88
    %v1773 = vunpack.c.l.b16 %v89
    %v1774 = vunpack.c.l.b16 %v90
    %v1775 = vunpack.c.l.b16 %v91
    %v1776 = vunpack.c.l.b16 %v92
    %v1777 = vunpack.c.l.b16 %v93
    %v1778 = vunpack.c.l.b16 %v94
    %v1779 = vunpack.c.l.b16 %v95
    %v1780 = vunpack.c.l.b16 %v96
    %v1781 = vunpack.c.l.b16 %v97
    %v1782 = vunpack.c.l.b16 %v98
    %v1783 = vunpack.c.l.b16 %v99
    %v1784 = vunpack.c.l.b16 %v100
    %v1785 = vunpack.c.l.b16 %v101
    %v1786 = vunpack.c.l.b16 %v102
    %v1787 = vunpack.c.l.b16 %v103
    %v1788 = vunpack.c.l.b16 %v104
    %v1789 = vunpack.c.l.b16 %v105
    %v1790 = vunpack.c.l.b16 %v106
    %v1791 = vunpack.c.l.b16 %v107
    %v1792 = vunpack.c.l.b16 %v108
    %v1793 = vunpack.c.l.b16 %v109
    %v1794 = vunpack.c.l.b16 %v110
    %v1795 = vunpack.c.l.b16 %v111
    %v1796 = vunpack.c.l.b16 %v112
    %v1797 = vunpack.c.l.b16 %v113
    %v1798 = vunpack.c.l.b16 %v114
    %v1799 = vunpack.c.l.b16 %v115
    %v1800 = vunpack.c.l.b16 %v116
    %v1801 = vunpack.c.l.b16 %v117
    %v1802 = vunpack.c.l.b16 %v118
    %v1803 = vunpack.c.l.b16 %v119
    %v1804 = vunpack.c.l.b16 %v120
    %v1805 = vunpack.c.l.b16 %v121
    %v1806 = vunpack.c.l.b16 %v122
    %v1807 = vunpack.c.l.b16 %v123
    %v1808 = vunpack.c.l.b16 %v124
    %v1809 = vunpack.c.l.b16 %v125
    %v1810 = vunpack.c.l.b16 %v126
    %v1811 = vunpack.c.l.b16 %v127
    %v1812 = vunpack.c.l.b16 %v128
    %v1813 = vunpack.c.l.b16 %v129
    %v1814 = vunpack.c.l.b16 %v130
    %v1815 = vunpack.c.l.b16 %v131
    %v1816 = vunpack.c.l.b16 %v132
    %v1817 = vunpack.c.l.b16 %v133
    %v1818 = vunpack.c.l.b16 %v134
    %v1819 = vunpack.c.l.b16 %v135
    %v1820 = vunpack.c.l.b16 %v136
    %v1821 = vunpack.c.l.b16 %v137
    %v1822 = vunpack.c.l.b16 %v138
    %v1823 = vunpack.c.l.b16 %v139
    %v1824 = vunpack.c.l.b16 %v140
    %v1825 = vunpack.c.l.b16 %v141
    %v1826 = vunpack.c.l.b16 %v142
    %v1827 = vunpack.c.l.b16 %v143
    %v1828 = vunpack.c.l.b16 %v144
    %v1829 = vunpack.c.l.b16 %v145
    %v1830 = vunpack.c.l.b16 %v146
    %v1831 = vunpack.c.l.b16 %v147
    %v1832 = vunpack.c.l.b16 %v148
    %v1833 = vunpack.c.l.b16 %v149
    %v1834 = vunpack.c.l.b16 %v150
    %v1835 = vunpack.c.l.b16 %v151
    %v1836 = vunpack.c.l.b16 %v152
    %v1837 = vunpack.c.l.b16 %v153
    %v1838 = vunpack.c.l.b16 %v154
    %v1839 = vunpack.c.l.b16 %v155
    %v1840 = vunpack.c.l.b16 %v156
    %v1841 = vunpack.c.l.b16 %v157
    %v1842 = vunpack.c.l.b16 %v158
    %v1843 = vunpack.c.l.b16 %v159
    %v1844 = vunpack.c.l.b16 %v160
    %v1845 = vunpack.c.l.b16 %v161
    %v1846 = vunpack.c.l.b16 %v162
    %v1847 = vunpack.c.l.b16 %v163
    %v1848 = vunpack.c.l.b16 %v164
    %v1849 = vunpack.c.l.b16 %v165
    %v1850 = vunpack.c.l.b16 %v166
    %v1851 = vunpack.c.l.b16 %v167
    %v1852 = vunpack.c.l.b16 %v168
    %v1853 = vunpack.c.l.b16 %v169
    %v1854 = vunpack.c.l.b16 %v170
    %v1855 = vunpack.c.l.b16 %v171
    %v1856 = vunpack.c.l.b16 %v172
    %v1857 = vunpack.c.l.b16 %v173
    %v1858 = vunpack.c.l.b16 %v174
    %v1859 = vunpack.c.l.b16 %v175
    %v1860 = vunpack.c.l.b16 %v176
    %v1861 = vunpack.c.l.b16 %v177
    %v1862 = vunpack.c.l.b16 %v178
    %v1863 = vunpack.c.l.b16 %v179
    %v1864 = vunpack.c.l.b16 %v180
    %v1865 = vunpack.c.l.b16 %v181
    %v1866 = vunpack.c.l.b16 %v182
    %v1867 = vunpack.c.l.b16 %v183
    %v1868 = vunpack.c.l.b16 %v184
    %v1869 = vunpack.c.l.b16 %v185
    %v1870 = vunpack.c.l.b16 %v186
    %v1871 = vunpack.c.l.b16 %v187
    %v1872 = vunpack.c.l.b16 %v188
    %v1873 = vunpack.c.l.b16 %v189
    %v1874 = vunpack.c.l.b16 %v190
    %v1875 = vunpack.c.l.b16 %v191
    %v1876 = vunpack.c.l.b16 %v192
    %v1877 = vunpack.c.l.b16 %v193
    %v1878 = vunpack.c.l.b16 %v194
    %v1879 = vunpack.c.l.b16 %v195
    %v1880 = vunpack.c.l.b16 %v196
    %v1881 = vunpack.c.l.b16 %v197
    %v1882 = vunpack.c.l.b16 %v198
    %v1883 = vunpack.c.l.b16 %v199
    %v1884 = vunpack.c.l.b16 %v200
    %v1885 = vunpack.c.l.b16 %v201
    %v1886 = vunpack.c.l.b16 %v202
    %v1887 = vunpack.c.l.b16 %v203
    %v1888 = vunpack.c.l.b16 %v204
    %v1889 = vunpack.c.l.b16 %v205
    %v1890 = vunpack.c.l.b16 %v206
    %v1891 = vunpack.c.l.b16 %v207
    %v1892 = vunpack.c.l.b16 %v208
    %v1893 = vunpack.c.l.b16 %v209
    %v1894 = vunpack.c.l.b16 %v210
    %v1895 = vunpack.c.l.b16 %v211
    %v1896 = vunpack.c.l.b16 %v212
    %v1897 = vunpack.c.l.b16 %v213
    %v1898 = vunpack.c.l.b16 %v214
    %v1899 = vunpack.c.l.b16 %v215
    %v1900 = vunpack.c.l.b16 %v216
    %v1901 = vunpack.c.l.b16 %v217
    %v1902 = vunpack.c.l.b16 %v218
    %v1903 = vunpack.c.l.b16 %v219
    %v1904 = vunpack.c.l.b16 %v220
    %v1905 = vunpack.c.l.b16 %v221
    %v1906 = vunpack.c.l.b16 %v222
    %v1907 = vunpack.c.l.b16 %v223
    %v1908 = vunpack.c.l.b16 %v224
    %v1909 = vunpack.c.l.b16 %v225
    %v1910 = vunpack.c.l.b16 %v226
    %v1911 = vunpack.c.l.b16 %v227
    %v1912 = vunpack.c.l.b16 %v228
    %v1913 = vunpack.c.l.b16 %v229
    %v1914 = vunpack.c.l.b16 %v230
    %v1915 = vunpack.c.l.b16 %v231
    %v1916 = vunpack.c.l.b16 %v232
    %v1917 = vunpack.c.l.b16 %v233
    %v1918 = vunpack.c.l.b16 %v234
    %v1919 = vunpack.c.l.b16 %v235
    %v1920 = vunpack.c.l.b16 %v236
    %v1921 = vunpack.c.l.b16 %v237
    %v1922 = vunpack.c.l.b16 %v238
    %v1923 = vunpack.c.l.b16 %v239
    %v1924 = vunpack.c.l.b16 %v240
    %v1925 = vunpack.c.l.b16 %v241
    %v1926 = vunpack.c.l.b16 %v242
    %v1927 = vunpack.c.l.b16 %v243
    %v1928 = vunpack.c.l.b16 %v244
    %v1929 = vunpack.c.l.b16 %v245
    %v1930 = vunpack.c.l.b16 %v246
    %v1931 = vunpack.c.l.b16 %v247
    %v1932 = vunpack.c.l.b16 %v248
    %v1933 = vunpack.c.l.b16 %v249
    %v1934 = vunpack.c.l.b16 %v250
    %v1935 = vunpack.c.l.b16 %v251
    %v1936 = vunpack.c.l.b16 %v252
    %v1937 = vunpack.c.l.b16 %v253
    %v1938 = vunpack.c.l.b16 %v254
    %v1939 = vunpack.c.l.b16 %v255
    %v1940 = vunpack.c.l.b16 %v256
    %v1941 = vunpack.c.l.b16 %v257
    %v1942 = vunpack.c.l.b16 %v258
    %v1943 = vunpack.c.l.b16 %v259
    %v1944 = vunpack.c.l.b16 %v260
    %v1945 = vunpack.c.l.b16 %v261
    %v1946 = vunpack.c.l.b16 %v262
    %v1947 = vunpack.c.l.b16 %v263
    %v1948 = vunpack.c.l.b16 %v264
    %v1949 = vunpack.c.l.b16 %v265
    %v1950 = vunpack.c.l.b16 %v266
    %v1951 = vunpack.c.l.b16 %v267
    %v1952 = vunpack.c.l.b16 %v268
    %v1953 = vunpack.c.l.b16 %v269
    %v1954 = vunpack.c.l.b16 %v270
    %v1955 = vunpack.c.l.b16 %v271
    %v1956 = vunpack.c.l.b16 %v272
    %v1957 = vunpack.c.l.b16 %v273
    %v1958 = vunpack.c.l.b16 %v274
    %v1959 = vunpack.c.l.b16 %v275
    %v1960 = vunpack.c.l.b16 %v276
    %v1961 = vunpack.c.l.b16 %v277
    %v1962 = vunpack.c.l.b16 %v278
    %v1963 = vunpack.c.l.b16 %v279
    %v1964 = vunpack.c.l.b16 %v280
    %v1965 = vunpack.c.l.b16 %v281
    %v1966 = vunpack.c.l.b16 %v282
    %v1967 = vunpack.c.l.b16 %v283
    %v1968 = vunpack.c.l.b16 %v284
    %v1969 = vunpack.c.l.b16 %v285
    %v1970 = vunpack.c.l.b16 %v286
    %v1971 = vunpack.c.l.b16 %v287
    %v1972 = vunpack.c.l.b16 %v288
    %v1973 = vunpack.c.l.b16 %v289
    %v1974 = vunpack.c.l.b16 %v290
    %v1975 = vunpack.c.l.b16 %v291
    %v1976 = vunpack.c.l.b16 %v292
    %v1977 = vunpack.c.l.b16 %v293
    %v1978 = vunpack.c.l.b16 %v294
    %v1979 = vunpack.c.l.b16 %v295
    %v1980 = vunpack.c.l.b16 %v296
    %v1981 = vunpack.c.l.b16 %v297
    %v1982 = vunpack.c.l.b16 %v298
    %v1983 = vunpack.c.l.b16 %v299
    %v1984 = vunpack.c.l.b16 %v300
    %v1985 = vunpack.c.l.b16 %v301
    %v1986 = vunpack.c.l.b16 %v302
    %v1987 = vunpack.c.l.b16 %v303
    %v1988 = vunpack.c.l.b16 %v304
    %v1989 = vunpack.c.l.b16 %v305
    %v1990 = vunpack.c.l.b16 %v306
    %v1991 = vunpack.c.l.b16 %v307
    %v1992 = vunpack.c.l.b16 %v308
    %v1993 = vunpack.c.l.b16 %v309
    %v1994 = vunpack.c.l.b16 %v310
    %v1995 = vunpack.c.l.b16 %v311
    %v1996 = vunpack.c.l.b16 %v312
    %v1997 = vunpack.c.l.b16 %v313
    %v1998 = vunpack.c.l.b16 %v314
    %v1999 = vunpack.c.l.b16 %v315
    %v2000 = vunpack.c.l.b16 %v316
    %v2001 = vunpack.c.l.b16 %v317
    %v2002 = vunpack.c.l.b16 %v318
    %v2003 = vunpack.c.l.b16 %v319
    %v2004 = vunpack.c.l.b16 %v320
    %v2005 = vunpack.c.l.b16 %v321
    %v2006 = vunpack.c.l.b16 %v322
    %v2007 = vunpack.c.l.b16 %v323
    %v2008 = vunpack.c.l.b16 %v324
    %v2009 = vunpack.c.l.b16 %v325
    %v2010 = vunpack.c.l.b16 %v326
    %v2011 = vunpack.c.l.b16 %v327
    %v2012 = vunpack.c.l.b16 %v328
    %v2013 = vunpack.c.l.b16 %v329
    %v2014 = vunpack.c.l.b16 %v330
    %v2015 = vunpack.c.l.b16 %v331
    %v2016 = vunpack.c.l.b16 %v332
    %v2017 = vunpack.c.l.b16 %v333
    %v2018 = vunpack.c.l.b16 %v334
    %v2019 = vunpack.c.l.b16 %v335
    %v2020 = vunpack.c.l.b16 %v336
    %v2021 = vunpack.c.l.b16 %v337
    %v2022 = vunpack.c.l.b16 %v338
    %v2023 = vunpack.c.l.b16 %v339
    %v2024 = vunpack.c.l.b16 %v340
    %v2025 = vunpack.c.l.b16 %v341
    %v2026 = vunpack.c.l.b16 %v342
    %v2027 = vunpack.c.l.b16 %v343
    %v2028 = vunpack.c.l.b16 %v344
    %v2029 = vunpack.c.l.b16 %v345
    %v2030 = vunpack.c.l.b16 %v346
    %v2031 = vunpack.c.l.b16 %v347
    %v2032 = vunpack.c.l.b16 %v348
    %v2033 = vunpack.c.l.b16 %v349
    %v2034 = vunpack.c.l.b16 %v350
    %v2035 = vunpack.c.l.b16 %v351
    %v2036 = vunpack.c.l.b16 %v352
    %v2037 = vunpack.c.l.b16 %v353
    %v2038 = vunpack.c.l.b16 %v354
    %v2039 = vunpack.c.l.b16 %v355
    %v2040 = vunpack.c.l.b16 %v356
    %v2041 = vunpack.c.l.b16 %v357
    %v2042 = vunpack.c.l.b16 %v358
    %v2043 = vunpack.c.l.b16 %v359
    %v2044 = vunpack.c.l.b16 %v360
    %v2045 = vunpack.c.l.b16 %v361
    %v2046 = vunpack.c.l.b16 %v362
    %v2047 = vunpack.c.l.b16 %v363
    %v2048 = vunpack.c.l.b16 %v364
    %v2049 = vunpack.c.l.b16 %v365
    %v2050 = vunpack.c.l.b16 %v366
    %v2051 = vunpack.c.l.b16 %v367
    %v2052 = vunpack.c.l.b16 %v368
    %v2053 = vunpack.c.l.b16 %v369
    %v2054 = vunpack.c.l.b16 %v370
    %v2055 = vunpack.c.l.b16 %v371
    %v2056 = vunpack.c.l.b16 %v372
    %v2057 = vunpack.c.l.b16 %v373
    %v2058 = vunpack.c.l.b16 %v374
    %v2059 = vunpack.c.l.b16 %v375
    %v2060 = vunpack.c.l.b16 %v376
    %v2061 = vunpack.c.l.b16 %v377
    %v2062 = vunpack.c.l.b16 %v378
    %v2063 = vunpack.c.l.b16 %v379
    %v2064 = vunpack.c.l.b16 %v380
    %v2065 = vunpack.c.l.b16 %v381
    %v2066 = vunpack.c.l.b16 %v382
    %v2067 = vunpack.c.l.b16 %v383
    %v2068 = vunpack.c.l.b16 %v384
    %v2069 = vunpack.c.l.b16 %v385
    %v2070 = vunpack.c.l.b16 %v386
    %v2071 = vunpack.c.l.b16 %v387
    %v2072 = vunpack.c.l.b16 %v388
    %v2073 = vunpack.c.l.b16 %v389
    %v2074 = vunpack.c.l.b16 %v390
    %v2075 = vunpack.c.l.b16 %v391
    %v2076 = vunpack.c.l.b16 %v392
    %v2077 = vunpack.c.l.b16 %v393
    %v2078 = vunpack.c.l.b16 %v394
    %v2079 = vunpack.c.l.b16 %v395
    %v2080 = vunpack.c.l.b16 %v396
    %v2081 = vunpack.c.l.b16 %v397
    %v2082 = vunpack.c.l.b16 %v398
    %v2083 = vunpack.c.l.b16 %v399
    %v2084 = vunpack.c.l.b16 %v400
    %v2085 = vunpack.c.l.b16 %v401
    %v2086 = vunpack.c.l.b16 %v402
    %v2087 = vunpack.c.l.b16 %v403
    %v2088 = vunpack.c.l.b16 %v404
    %v2089 = vunpack.c.l.b16 %v405
    %v2090 = vunpack.c.l.b16 %v406
    %v2091 = vunpack.c.l.b16 %v407
    %v2092 = vunpack.c.l.b16 %v408
    %v2093 = vunpack.c.l.b16 %v409
    %v2094 = vunpack.c.l.b16 %v410
    %v2095 = vunpack.c.l.b16 %v411
    %v2096 = vunpack.c.l.b16 %v412
    %v2097 = vunpack.c.l.b16 %v413
    %v2098 = vunpack.c.l.b16 %v414
    %v2099 = vunpack.c.l.b16 %v415
    %v2100 = vunpack.c.l.b16 %v416
    %v2101 = vunpack.c.l.b16 %v417
    %v2102 = vunpack.c.l.b16 %v418
    %v2103 = vunpack.c.l.b16 %v419
    %v2104 = vunpack.c.l.b16 %v420
    %v2105 = vunpack.c.l.b16 %v421
    %v2106 = vunpack.c.l.b16 %v422
    %v2107 = vunpack.c.l.b16 %v423
    %v2108 = vunpack.c.l.b16 %v424
    %v2109 = vunpack.c.l.b16 %v425
    %v2110 = vunpack.c.l.b16 %v426
    %v2111 = vunpack.c.l.b16 %v427
    %v2112 = vunpack.c.l.b16 %v428
    %v2113 = vunpack.c.l.b16 %v429
    %v2114 = vunpack.c.l.b16 %v430
    %v2115 = vunpack.c.l.b16 %v431
    %v2116 = vunpack.c.l.b16 %v432
    %v2117 = vunpack.c.l.b16 %v433
    %v2118 = vunpack.c.l.b16 %v434
    %v2119 = vunpack.c.l.b16 %v435
    %v2120 = vunpack.c.l.b16 %v436
    %v2121 = vunpack.c.l.b16 %v437
    %v2122 = vunpack.c.l.b16 %v438
    %v2123 = vunpack.c.l.b16 %v439
    %v2124 = vunpack.c.l.b16 %v440
    %v2125 = vunpack.c.l.b16 %v441
    %v2126 = vunpack.c.l.b16 %v442
    %v2127 = vunpack.c.l.b16 %v443
    %v2128 = vunpack.c.l.b16 %v444
    %v2129 = vunpack.c.l.b16 %v445
    %v2130 = vunpack.c.l.b16 %v446
    %v2131 = vunpack.c.l.b16 %v447
    %v2132 = vunpack.c.l.b16 %v448
    %v2133 = vunpack.c.l.b16 %v449
    %v2134 = vunpack.c.l.b16 %v450
    %v2135 = vunpack.c.l.b16 %v451
    %v2136 = vunpack.c.l.b16 %v452
    %v2137 = vunpack.c.l.b16 %v453
    %v2138 = vunpack.c.l.b16 %v454
    %v2139 = vunpack.c.l.b16 %v455
    %v2140 = vunpack.c.l.b16 %v456
    %v2141 = vunpack.c.l.b16 %v457
    %v2142 = vunpack.c.l.b16 %v458
    %v2143 = vunpack.c.l.b16 %v459
    %v2144 = vunpack.c.l.b16 %v460
    %v2145 = vunpack.c.l.b16 %v461
    %v2146 = vunpack.c.l.b16 %v462
    %v2147 = vunpack.c.l.b16 %v463
    %v2148 = vunpack.c.l.b16 %v464
    %v2149 = vunpack.c.l.b16 %v465
    %v2150 = vunpack.c.l.b16 %v466
    %v2151 = vunpack.c.l.b16 %v467
    %v2152 = vunpack.c.l.b16 %v468
    %v2153 = vunpack.c.l.b16 %v469
    %v2154 = vunpack.c.l.b16 %v470
    %v2155 = vunpack.c.l.b16 %v471
    %v2156 = vunpack.c.l.b16 %v472
    %v2157 = vunpack.c.l.b16 %v473
    %v2158 = vunpack.c.l.b16 %v474
    %v2159 = vunpack.c.l.b16 %v475
    %v2160 = vunpack.c.l.b16 %v476
    %v2161 = vunpack.c.l.b16 %v477
    %v2162 = vunpack.c.l.b16 %v478
    %v2163 = vunpack.c.l.b16 %v479
    %v2164 = vunpack.c.l.b16 %v480
    %v2165 = vunpack.c.l.b16 %v481
    %v2166 = vunpack.c.l.b16 %v482
    %v2167 = vunpack.c.l.b16 %v483
    %v2168 = vunpack.c.l.b16 %v484
    %v2169 = vunpack.c.l.b16 %v485
    %v2170 = vunpack.c.l.b16 %v486
    %v2171 = vunpack.c.l.b16 %v487
    %v2172 = vunpack.c.l.b16 %v488
    %v2173 = vunpack.c.l.b16 %v489
    %v2174 = vunpack.c.l.b16 %v490
    %v2175 = vunpack.c.l.b16 %v491
    %v2176 = vunpack.c.l.b16 %v492
    %v2177 = vunpack.c.l.b16 %v493
    %v2178 = vunpack.c.l.b16 %v494
    %v2179 = vunpack.c.l.b16 %v495
    %v2180 = vunpack.c.l.b16 %v496
    %v2181 = vunpack.c.l.b16 %v497
    %v2182 = vunpack.c.l.b16 %v498
    %v2183 = vunpack.c.l.b16 %v499
    %v2184 = vunpack.c.l.b16 %v500
    %v2185 = vunpack.c.l.b16 %v501
    %v2186 = vunpack.c.l.b16 %v502
    %v2187 = vunpack.c.l.b16 %v503
    %v2188 = vunpack.c.l.b16 %v504
    %v2189 = vunpack.c.l.b16 %v505
    %v2190 = vunpack.c.l.b16 %v506
    %v2191 = vunpack.c.l.b16 %v507
    %v2192 = vunpack.c.l.b16 %v508
    %v2193 = vunpack.c.l.b16 %v509
    %v2194 = vunpack.c.l.b16 %v510
    %v2195 = vunpack.c.l.b16 %v511
    %v2196 = vunpack.c.l.b16 %v512
    %v2197 = vunpack.c.l.b16 %v513
    %v2198 = vunpack.c.l.b16 %v514
    %v2199 = vunpack.c.l.b16 %v515
    %v2200 = vunpack.c.l.b16 %v516
    %v2201 = vunpack.c.l.b16 %v517
    %v2202 = vunpack.c.l.b16 %v518
    %v2203 = vunpack.c.l.b16 %v519
    %v2204 = vunpack.c.l.b16 %v520
    %v2205 = vunpack.c.l.b16 %v521
    %v2206 = vunpack.c.l.b16 %v522
    %v2207 = vunpack.c.l.b16 %v523
    %v2208 = vunpack.c.l.b16 %v524
    %v2209 = vunpack.c.l.b16 %v525
    %v2210 = vunpack.c.l.b16 %v526
    %v2211 = vunpack.c.l.b16 %v527
    %v2212 = vunpack.c.l.b16 %v528
    %v2213 = vunpack.c.l.b16 %v529
    %v2214 = vunpack.c.l.b16 %v530
    %v2215 = vunpack.c.l.b16 %v531
    %v2216 = vunpack.c.l.b16 %v532
    %v2217 = vunpack.c.l.b16 %v533
    %v2218 = vunpack.c.l.b16 %v534
    %v2219 = vunpack.c.l.b16 %v535
    %v2220 = vunpack.c.l.b16 %v536
    %v2221 = vunpack.c.l.b16 %v537
    %v2222 = vunpack.c.l.b16 %v538
    %v2223 = vunpack.c.l.b16 %v539
    %v2224 = vunpack.c.l.b16 %v540
    %v2225 = vunpack.c.l.b16 %v541
    %v2226 = vunpack.c.l.b16 %v542
    %v2227 = vunpack.c.l.b16 %v543
    %v2228 = vunpack.c.l.b16 %v544
    %v2229 = vunpack.c.l.b16 %v545
    %v2230 = vunpack.c.l.b16 %v546
    %v2231 = vunpack.c.l.b16 %v547
    %v2232 = vunpack.c.l.b16 %v548
    %v2233 = vunpack.c.l.b16 %v549
    %v2234 = vunpack.c.l.b16 %v550
    %v2235 = vunpack.c.l.b16 %v551
    %v2236 = vunpack.c.l.b16 %v552
    %v2237 = vunpack.c.l.b16 %v553
    %v2238 = vunpack.c.l.b16 %v554
    %v2239 = vunpack.c.l.b16 %v555
    %v2240 = vunpack.c.l.b16 %v556
    %v2241 = vunpack.c.l.b16 %v557
    %v2242 = vunpack.c.l.b16 %v558
    %v2243 = vunpack.c.l.b16 %v559
    %v2244 = vunpack.c.l.b16 %v560
    %v2245 = vunpack.c.l.b16 %v561
    %v2246 = vunpack.c.l.b16 %v562
    %v2247 = vunpack.c.l.b16 %v563
    %v2248 = vunpack.c.l.b16 %v564
    %v2249 = vunpack.c.l.b16 %v565
    %v2250 = vunpack.c.l.b16 %v566
    %v2251 = vunpack.c.l.b16 %v567
    %v2252 = vunpack.c.l.b16 %v568
    %v2253 = vunpack.c.l.b16 %v569
    %v2254 = vunpack.c.l.b16 %v570
    %v2255 = vunpack.c.l.b16 %v571
    %v2256 = vunpack.c.l.b16 %v572
    %v2257 = vunpack.c.l.b16 %v573
    %v2258 = vunpack.c.l.b16 %v574
    %v2259 = vunpack.c.l.b16 %v575
    %v2260 = vunpack.c.l.b16 %v576
    %v2261 = vunpack.c.l.b16 %v577
    %v2262 = vunpack.c.l.b16 %v578
    %v2263 = vunpack.c.l.b16 %v579
    %v2264 = vunpack.c.l.b16 %v580
    %v2265 = vunpack.c.l.b16 %v581
    %v2266 = vunpack.c.l.b16 %v582
    %v2267 = vunpack.c.l.b16 %v583
    %v2268 = vunpack.c.l.b16 %v584
    %v2269 = vunpack.c.l.b16 %v585
    %v2270 = vunpack.c.l.b16 %v586
    %v2271 = vunpack.c.l.b16 %v587
    %v2272 = vunpack.c.l.b16 %v588
    %v2273 = vunpack.c.l.b16 %v589
    %v2274 = vunpack.c.l.b16 %v590
    %v2275 = vunpack.c.l.b16 %v591
    %v2276 = vunpack.c.l.b16 %v592
    %v2277 = vunpack.c.l.b16 %v593
    %v2278 = vunpack.c.l.b16 %v594
    %v2279 = vunpack.c.l.b16 %v595
    %v2280 = vunpack.c.l.b16 %v596
    %v2281 = vunpack.c.l.b16 %v597
    %v2282 = vunpack.c.l.b16 %v598
    %v2283 = vunpack.c.l.b16 %v599
    %v2284 = vunpack.c.l.b16 %v600
    %v2285 = vunpack.c.l.b16 %v601
    %v2286 = vunpack.c.l.b16 %v602
    %v2287 = vunpack.c.l.b16 %v603
    %v2288 = vunpack.c.l.b16 %v604
    %v2289 = vunpack.c.l.b16 %v605
    %v2290 = vunpack.c.l.b16 %v606
    %v2291 = vunpack.c.l.b16 %v607
    %v2292 = vunpack.c.l.b16 %v608
    %v2293 = vunpack.c.l.b16 %v609
    %v2294 = vunpack.c.l.b16 %v610
    %v2295 = vunpack.c.l.b16 %v611
    %v2296 = vunpack.c.l.b16 %v612
    %v2297 = vunpack.c.l.b16 %v613
    %v2298 = vunpack.c.l.b16 %v614
    %v2299 = vunpack.c.l.b16 %v615
    %v2300 = vunpack.c.l.b16 %v616
    %v2301 = vunpack.c.l.b16 %v617
    %v2302 = vunpack.c.l.b16 %v618
    %v2303 = vunpack.c.l.b16 %v619
    %v2304 = vunpack.c.l.b16 %v620
    %v2305 = vunpack.c.l.b16 %v621
    %v2306 = vunpack.c.l.b16 %v622
    %v2307 = vunpack.c.l.b16 %v623
    %v2308 = vunpack.c.l.b16 %v624
    %v2309 = vunpack.c.l.b16 %v625
    %v2310 = vunpack.c.l.b16 %v626
    %v2311 = vunpack.c.l.b16 %v627
    %v2312 = vunpack.c.l.b16 %v628
    %v2313 = vunpack.c.l.b16 %v629
    %v2314 = vunpack.c.l.b16 %v630
    %v2315 = vunpack.c.l.b16 %v631
    %v2316 = vunpack.c.l.b16 %v632
    %v2317 = vunpack.c.l.b16 %v633
    %v2318 = vunpack.c.l.b16 %v634
    %v2319 = vunpack.c.l.b16 %v635
    %v2320 = vunpack.c.l.b16 %v636
    %v2321 = vunpack.c.l.b16 %v637
    %v2322 = vunpack.c.l.b16 %v638
    %v2323 = vunpack.c.l.b16 %v639
    %v2324 = vunpack.c.l.b16 %v640
    %v2325 = vunpack.c.l.b16 %v641
    %v2326 = vunpack.c.l.b16 %v642
    %v2327 = vunpack.c.l.b16 %v643
    %v2328 = vunpack.c.l.b16 %v644
    %v2329 = vunpack.c.l.b16 %v645
    %v2330 = vunpack.c.l.b16 %v646
    %v2331 = vunpack.c.l.b16 %v647
    %v2332 = vunpack.c.l.b16 %v648
    %v2333 = vunpack.c.l.b16 %v649
    %v2334 = vunpack.c.l.b16 %v650
    %v2335 = vunpack.c.l.b16 %v651
    %v2336 = vunpack.c.l.b16 %v652
    %v2337 = vunpack.c.l.b16 %v653
    %v2338 = vunpack.c.l.b16 %v654
    %v2339 = vunpack.c.l.b16 %v655
    %v2340 = vunpack.c.l.b16 %v656
    %v2341 = vunpack.c.l.b16 %v657
    %v2342 = vunpack.c.l.b16 %v658
    %v2343 = vunpack.c.l.b16 %v659
    %v2344 = vunpack.c.l.b16 %v660
    %v2345 = vunpack.c.l.b16 %v661
    %v2346 = vunpack.c.l.b16 %v662
    %v2347 = vunpack.c.l.b16 %v663
    %v2348 = vunpack.c.l.b16 %v664
    %v2349 = vunpack.c.l.b16 %v665
    %v2350 = vunpack.c.l.b16 %v666
    %v2351 = vunpack.c.l.b16 %v667
    %v2352 = vunpack.c.l.b16 %v668
    %v2353 = vunpack.c.l.b16 %v669
    %v2354 = vunpack.c.l.b16 %v670
    %v2355 = vunpack.c.l.b16 %v671
    %v2356 = vunpack.c.l.b16 %v672
    %v2357 = vunpack.c.l.b16 %v673
    %v2358 = vunpack.c.l.b16 %v674
    %v2359 = vunpack.c.l.b16 %v675
    %v2360 = vunpack.c.l.b16 %v676
    %v2361 = vunpack.c.l.b16 %v677
    %v2362 = vunpack.c.l.b16 %v678
    %v2363 = vunpack.c.l.b16 %v679
    %v2364 = vunpack.c.l.b16 %v680
    %v2365 = vunpack.c.l.b16 %v681
    %v2366 = vunpack.c.l.b16 %v682
    %v2367 = vunpack.c.l.b16 %v683
    %v2368 = vunpack.c.l.b16 %v684
    %v2369 = vunpack.c.l.b16 %v685
    %v2370 = vunpack.c.l.b16 %v686
    %v2371 = vunpack.c.l.b16 %v687
    %v2372 = vunpack.c.l.b16 %v688
    %v2373 = vunpack.c.l.b16 %v689
    %v2374 = vunpack.c.l.b16 %v690
    %v2375 = vunpack.c.l.b16 %v691
    %v2376 = vunpack.c.l.b16 %v692
    %v2377 = vunpack.c.l.b16 %v693
    %v2378 = vunpack.c.l.b16 %v694
    %v2379 = vunpack.c.l.b16 %v695
    %v2380 = vunpack.c.l.b16 %v696
    %v2381 = vunpack.c.l.b16 %v697
    %v2382 = vunpack.c.l.b16 %v698
    %v2383 = vunpack.c.l.b16 %v699
    %v2384 = vunpack.c.l.b16 %v700
    %v2385 = vunpack.c.l.b16 %v701
    %v2386 = vunpack.c.l.b16 %v702
    %v2387 = vunpack.c.l.b16 %v703
    %v2388 = vunpack.c.l.b16 %v704
    %v2389 = vunpack.c.l.b16 %v705
    %v2390 = vunpack.c.l.b16 %v706
    %v2391 = vunpack.c.l.b16 %v707
    %v2392 = vunpack.c.l.b16 %v708
    %v2393 = vunpack.c.l.b16 %v709
    %v2394 = vunpack.c.l.b16 %v710
    %v2395 = vunpack.c.l.b16 %v711
    %v2396 = vunpack.c.l.b16 %v712
    %v2397 = vunpack.c.l.b16 %v713
    %v2398 = vunpack.c.l.b16 %v714
    %v2399 = vunpack.c.l.b16 %v715
    %v2400 = vunpack.c.l.b16 %v716
    %v2401 = vunpack.c.l.b16 %v717
    %v2402 = vunpack.c.l.b16 %v718
    %v2403 = vunpack.c.l.b16 %v719
    %v2404 = vunpack.c.l.b16 %v720
    %v2405 = vunpack.c.l.b16 %v721
    %v2406 = vunpack.c.l.b16 %v722
    %v2407 = vunpack.c.l.b16 %v723
    %v2408 = vunpack.c.l.b16 %v724
    %v2409 = vunpack.c.l.b16 %v725
    %v2410 = vunpack.c.l.b16 %v726
    %v2411 = vunpack.c.l.b16 %v727
    %v2412 = vunpack.c.l.b16 %v728
    %v2413 = vunpack.c.l.b16 %v729
    %v2414 = vunpack.c.l.b16 %v730
    %v2415 = vunpack.c.l.b16 %v731
    %v2416 = vunpack.c.l.b16 %v732
    %v2417 = vunpack.c.l.b16 %v733
    %v2418 = vunpack.c.l.b16 %v734
    %v2419 = vunpack.c.l.b16 %v735
    %v2420 = vunpack.c.l.b16 %v736
    %v2421 = vunpack.c.l.b16 %v737
    %v2422 = vunpack.c.l.b16 %v738
    %v2423 = vunpack.c.l.b16 %v739
    %v2424 = vunpack.c.l.b16 %v740
    %v2425 = vunpack.c.l.b16 %v741
    %v2426 = vunpack.c.l.b16 %v742
    %v2427 = vunpack.c.l.b16 %v743
    %v2428 = vunpack.c.l.b16 %v744
    %v2429 = vunpack.c.l.b16 %v745
    %v2430 = vunpack.c.l.b16 %v746
    %v2431 = vunpack.c.l.b16 %v747
    %v2432 = vunpack.c.l.b16 %v748
    %v2433 = vunpack.c.l.b16 %v749
    %v2434 = vunpack.c.l.b16 %v750
    %v2435 = vunpack.c.l.b16 %v751
    %v2436 = vunpack.c.l.b16 %v752
    %v2437 = vunpack.c.l.b16 %v753
    %v2438 = vunpack.c.l.b16 %v754
    %v2439 = vunpack.c.l.b16 %v755
    %v2440 = vunpack.c.l.b16 %v756
    %v2441 = vunpack.c.l.b16 %v757
    %v2442 = vunpack.c.l.b16 %v758
    %v2443 = vunpack.c.l.b16 %v759
    %v2444 = vunpack.c.l.b16 %v760
    %v2445 = vunpack.c.l.b16 %v761
    %v2446 = vunpack.c.l.b16 %v762
    %v2447 = vunpack.c.l.b16 %v763
    %v2448 = vunpack.c.l.b16 %v764
    %v2449 = vunpack.c.l.b16 %v765
    %v2450 = vunpack.c.l.b16 %v766
    %v2451 = vunpack.c.l.b16 %v767
    %v2452 = vunpack.c.l.b16 %v768
    %v2453 = vunpack.c.l.b16 %v769
    %v2454 = vunpack.c.l.b16 %v770
    %v2455 = vunpack.c.l.b16 %v771
    %v2456 = vunpack.c.l.b16 %v772
    %v2457 = vunpack.c.l.b16 %v773
    %v2458 = vunpack.c.l.b16 %v774
    %v2459 = vunpack.c.l.b16 %v775
    %v2460 = vunpack.c.l.b16 %v776
    %v2461 = vunpack.c.l.b16 %v777
    %v2462 = vunpack.c.l.b16 %v778
    %v2463 = vunpack.c.l.b16 %v779
    %v2464 = vunpack.c.l.b16 %v780
    %v2465 = vunpack.c.l.b16 %v781
    %v2466 = vunpack.c.l.b16 %v782
    %v2467 = vunpack.c.l.b16 %v783
    %v2468 = vunpack.c.l.b16 %v784
    %v2469 = vunpack.c.l.b16 %v785
    %v2470 = vunpack.c.l.b16 %v786
    %v2471 = vunpack.c.l.b16 %v787
    %v2472 = vunpack.c.l.b16 %v788
    %v2473 = vunpack.c.l.b16 %v789
    %v2474 = vunpack.c.l.b16 %v790
    %v2475 = vunpack.c.l.b16 %v791
    %v2476 = vunpack.c.l.b16 %v792
    %v2477 = vunpack.c.l.b16 %v793
    %v2478 = vunpack.c.l.b16 %v794
    %v2479 = vunpack.c.l.b16 %v795
    %v2480 = vunpack.c.l.b16 %v796
    %v2481 = vunpack.c.l.b16 %v797
    %v2482 = vunpack.c.l.b16 %v798
    %v2483 = vunpack.c.l.b16 %v799
    %v2484 = vunpack.c.l.b16 %v800
    %v2485 = vunpack.c.l.b16 %v801
    %v2486 = vunpack.c.l.b16 %v802
    %v2487 = vunpack.c.l.b16 %v803
    %v2488 = vunpack.c.l.b16 %v804
    %v2489 = vunpack.c.l.b16 %v805
    %v2490 = vpack.c.b16 %v1707, %v1706
    %v2491 = vpack.c.b16 %v1709, %v1708
    %v2492 = vpack.c.b16 %v1711, %v1710
    %v2493 = vpack.c.b16 %v1713, %v1712
    %v2494 = vpack.c.b16 %v1715, %v1714
    %v2495 = vpack.c.b16 %v1717, %v1716
    %v2496 = vpack.c.b16 %v1719, %v1718
    %v2497 = vpack.c.b16 %v1721, %v1720
    %v2498 = vpack.c.b16 %v1723, %v1722
    %v2499 = vpack.c.b16 %v1725, %v1724
    %v2500 = vpack.c.b16 %v1727, %v1726
    %v2501 = vpack.c.b16 %v1729, %v1728
    %v2502 = vpack.c.b16 %v1731, %v1730
    %v2503 = vpack.c.b16 %v1733, %v1732
    %v2504 = vpack.c.b16 %v1735, %v1734
    %v2505 = vpack.c.b16 %v1737, %v1736
    %v2506 = vpack.c.b16 %v1739, %v1738
    %v2507 = vpack.c.b16 %v1741, %v1740
    %v2508 = vpack.c.b16 %v1743, %v1742
    %v2509 = vpack.c.b16 %v1745, %v1744
    %v2510 = vpack.c.b16 %v1747, %v1746
    %v2511 = vpack.c.b16 %v1749, %v1748
    %v2512 = vpack.c.b16 %v1751, %v1750
    %v2513 = vpack.c.b16 %v1753, %v1752
    %v2514 = vpack.c.b16 %v1755, %v1754
    %v2515 = vpack.c.b16 %v1757, %v1756
    %v2516 = vpack.c.b16 %v1759, %v1758
    %v2517 = vpack.c.b16 %v1761, %v1760
    %v2518 = vpack.c.b16 %v1763, %v1762
    %v2519 = vpack.c.b16 %v1765, %v1764
    %v2520 = vpack.c.b16 %v1767, %v1766
    %v2521 = vpack.c.b16 %v1769, %v1768
    %v2522 = vpack.c.b16 %v1771, %v1770
    %v2523 = vpack.c.b16 %v1773, %v1772
    %v2524 = vpack.c.b16 %v1775, %v1774
    %v2525 = vpack.c.b16 %v1777, %v1776
    %v2526 = vpack.c.b16 %v1779, %v1778
    %v2527 = vpack.c.b16 %v1781, %v1780
    %v2528 = vpack.c.b16 %v1783, %v1782
    %v2529 = vpack.c.b16 %v1785, %v1784
    %v2530 = vpack.c.b16 %v1787, %v1786
    %v2531 = vpack.c.b16 %v1789, %v1788
    %v2532 = vpack.c.b16 %v1791, %v1790
    %v2533 = vpack.c.b16 %v1793, %v1792
    %v2534 = vpack.c.b16 %v1795, %v1794
    %v2535 = vpack.c.b16 %v1797, %v1796
    %v2536 = vpack.c.b16 %v1799, %v1798
    %v2537 = vpack.c.b16 %v1801, %v1800
    %v2538 = vpack.c.b16 %v1803, %v1802
    %v2539 = vpack.c.b16 %v1805, %v1804
    %v2540 = vpack.c.b16 %v1807, %v1806
    %v2541 = vpack.c.b16 %v1809, %v1808
    %v2542 = vpack.c.b16 %v1811, %v1810
    %v2543 = vpack.c.b16 %v1813, %v1812
    %v2544 = vpack.c.b16 %v1815, %v1814
    %v2545 = vpack.c.b16 %v1817, %v1816
    %v2546 = vpack.c.b16 %v1819, %v1818
    %v2547 = vpack.c.b16 %v1821, %v1820
    %v2548 = vpack.c.b16 %v1823, %v1822
    %v2549 = vpack.c.b16 %v1825, %v1824
    %v2550 = vpack.c.b16 %v1827, %v1826
    %v2551 = vpack.c.b16 %v1829, %v1828
    %v2552 = vpack.c.b16 %v1831, %v1830
    %v2553 = vpack.c.b16 %v1833, %v1832
    %v2554 = vpack.c.b16 %v1835, %v1834
    %v2555 = vpack.c.b16 %v1837, %v1836
    %v2556 = vpack.c.b16 %v1839, %v1838
    %v2557 = vpack.c.b16 %v1841, %v1840
    %v2558 = vpack.c.b16 %v1843, %v1842
    %v2559 = vpack.c.b16 %v1845, %v1844
    %v2560 = vpack.c.b16 %v1847, %v1846
    %v2561 = vpack.c.b16 %v1849, %v1848
    %v2562 = vpack.c.b16 %v1851, %v1850
    %v2563 = vpack.c.b16 %v1853, %v1852
    %v2564 = vpack.c.b16 %v1855, %v1854
    %v2565 = vpack.c.b16 %v1857, %v1856
    %v2566 = vpack.c.b16 %v1859, %v1858
    %v2567 = vpack.c.b16 %v1861, %v1860
    %v2568 = vpack.c.b16 %v1863, %v1862
    %v2569 = vpack.c.b16 %v1865, %v1864
    %v2570 = vpack.c.b16 %v1867, %v1866
    %v2571 = vpack.c.b16 %v1869, %v1868
    %v2572 = vpack.c.b16 %v1871, %v1870
    %v2573 = vpack.c.b16 %v1873, %v1872
    %v2574 = vpack.c.b16 %v1875, %v1874
    %v2575 = vpack.c.b16 %v1877, %v1876
    %v2576 = vpack.c.b16 %v1879, %v1878
    %v2577 = vpack.c.b16 %v1881, %v1880
    %v2578 = vpack.c.b16 %v1883, %v1882
    %v2579 = vpack.c.b16 %v1885, %v1884
    %v2580 = vpack.c.b16 %v1887, %v1886
    %v2581 = vpack.c.b16 %v1889, %v1888
    %v2582 = vpack.c.b16 %v1891, %v1890
    %v2583 = vpack.c.b16 %v1893, %v1892
    %v2584 = vpack.c.b16 %v1895, %v1894
    %v2585 = vpack.c.b16 %v1897, %v1896
    %v2586 = vpack.c.b16 %v1899, %v1898
    %v2587 = vpack.c.b16 %v1901, %v1900
    %v2588 = vpack.c.b16 %v1903, %v1902
    %v2589 = vpack.c.b16 %v1905, %v1904
    %v2590 = vpack.c.b16 %v1907, %v1906
    %v2591 = vpack.c.b16 %v1909, %v1908
    %v2592 = vpack.c.b16 %v1911, %v1910
    %v2593 = vpack.c.b16 %v1913, %v1912
    %v2594 = vpack.c.b16 %v1915, %v1914
    %v2595 = vpack.c.b16 %v1917, %v1916
    %v2596 = vpack.c.b16 %v1919, %v1918
    %v2597 = vpack.c.b16 %v1921, %v1920
    %v2598 = vpack.c.b16 %v1923, %v1922
    %v2599 = vpack.c.b16 %v1925, %v1924
    %v2600 = vpack.c.b16 %v1927, %v1926
    %v2601 = vpack.c.b16 %v1929, %v1928
    %v2602 = vpack.c.b16 %v1931, %v1930
    %v2603 = vpack.c.b16 %v1933, %v1932
    %v2604 = vpack.c.b16 %v1935, %v1934
    %v2605 = vpack.c.b16 %v1937, %v1936
    %v2606 = vpack.c.b16 %v1939, %v1938
    %v2607 = vpack.c.b16 %v1941, %v1940
    %v2608 = vpack.c.b16 %v1943, %v1942
    %v2609 = vpack.c.b16 %v1945, %v1944
    %v2610 = vpack.c.b16 %v1947, %v1946
    %v2611 = vpack.c.b16 %v1949, %v1948
    %v2612 = vpack.c.b16 %v1951, %v1950
    %v2613 = vpack.c.b16 %v1953, %v1952
    %v2614 = vpack.c.b16 %v1955, %v1954
    %v2615 = vpack.c.b16 %v1957, %v1956
    %v2616 = vpack.c.b16 %v1959, %v1958
    %v2617 = vpack.c.b16 %v1961, %v1960
    %v2618 = vpack.c.b16 %v1963, %v1962
    %v2619 = vpack.c.b16 %v1965, %v1964
    %v2620 = vpack.c.b16 %v1967, %v1966
    %v2621 = vpack.c.b16 %v1969, %v1968
    %v2622 = vpack.c.b16 %v1971, %v1970
    %v2623 = vpack.c.b16 %v1973, %v1972
    %v2624 = vpack.c.b16 %v1975, %v1974
    %v2625 = vpack.c.b16 %v1977, %v1976
    %v2626 = vpack.c.b16 %v1979, %v1978
    %v2627 = vpack.c.b16 %v1981, %v1980
    %v2628 = vpack.c.b16 %v1983, %v1982
    %v2629 = vpack.c.b16 %v1985, %v1984
    %v2630 = vpack.c.b16 %v1987, %v1986
    %v2631 = vpack.c.b16 %v1989, %v1988
    %v2632 = vpack.c.b16 %v1991, %v1990
    %v2633 = vpack.c.b16 %v1993, %v1992
    %v2634 = vpack.c.b16 %v1995, %v1994
    %v2635 = vpack.c.b16 %v1997, %v1996
    %v2636 = vpack.c.b16 %v1999, %v1998
    %v2637 = vpack.c.b16 %v2001, %v2000
    %v2638 = vpack.c.b16 %v2003, %v2002
    %v2639 = vpack.c.b16 %v2005, %v2004
    %v2640 = vpack.c.b16 %v2007, %v2006
    %v2641 = vpack.c.b16 %v2009, %v2008
    %v2642 = vpack.c.b16 %v2011, %v2010
    %v2643 = vpack.c.b16 %v2013, %v2012
    %v2644 = vpack.c.b16 %v2015, %v2014
    %v2645 = vpack.c.b16 %v2017, %v2016
    %v2646 = vpack.c.b16 %v2019, %v2018
    %v2647 = vpack.c.b16 %v2021, %v2020
    %v2648 = vpack.c.b16 %v2023, %v2022
    %v2649 = vpack.c.b16 %v2025, %v2024
    %v2650 = vpack.c.b16 %v2027, %v2026
    %v2651 = vpack.c.b16 %v2029, %v2028
    %v2652 = vpack.c.b16 %v2031, %v2030
    %v2653 = vpack.c.b16 %v2033, %v2032
    %v2654 = vpack.c.b16 %v2035, %v2034
    %v2655 = vpack.c.b16 %v2037, %v2036
    %v2656 = vpack.c.b16 %v2039, %v2038
    %v2657 = vpack.c.b16 %v2041, %v2040
    %v2658 = vpack.c.b16 %v2043, %v2042
    %v2659 = vpack.c.b16 %v2045, %v2044
    %v2660 = vpack.c.b16 %v2047, %v2046
    %v2661 = vpack.c.b16 %v2049, %v2048
    %v2662 = vpack.c.b16 %v2051, %v2050
    %v2663 = vpack.c.b16 %v2053, %v2052
    %v2664 = vpack.c.b16 %v2055, %v2054
    %v2665 = vpack.c.b16 %v2057, %v2056
    %v2666 = vpack.c.b16 %v2059, %v2058
    %v2667 = vpack.c.b16 %v2061, %v2060
    %v2668 = vpack.c.b16 %v2063, %v2062
    %v2669 = vpack.c.b16 %v2065, %v2064
    %v2670 = vpack.c.b16 %v2067, %v2066
    %v2671 = vpack.c.b16 %v2069, %v2068
    %v2672 = vpack.c.b16 %v2071, %v2070
    %v2673 = vpack.c.b16 %v2073, %v2072
    %v2674 = vpack.c.b16 %v2075, %v2074
    %v2675 = vpack.c.b16 %v2077, %v2076
    %v2676 = vpack.c.b16 %v2079, %v2078
    %v2677 = vpack.c.b16 %v2081, %v2080
    %v2678 = vpack.c.b16 %v2083, %v2082
    %v2679 = vpack.c.b16 %v2085, %v2084
    %v2680 = vpack.c.b16 %v2087, %v2086
    %v2681 = vpack.c.b16 %v2089, %v2088
    %v2682 = vpack.c.b16 %v2091, %v2090
    %v2683 = vpack.c.b16 %v2093, %v2092
    %v2684 = vpack.c.b16 %v2095, %v2094
    %v2685 = vpack.c.b16 %v2097, %v2096
    %v2686 = vpack.c.b16 %v2099, %v2098
    %v2687 = vpack.c.b16 %v2101, %v2100
    %v2688 = vpack.c.b16 %v2103, %v2102
    %v2689 = vpack.c.b16 %v2105, %v2104
    %v2690 = vpack.c.b16 %v2107, %v2106
    %v2691 = vpack.c.b16 %v2109, %v2108
    %v2692 = vpack.c.b16 %v2111, %v2110
    %v2693 = vpack.c.b16 %v2113, %v2112
    %v2694 = vpack.c.b16 %v2115, %v2114
    %v2695 = vpack.c.b16 %v2117, %v2116
    %v2696 = vpack.c.b16 %v2119, %v2118
    %v2697 = vpack.c.b16 %v2121, %v2120
    %v2698 = vpack.c.b16 %v2123, %v2122
    %v2699 = vpack.c.b16 %v2125, %v2124
    %v2700 = vpack.c.b16 %v2127, %v2126
    %v2701 = vpack.c.b16 %v2129, %v2128
    %v2702 = vpack.c.b16 %v2131, %v2130
    %v2703 = vpack.c.b16 %v2133, %v2132
    %v2704 = vpack.c.b16 %v2135, %v2134
    %v2705 = vpack.c.b16 %v2137, %v2136
    %v2706 = vpack.c.b16 %v2139, %v2138
    %v2707 = vpack.c.b16 %v2141, %v2140
    %v2708 = vpack.c.b16 %v2143, %v2142
    %v2709 = vpack.c.b16 %v2145, %v2144
    %v2710 = vpack.c.b16 %v2147, %v2146
    %v2711 = vpack.c.b16 %v2149, %v2148
    %v2712 = vpack.c.b16 %v2151, %v2150
    %v2713 = vpack.c.b16 %v2153, %v2152
    %v2714 = vpack.c.b16 %v2155, %v2154
    %v2715 = vpack.c.b16 %v2157, %v2156
    %v2716 = vpack.c.b16 %v2159, %v2158
    %v2717 = vpack.c.b16 %v2161, %v2160
    %v2718 = vpack.c.b16 %v2163, %v2162
    %v2719 = vpack.c.b16 %v2165, %v2164
    %v2720 = vpack.c.b16 %v2167, %v2166
    %v2721 = vpack.c.b16 %v2169, %v2168
    %v2722 = vpack.c.b16 %v2171, %v2170
    %v2723 = vpack.c.b16 %v2173, %v2172
    %v2724 = vpack.c.b16 %v2175, %v2174
    %v2725 = vpack.c.b16 %v2177, %v2176
    %v2726 = vpack.c.b16 %v2179, %v2178
    %v2727 = vpack.c.b16 %v2181, %v2180
    %v2728 = vpack.c.b16 %v2183, %v2182
    %v2729 = vpack.c.b16 %v2185, %v2184
    %v2730 = vpack.c.b16 %v2187, %v2186
    %v2731 = vpack.c.b16 %v2189, %v2188
    %v2732 = vpack.c.b16 %v2191, %v2190
    %v2733 = vpack.c.b16 %v2193, %v2192
    %v2734 = vpack.c.b16 %v2195, %v2194
    %v2735 = vpack.c.b16 %v2197, %v2196
    %v2736 = vpack.c.b16 %v2199, %v2198
    %v2737 = vpack.c.b16 %v2201, %v2200
    %v2738 = vpack.c.b16 %v2203, %v2202
    %v2739 = vpack.c.b16 %v2205, %v2204
    %v2740 = vpack.c.b16 %v2207, %v2206
    %v2741 = vpack.c.b16 %v2209, %v2208
    %v2742 = vpack.c.b16 %v2211, %v2210
    %v2743 = vpack.c.b16 %v2213, %v2212
    %v2744 = vpack.c.b16 %v2215, %v2214
    %v2745 = vpack.c.b16 %v2217, %v2216
    %v2746 = vpack.c.b16 %v2219, %v2218
    %v2747 = vpack.c.b16 %v2221, %v2220
    %v2748 = vpack.c.b16 %v2223, %v2222
    %v2749 = vpack.c.b16 %v2225, %v2224
    %v2750 = vpack.c.b16 %v2227, %v2226
    %v2751 = vpack.c.b16 %v2229, %v2228
    %v2752 = vpack.c.b16 %v2231, %v2230
    %v2753 = vpack.c.b16 %v2233, %v2232
    %v2754 = vpack.c.b16 %v2235, %v2234
    %v2755 = vpack.c.b16 %v2237, %v2236
    %v2756 = vpack.c.b16 %v2239, %v2238
    %v2757 = vpack.c.b16 %v2241, %v2240
    %v2758 = vpack.c.b16 %v2243, %v2242
    %v2759 = vpack.c.b16 %v2245, %v2244
    %v2760 = vpack.c.b16 %v2247, %v2246
    %v2761 = vpack.c.b16 %v2249, %v2248
    %v2762 = vpack.c.b16 %v2251, %v2250
    %v2763 = vpack.c.b16 %v2253, %v2252
    %v2764 = vpack.c.b16 %v2255, %v2254
    %v2765 = vpack.c.b16 %v2257, %v2256
    %v2766 = vpack.c.b16 %v2259, %v2258
    %v2767 = vpack.c.b16 %v2261, %v2260
    %v2768 = vpack.c.b16 %v2263, %v2262
    %v2769 = vpack.c.b16 %v2265, %v2264
    %v2770 = vpack.c.b16 %v2267, %v2266
    %v2771 = vpack.c.b16 %v2269, %v2268
    %v2772 = vpack.c.b16 %v2271, %v2270
    %v2773 = vpack.c.b16 %v2273, %v2272
    %v2774 = vpack.c.b16 %v2275, %v2274
    %v2775 = vpack.c.b16 %v2277, %v2276
    %v2776 = vpack.c.b16 %v2279, %v2278
    %v2777 = vpack.c.b16 %v2281, %v2280
    %v2778 = vpack.c.b16 %v2283, %v2282
    %v2779 = vpack.c.b16 %v2285, %v2284
    %v2780 = vpack.c.b16 %v2287, %v2286
    %v2781 = vpack.c.b16 %v2289, %v2288
    %v2782 = vpack.c.b16 %v2291, %v2290
    %v2783 = vpack.c.b16 %v2293, %v2292
    %v2784 = vpack.c.b16 %v2295, %v2294
    %v2785 = vpack.c.b16 %v2297, %v2296
    %v2786 = vpack.c.b16 %v2299, %v2298
    %v2787 = vpack.c.b16 %v2301, %v2300
    %v2788 = vpack.c.b16 %v2303, %v2302
    %v2789 = vpack.c.b16 %v2305, %v2304
    %v2790 = vpack.c.b16 %v2307, %v2306
    %v2791 = vpack.c.b16 %v2309, %v2308
    %v2792 = vpack.c.b16 %v2311, %v2310
    %v2793 = vpack.c.b16 %v2313, %v2312
    %v2794 = vpack.c.b16 %v2315, %v2314
    %v2795 = vpack.c.b16 %v2317, %v2316
    %v2796 = vpack.c.b16 %v2319, %v2318
    %v2797 = vpack.c.b16 %v2321, %v2320
    %v2798 = vpack.c.b16 %v2323, %v2322
    %v2799 = vpack.c.b16 %v2325, %v2324
    %v2800 = vpack.c.b16 %v2327, %v2326
    %v2801 = vpack.c.b16 %v2329, %v2328
    %v2802 = vpack.c.b16 %v2331, %v2330
    %v2803 = vpack.c.b16 %v2333, %v2332
    %v2804 = vpack.c.b16 %v2335, %v2334
    %v2805 = vpack.c.b16 %v2337, %v2336
    %v2806 = vpack.c.b16 %v2339, %v2338
    %v2807 = vpack.c.b16 %v2341, %v2340
    %v2808 = vpack.c.b16 %v2343, %v2342
    %v2809 = vpack.c.b16 %v2345, %v2344
    %v2810 = vpack.c.b16 %v2347, %v2346
    %v2811 = vpack.c.b16 %v2349, %v2348
    %v2812 = vpack.c.b16 %v2351, %v2350
    %v2813 = vpack.c.b16 %v2353, %v2352
    %v2814 = vpack.c.b16 %v2355, %v2354
    %v2815 = vpack.c.b16 %v2357, %v2356
    %v2816 = vpack.c.b16 %v2359, %v2358
    %v2817 = vpack.c.b16 %v2361, %v2360
    %v2818 = vpack.c.b16 %v2363, %v2362
    %v2819 = vpack.c.b16 %v2365, %v2364
    %v2820 = vpack.c.b16 %v2367, %v2366
    %v2821 = vpack.c.b16 %v2369, %v2368
    %v2822 = vpack.c.b16 %v2371, %v2370
    %v2823 = vpack.c.b16 %v2373, %v2372
    %v2824 = vpack.c.b16 %v2375, %v2374
    %v2825 = vpack.c.b16 %v2377, %v2376
    %v2826 = vpack.c.b16 %v2379, %v2378
    %v2827 = vpack.c.b16 %v2381, %v2380
    %v2828 = vpack.c.b16 %v2383, %v2382
    %v2829 = vpack.c.b16 %v2385, %v2384
    %v2830 = vpack.c.b16 %v2387, %v2386
    %v2831 = vpack.c.b16 %v2389, %v2388
    %v2832 = vpack.c.b16 %v2391, %v2390
    %v2833 = vpack.c.b16 %v2393, %v2392
    %v2834 = vpack.c.b16 %v2395, %v2394
    %v2835 = vpack.c.b16 %v2397, %v2396
    %v2836 = vpack.c.b16 %v2399, %v2398
    %v2837 = vpack.c.b16 %v2401, %v2400
    %v2838 = vpack.c.b16 %v2403, %v2402
    %v2839 = vpack.c.b16 %v2405, %v2404
    %v2840 = vpack.c.b16 %v2407, %v2406
    %v2841 = vpack.c.b16 %v2409, %v2408
    %v2842 = vpack.c.b16 %v2411, %v2410
    %v2843 = vpack.c.b16 %v2413, %v2412
    %v2844 = vpack.c.b16 %v2415, %v2414
    %v2845 = vpack.c.b16 %v2417, %v2416
    %v2846 = vpack.c.b16 %v2419, %v2418
    %v2847 = vpack.c.b16 %v2421, %v2420
    %v2848 = vpack.c.b16 %v2423, %v2422
    %v2849 = vpack.c.b16 %v2425, %v2424
    %v2850 = vpack.c.b16 %v2427, %v2426
    %v2851 = vpack.c.b16 %v2429, %v2428
    %v2852 = vpack.c.b16 %v2431, %v2430
    %v2853 = vpack.c.b16 %v2433, %v2432
    %v2854 = vpack.c.b16 %v2435, %v2434
    %v2855 = vpack.c.b16 %v2437, %v2436
    %v2856 = vpack.c.b16 %v2439, %v2438
    %v2857 = vpack.c.b16 %v2441, %v2440
    %v2858 = vpack.c.b16 %v2443, %v2442
    %v2859 = vpack.c.b16 %v2445, %v2444
    %v2860 = vpack.c.b16 %v2447, %v2446
    %v2861 = vpack.c.b16 %v2449, %v2448
    %v2862 = vpack.c.b16 %v2451, %v2450
    %v2863 = vpack.c.b16 %v2453, %v2452
    %v2864 = vpack.c.b16 %v2455, %v2454
    %v2865 = vpack.c.b16 %v2457, %v2456
    %v2866 = vpack.c.b16 %v2459, %v2458
    %v2867 = vpack.c.b16 %v2461, %v2460
    %v2868 = vpack.c.b16 %v2463, %v2462
    %v2869 = vpack.c.b16 %v2465, %v2464
    %v2870 = vpack.c.b16 %v2467, %v2466
    %v2871 = vpack.c.b16 %v2469, %v2468
    %v2872 = vpack.c.b16 %v2471, %v2470
    %v2873 = vpack.c.b16 %v2473, %v2472
    %v2874 = vpack.c.b16 %v2475, %v2474
    %v2875 = vpack.c.b16 %v2477, %v2476
    %v2876 = vpack.c.b16 %v2479, %v2478
    %v2877 = vpack.c.b16 %v2481, %v2480
    %v2878 = vpack.c.b16 %v2483, %v2482
    %v2879 = vpack.c.b16 %v2485, %v2484
    %v2880 = vpack.c.b16 %v2487, %v2486
    %v2881 = vpack.c.b16 %v2489, %v2488
    %3274 = vmatpush.bf16.msra.mxu0 %v2497
    %3275 = vmatpush.bf16.msra.mxu0 %v2496
    %3276 = vmatpush.bf16.msra.mxu0 %v2495
    %3277 = vmatpush.bf16.msra.mxu0 %v2494
    %3278 = vmatpush.bf16.msra.mxu0 %v2493
    %3279 = vmatpush.bf16.msra.mxu0 %v2492
    %3280 = vmatpush.bf16.msra.mxu0 %v2491
    %3281 = vmatpush.bf16.msra.mxu0 %v2490
    %3282 = vmatmul.bf16.gmra.mxu0 %v812
    %v3283 = vpop.f32.mrf.mxu0
    %v3284 = vadd.f32 %v808, %v3283
    %v3285 = vpop.f32.mrf.mxu0
    %3286 = vdwg.mxu0
    %3287 = vmatpush.bf16.msra.mxu0 %v2505
    %3288 = vmatpush.bf16.msra.mxu0 %v2504
    %3289 = vmatpush.bf16.msra.mxu0 %v2503
    %3290 = vmatpush.bf16.msra.mxu0 %v2502
    %3291 = vmatpush.bf16.msra.mxu0 %v2501
    %3292 = vmatpush.bf16.msra.mxu0 %v2500
    %3293 = vmatpush.bf16.msra.mxu0 %v2499
    %3294 = vmatpush.bf16.msra.mxu0 %v2498
    %3295 = vmatmul.bf16.gmra.mxu0 %v813
    %v3296 = vpop.f32.mrf.mxu0
    %v3297 = vadd.f32 %v3284, %v3296
    %v3298 = vpop.f32.mrf.mxu0
    %3299 = vdwg.mxu0
    %3300 = vmatpush.bf16.msra.mxu0 %v2513
    %3301 = vmatpush.bf16.msra.mxu0 %v2512
    %3302 = vmatpush.bf16.msra.mxu0 %v2511
    %3303 = vmatpush.bf16.msra.mxu0 %v2510
    %3304 = vmatpush.bf16.msra.mxu0 %v2509
    %3305 = vmatpush.bf16.msra.mxu0 %v2508
    %3306 = vmatpush.bf16.msra.mxu0 %v2507
    %3307 = vmatpush.bf16.msra.mxu0 %v2506
    %3308 = vmatmul.bf16.gmra.mxu0 %v814
    %v3309 = vpop.f32.mrf.mxu0
    %v3310 = vadd.f32 %v3297, %v3309
    %v3311 = vpop.f32.mrf.mxu0
    %3312 = vdwg.mxu0
    %3313 = vmatpush.bf16.msra.mxu0 %v2521
    %3314 = vmatpush.bf16.msra.mxu0 %v2520
    %3315 = vmatpush.bf16.msra.mxu0 %v2519
    %3316 = vmatpush.bf16.msra.mxu0 %v2518
    %3317 = vmatpush.bf16.msra.mxu0 %v2517
    %3318 = vmatpush.bf16.msra.mxu0 %v2516
    %3319 = vmatpush.bf16.msra.mxu0 %v2515
    %3320 = vmatpush.bf16.msra.mxu0 %v2514
    %3321 = vmatmul.bf16.gmra.mxu0 %v815
    %v3322 = vpop.f32.mrf.mxu0
    %v3323 = vadd.f32 %v3310, %v3322
    %v3324 = vpop.f32.mrf.mxu0
    %3325 = vdwg.mxu0
    %3326 = vmatpush.bf16.msra.mxu0 %v2529
    %3327 = vmatpush.bf16.msra.mxu0 %v2528
    %3328 = vmatpush.bf16.msra.mxu0 %v2527
    %3329 = vmatpush.bf16.msra.mxu0 %v2526
    %3330 = vmatpush.bf16.msra.mxu0 %v2525
    %3331 = vmatpush.bf16.msra.mxu0 %v2524
    %3332 = vmatpush.bf16.msra.mxu0 %v2523
    %3333 = vmatpush.bf16.msra.mxu0 %v2522
    %3334 = vmatmul.bf16.gmra.mxu0 %v816
    %v3335 = vpop.f32.mrf.mxu0
    %v3336 = vadd.f32 %v3323, %v3335
    %v3337 = vpop.f32.mrf.mxu0
    %3338 = vdwg.mxu0
    %3339 = vmatpush.bf16.msra.mxu0 %v2537
    %3340 = vmatpush.bf16.msra.mxu0 %v2536
    %3341 = vmatpush.bf16.msra.mxu0 %v2535
    %3342 = vmatpush.bf16.msra.mxu0 %v2534
    %3343 = vmatpush.bf16.msra.mxu0 %v2533
    %3344 = vmatpush.bf16.msra.mxu0 %v2532
    %3345 = vmatpush.bf16.msra.mxu0 %v2531
    %3346 = vmatpush.bf16.msra.mxu0 %v2530
    %3347 = vmatmul.bf16.gmra.mxu0 %v817
    %v3348 = vpop.f32.mrf.mxu0
    %v3349 = vadd.f32 %v3336, %v3348
    %v3350 = vpop.f32.mrf.mxu0
    %3351 = vdwg.mxu0
    %3352 = vmatpush.bf16.msra.mxu0 %v2545
    %3353 = vmatpush.bf16.msra.mxu0 %v2544
    %3354 = vmatpush.bf16.msra.mxu0 %v2543
    %3355 = vmatpush.bf16.msra.mxu0 %v2542
    %3356 = vmatpush.bf16.msra.mxu0 %v2541
    %3357 = vmatpush.bf16.msra.mxu0 %v2540
    %3358 = vmatpush.bf16.msra.mxu0 %v2539
    %3359 = vmatpush.bf16.msra.mxu0 %v2538
    %3360 = vmatmul.bf16.gmra.mxu0 %v818
    %v3361 = vpop.f32.mrf.mxu0
    %v3362 = vadd.f32 %v3349, %v3361
    %v3363 = vpop.f32.mrf.mxu0
    %3364 = vdwg.mxu0
    %3365 = vmatpush.bf16.msra.mxu0 %v2553
    %3366 = vmatpush.bf16.msra.mxu0 %v2552
    %3367 = vmatpush.bf16.msra.mxu0 %v2551
    %3368 = vmatpush.bf16.msra.mxu0 %v2550
    %3369 = vmatpush.bf16.msra.mxu0 %v2549
    %3370 = vmatpush.bf16.msra.mxu0 %v2548
    %3371 = vmatpush.bf16.msra.mxu0 %v2547
    %3372 = vmatpush.bf16.msra.mxu0 %v2546
    %3373 = vmatmul.bf16.gmra.mxu0 %v819
    %v3374 = vpop.f32.mrf.mxu0
    %v3375 = vadd.f32 %v3362, %v3374
    %v3376 = vpop.f32.mrf.mxu0
    %3377 = vdwg.mxu0
    %3378 = vmatpush.bf16.msra.mxu0 %v2561
    %3379 = vmatpush.bf16.msra.mxu0 %v2560
    %3380 = vmatpush.bf16.msra.mxu0 %v2559
    %3381 = vmatpush.bf16.msra.mxu0 %v2558
    %3382 = vmatpush.bf16.msra.mxu0 %v2557
    %3383 = vmatpush.bf16.msra.mxu0 %v2556
    %3384 = vmatpush.bf16.msra.mxu0 %v2555
    %3385 = vmatpush.bf16.msra.mxu0 %v2554
    %3386 = vmatmul.bf16.gmra.mxu0 %v822
    %v3387 = vpop.f32.mrf.mxu0
    %v3388 = vadd.f32 %v3375, %v3387
    %v3389 = vpop.f32.mrf.mxu0
    %3390 = vdwg.mxu0
    %3391 = vmatpush.bf16.msra.mxu0 %v2569
    %3392 = vmatpush.bf16.msra.mxu0 %v2568
    %3393 = vmatpush.bf16.msra.mxu0 %v2567
    %3394 = vmatpush.bf16.msra.mxu0 %v2566
    %3395 = vmatpush.bf16.msra.mxu0 %v2565
    %3396 = vmatpush.bf16.msra.mxu0 %v2564
    %3397 = vmatpush.bf16.msra.mxu0 %v2563
    %3398 = vmatpush.bf16.msra.mxu0 %v2562
    %3399 = vmatmul.bf16.gmra.mxu0 %v823
    %v3400 = vpop.f32.mrf.mxu0
    %v3401 = vadd.f32 %v3388, %v3400
    %v3402 = vpop.f32.mrf.mxu0
    %3403 = vdwg.mxu0
    %3404 = vmatpush.bf16.msra.mxu0 %v2577
    %3405 = vmatpush.bf16.msra.mxu0 %v2576
    %3406 = vmatpush.bf16.msra.mxu0 %v2575
    %3407 = vmatpush.bf16.msra.mxu0 %v2574
    %3408 = vmatpush.bf16.msra.mxu0 %v2573
    %3409 = vmatpush.bf16.msra.mxu0 %v2572
    %3410 = vmatpush.bf16.msra.mxu0 %v2571
    %3411 = vmatpush.bf16.msra.mxu0 %v2570
    %3412 = vmatmul.bf16.gmra.mxu0 %v824
    %v3413 = vpop.f32.mrf.mxu0
    %v3414 = vadd.f32 %v3401, %v3413
    %v3415 = vpop.f32.mrf.mxu0
    %3416 = vdwg.mxu0
    %3417 = vmatpush.bf16.msra.mxu0 %v2585
    %3418 = vmatpush.bf16.msra.mxu0 %v2584
    %3419 = vmatpush.bf16.msra.mxu0 %v2583
    %3420 = vmatpush.bf16.msra.mxu0 %v2582
    %3421 = vmatpush.bf16.msra.mxu0 %v2581
    %3422 = vmatpush.bf16.msra.mxu0 %v2580
    %3423 = vmatpush.bf16.msra.mxu0 %v2579
    %3424 = vmatpush.bf16.msra.mxu0 %v2578
    %3425 = vmatmul.bf16.gmra.mxu0 %v825
    %v3426 = vpop.f32.mrf.mxu0
    %v3427 = vadd.f32 %v3414, %v3426
    %v3428 = vpop.f32.mrf.mxu0
    %3429 = vdwg.mxu0
    %3430 = vmatpush.bf16.msra.mxu0 %v2593
    %3431 = vmatpush.bf16.msra.mxu0 %v2592
    %3432 = vmatpush.bf16.msra.mxu0 %v2591
    %3433 = vmatpush.bf16.msra.mxu0 %v2590
    %3434 = vmatpush.bf16.msra.mxu0 %v2589
    %3435 = vmatpush.bf16.msra.mxu0 %v2588
    %3436 = vmatpush.bf16.msra.mxu0 %v2587
    %3437 = vmatpush.bf16.msra.mxu0 %v2586
    %3438 = vmatmul.bf16.gmra.mxu0 %v826
    %v3439 = vpop.f32.mrf.mxu0
    %v3440 = vadd.f32 %v3427, %v3439
    %v3441 = vpop.f32.mrf.mxu0
    %3442 = vdwg.mxu0
    %3443 = vmatpush.bf16.msra.mxu0 %v2601
    %3444 = vmatpush.bf16.msra.mxu0 %v2600
    %3445 = vmatpush.bf16.msra.mxu0 %v2599
    %3446 = vmatpush.bf16.msra.mxu0 %v2598
    %3447 = vmatpush.bf16.msra.mxu0 %v2597
    %3448 = vmatpush.bf16.msra.mxu0 %v2596
    %3449 = vmatpush.bf16.msra.mxu0 %v2595
    %3450 = vmatpush.bf16.msra.mxu0 %v2594
    %3451 = vmatmul.bf16.gmra.mxu0 %v827
    %v3452 = vpop.f32.mrf.mxu0
    %v3453 = vadd.f32 %v3440, %v3452
    %v3454 = vpop.f32.mrf.mxu0
    %3455 = vdwg.mxu0
    %3456 = vmatpush.bf16.msra.mxu0 %v2609
    %3457 = vmatpush.bf16.msra.mxu0 %v2608
    %3458 = vmatpush.bf16.msra.mxu0 %v2607
    %3459 = vmatpush.bf16.msra.mxu0 %v2606
    %3460 = vmatpush.bf16.msra.mxu0 %v2605
    %3461 = vmatpush.bf16.msra.mxu0 %v2604
    %3462 = vmatpush.bf16.msra.mxu0 %v2603
    %3463 = vmatpush.bf16.msra.mxu0 %v2602
    %3464 = vmatmul.bf16.gmra.mxu0 %v828
    %v3465 = vpop.f32.mrf.mxu0
    %v3466 = vadd.f32 %v3453, %v3465
    %v3467 = vpop.f32.mrf.mxu0
    %3468 = vdwg.mxu0
    %3469 = vmatpush.bf16.msra.mxu0 %v2617
    %3470 = vmatpush.bf16.msra.mxu0 %v2616
    %3471 = vmatpush.bf16.msra.mxu0 %v2615
    %3472 = vmatpush.bf16.msra.mxu0 %v2614
    %3473 = vmatpush.bf16.msra.mxu0 %v2613
    %3474 = vmatpush.bf16.msra.mxu0 %v2612
    %3475 = vmatpush.bf16.msra.mxu0 %v2611
    %3476 = vmatpush.bf16.msra.mxu0 %v2610
    %3477 = vmatmul.bf16.gmra.mxu0 %v829
    %v3478 = vpop.f32.mrf.mxu0
    %v3479 = vadd.f32 %v3466, %v3478
    %v3480 = vpop.f32.mrf.mxu0
    %3481 = vdwg.mxu0
    %3482 = vmatpush.bf16.msra.mxu0 %v2625
    %3483 = vmatpush.bf16.msra.mxu0 %v2624
    %3484 = vmatpush.bf16.msra.mxu0 %v2623
    %3485 = vmatpush.bf16.msra.mxu0 %v2622
    %3486 = vmatpush.bf16.msra.mxu0 %v2621
    %3487 = vmatpush.bf16.msra.mxu0 %v2620
    %3488 = vmatpush.bf16.msra.mxu0 %v2619
    %3489 = vmatpush.bf16.msra.mxu0 %v2618
    %3490 = vmatmul.bf16.gmra.mxu0 %v832
    %v3491 = vpop.f32.mrf.mxu0
    %v3492 = vadd.f32 %v3479, %v3491
    %v3493 = vpop.f32.mrf.mxu0
    %3494 = vdwg.mxu0
    %3495 = vmatpush.bf16.msra.mxu0 %v2633
    %3496 = vmatpush.bf16.msra.mxu0 %v2632
    %3497 = vmatpush.bf16.msra.mxu0 %v2631
    %3498 = vmatpush.bf16.msra.mxu0 %v2630
    %3499 = vmatpush.bf16.msra.mxu0 %v2629
    %3500 = vmatpush.bf16.msra.mxu0 %v2628
    %3501 = vmatpush.bf16.msra.mxu0 %v2627
    %3502 = vmatpush.bf16.msra.mxu0 %v2626
    %3503 = vmatmul.bf16.gmra.mxu0 %v833
    %v3504 = vpop.f32.mrf.mxu0
    %v3505 = vadd.f32 %v3492, %v3504
    %v3506 = vpop.f32.mrf.mxu0
    %3507 = vdwg.mxu0
    %3508 = vmatpush.bf16.msra.mxu0 %v2641
    %3509 = vmatpush.bf16.msra.mxu0 %v2640
    %3510 = vmatpush.bf16.msra.mxu0 %v2639
    %3511 = vmatpush.bf16.msra.mxu0 %v2638
    %3512 = vmatpush.bf16.msra.mxu0 %v2637
    %3513 = vmatpush.bf16.msra.mxu0 %v2636
    %3514 = vmatpush.bf16.msra.mxu0 %v2635
    %3515 = vmatpush.bf16.msra.mxu0 %v2634
    %3516 = vmatmul.bf16.gmra.mxu0 %v834
    %v3517 = vpop.f32.mrf.mxu0
    %v3518 = vadd.f32 %v3505, %v3517
    %v3519 = vpop.f32.mrf.mxu0
    %3520 = vdwg.mxu0
    %3521 = vmatpush.bf16.msra.mxu0 %v2649
    %3522 = vmatpush.bf16.msra.mxu0 %v2648
    %3523 = vmatpush.bf16.msra.mxu0 %v2647
    %3524 = vmatpush.bf16.msra.mxu0 %v2646
    %3525 = vmatpush.bf16.msra.mxu0 %v2645
    %3526 = vmatpush.bf16.msra.mxu0 %v2644
    %3527 = vmatpush.bf16.msra.mxu0 %v2643
    %3528 = vmatpush.bf16.msra.mxu0 %v2642
    %3529 = vmatmul.bf16.gmra.mxu0 %v835
    %v3530 = vpop.f32.mrf.mxu0
    %v3531 = vadd.f32 %v3518, %v3530
    %v3532 = vpop.f32.mrf.mxu0
    %3533 = vdwg.mxu0
    %3534 = vmatpush.bf16.msra.mxu0 %v2657
    %3535 = vmatpush.bf16.msra.mxu0 %v2656
    %3536 = vmatpush.bf16.msra.mxu0 %v2655
    %3537 = vmatpush.bf16.msra.mxu0 %v2654
    %3538 = vmatpush.bf16.msra.mxu0 %v2653
    %3539 = vmatpush.bf16.msra.mxu0 %v2652
    %3540 = vmatpush.bf16.msra.mxu0 %v2651
    %3541 = vmatpush.bf16.msra.mxu0 %v2650
    %3542 = vmatmul.bf16.gmra.mxu0 %v836
    %v3543 = vpop.f32.mrf.mxu0
    %v3544 = vadd.f32 %v3531, %v3543
    %v3545 = vpop.f32.mrf.mxu0
    %3546 = vdwg.mxu0
    %3547 = vmatpush.bf16.msra.mxu0 %v2665
    %3548 = vmatpush.bf16.msra.mxu0 %v2664
    %3549 = vmatpush.bf16.msra.mxu0 %v2663
    %3550 = vmatpush.bf16.msra.mxu0 %v2662
    %3551 = vmatpush.bf16.msra.mxu0 %v2661
    %3552 = vmatpush.bf16.msra.mxu0 %v2660
    %3553 = vmatpush.bf16.msra.mxu0 %v2659
    %3554 = vmatpush.bf16.msra.mxu0 %v2658
    %3555 = vmatmul.bf16.gmra.mxu0 %v837
    %v3556 = vpop.f32.mrf.mxu0
    %v3557 = vadd.f32 %v3544, %v3556
    %v3558 = vpop.f32.mrf.mxu0
    %3559 = vdwg.mxu0
    %3560 = vmatpush.bf16.msra.mxu0 %v2673
    %3561 = vmatpush.bf16.msra.mxu0 %v2672
    %3562 = vmatpush.bf16.msra.mxu0 %v2671
    %3563 = vmatpush.bf16.msra.mxu0 %v2670
    %3564 = vmatpush.bf16.msra.mxu0 %v2669
    %3565 = vmatpush.bf16.msra.mxu0 %v2668
    %3566 = vmatpush.bf16.msra.mxu0 %v2667
    %3567 = vmatpush.bf16.msra.mxu0 %v2666
    %3568 = vmatmul.bf16.gmra.mxu0 %v838
    %v3569 = vpop.f32.mrf.mxu0
    %v3570 = vadd.f32 %v3557, %v3569
    %v3571 = vpop.f32.mrf.mxu0
    %3572 = vdwg.mxu0
    %3573 = vmatpush.bf16.msra.mxu0 %v2681
    %3574 = vmatpush.bf16.msra.mxu0 %v2680
    %3575 = vmatpush.bf16.msra.mxu0 %v2679
    %3576 = vmatpush.bf16.msra.mxu0 %v2678
    %3577 = vmatpush.bf16.msra.mxu0 %v2677
    %3578 = vmatpush.bf16.msra.mxu0 %v2676
    %3579 = vmatpush.bf16.msra.mxu0 %v2675
    %3580 = vmatpush.bf16.msra.mxu0 %v2674
    %3581 = vmatmul.bf16.gmra.mxu0 %v839
    %v3582 = vpop.f32.mrf.mxu0
    %v3583 = vadd.f32 %v3570, %v3582
    %v3584 = vpop.f32.mrf.mxu0
    %3585 = vdwg.mxu0
    %3586 = vmatpush.bf16.msra.mxu0 %v2689
    %3587 = vmatpush.bf16.msra.mxu0 %v2688
    %3588 = vmatpush.bf16.msra.mxu0 %v2687
    %3589 = vmatpush.bf16.msra.mxu0 %v2686
    %3590 = vmatpush.bf16.msra.mxu0 %v2685
    %3591 = vmatpush.bf16.msra.mxu0 %v2684
    %3592 = vmatpush.bf16.msra.mxu0 %v2683
    %3593 = vmatpush.bf16.msra.mxu0 %v2682
    %3594 = vmatmul.bf16.gmra.mxu0 %v842
    %v3595 = vpop.f32.mrf.mxu0
    %v3596 = vadd.f32 %v3583, %v3595
    %v3597 = vpop.f32.mrf.mxu0
    %3598 = vdwg.mxu0
    %3599 = vmatpush.bf16.msra.mxu0 %v2697
    %3600 = vmatpush.bf16.msra.mxu0 %v2696
    %3601 = vmatpush.bf16.msra.mxu0 %v2695
    %3602 = vmatpush.bf16.msra.mxu0 %v2694
    %3603 = vmatpush.bf16.msra.mxu0 %v2693
    %3604 = vmatpush.bf16.msra.mxu0 %v2692
    %3605 = vmatpush.bf16.msra.mxu0 %v2691
    %3606 = vmatpush.bf16.msra.mxu0 %v2690
    %3607 = vmatmul.bf16.gmra.mxu0 %v843
    %v3608 = vpop.f32.mrf.mxu0
    %v3609 = vadd.f32 %v3596, %v3608
    %v3610 = vpop.f32.mrf.mxu0
    %3611 = vdwg.mxu0
    %3612 = vmatpush.bf16.msra.mxu0 %v2705
    %3613 = vmatpush.bf16.msra.mxu0 %v2704
    %3614 = vmatpush.bf16.msra.mxu0 %v2703
    %3615 = vmatpush.bf16.msra.mxu0 %v2702
    %3616 = vmatpush.bf16.msra.mxu0 %v2701
    %3617 = vmatpush.bf16.msra.mxu0 %v2700
    %3618 = vmatpush.bf16.msra.mxu0 %v2699
    %3619 = vmatpush.bf16.msra.mxu0 %v2698
    %3620 = vmatmul.bf16.gmra.mxu0 %v844
    %v3621 = vpop.f32.mrf.mxu0
    %v3622 = vadd.f32 %v3609, %v3621
    %v3623 = vpop.f32.mrf.mxu0
    %3624 = vdwg.mxu0
    %3625 = vmatpush.bf16.msra.mxu0 %v2713
    %3626 = vmatpush.bf16.msra.mxu0 %v2712
    %3627 = vmatpush.bf16.msra.mxu0 %v2711
    %3628 = vmatpush.bf16.msra.mxu0 %v2710
    %3629 = vmatpush.bf16.msra.mxu0 %v2709
    %3630 = vmatpush.bf16.msra.mxu0 %v2708
    %3631 = vmatpush.bf16.msra.mxu0 %v2707
    %3632 = vmatpush.bf16.msra.mxu0 %v2706
    %3633 = vmatmul.bf16.gmra.mxu0 %v845
    %v3634 = vpop.f32.mrf.mxu0
    %v3635 = vadd.f32 %v3622, %v3634
    %v3636 = vpop.f32.mrf.mxu0
    %3637 = vdwg.mxu0
    %3638 = vmatpush.bf16.msra.mxu0 %v2721
    %3639 = vmatpush.bf16.msra.mxu0 %v2720
    %3640 = vmatpush.bf16.msra.mxu0 %v2719
    %3641 = vmatpush.bf16.msra.mxu0 %v2718
    %3642 = vmatpush.bf16.msra.mxu0 %v2717
    %3643 = vmatpush.bf16.msra.mxu0 %v2716
    %3644 = vmatpush.bf16.msra.mxu0 %v2715
    %3645 = vmatpush.bf16.msra.mxu0 %v2714
    %3646 = vmatmul.bf16.gmra.mxu0 %v846
    %v3647 = vpop.f32.mrf.mxu0
    %v3648 = vadd.f32 %v3635, %v3647
    %v3649 = vpop.f32.mrf.mxu0
    %3650 = vdwg.mxu0
    %3651 = vmatpush.bf16.msra.mxu0 %v2729
    %3652 = vmatpush.bf16.msra.mxu0 %v2728
    %3653 = vmatpush.bf16.msra.mxu0 %v2727
    %3654 = vmatpush.bf16.msra.mxu0 %v2726
    %3655 = vmatpush.bf16.msra.mxu0 %v2725
    %3656 = vmatpush.bf16.msra.mxu0 %v2724
    %3657 = vmatpush.bf16.msra.mxu0 %v2723
    %3658 = vmatpush.bf16.msra.mxu0 %v2722
    %3659 = vmatmul.bf16.gmra.mxu0 %v847
    %v3660 = vpop.f32.mrf.mxu0
    %v3661 = vadd.f32 %v3648, %v3660
    %v3662 = vpop.f32.mrf.mxu0
    %3663 = vdwg.mxu0
    %3664 = vmatpush.bf16.msra.mxu0 %v2737
    %3665 = vmatpush.bf16.msra.mxu0 %v2736
    %3666 = vmatpush.bf16.msra.mxu0 %v2735
    %3667 = vmatpush.bf16.msra.mxu0 %v2734
    %3668 = vmatpush.bf16.msra.mxu0 %v2733
    %3669 = vmatpush.bf16.msra.mxu0 %v2732
    %3670 = vmatpush.bf16.msra.mxu0 %v2731
    %3671 = vmatpush.bf16.msra.mxu0 %v2730
    %3672 = vmatmul.bf16.gmra.mxu0 %v848
    %v3673 = vpop.f32.mrf.mxu0
    %v3674 = vadd.f32 %v3661, %v3673
    %v3675 = vpop.f32.mrf.mxu0
    %3676 = vdwg.mxu0
    %3677 = vmatpush.bf16.msra.mxu0 %v2745
    %3678 = vmatpush.bf16.msra.mxu0 %v2744
    %3679 = vmatpush.bf16.msra.mxu0 %v2743
    %3680 = vmatpush.bf16.msra.mxu0 %v2742
    %3681 = vmatpush.bf16.msra.mxu0 %v2741
    %3682 = vmatpush.bf16.msra.mxu0 %v2740
    %3683 = vmatpush.bf16.msra.mxu0 %v2739
    %3684 = vmatpush.bf16.msra.mxu0 %v2738
    %3685 = vmatmul.bf16.gmra.mxu0 %v849
    %v3686 = vpop.f32.mrf.mxu0
    %v3687 = vadd.f32 %v3674, %v3686
    %v3688 = vpop.f32.mrf.mxu0
    %3689 = vdwg.mxu0
    %3690 = vmatpush.bf16.msra.mxu0 %v2753
    %3691 = vmatpush.bf16.msra.mxu0 %v2752
    %3692 = vmatpush.bf16.msra.mxu0 %v2751
    %3693 = vmatpush.bf16.msra.mxu0 %v2750
    %3694 = vmatpush.bf16.msra.mxu0 %v2749
    %3695 = vmatpush.bf16.msra.mxu0 %v2748
    %3696 = vmatpush.bf16.msra.mxu0 %v2747
    %3697 = vmatpush.bf16.msra.mxu0 %v2746
    %3698 = vmatmul.bf16.gmra.mxu0 %v852
    %v3699 = vpop.f32.mrf.mxu0
    %v3700 = vadd.f32 %v3687, %v3699
    %v3701 = vpop.f32.mrf.mxu0
    %3702 = vdwg.mxu0
    %3703 = vmatpush.bf16.msra.mxu0 %v2761
    %3704 = vmatpush.bf16.msra.mxu0 %v2760
    %3705 = vmatpush.bf16.msra.mxu0 %v2759
    %3706 = vmatpush.bf16.msra.mxu0 %v2758
    %3707 = vmatpush.bf16.msra.mxu0 %v2757
    %3708 = vmatpush.bf16.msra.mxu0 %v2756
    %3709 = vmatpush.bf16.msra.mxu0 %v2755
    %3710 = vmatpush.bf16.msra.mxu0 %v2754
    %3711 = vmatmul.bf16.gmra.mxu0 %v853
    %v3712 = vpop.f32.mrf.mxu0
    %v3713 = vadd.f32 %v3700, %v3712
    %v3714 = vpop.f32.mrf.mxu0
    %3715 = vdwg.mxu0
    %3716 = vmatpush.bf16.msra.mxu0 %v2769
    %3717 = vmatpush.bf16.msra.mxu0 %v2768
    %3718 = vmatpush.bf16.msra.mxu0 %v2767
    %3719 = vmatpush.bf16.msra.mxu0 %v2766
    %3720 = vmatpush.bf16.msra.mxu0 %v2765
    %3721 = vmatpush.bf16.msra.mxu0 %v2764
    %3722 = vmatpush.bf16.msra.mxu0 %v2763
    %3723 = vmatpush.bf16.msra.mxu0 %v2762
    %3724 = vmatmul.bf16.gmra.mxu0 %v854
    %v3725 = vpop.f32.mrf.mxu0
    %v3726 = vadd.f32 %v3713, %v3725
    %v3727 = vpop.f32.mrf.mxu0
    %3728 = vdwg.mxu0
    %3729 = vmatpush.bf16.msra.mxu0 %v2777
    %3730 = vmatpush.bf16.msra.mxu0 %v2776
    %3731 = vmatpush.bf16.msra.mxu0 %v2775
    %3732 = vmatpush.bf16.msra.mxu0 %v2774
    %3733 = vmatpush.bf16.msra.mxu0 %v2773
    %3734 = vmatpush.bf16.msra.mxu0 %v2772
    %3735 = vmatpush.bf16.msra.mxu0 %v2771
    %3736 = vmatpush.bf16.msra.mxu0 %v2770
    %3737 = vmatmul.bf16.gmra.mxu0 %v855
    %v3738 = vpop.f32.mrf.mxu0
    %v3739 = vadd.f32 %v3726, %v3738
    %v3740 = vpop.f32.mrf.mxu0
    %3741 = vdwg.mxu0
    %3742 = vmatpush.bf16.msra.mxu0 %v2785
    %3743 = vmatpush.bf16.msra.mxu0 %v2784
    %3744 = vmatpush.bf16.msra.mxu0 %v2783
    %3745 = vmatpush.bf16.msra.mxu0 %v2782
    %3746 = vmatpush.bf16.msra.mxu0 %v2781
    %3747 = vmatpush.bf16.msra.mxu0 %v2780
    %3748 = vmatpush.bf16.msra.mxu0 %v2779
    %3749 = vmatpush.bf16.msra.mxu0 %v2778
    %3750 = vmatmul.bf16.gmra.mxu0 %v856
    %v3751 = vpop.f32.mrf.mxu0
    %v3752 = vadd.f32 %v3739, %v3751
    %v3753 = vpop.f32.mrf.mxu0
    %3754 = vdwg.mxu0
    %3755 = vmatpush.bf16.msra.mxu0 %v2793
    %3756 = vmatpush.bf16.msra.mxu0 %v2792
    %3757 = vmatpush.bf16.msra.mxu0 %v2791
    %3758 = vmatpush.bf16.msra.mxu0 %v2790
    %3759 = vmatpush.bf16.msra.mxu0 %v2789
    %3760 = vmatpush.bf16.msra.mxu0 %v2788
    %3761 = vmatpush.bf16.msra.mxu0 %v2787
    %3762 = vmatpush.bf16.msra.mxu0 %v2786
    %3763 = vmatmul.bf16.gmra.mxu0 %v857
    %v3764 = vpop.f32.mrf.mxu0
    %v3765 = vadd.f32 %v3752, %v3764
    %v3766 = vpop.f32.mrf.mxu0
    %3767 = vdwg.mxu0
    %3768 = vmatpush.bf16.msra.mxu0 %v2801
    %3769 = vmatpush.bf16.msra.mxu0 %v2800
    %3770 = vmatpush.bf16.msra.mxu0 %v2799
    %3771 = vmatpush.bf16.msra.mxu0 %v2798
    %3772 = vmatpush.bf16.msra.mxu0 %v2797
    %3773 = vmatpush.bf16.msra.mxu0 %v2796
    %3774 = vmatpush.bf16.msra.mxu0 %v2795
    %3775 = vmatpush.bf16.msra.mxu0 %v2794
    %3776 = vmatmul.bf16.gmra.mxu0 %v858
    %v3777 = vpop.f32.mrf.mxu0
    %v3778 = vadd.f32 %v3765, %v3777
    %v3779 = vpop.f32.mrf.mxu0
    %3780 = vdwg.mxu0
    %3781 = vmatpush.bf16.msra.mxu0 %v2809
    %3782 = vmatpush.bf16.msra.mxu0 %v2808
    %3783 = vmatpush.bf16.msra.mxu0 %v2807
    %3784 = vmatpush.bf16.msra.mxu0 %v2806
    %3785 = vmatpush.bf16.msra.mxu0 %v2805
    %3786 = vmatpush.bf16.msra.mxu0 %v2804
    %3787 = vmatpush.bf16.msra.mxu0 %v2803
    %3788 = vmatpush.bf16.msra.mxu0 %v2802
    %3789 = vmatmul.bf16.gmra.mxu0 %v859
    %v3790 = vpop.f32.mrf.mxu0
    %v3791 = vadd.f32 %v3778, %v3790
    %v3792 = vpop.f32.mrf.mxu0
    %3793 = vdwg.mxu0
    %3794 = vmatpush.bf16.msra.mxu0 %v2817
    %3795 = vmatpush.bf16.msra.mxu0 %v2816
    %3796 = vmatpush.bf16.msra.mxu0 %v2815
    %3797 = vmatpush.bf16.msra.mxu0 %v2814
    %3798 = vmatpush.bf16.msra.mxu0 %v2813
    %3799 = vmatpush.bf16.msra.mxu0 %v2812
    %3800 = vmatpush.bf16.msra.mxu0 %v2811
    %3801 = vmatpush.bf16.msra.mxu0 %v2810
    %3802 = vmatmul.bf16.gmra.mxu0 %v862
    %v3803 = vpop.f32.mrf.mxu0
    %v3804 = vadd.f32 %v3791, %v3803
    %v3805 = vpop.f32.mrf.mxu0
    %3806 = vdwg.mxu0
    %3807 = vmatpush.bf16.msra.mxu0 %v2825
    %3808 = vmatpush.bf16.msra.mxu0 %v2824
    %3809 = vmatpush.bf16.msra.mxu0 %v2823
    %3810 = vmatpush.bf16.msra.mxu0 %v2822
    %3811 = vmatpush.bf16.msra.mxu0 %v2821
    %3812 = vmatpush.bf16.msra.mxu0 %v2820
    %3813 = vmatpush.bf16.msra.mxu0 %v2819
    %3814 = vmatpush.bf16.msra.mxu0 %v2818
    %3815 = vmatmul.bf16.gmra.mxu0 %v863
    %v3816 = vpop.f32.mrf.mxu0
    %v3817 = vadd.f32 %v3804, %v3816
    %v3818 = vpop.f32.mrf.mxu0
    %3819 = vdwg.mxu0
    %3820 = vmatpush.bf16.msra.mxu0 %v2833
    %3821 = vmatpush.bf16.msra.mxu0 %v2832
    %3822 = vmatpush.bf16.msra.mxu0 %v2831
    %3823 = vmatpush.bf16.msra.mxu0 %v2830
    %3824 = vmatpush.bf16.msra.mxu0 %v2829
    %3825 = vmatpush.bf16.msra.mxu0 %v2828
    %3826 = vmatpush.bf16.msra.mxu0 %v2827
    %3827 = vmatpush.bf16.msra.mxu0 %v2826
    %3828 = vmatmul.bf16.gmra.mxu0 %v864
    %v3829 = vpop.f32.mrf.mxu0
    %v3830 = vadd.f32 %v3817, %v3829
    %v3831 = vpop.f32.mrf.mxu0
    %3832 = vdwg.mxu0
    %3833 = vmatpush.bf16.msra.mxu0 %v2841
    %3834 = vmatpush.bf16.msra.mxu0 %v2840
    %3835 = vmatpush.bf16.msra.mxu0 %v2839
    %3836 = vmatpush.bf16.msra.mxu0 %v2838
    %3837 = vmatpush.bf16.msra.mxu0 %v2837
    %3838 = vmatpush.bf16.msra.mxu0 %v2836
    %3839 = vmatpush.bf16.msra.mxu0 %v2835
    %3840 = vmatpush.bf16.msra.mxu0 %v2834
    %3841 = vmatmul.bf16.gmra.mxu0 %v865
    %v3842 = vpop.f32.mrf.mxu0
    %v3843 = vadd.f32 %v3830, %v3842
    %v3844 = vpop.f32.mrf.mxu0
    %3845 = vdwg.mxu0
    %3846 = vmatpush.bf16.msra.mxu0 %v2849
    %3847 = vmatpush.bf16.msra.mxu0 %v2848
    %3848 = vmatpush.bf16.msra.mxu0 %v2847
    %3849 = vmatpush.bf16.msra.mxu0 %v2846
    %3850 = vmatpush.bf16.msra.mxu0 %v2845
    %3851 = vmatpush.bf16.msra.mxu0 %v2844
    %3852 = vmatpush.bf16.msra.mxu0 %v2843
    %3853 = vmatpush.bf16.msra.mxu0 %v2842
    %3854 = vmatmul.bf16.gmra.mxu0 %v866
    %v3855 = vpop.f32.mrf.mxu0
    %v3856 = vadd.f32 %v3843, %v3855
    %v3857 = vpop.f32.mrf.mxu0
    %3858 = vdwg.mxu0
    %3859 = vmatpush.bf16.msra.mxu0 %v2857
    %3860 = vmatpush.bf16.msra.mxu0 %v2856
    %3861 = vmatpush.bf16.msra.mxu0 %v2855
    %3862 = vmatpush.bf16.msra.mxu0 %v2854
    %3863 = vmatpush.bf16.msra.mxu0 %v2853
    %3864 = vmatpush.bf16.msra.mxu0 %v2852
    %3865 = vmatpush.bf16.msra.mxu0 %v2851
    %3866 = vmatpush.bf16.msra.mxu0 %v2850
    %3867 = vmatmul.bf16.gmra.mxu0 %v867
    %v3868 = vpop.f32.mrf.mxu0
    %v3869 = vadd.f32 %v3856, %v3868
    %v3870 = vpop.f32.mrf.mxu0
    %3871 = vdwg.mxu0
    %3872 = vmatpush.bf16.msra.mxu0 %v2865
    %3873 = vmatpush.bf16.msra.mxu0 %v2864
    %3874 = vmatpush.bf16.msra.mxu0 %v2863
    %3875 = vmatpush.bf16.msra.mxu0 %v2862
    %3876 = vmatpush.bf16.msra.mxu0 %v2861
    %3877 = vmatpush.bf16.msra.mxu0 %v2860
    %3878 = vmatpush.bf16.msra.mxu0 %v2859
    %3879 = vmatpush.bf16.msra.mxu0 %v2858
    %3880 = vmatmul.bf16.gmra.mxu0 %v868
    %v3881 = vpop.f32.mrf.mxu0
    %v3882 = vadd.f32 %v3869, %v3881
    %v3883 = vpop.f32.mrf.mxu0
    %3884 = vdwg.mxu0
    %3885 = vmatpush.bf16.msra.mxu0 %v2873
    %3886 = vmatpush.bf16.msra.mxu0 %v2872
    %3887 = vmatpush.bf16.msra.mxu0 %v2871
    %3888 = vmatpush.bf16.msra.mxu0 %v2870
    %3889 = vmatpush.bf16.msra.mxu0 %v2869
    %3890 = vmatpush.bf16.msra.mxu0 %v2868
    %3891 = vmatpush.bf16.msra.mxu0 %v2867
    %3892 = vmatpush.bf16.msra.mxu0 %v2866
    %3893 = vmatmul.bf16.gmra.mxu0 %v869
    %v3894 = vpop.f32.mrf.mxu0
    %v3895 = vadd.f32 %v3882, %v3894
    %v3896 = vpop.f32.mrf.mxu0
    %3897 = vdwg.mxu0
    %3898 = vmatpush.bf16.msra.mxu0 %v2881
    %3899 = vmatpush.bf16.msra.mxu0 %v2880
    %3900 = vmatpush.bf16.msra.mxu0 %v2879
    %3901 = vmatpush.bf16.msra.mxu0 %v2878
    %3902 = vmatpush.bf16.msra.mxu0 %v2877
    %3903 = vmatpush.bf16.msra.mxu0 %v2876
    %3904 = vmatpush.bf16.msra.mxu0 %v2875
    %3905 = vmatpush.bf16.msra.mxu0 %v2874
    %3906 = vmatmul.bf16.gmra.mxu0 %v872
    %v3907 = vpop.f32.mrf.mxu0
    %v3908 = vadd.f32 %v3895, %v3907
    %v3909 = vpop.f32.mrf.mxu0
    %3910 = vdwg.mxu0
    %v3911 = vmax.f32 %v3908, 0.0
    %3912 = vst [vmem:[#allocation2] sm:$0x3] %v3911
    // Predicated region
    $region14: #{embedding_forward.7} parent=1 // pred_check
      _
    $region15: #{embedding_forward.7} parent=1 // pred_check_branch
      %3914 = sbr.rel (0) target = $region17
    $region16: #{embedding_forward.7} parent=1 // pred_region
      %3916 = vsyncadd [#allocation3], 0
      %s3918 = sshll.u32 [#allocation2], 4
      %s3919 = int_to_ptr.vmem [resolvable:$true] %s3918
      %s3920 = sshll.u32 %s3, 4
      %s3921 = int_to_ptr.hbm [resolvable:$true] %s3920
      %3923 = dma.vmem_to_hbm [thread:$0]  %s3919, 32, %s3921, [#allocation3]
    $region17: #{embedding_forward.7} parent=1 // pred_fallthru
      _
    // Predicated region
    $region18: #{embedding_forward.7} parent=1 // pred_check
      _
    $region19: #{embedding_forward.7} parent=1 // pred_check_branch
      %3925 = sbr.rel (0) target = $region21
    $region20: #{embedding_forward.7} parent=1 // pred_region
      %3927 = dma.done [#allocation3], 32
    $region21: #{embedding_forward.7} parent=1 // pred_fallthru
      _
    %3928 = vsyncpa [#allocation3], 1

</llo_original>
